<compile_context>
chip_gen: v5e
topology: v5e:2x2
jax: 0.10.0
libtpu: 0.0.40
codegen_flags: <defaults>
</compile_context>

<pallas_src>
import jax
import jax.numpy as jnp
from jax.experimental import pallas as pl
from jax.experimental.pallas import tpu as pltpu

# Fixed by the module: Sequential(Linear(5121,512), ReLU, Linear(512,256), ReLU,
# Linear(256,1), Sigmoid)
IN_FEATURES = 5121
IN_DATA = 5120          # flattened data features  (= 40 * 128, lane aligned)
H1 = 512
H2 = 256
OUT = 1

_LANE = 128
_F32_SUBLANE = 8        # f32 packs 8 sublanes per vreg
_TB_MAX = 256           # batch tile for large B (fills the 256-wide MXU rows)
_OUTP = _LANE           # padded output lanes (lane-dense stores)


def _round_up(x, m):
    return (x + m - 1) // m * m


# --------------------------------------------------------------------------- #
# Kernel: fully fused 3-layer MLP, one grid step per batch tile.
# grid = (batch_tiles,)  [parallel]
# --------------------------------------------------------------------------- #
def _disc_kernel(x_ref, lbl_ref, w1_ref, w1l_ref, b1_ref,
                 w2_ref, b2_ref, w3_ref, b3_ref, o_ref):
    # Cast activations to bf16 in VMEM (X streamed from HBM as f32 exactly once).
    x = x_ref[...].astype(jnp.bfloat16)            # (tb, 5120)
    lbl = lbl_ref[...].astype(jnp.bfloat16)        # (tb, 128), cols > 0 are zero

    # Layer 1: label-column term + bias initialize the accumulator, then the
    # big resident-W1 contraction adds into it (f32 accumulation throughout).
    h1 = jnp.dot(lbl, w1l_ref[...], preferred_element_type=jnp.float32) + b1_ref[...]
    h1 = h1 + jnp.dot(x, w1_ref[...], preferred_element_type=jnp.float32)
    h1 = jnp.maximum(h1, 0.0).astype(jnp.bfloat16)                     # (tb, 512)

    # Layer 2
    h2 = jnp.dot(h1, w2_ref[...], preferred_element_type=jnp.float32) + b2_ref[...]
    h2 = jnp.maximum(h2, 0.0).astype(jnp.bfloat16)                     # (tb, 256)

    # Layer 3 + sigmoid (exp on EUP; exact reciprocal for output parity).
    z = jnp.dot(h2, w3_ref[...], preferred_element_type=jnp.float32) + b3_ref[...]
    o_ref[...] = pl.reciprocal(1.0 + jnp.exp(-z), approx=False)        # (tb, 128)


# --------------------------------------------------------------------------- #
# Parameters
# --------------------------------------------------------------------------- #
def init_params(key):
    """Logical f32 params, torch.nn.Linear-style init, stored (in, out)."""
    ks = jax.random.split(key, 6)

    def lin(kw, kb, fan_in, fan_out):
        bound = 1.0 / jnp.sqrt(jnp.float32(fan_in))
        w = jax.random.uniform(kw, (fan_in, fan_out), jnp.float32, -bound, bound)
        b = jax.random.uniform(kb, (1, fan_out), jnp.float32, -bound, bound)
        return w, b

    w1, b1 = lin(ks[0], ks[1], IN_FEATURES, H1)
    w2, b2 = lin(ks[2], ks[3], H1, H2)
    w3, b3 = lin(ks[4], ks[5], H2, OUT)
    return dict(w1=w1, b1=b1, w2=w2, b2=b2, w3=w3, b3=b3)


def pack_params(params):
    """One-time padding + bf16 cast into kernel layout (at init, NOT per call)."""
    w1 = params["w1"]                                                   # (5121, 512)
    w1d = w1[:IN_DATA].astype(jnp.bfloat16)                             # (5120, 512)
    w1l = (jnp.zeros((_LANE, H1), jnp.bfloat16)
           .at[0, :].set(w1[IN_DATA].astype(jnp.bfloat16)))             # (128, 512)
    w3p = (jnp.zeros((H2, _OUTP), jnp.bfloat16)
           .at[:, :OUT].set(params["w3"].astype(jnp.bfloat16)))         # (256, 128)
    b3p = jnp.zeros((1, _OUTP), jnp.float32).at[:, :OUT].set(params["b3"])
    return dict(
        w1d=w1d, w1l=w1l, b1=params["b1"].astype(jnp.float32),
        w2=params["w2"].astype(jnp.bfloat16), b2=params["b2"].astype(jnp.float32),
        w3=w3p, b3=b3p,
    )


# --------------------------------------------------------------------------- #
# Forward wrapper
# --------------------------------------------------------------------------- #
@jax.jit
def discriminator2_forward(data, labels, kparams):
    """Equivalent of Discriminator2.forward(data, labels) with packed params."""
    B = data.shape[0]
    x = data.reshape(B, -1)                      # f32, view-level reshape (no cast)
    assert x.shape[1] == IN_DATA, x.shape
    x = x.astype(jnp.float32)

    # Batch tiling: one tile for small B; 256-row tiles (parallel) for large B.
    if B <= _TB_MAX:
        tb = Bp = max(_round_up(B, _F32_SUBLANE), _F32_SUBLANE)
    else:
        tb = _TB_MAX
        Bp = _round_up(B, tb)

    if Bp != B:
        xp = jnp.zeros((Bp, IN_DATA), jnp.float32).at[:B].set(x)
    else:
        xp = x
    lblp = (jnp.zeros((Bp, _LANE), jnp.float32)
            .at[:B, :OUT].set(labels.reshape(B, OUT).astype(jnp.float32)))

    n_bt = Bp // tb
    const = lambda i: (0, 0)
    single = pl.Buffered(1)            # resident / constant-index operands

    out = pl.pallas_call(
        _disc_kernel,
        out_shape=jax.ShapeDtypeStruct((Bp, _OUTP), jnp.float32),
        grid_spec=pltpu.PrefetchScalarGridSpec(
            num_scalar_prefetch=0,
            grid=(n_bt,),
            in_specs=[
                pl.BlockSpec((tb, IN_DATA), lambda i: (i, 0)),              # X (f32)
                pl.BlockSpec((tb, _LANE), lambda i: (i, 0)),                # labels (padded)
                pl.BlockSpec((IN_DATA, H1), const, pipeline_mode=single),   # W1 (resident)
                pl.BlockSpec((_LANE, H1), const, pipeline_mode=single),     # W1 label row
                pl.BlockSpec((1, H1), const, pipeline_mode=single),         # b1
                pl.BlockSpec((H1, H2), const, pipeline_mode=single),        # W2
                pl.BlockSpec((1, H2), const, pipeline_mode=single),         # b2
                pl.BlockSpec((H2, _OUTP), const, pipeline_mode=single),     # W3 (padded)
                pl.BlockSpec((1, _OUTP), const, pipeline_mode=single),      # b3 (padded)
            ],
            out_specs=pl.BlockSpec((tb, _OUTP), lambda i: (i, 0)),
        ),
        compiler_params=pltpu.CompilerParams(
            dimension_semantics=("parallel",),
            vmem_limit_bytes=32 * 1024 * 1024),
    )(xp, lblp, kparams["w1d"], kparams["w1l"], kparams["b1"],
      kparams["w2"], kparams["b2"], kparams["w3"], kparams["b3"])

    return out[:B, :OUT]                                               # (B, 1)


# --------------------------------------------------------------------------- #
# Pure-JAX f32 reference
# --------------------------------------------------------------------------- #
def _reference_forward(data, labels, params):
    B = data.shape[0]
    X = jnp.concatenate(
        [data.reshape(B, -1).astype(jnp.float32), labels.astype(jnp.float32)],
        axis=1)
    h1 = jax.nn.relu(X @ params["w1"] + params["b1"])
    h2 = jax.nn.relu(h1 @ params["w2"] + params["b2"])
    return jax.nn.sigmoid(h2 @ params["w3"] + params["b3"])


if __name__ == "__main__":
    # TODO(synk): the SlitCNN submodule is unused by Discriminator2.forward and is
    # intentionally not implemented.
    key = jax.random.PRNGKey(0)
    k_data, k_labels, k_params = jax.random.split(key, 3)

    # Linear(5121, ...) implies 5120 flattened data features + 1 label column.
    batch = 2
    data = jax.random.normal(k_data, (batch, 1, 5120), jnp.float32)
    labels = jax.random.normal(k_labels, (batch, 1), jnp.float32)

    params = init_params(k_params)
    kparams = pack_params(params)        # one-time pad + bf16 cast

    out = discriminator2_forward(data, labels, kparams)
    out = jax.block_until_ready(out)

    ref = _reference_forward(data, labels, params)
    assert out.shape == (batch, 1), out.shape
    # bf16 weights/activations (f32 accumulation) vs f32 reference.
    assert jnp.allclose(out, ref, atol=1e-2, rtol=1e-2), (out, ref)

    print("KERNEL_OK")
</pallas_src>

<mosaic_0001>
module attributes {stable_mosaic.version = 11 : i64} {
  func.func @_disc_kernel(%arg0: i32, %arg1: memref<8x5120xf32, #tpu.memory_space<vmem>>, %arg2: memref<8x128xf32, #tpu.memory_space<vmem>>, %arg3: memref<5120x512xbf16, #tpu.memory_space<vmem>>, %arg4: memref<128x512xbf16, #tpu.memory_space<vmem>>, %arg5: memref<1x512xf32, #tpu.memory_space<vmem>>, %arg6: memref<512x256xbf16, #tpu.memory_space<vmem>>, %arg7: memref<1x256xf32, #tpu.memory_space<vmem>>, %arg8: memref<256x128xbf16, #tpu.memory_space<vmem>>, %arg9: memref<1x128xf32, #tpu.memory_space<vmem>>, %arg10: memref<8x128xf32, #tpu.memory_space<vmem>>) attributes {dimension_semantics = [#tpu.dimension_semantics<parallel>], iteration_bounds = array<i64: 1>, scalar_prefetch = 0 : i64, scratch_operands = 0 : i64, tpu.core_type = #tpu.core_type<tc>, window_params = [{transform_indices = @transform_0, window_bounds = array<i64: 8, 5120>}, {transform_indices = @transform_1, window_bounds = array<i64: 8, 128>}, {pipeline_mode = #tpu.pipeline_mode<synchronous>, transform_indices = @transform_2, window_bounds = array<i64: 5120, 512>}, {pipeline_mode = #tpu.pipeline_mode<synchronous>, transform_indices = @transform_3, window_bounds = array<i64: 128, 512>}, {pipeline_mode = #tpu.pipeline_mode<synchronous>, transform_indices = @transform_4, window_bounds = array<i64: 1, 512>}, {pipeline_mode = #tpu.pipeline_mode<synchronous>, transform_indices = @transform_5, window_bounds = array<i64: 512, 256>}, {pipeline_mode = #tpu.pipeline_mode<synchronous>, transform_indices = @transform_6, window_bounds = array<i64: 1, 256>}, {pipeline_mode = #tpu.pipeline_mode<synchronous>, transform_indices = @transform_7, window_bounds = array<i64: 256, 128>}, {pipeline_mode = #tpu.pipeline_mode<synchronous>, transform_indices = @transform_8, window_bounds = array<i64: 1, 128>}, {transform_indices = @transform_9, window_bounds = array<i64: 8, 128>}]} {
    %c0 = arith.constant 0 : index
    %c0_0 = arith.constant 0 : index
    %0 = vector.load %arg1[%c0, %c0_0] : memref<8x5120xf32, #tpu.memory_space<vmem>>, vector<8x5120xf32>
    %1 = arith.truncf %0 : vector<8x5120xf32> to vector<8x5120xbf16>
    %c0_1 = arith.constant 0 : index
    %c0_2 = arith.constant 0 : index
    %2 = vector.load %arg2[%c0_1, %c0_2] : memref<8x128xf32, #tpu.memory_space<vmem>>, vector<8x128xf32>
    %3 = arith.truncf %2 : vector<8x128xf32> to vector<8x128xbf16>
    %c0_3 = arith.constant 0 : index
    %c0_4 = arith.constant 0 : index
    %4 = vector.load %arg4[%c0_3, %c0_4] : memref<128x512xbf16, #tpu.memory_space<vmem>>, vector<128x512xbf16>
    %cst = arith.constant dense<0.000000e+00> : vector<8x512xf32>
    %5 = tpu.matmul %3, %4, %cst {dimension_numbers = #tpu.dot_dimension_numbers<[1], [0], [0], [1], [0, 0, 1, 1], [], []>} : vector<8x128xbf16>, vector<128x512xbf16>, vector<8x512xf32> -> vector<8x512xf32>
    %c0_5 = arith.constant 0 : index
    %c0_6 = arith.constant 0 : index
    %6 = vector.load %arg5[%c0_5, %c0_6] : memref<1x512xf32, #tpu.memory_space<vmem>>, vector<1x512xf32>
    %7 = vector.broadcast %6 : vector<1x512xf32> to vector<8x512xf32>
    %8 = arith.addf %5, %7 : vector<8x512xf32>
    %c0_7 = arith.constant 0 : index
    %c0_8 = arith.constant 0 : index
    %9 = vector.load %arg3[%c0_7, %c0_8] : memref<5120x512xbf16, #tpu.memory_space<vmem>>, vector<5120x512xbf16>
    %cst_9 = arith.constant dense<0.000000e+00> : vector<8x512xf32>
    %10 = tpu.matmul %1, %9, %cst_9 {dimension_numbers = #tpu.dot_dimension_numbers<[1], [0], [0], [1], [0, 0, 1, 1], [], []>} : vector<8x5120xbf16>, vector<5120x512xbf16>, vector<8x512xf32> -> vector<8x512xf32>
    %11 = arith.addf %8, %10 : vector<8x512xf32>
    %cst_10 = arith.constant 0.000000e+00 : f32
    %12 = vector.broadcast %cst_10 : f32 to vector<8x512xf32>
    %13 = arith.maximumf %11, %12 : vector<8x512xf32>
    %14 = arith.truncf %13 : vector<8x512xf32> to vector<8x512xbf16>
    %c0_11 = arith.constant 0 : index
    %c0_12 = arith.constant 0 : index
    %15 = vector.load %arg6[%c0_11, %c0_12] : memref<512x256xbf16, #tpu.memory_space<vmem>>, vector<512x256xbf16>
    %cst_13 = arith.constant dense<0.000000e+00> : vector<8x256xf32>
    %16 = tpu.matmul %14, %15, %cst_13 {dimension_numbers = #tpu.dot_dimension_numbers<[1], [0], [0], [1], [0, 0, 1, 1], [], []>} : vector<8x512xbf16>, vector<512x256xbf16>, vector<8x256xf32> -> vector<8x256xf32>
    %c0_14 = arith.constant 0 : index
    %c0_15 = arith.constant 0 : index
    %17 = vector.load %arg7[%c0_14, %c0_15] : memref<1x256xf32, #tpu.memory_space<vmem>>, vector<1x256xf32>
    %18 = vector.broadcast %17 : vector<1x256xf32> to vector<8x256xf32>
    %19 = arith.addf %16, %18 : vector<8x256xf32>
    %cst_16 = arith.constant 0.000000e+00 : f32
    %20 = vector.broadcast %cst_16 : f32 to vector<8x256xf32>
    %21 = arith.maximumf %19, %20 : vector<8x256xf32>
    %22 = arith.truncf %21 : vector<8x256xf32> to vector<8x256xbf16>
    %c0_17 = arith.constant 0 : index
    %c0_18 = arith.constant 0 : index
    %23 = vector.load %arg8[%c0_17, %c0_18] : memref<256x128xbf16, #tpu.memory_space<vmem>>, vector<256x128xbf16>
    %cst_19 = arith.constant dense<0.000000e+00> : vector<8x128xf32>
    %24 = tpu.matmul %22, %23, %cst_19 {dimension_numbers = #tpu.dot_dimension_numbers<[1], [0], [0], [1], [0, 0, 1, 1], [], []>} : vector<8x256xbf16>, vector<256x128xbf16>, vector<8x128xf32> -> vector<8x128xf32>
    %c0_20 = arith.constant 0 : index
    %c0_21 = arith.constant 0 : index
    %25 = vector.load %arg9[%c0_20, %c0_21] : memref<1x128xf32, #tpu.memory_space<vmem>>, vector<1x128xf32>
    %26 = vector.broadcast %25 : vector<1x128xf32> to vector<8x128xf32>
    %27 = arith.addf %24, %26 : vector<8x128xf32>
    %cst_22 = arith.constant 0.000000e+00 : f32
    %28 = vector.broadcast %cst_22 : f32 to vector<8x128xf32>
    %29 = arith.subf %28, %27 : vector<8x128xf32>
    %30 = math.exp %29 : vector<8x128xf32>
    %cst_23 = arith.constant 1.000000e+00 : f32
    %31 = vector.broadcast %cst_23 : f32 to vector<8x128xf32>
    %32 = arith.addf %31, %30 : vector<8x128xf32>
    %33 = tpu.reciprocal %32 : vector<8x128xf32> -> vector<8x128xf32>
    %c0_24 = arith.constant 0 : index
    %c0_25 = arith.constant 0 : index
    %34 = vector.load %arg10[%c0_24, %c0_25] : memref<8x128xf32, #tpu.memory_space<vmem>>, vector<8x128xf32>
    tpu.vector_store %arg10[%c0_24, %c0_25], %33 {strides = array<i32>} : memref<8x128xf32, #tpu.memory_space<vmem>>, vector<8x128xf32>,
    return
  }
  func.func @transform_0(%arg0: i32) -> (i32, i32) {
    %c0_i32 = arith.constant 0 : i32
    %c0_i32_0 = arith.constant 0 : i32
    return %arg0, %c0_i32 : i32, i32
  }
  func.func @transform_1(%arg0: i32) -> (i32, i32) {
    %c0_i32 = arith.constant 0 : i32
    %c0_i32_0 = arith.constant 0 : i32
    return %arg0, %c0_i32 : i32, i32
  }
  func.func @transform_2(%arg0: i32) -> (i32, i32) {
    %c0_i32 = arith.constant 0 : i32
    %c0_i32_0 = arith.constant 0 : i32
    %c0_i32_1 = arith.constant 0 : i32
    return %c0_i32, %c0_i32_0 : i32, i32
  }
  func.func @transform_3(%arg0: i32) -> (i32, i32) {
    %c0_i32 = arith.constant 0 : i32
    %c0_i32_0 = arith.constant 0 : i32
    %c0_i32_1 = arith.constant 0 : i32
    return %c0_i32, %c0_i32_0 : i32, i32
  }
  func.func @transform_4(%arg0: i32) -> (i32, i32) {
    %c0_i32 = arith.constant 0 : i32
    %c0_i32_0 = arith.constant 0 : i32
    %c0_i32_1 = arith.constant 0 : i32
    return %c0_i32, %c0_i32_0 : i32, i32
  }
  func.func @transform_5(%arg0: i32) -> (i32, i32) {
    %c0_i32 = arith.constant 0 : i32
    %c0_i32_0 = arith.constant 0 : i32
    %c0_i32_1 = arith.constant 0 : i32
    return %c0_i32, %c0_i32_0 : i32, i32
  }
  func.func @transform_6(%arg0: i32) -> (i32, i32) {
    %c0_i32 = arith.constant 0 : i32
    %c0_i32_0 = arith.constant 0 : i32
    %c0_i32_1 = arith.constant 0 : i32
    return %c0_i32, %c0_i32_0 : i32, i32
  }
  func.func @transform_7(%arg0: i32) -> (i32, i32) {
    %c0_i32 = arith.constant 0 : i32
    %c0_i32_0 = arith.constant 0 : i32
    %c0_i32_1 = arith.constant 0 : i32
    return %c0_i32, %c0_i32_0 : i32, i32
  }
  func.func @transform_8(%arg0: i32) -> (i32, i32) {
    %c0_i32 = arith.constant 0 : i32
    %c0_i32_0 = arith.constant 0 : i32
    %c0_i32_1 = arith.constant 0 : i32
    return %c0_i32, %c0_i32_0 : i32, i32
  }
  func.func @transform_9(%arg0: i32) -> (i32, i32) {
    %c0_i32 = arith.constant 0 : i32
    %c0_i32_0 = arith.constant 0 : i32
    return %arg0, %c0_i32 : i32, i32
  }
}

</mosaic_0001>

<llo_original>
// kernel: discriminator2_forward.1
$region0: #{discriminator2_forward.1}
  #allocation0 [shape = 'u32[]', space=smem, size = 0x4, offset = 0x4, fixed_abs, tag = 'smem constant byte address 0x4 - core index']
  #allocation1 [shape = 'u32[72,128]{1,0:T(1,128)}', space=vmem, size = 0x9000, scoped, tag = 'internal scratch']
  %s0 = inlined_call_operand.vmem [shape: f32[8,5120], index: 0, kind: input, shape index: {}]
  %s1 = inlined_call_operand.vmem [shape: f32[8,128], index: 1, kind: input, shape index: {}]
  %s2 = inlined_call_operand.hbm [shape: bf16[5120,512], index: 2, kind: input, shape index: {}]
  %s3 = inlined_call_operand.hbm [shape: bf16[128,512], index: 3, kind: input, shape index: {}]
  %s4 = inlined_call_operand.hbm [shape: f32[1,512], index: 4, kind: input, shape index: {}]
  %s5 = inlined_call_operand.hbm [shape: bf16[512,256], index: 5, kind: input, shape index: {}]
  %s6 = inlined_call_operand.hbm [shape: f32[1,256], index: 6, kind: input, shape index: {}]
  %s7 = inlined_call_operand.hbm [shape: bf16[256,128], index: 7, kind: input, shape index: {}]
  %s8 = inlined_call_operand.hbm [shape: f32[1,128], index: 8, kind: input, shape index: {}]
  %s9 = inlined_call_operand.vmem [shape: f32[8,128], index: 9, kind: output, shape index: {}]
  %s10 = sld [smem:[#allocation0]]
  $region74: #{discriminator2_forward.1} parent=0
    _
  %s12 = ssub.s32 1, %s10
  %s13 = scalar_select 0, %s12, %s10
  $region1: #{discriminator2_forward.1} parent=0
    #allocation2 [shape = 'u8[5242880]{0}', space=vmem, size = 0x500000, scoped, tag = 'input window, operand 2, single buffered']
    #allocation3 [shape = 's32[1]{0}', space=sflag, size = 0x4, scoped, tag = 'scoped memory for discriminator2_forward.1']
    #allocation4 [shape = 'u8[131072]{0}', space=vmem, size = 0x20000, scoped, tag = 'input window, operand 3, single buffered']
    #allocation5 [shape = 's32[1]{0}', space=sflag, size = 0x4, scoped, tag = 'scoped memory for discriminator2_forward.1']
    #allocation6 [shape = 'u8[2048]{0}', space=vmem, size = 0x800, scoped, tag = 'input window, operand 4, single buffered']
    #allocation7 [shape = 'u8[262144]{0}', space=vmem, size = 0x40000, scoped, tag = 'input window, operand 5, single buffered']
    #allocation8 [shape = 's32[1]{0}', space=sflag, size = 0x4, scoped, tag = 'scoped memory for discriminator2_forward.1']
    #allocation9 [shape = 'u8[1024]{0}', space=vmem, size = 0x400, scoped, tag = 'input window, operand 6, single buffered']
    #allocation10 [shape = 'u8[65536]{0}', space=vmem, size = 0x10000, scoped, tag = 'input window, operand 7, single buffered']
    #allocation11 [shape = 's32[1]{0}', space=sflag, size = 0x4, scoped, tag = 'scoped memory for discriminator2_forward.1']
    #allocation12 [shape = 'u8[512]{0}', space=vmem, size = 0x400, scoped, tag = 'input window, operand 8, single buffered']
    %14 = vsyncpa [#allocation3], 0
    %15 = vsyncpa [#allocation5], 0
    %16 = vsyncpa [#allocation8], 0
    %17 = vsyncpa [#allocation11], 0
    // Predicated region
    $region2: #{discriminator2_forward.1} parent=1 // pred_check
      _
    $region3: #{discriminator2_forward.1} parent=1 // pred_check_branch
      %19 = sbr.rel (0) target = $region5
    $region4: #{discriminator2_forward.1} parent=1 // pred_region
      _
    $region5: #{discriminator2_forward.1} parent=1 // pred_fallthru
      _
    // Predicated region
    $region6: #{discriminator2_forward.1} parent=1 // pred_check
      _
    $region7: #{discriminator2_forward.1} parent=1 // pred_check_branch
      %21 = sbr.rel (0) target = $region9
    $region8: #{discriminator2_forward.1} parent=1 // pred_region
      _
    $region9: #{discriminator2_forward.1} parent=1 // pred_fallthru
      _
    // Predicated region
    $region10: #{discriminator2_forward.1} parent=1 // pred_check
      _
    $region11: #{discriminator2_forward.1} parent=1 // pred_check_branch
      %23 = sbr.rel (0) target = $region13
    $region12: #{discriminator2_forward.1} parent=1 // pred_region
      %25 = vsyncadd [#allocation3], 0
      %s26 = sshll.u32 %s2, 4
      %s27 = int_to_ptr.hbm [resolvable:$true] %s26
      %s28 = sshll.u32 [#allocation2], 4
      %s29 = int_to_ptr.vmem [resolvable:$true] %s28
      %34 = dma.hbm_to_vmem [thread:$0]  %s27, 163840, %s29, [#allocation3], 256, 256, 16
    $region13: #{discriminator2_forward.1} parent=1 // pred_fallthru
      _
    // Predicated region
    $region14: #{discriminator2_forward.1} parent=1 // pred_check
      _
    $region15: #{discriminator2_forward.1} parent=1 // pred_check_branch
      %36 = sbr.rel (0) target = $region17
    $region16: #{discriminator2_forward.1} parent=1 // pred_region
      %38 = vsyncadd [#allocation5], 0
      %s39 = sshll.u32 %s3, 4
      %s40 = int_to_ptr.hbm [resolvable:$true] %s39
      %s41 = sshll.u32 [#allocation4], 4
      %s42 = int_to_ptr.vmem [resolvable:$true] %s41
      %47 = dma.hbm_to_vmem [thread:$0]  %s40, 4096, %s42, [#allocation5], 256, 256, 16
    $region17: #{discriminator2_forward.1} parent=1 // pred_fallthru
      _
    // Predicated region
    $region18: #{discriminator2_forward.1} parent=1 // pred_check
      _
    $region19: #{discriminator2_forward.1} parent=1 // pred_check_branch
      %49 = sbr.rel (0) target = $region21
    $region20: #{discriminator2_forward.1} parent=1 // pred_region
      %51 = vsyncadd [#allocation5], 0
      %s53 = sshll.u32 %s4, 4
      %s54 = int_to_ptr.hbm [resolvable:$true] %s53
      %s55 = sshll.u32 [#allocation6], 4
      %s56 = int_to_ptr.vmem [resolvable:$true] %s55
      %58 = dma.hbm_to_vmem [thread:$0]  %s54, 64, %s56, [#allocation5]
    $region21: #{discriminator2_forward.1} parent=1 // pred_fallthru
      _
    // Predicated region
    $region22: #{discriminator2_forward.1} parent=1 // pred_check
      _
    $region23: #{discriminator2_forward.1} parent=1 // pred_check_branch
      %60 = sbr.rel (0) target = $region25
    $region24: #{discriminator2_forward.1} parent=1 // pred_region
      %62 = vsyncadd [#allocation8], 0
      %s63 = sshll.u32 %s5, 4
      %s64 = int_to_ptr.hbm [resolvable:$true] %s63
      %s65 = sshll.u32 [#allocation7], 4
      %s66 = int_to_ptr.vmem [resolvable:$true] %s65
      %71 = dma.hbm_to_vmem [thread:$0]  %s64, 8192, %s66, [#allocation8], 128, 128, 8
    $region25: #{discriminator2_forward.1} parent=1 // pred_fallthru
      _
    // Predicated region
    $region26: #{discriminator2_forward.1} parent=1 // pred_check
      _
    $region27: #{discriminator2_forward.1} parent=1 // pred_check_branch
      %73 = sbr.rel (0) target = $region29
    $region28: #{discriminator2_forward.1} parent=1 // pred_region
      %75 = vsyncadd [#allocation8], 0
      %s77 = sshll.u32 %s6, 4
      %s78 = int_to_ptr.hbm [resolvable:$true] %s77
      %s79 = sshll.u32 [#allocation9], 4
      %s80 = int_to_ptr.vmem [resolvable:$true] %s79
      %82 = dma.hbm_to_vmem [thread:$0]  %s78, 32, %s80, [#allocation8]
    $region29: #{discriminator2_forward.1} parent=1 // pred_fallthru
      _
    // Predicated region
    $region30: #{discriminator2_forward.1} parent=1 // pred_check
      _
    $region31: #{discriminator2_forward.1} parent=1 // pred_check_branch
      %84 = sbr.rel (0) target = $region33
    $region32: #{discriminator2_forward.1} parent=1 // pred_region
      %86 = vsyncadd [#allocation11], 0
      %s87 = sshll.u32 %s7, 4
      %s88 = int_to_ptr.hbm [resolvable:$true] %s87
      %s89 = sshll.u32 [#allocation10], 4
      %s90 = int_to_ptr.vmem [resolvable:$true] %s89
      %95 = dma.hbm_to_vmem [thread:$0]  %s88, 2048, %s90, [#allocation11], 64, 64, 4
    $region33: #{discriminator2_forward.1} parent=1 // pred_fallthru
      _
    // Predicated region
    $region34: #{discriminator2_forward.1} parent=1 // pred_check
      _
    $region35: #{discriminator2_forward.1} parent=1 // pred_check_branch
      %97 = sbr.rel (0) target = $region37
    $region36: #{discriminator2_forward.1} parent=1 // pred_region
      %99 = vsyncadd [#allocation11], 0
      %s101 = sshll.u32 %s8, 4
      %s102 = int_to_ptr.hbm [resolvable:$true] %s101
      %s103 = sshll.u32 [#allocation12], 4
      %s104 = int_to_ptr.vmem [resolvable:$true] %s103
      %106 = dma.hbm_to_vmem [thread:$0]  %s102, 16, %s104, [#allocation11]
    $region37: #{discriminator2_forward.1} parent=1 // pred_fallthru
      _
    // Predicated region
    $region38: #{discriminator2_forward.1} parent=1 // pred_check
      _
    $region39: #{discriminator2_forward.1} parent=1 // pred_check_branch
      %108 = sbr.rel (0) target = $region41
    $region40: #{discriminator2_forward.1} parent=1 // pred_region
      %110 = dma.done [#allocation3], 163840
    $region41: #{discriminator2_forward.1} parent=1 // pred_fallthru
      _
    // Predicated region
    $region42: #{discriminator2_forward.1} parent=1 // pred_check
      _
    $region43: #{discriminator2_forward.1} parent=1 // pred_check_branch
      %112 = sbr.rel (0) target = $region45
    $region44: #{discriminator2_forward.1} parent=1 // pred_region
      %114 = dma.done [#allocation5], 4096
    $region45: #{discriminator2_forward.1} parent=1 // pred_fallthru
      _
    // Predicated region
    $region46: #{discriminator2_forward.1} parent=1 // pred_check
      _
    $region47: #{discriminator2_forward.1} parent=1 // pred_check_branch
      %116 = sbr.rel (0) target = $region49
    $region48: #{discriminator2_forward.1} parent=1 // pred_region
      %118 = dma.done [#allocation5], 64
    $region49: #{discriminator2_forward.1} parent=1 // pred_fallthru
      _
    // Predicated region
    $region50: #{discriminator2_forward.1} parent=1 // pred_check
      _
    $region51: #{discriminator2_forward.1} parent=1 // pred_check_branch
      %120 = sbr.rel (0) target = $region53
    $region52: #{discriminator2_forward.1} parent=1 // pred_region
      %122 = dma.done [#allocation8], 8192
    $region53: #{discriminator2_forward.1} parent=1 // pred_fallthru
      _
    // Predicated region
    $region54: #{discriminator2_forward.1} parent=1 // pred_check
      _
    $region55: #{discriminator2_forward.1} parent=1 // pred_check_branch
      %124 = sbr.rel (0) target = $region57
    $region56: #{discriminator2_forward.1} parent=1 // pred_region
      %126 = dma.done [#allocation8], 32
    $region57: #{discriminator2_forward.1} parent=1 // pred_fallthru
      _
    // Predicated region
    $region58: #{discriminator2_forward.1} parent=1 // pred_check
      _
    $region59: #{discriminator2_forward.1} parent=1 // pred_check_branch
      %128 = sbr.rel (0) target = $region61
    $region60: #{discriminator2_forward.1} parent=1 // pred_region
      %130 = dma.done [#allocation11], 2048
    $region61: #{discriminator2_forward.1} parent=1 // pred_fallthru
      _
    // Predicated region
    $region62: #{discriminator2_forward.1} parent=1 // pred_check
      _
    $region63: #{discriminator2_forward.1} parent=1 // pred_check_branch
      %132 = sbr.rel (0) target = $region65
    $region64: #{discriminator2_forward.1} parent=1 // pred_region
      %134 = dma.done [#allocation11], 16
    $region65: #{discriminator2_forward.1} parent=1 // pred_fallthru
      _
    %v135 = vld [vmem:[%s0] sm:$0xff]
    %v136 = vld [vmem:[%s0 + $0x8] sm:$0xff]
    %v137 = vld [vmem:[%s0 + $0x10] sm:$0xff]
    %v138 = vld [vmem:[%s0 + $0x18] sm:$0xff]
    %v139 = vld [vmem:[%s0 + $0x20] sm:$0xff]
    %v140 = vld [vmem:[%s0 + $0x28] sm:$0xff]
    %v141 = vld [vmem:[%s0 + $0x30] sm:$0xff]
    %v142 = vld [vmem:[%s0 + $0x38] sm:$0xff]
    %v143 = vld [vmem:[%s0 + $0x40] sm:$0xff]
    %v144 = vld [vmem:[%s0 + $0x48] sm:$0xff]
    %v145 = vld [vmem:[%s0 + $0x50] sm:$0xff]
    %v146 = vld [vmem:[%s0 + $0x58] sm:$0xff]
    %v147 = vld [vmem:[%s0 + $0x60] sm:$0xff]
    %v148 = vld [vmem:[%s0 + $0x68] sm:$0xff]
    %v149 = vld [vmem:[%s0 + $0x70] sm:$0xff]
    %v150 = vld [vmem:[%s0 + $0x78] sm:$0xff]
    %v151 = vld [vmem:[%s0 + $0x80] sm:$0xff]
    %v152 = vld [vmem:[%s0 + $0x88] sm:$0xff]
    %v153 = vld [vmem:[%s0 + $0x90] sm:$0xff]
    %v154 = vld [vmem:[%s0 + $0x98] sm:$0xff]
    %v155 = vld [vmem:[%s0 + $0xa0] sm:$0xff]
    %v156 = vld [vmem:[%s0 + $0xa8] sm:$0xff]
    %v157 = vld [vmem:[%s0 + $0xb0] sm:$0xff]
    %v158 = vld [vmem:[%s0 + $0xb8] sm:$0xff]
    %v159 = vld [vmem:[%s0 + $0xc0] sm:$0xff]
    %v160 = vld [vmem:[%s0 + $0xc8] sm:$0xff]
    %v161 = vld [vmem:[%s0 + $0xd0] sm:$0xff]
    %v162 = vld [vmem:[%s0 + $0xd8] sm:$0xff]
    %v163 = vld [vmem:[%s0 + $0xe0] sm:$0xff]
    %v164 = vld [vmem:[%s0 + $0xe8] sm:$0xff]
    %v165 = vld [vmem:[%s0 + $0xf0] sm:$0xff]
    %v166 = vld [vmem:[%s0 + $0xf8] sm:$0xff]
    %v167 = vld [vmem:[%s0 + $0x100] sm:$0xff]
    %v168 = vld [vmem:[%s0 + $0x108] sm:$0xff]
    %v169 = vld [vmem:[%s0 + $0x110] sm:$0xff]
    %v170 = vld [vmem:[%s0 + $0x118] sm:$0xff]
    %v171 = vld [vmem:[%s0 + $0x120] sm:$0xff]
    %v172 = vld [vmem:[%s0 + $0x128] sm:$0xff]
    %v173 = vld [vmem:[%s0 + $0x130] sm:$0xff]
    %v174 = vld [vmem:[%s0 + $0x138] sm:$0xff]
    %v175 = vpack.c.bf16 %v135, %v135
    %v176 = vpack.c.bf16 %v136, %v136
    %v177 = vpack.c.bf16 %v137, %v137
    %v178 = vpack.c.bf16 %v138, %v138
    %v179 = vpack.c.bf16 %v139, %v139
    %v180 = vpack.c.bf16 %v140, %v140
    %v181 = vpack.c.bf16 %v141, %v141
    %v182 = vpack.c.bf16 %v142, %v142
    %v183 = vpack.c.bf16 %v143, %v143
    %v184 = vpack.c.bf16 %v144, %v144
    %v185 = vpack.c.bf16 %v145, %v145
    %v186 = vpack.c.bf16 %v146, %v146
    %v187 = vpack.c.bf16 %v147, %v147
    %v188 = vpack.c.bf16 %v148, %v148
    %v189 = vpack.c.bf16 %v149, %v149
    %v190 = vpack.c.bf16 %v150, %v150
    %v191 = vpack.c.bf16 %v151, %v151
    %v192 = vpack.c.bf16 %v152, %v152
    %v193 = vpack.c.bf16 %v153, %v153
    %v194 = vpack.c.bf16 %v154, %v154
    %v195 = vpack.c.bf16 %v155, %v155
    %v196 = vpack.c.bf16 %v156, %v156
    %v197 = vpack.c.bf16 %v157, %v157
    %v198 = vpack.c.bf16 %v158, %v158
    %v199 = vpack.c.bf16 %v159, %v159
    %v200 = vpack.c.bf16 %v160, %v160
    %v201 = vpack.c.bf16 %v161, %v161
    %v202 = vpack.c.bf16 %v162, %v162
    %v203 = vpack.c.bf16 %v163, %v163
    %v204 = vpack.c.bf16 %v164, %v164
    %v205 = vpack.c.bf16 %v165, %v165
    %v206 = vpack.c.bf16 %v166, %v166
    %v207 = vpack.c.bf16 %v167, %v167
    %v208 = vpack.c.bf16 %v168, %v168
    %v209 = vpack.c.bf16 %v169, %v169
    %v210 = vpack.c.bf16 %v170, %v170
    %v211 = vpack.c.bf16 %v171, %v171
    %v212 = vpack.c.bf16 %v172, %v172
    %v213 = vpack.c.bf16 %v173, %v173
    %v214 = vpack.c.bf16 %v174, %v174
    %v215 = vld [vmem:[%s1] sm:$0xff]
    %v216 = vpack.c.bf16 %v215, %v215
    %v217 = vld [vmem:[#allocation4] sm:$0xff]
    %v218 = vld [vmem:[#allocation4 + $0x8] sm:$0xff]
    %v219 = vld [vmem:[#allocation4 + $0x10] sm:$0xff]
    %v220 = vld [vmem:[#allocation4 + $0x18] sm:$0xff]
    %v221 = vld [vmem:[#allocation4 + $0x20] sm:$0xff]
    %v222 = vld [vmem:[#allocation4 + $0x28] sm:$0xff]
    %v223 = vld [vmem:[#allocation4 + $0x30] sm:$0xff]
    %v224 = vld [vmem:[#allocation4 + $0x38] sm:$0xff]
    %v225 = vld [vmem:[#allocation4 + $0x40] sm:$0xff]
    %v226 = vld [vmem:[#allocation4 + $0x48] sm:$0xff]
    %v227 = vld [vmem:[#allocation4 + $0x50] sm:$0xff]
    %v228 = vld [vmem:[#allocation4 + $0x58] sm:$0xff]
    %v229 = vld [vmem:[#allocation4 + $0x60] sm:$0xff]
    %v230 = vld [vmem:[#allocation4 + $0x68] sm:$0xff]
    %v231 = vld [vmem:[#allocation4 + $0x70] sm:$0xff]
    %v232 = vld [vmem:[#allocation4 + $0x78] sm:$0xff]
    %v233 = vld [vmem:[#allocation4 + $0x80] sm:$0xff]
    %v234 = vld [vmem:[#allocation4 + $0x88] sm:$0xff]
    %v235 = vld [vmem:[#allocation4 + $0x90] sm:$0xff]
    %v236 = vld [vmem:[#allocation4 + $0x98] sm:$0xff]
    %v237 = vld [vmem:[#allocation4 + $0xa0] sm:$0xff]
    %v238 = vld [vmem:[#allocation4 + $0xa8] sm:$0xff]
    %v239 = vld [vmem:[#allocation4 + $0xb0] sm:$0xff]
    %v240 = vld [vmem:[#allocation4 + $0xb8] sm:$0xff]
    %v241 = vld [vmem:[#allocation4 + $0xc0] sm:$0xff]
    %v242 = vld [vmem:[#allocation4 + $0xc8] sm:$0xff]
    %v243 = vld [vmem:[#allocation4 + $0xd0] sm:$0xff]
    %v244 = vld [vmem:[#allocation4 + $0xd8] sm:$0xff]
    %v245 = vld [vmem:[#allocation4 + $0xe0] sm:$0xff]
    %v246 = vld [vmem:[#allocation4 + $0xe8] sm:$0xff]
    %v247 = vld [vmem:[#allocation4 + $0xf0] sm:$0xff]
    %v248 = vld [vmem:[#allocation4 + $0xf8] sm:$0xff]
    %v249 = vld [vmem:[#allocation6] sm:$0xf]
    %v251 = vperm.slane %v249, 0
    %v252 = vperm.slane %v249, 1
    %v253 = vperm.slane %v249, 2
    %v254 = vperm.slane %v249, 3
    %v291 = vunpack.c.l.b16 %v217
    %v292 = vunpack.c.h.b16 %v217
    %v293 = vunpack.c.l.b16 %v218
    %v294 = vunpack.c.h.b16 %v218
    %v295 = vunpack.c.l.b16 %v219
    %v296 = vunpack.c.h.b16 %v219
    %v297 = vunpack.c.l.b16 %v220
    %v298 = vunpack.c.h.b16 %v220
    %v299 = vunpack.c.l.b16 %v221
    %v300 = vunpack.c.h.b16 %v221
    %v301 = vunpack.c.l.b16 %v222
    %v302 = vunpack.c.h.b16 %v222
    %v303 = vunpack.c.l.b16 %v223
    %v304 = vunpack.c.h.b16 %v223
    %v305 = vunpack.c.l.b16 %v224
    %v306 = vunpack.c.h.b16 %v224
    %v307 = vunpack.c.l.b16 %v225
    %v308 = vunpack.c.h.b16 %v225
    %v309 = vunpack.c.l.b16 %v226
    %v310 = vunpack.c.h.b16 %v226
    %v311 = vunpack.c.l.b16 %v227
    %v312 = vunpack.c.h.b16 %v227
    %v313 = vunpack.c.l.b16 %v228
    %v314 = vunpack.c.h.b16 %v228
    %v315 = vunpack.c.l.b16 %v229
    %v316 = vunpack.c.h.b16 %v229
    %v317 = vunpack.c.l.b16 %v230
    %v318 = vunpack.c.h.b16 %v230
    %v319 = vunpack.c.l.b16 %v231
    %v320 = vunpack.c.h.b16 %v231
    %v321 = vunpack.c.l.b16 %v232
    %v322 = vunpack.c.h.b16 %v232
    %v323 = vunpack.c.l.b16 %v233
    %v324 = vunpack.c.h.b16 %v233
    %v325 = vunpack.c.l.b16 %v234
    %v326 = vunpack.c.h.b16 %v234
    %v327 = vunpack.c.l.b16 %v235
    %v328 = vunpack.c.h.b16 %v235
    %v329 = vunpack.c.l.b16 %v236
    %v330 = vunpack.c.h.b16 %v236
    %v331 = vunpack.c.l.b16 %v237
    %v332 = vunpack.c.h.b16 %v237
    %v333 = vunpack.c.l.b16 %v238
    %v334 = vunpack.c.h.b16 %v238
    %v335 = vunpack.c.l.b16 %v239
    %v336 = vunpack.c.h.b16 %v239
    %v337 = vunpack.c.l.b16 %v240
    %v338 = vunpack.c.h.b16 %v240
    %v339 = vunpack.c.l.b16 %v241
    %v340 = vunpack.c.h.b16 %v241
    %v341 = vunpack.c.l.b16 %v242
    %v342 = vunpack.c.h.b16 %v242
    %v343 = vunpack.c.l.b16 %v243
    %v344 = vunpack.c.h.b16 %v243
    %v345 = vunpack.c.l.b16 %v244
    %v346 = vunpack.c.h.b16 %v244
    %v347 = vunpack.c.l.b16 %v245
    %v348 = vunpack.c.h.b16 %v245
    %v349 = vunpack.c.l.b16 %v246
    %v350 = vunpack.c.h.b16 %v246
    %v351 = vunpack.c.l.b16 %v247
    %v352 = vunpack.c.h.b16 %v247
    %v353 = vunpack.c.l.b16 %v248
    %v354 = vunpack.c.h.b16 %v248
    %v355 = vpack.c.b16 %v295, %v291
    %v356 = vpack.c.b16 %v296, %v292
    %v357 = vpack.c.b16 %v297, %v293
    %v358 = vpack.c.b16 %v298, %v294
    %v359 = vpack.c.b16 %v303, %v299
    %v360 = vpack.c.b16 %v304, %v300
    %v361 = vpack.c.b16 %v305, %v301
    %v362 = vpack.c.b16 %v306, %v302
    %v363 = vpack.c.b16 %v311, %v307
    %v364 = vpack.c.b16 %v312, %v308
    %v365 = vpack.c.b16 %v313, %v309
    %v366 = vpack.c.b16 %v314, %v310
    %v367 = vpack.c.b16 %v319, %v315
    %v368 = vpack.c.b16 %v320, %v316
    %v369 = vpack.c.b16 %v321, %v317
    %v370 = vpack.c.b16 %v322, %v318
    %v371 = vpack.c.b16 %v327, %v323
    %v372 = vpack.c.b16 %v328, %v324
    %v373 = vpack.c.b16 %v329, %v325
    %v374 = vpack.c.b16 %v330, %v326
    %v375 = vpack.c.b16 %v335, %v331
    %v376 = vpack.c.b16 %v336, %v332
    %v377 = vpack.c.b16 %v337, %v333
    %v378 = vpack.c.b16 %v338, %v334
    %v379 = vpack.c.b16 %v343, %v339
    %v380 = vpack.c.b16 %v344, %v340
    %v381 = vpack.c.b16 %v345, %v341
    %v382 = vpack.c.b16 %v346, %v342
    %v383 = vpack.c.b16 %v351, %v347
    %v384 = vpack.c.b16 %v352, %v348
    %v385 = vpack.c.b16 %v353, %v349
    %v386 = vpack.c.b16 %v354, %v350
    %419 = vmatpush.bf16.msra.mxu0 %v383
    %420 = vmatpush.bf16.msra.mxu0 %v379
    %421 = vmatpush.bf16.msra.mxu0 %v375
    %422 = vmatpush.bf16.msra.mxu0 %v371
    %423 = vmatpush.bf16.msra.mxu0 %v367
    %424 = vmatpush.bf16.msra.mxu0 %v363
    %425 = vmatpush.bf16.msra.mxu0 %v359
    %426 = vmatpush.bf16.msra.mxu0 %v355
    %427 = vmatmul.bf16.gmra.mxu0 %v216
    %v428 = vpop.f32.mrf.mxu0
    %v429 = vadd.f32 %v251, %v428
    %v430 = vpop.f32.mrf.mxu0
    %431 = vdwg.mxu0
    %432 = vmatpush.bf16.msra.mxu0 %v384
    %433 = vmatpush.bf16.msra.mxu0 %v380
    %434 = vmatpush.bf16.msra.mxu0 %v376
    %435 = vmatpush.bf16.msra.mxu0 %v372
    %436 = vmatpush.bf16.msra.mxu0 %v368
    %437 = vmatpush.bf16.msra.mxu0 %v364
    %438 = vmatpush.bf16.msra.mxu0 %v360
    %439 = vmatpush.bf16.msra.mxu0 %v356
    %440 = vmatmul.bf16.gmra.mxu0 %v216
    %v441 = vpop.f32.mrf.mxu0
    %v442 = vadd.f32 %v252, %v441
    %v443 = vpop.f32.mrf.mxu0
    %444 = vdwg.mxu0
    %445 = vmatpush.bf16.msra.mxu0 %v385
    %446 = vmatpush.bf16.msra.mxu0 %v381
    %447 = vmatpush.bf16.msra.mxu0 %v377
    %448 = vmatpush.bf16.msra.mxu0 %v373
    %449 = vmatpush.bf16.msra.mxu0 %v369
    %450 = vmatpush.bf16.msra.mxu0 %v365
    %451 = vmatpush.bf16.msra.mxu0 %v361
    %452 = vmatpush.bf16.msra.mxu0 %v357
    %453 = vmatmul.bf16.gmra.mxu0 %v216
    %v454 = vpop.f32.mrf.mxu0
    %v455 = vadd.f32 %v253, %v454
    %v456 = vpop.f32.mrf.mxu0
    %457 = vdwg.mxu0
    %458 = vmatpush.bf16.msra.mxu0 %v386
    %459 = vmatpush.bf16.msra.mxu0 %v382
    %460 = vmatpush.bf16.msra.mxu0 %v378
    %461 = vmatpush.bf16.msra.mxu0 %v374
    %462 = vmatpush.bf16.msra.mxu0 %v370
    %463 = vmatpush.bf16.msra.mxu0 %v366
    %464 = vmatpush.bf16.msra.mxu0 %v362
    %465 = vmatpush.bf16.msra.mxu0 %v358
    %466 = vmatmul.bf16.gmra.mxu0 %v216
    %v467 = vpop.f32.mrf.mxu0
    %v468 = vadd.f32 %v254, %v467
    %v469 = vpop.f32.mrf.mxu0
    %470 = vdwg.mxu0
    %v471 = vld [vmem:[#allocation2] sm:$0xff]
    %v472 = vld [vmem:[#allocation2 + $0x8] sm:$0xff]
    %v473 = vld [vmem:[#allocation2 + $0x10] sm:$0xff]
    %v474 = vld [vmem:[#allocation2 + $0x18] sm:$0xff]
    %v475 = vld [vmem:[#allocation2 + $0x20] sm:$0xff]
    %v476 = vld [vmem:[#allocation2 + $0x28] sm:$0xff]
    %v477 = vld [vmem:[#allocation2 + $0x30] sm:$0xff]
    %v478 = vld [vmem:[#allocation2 + $0x38] sm:$0xff]
    %v479 = vld [vmem:[#allocation2 + $0x40] sm:$0xff]
    %v480 = vld [vmem:[#allocation2 + $0x48] sm:$0xff]
    %v481 = vld [vmem:[#allocation2 + $0x50] sm:$0xff]
    %v482 = vld [vmem:[#allocation2 + $0x58] sm:$0xff]
    %v483 = vld [vmem:[#allocation2 + $0x60] sm:$0xff]
    %v484 = vld [vmem:[#allocation2 + $0x68] sm:$0xff]
    %v485 = vld [vmem:[#allocation2 + $0x70] sm:$0xff]
    %v486 = vld [vmem:[#allocation2 + $0x78] sm:$0xff]
    %v487 = vld [vmem:[#allocation2 + $0x80] sm:$0xff]
    %v488 = vld [vmem:[#allocation2 + $0x88] sm:$0xff]
    %v489 = vld [vmem:[#allocation2 + $0x90] sm:$0xff]
    %v490 = vld [vmem:[#allocation2 + $0x98] sm:$0xff]
    %v491 = vld [vmem:[#allocation2 + $0xa0] sm:$0xff]
    %v492 = vld [vmem:[#allocation2 + $0xa8] sm:$0xff]
    %v493 = vld [vmem:[#allocation2 + $0xb0] sm:$0xff]
    %v494 = vld [vmem:[#allocation2 + $0xb8] sm:$0xff]
    %v495 = vld [vmem:[#allocation2 + $0xc0] sm:$0xff]
    %v496 = vld [vmem:[#allocation2 + $0xc8] sm:$0xff]
    %v497 = vld [vmem:[#allocation2 + $0xd0] sm:$0xff]
    %v498 = vld [vmem:[#allocation2 + $0xd8] sm:$0xff]
    %v499 = vld [vmem:[#allocation2 + $0xe0] sm:$0xff]
    %v500 = vld [vmem:[#allocation2 + $0xe8] sm:$0xff]
    %v501 = vld [vmem:[#allocation2 + $0xf0] sm:$0xff]
    %v502 = vld [vmem:[#allocation2 + $0xf8] sm:$0xff]
    %v503 = vld [vmem:[#allocation2 + $0x100] sm:$0xff]
    %v504 = vld [vmem:[#allocation2 + $0x108] sm:$0xff]
    %v505 = vld [vmem:[#allocation2 + $0x110] sm:$0xff]
    %v506 = vld [vmem:[#allocation2 + $0x118] sm:$0xff]
    %v507 = vld [vmem:[#allocation2 + $0x120] sm:$0xff]
    %v508 = vld [vmem:[#allocation2 + $0x128] sm:$0xff]
    %v509 = vld [vmem:[#allocation2 + $0x130] sm:$0xff]
    %v510 = vld [vmem:[#allocation2 + $0x138] sm:$0xff]
    %v511 = vld [vmem:[#allocation2 + $0x140] sm:$0xff]
    %v512 = vld [vmem:[#allocation2 + $0x148] sm:$0xff]
    %v513 = vld [vmem:[#allocation2 + $0x150] sm:$0xff]
    %v514 = vld [vmem:[#allocation2 + $0x158] sm:$0xff]
    %v515 = vld [vmem:[#allocation2 + $0x160] sm:$0xff]
    %v516 = vld [vmem:[#allocation2 + $0x168] sm:$0xff]
    %v517 = vld [vmem:[#allocation2 + $0x170] sm:$0xff]
    %v518 = vld [vmem:[#allocation2 + $0x178] sm:$0xff]
    %v519 = vld [vmem:[#allocation2 + $0x180] sm:$0xff]
    %v520 = vld [vmem:[#allocation2 + $0x188] sm:$0xff]
    %v521 = vld [vmem:[#allocation2 + $0x190] sm:$0xff]
    %v522 = vld [vmem:[#allocation2 + $0x198] sm:$0xff]
    %v523 = vld [vmem:[#allocation2 + $0x1a0] sm:$0xff]
    %v524 = vld [vmem:[#allocation2 + $0x1a8] sm:$0xff]
    %v525 = vld [vmem:[#allocation2 + $0x1b0] sm:$0xff]
    %v526 = vld [vmem:[#allocation2 + $0x1b8] sm:$0xff]
    %v527 = vld [vmem:[#allocation2 + $0x1c0] sm:$0xff]
    %v528 = vld [vmem:[#allocation2 + $0x1c8] sm:$0xff]
    %v529 = vld [vmem:[#allocation2 + $0x1d0] sm:$0xff]
    %v530 = vld [vmem:[#allocation2 + $0x1d8] sm:$0xff]
    %v531 = vld [vmem:[#allocation2 + $0x1e0] sm:$0xff]
    %v532 = vld [vmem:[#allocation2 + $0x1e8] sm:$0xff]
    %v533 = vld [vmem:[#allocation2 + $0x1f0] sm:$0xff]
    %v534 = vld [vmem:[#allocation2 + $0x1f8] sm:$0xff]
    %v535 = vld [vmem:[#allocation2 + $0x200] sm:$0xff]
    %v536 = vld [vmem:[#allocation2 + $0x208] sm:$0xff]
    %v537 = vld [vmem:[#allocation2 + $0x210] sm:$0xff]
    %v538 = vld [vmem:[#allocation2 + $0x218] sm:$0xff]
    %v539 = vld [vmem:[#allocation2 + $0x220] sm:$0xff]
    %v540 = vld [vmem:[#allocation2 + $0x228] sm:$0xff]
    %v541 = vld [vmem:[#allocation2 + $0x230] sm:$0xff]
    %v542 = vld [vmem:[#allocation2 + $0x238] sm:$0xff]
    %v543 = vld [vmem:[#allocation2 + $0x240] sm:$0xff]
    %v544 = vld [vmem:[#allocation2 + $0x248] sm:$0xff]
    %v545 = vld [vmem:[#allocation2 + $0x250] sm:$0xff]
    %v546 = vld [vmem:[#allocation2 + $0x258] sm:$0xff]
    %v547 = vld [vmem:[#allocation2 + $0x260] sm:$0xff]
    %v548 = vld [vmem:[#allocation2 + $0x268] sm:$0xff]
    %v549 = vld [vmem:[#allocation2 + $0x270] sm:$0xff]
    %v550 = vld [vmem:[#allocation2 + $0x278] sm:$0xff]
    %v551 = vld [vmem:[#allocation2 + $0x280] sm:$0xff]
    %v552 = vld [vmem:[#allocation2 + $0x288] sm:$0xff]
    %v553 = vld [vmem:[#allocation2 + $0x290] sm:$0xff]
    %v554 = vld [vmem:[#allocation2 + $0x298] sm:$0xff]
    %v555 = vld [vmem:[#allocation2 + $0x2a0] sm:$0xff]
    %v556 = vld [vmem:[#allocation2 + $0x2a8] sm:$0xff]
    %v557 = vld [vmem:[#allocation2 + $0x2b0] sm:$0xff]
    %v558 = vld [vmem:[#allocation2 + $0x2b8] sm:$0xff]
    %v559 = vld [vmem:[#allocation2 + $0x2c0] sm:$0xff]
    %v560 = vld [vmem:[#allocation2 + $0x2c8] sm:$0xff]
    %v561 = vld [vmem:[#allocation2 + $0x2d0] sm:$0xff]
    %v562 = vld [vmem:[#allocation2 + $0x2d8] sm:$0xff]
    %v563 = vld [vmem:[#allocation2 + $0x2e0] sm:$0xff]
    %v564 = vld [vmem:[#allocation2 + $0x2e8] sm:$0xff]
    %v565 = vld [vmem:[#allocation2 + $0x2f0] sm:$0xff]
    %v566 = vld [vmem:[#allocation2 + $0x2f8] sm:$0xff]
    %v567 = vld [vmem:[#allocation2 + $0x300] sm:$0xff]
    %v568 = vld [vmem:[#allocation2 + $0x308] sm:$0xff]
    %v569 = vld [vmem:[#allocation2 + $0x310] sm:$0xff]
    %v570 = vld [vmem:[#allocation2 + $0x318] sm:$0xff]
    %v571 = vld [vmem:[#allocation2 + $0x320] sm:$0xff]
    %v572 = vld [vmem:[#allocation2 + $0x328] sm:$0xff]
    %v573 = vld [vmem:[#allocation2 + $0x330] sm:$0xff]
    %v574 = vld [vmem:[#allocation2 + $0x338] sm:$0xff]
    %v575 = vld [vmem:[#allocation2 + $0x340] sm:$0xff]
    %v576 = vld [vmem:[#allocation2 + $0x348] sm:$0xff]
    %v577 = vld [vmem:[#allocation2 + $0x350] sm:$0xff]
    %v578 = vld [vmem:[#allocation2 + $0x358] sm:$0xff]
    %v579 = vld [vmem:[#allocation2 + $0x360] sm:$0xff]
    %v580 = vld [vmem:[#allocation2 + $0x368] sm:$0xff]
    %v581 = vld [vmem:[#allocation2 + $0x370] sm:$0xff]
    %v582 = vld [vmem:[#allocation2 + $0x378] sm:$0xff]
    %v583 = vld [vmem:[#allocation2 + $0x380] sm:$0xff]
    %v584 = vld [vmem:[#allocation2 + $0x388] sm:$0xff]
    %v585 = vld [vmem:[#allocation2 + $0x390] sm:$0xff]
    %v586 = vld [vmem:[#allocation2 + $0x398] sm:$0xff]
    %v587 = vld [vmem:[#allocation2 + $0x3a0] sm:$0xff]
    %v588 = vld [vmem:[#allocation2 + $0x3a8] sm:$0xff]
    %v589 = vld [vmem:[#allocation2 + $0x3b0] sm:$0xff]
    %v590 = vld [vmem:[#allocation2 + $0x3b8] sm:$0xff]
    %v591 = vld [vmem:[#allocation2 + $0x3c0] sm:$0xff]
    %v592 = vld [vmem:[#allocation2 + $0x3c8] sm:$0xff]
    %v593 = vld [vmem:[#allocation2 + $0x3d0] sm:$0xff]
    %v594 = vld [vmem:[#allocation2 + $0x3d8] sm:$0xff]
    %v595 = vld [vmem:[#allocation2 + $0x3e0] sm:$0xff]
    %v596 = vld [vmem:[#allocation2 + $0x3e8] sm:$0xff]
    %v597 = vld [vmem:[#allocation2 + $0x3f0] sm:$0xff]
    %v598 = vld [vmem:[#allocation2 + $0x3f8] sm:$0xff]
    %v599 = vld [vmem:[#allocation2 + $0x400] sm:$0xff]
    %v600 = vld [vmem:[#allocation2 + $0x408] sm:$0xff]
    %v601 = vld [vmem:[#allocation2 + $0x410] sm:$0xff]
    %v602 = vld [vmem:[#allocation2 + $0x418] sm:$0xff]
    %v603 = vld [vmem:[#allocation2 + $0x420] sm:$0xff]
    %v604 = vld [vmem:[#allocation2 + $0x428] sm:$0xff]
    %v605 = vld [vmem:[#allocation2 + $0x430] sm:$0xff]
    %v606 = vld [vmem:[#allocation2 + $0x438] sm:$0xff]
    %v607 = vld [vmem:[#allocation2 + $0x440] sm:$0xff]
    %v608 = vld [vmem:[#allocation2 + $0x448] sm:$0xff]
    %v609 = vld [vmem:[#allocation2 + $0x450] sm:$0xff]
    %v610 = vld [vmem:[#allocation2 + $0x458] sm:$0xff]
    %v611 = vld [vmem:[#allocation2 + $0x460] sm:$0xff]
    %v612 = vld [vmem:[#allocation2 + $0x468] sm:$0xff]
    %v613 = vld [vmem:[#allocation2 + $0x470] sm:$0xff]
    %v614 = vld [vmem:[#allocation2 + $0x478] sm:$0xff]
    %v615 = vld [vmem:[#allocation2 + $0x480] sm:$0xff]
    %v616 = vld [vmem:[#allocation2 + $0x488] sm:$0xff]
    %v617 = vld [vmem:[#allocation2 + $0x490] sm:$0xff]
    %v618 = vld [vmem:[#allocation2 + $0x498] sm:$0xff]
    %v619 = vld [vmem:[#allocation2 + $0x4a0] sm:$0xff]
    %v620 = vld [vmem:[#allocation2 + $0x4a8] sm:$0xff]
    %v621 = vld [vmem:[#allocation2 + $0x4b0] sm:$0xff]
    %v622 = vld [vmem:[#allocation2 + $0x4b8] sm:$0xff]
    %v623 = vld [vmem:[#allocation2 + $0x4c0] sm:$0xff]
    %v624 = vld [vmem:[#allocation2 + $0x4c8] sm:$0xff]
    %v625 = vld [vmem:[#allocation2 + $0x4d0] sm:$0xff]
    %v626 = vld [vmem:[#allocation2 + $0x4d8] sm:$0xff]
    %v627 = vld [vmem:[#allocation2 + $0x4e0] sm:$0xff]
    %v628 = vld [vmem:[#allocation2 + $0x4e8] sm:$0xff]
    %v629 = vld [vmem:[#allocation2 + $0x4f0] sm:$0xff]
    %v630 = vld [vmem:[#allocation2 + $0x4f8] sm:$0xff]
    %v631 = vld [vmem:[#allocation2 + $0x500] sm:$0xff]
    %v632 = vld [vmem:[#allocation2 + $0x508] sm:$0xff]
    %v633 = vld [vmem:[#allocation2 + $0x510] sm:$0xff]
    %v634 = vld [vmem:[#allocation2 + $0x518] sm:$0xff]
    %v635 = vld [vmem:[#allocation2 + $0x520] sm:$0xff]
    %v636 = vld [vmem:[#allocation2 + $0x528] sm:$0xff]
    %v637 = vld [vmem:[#allocation2 + $0x530] sm:$0xff]
    %v638 = vld [vmem:[#allocation2 + $0x538] sm:$0xff]
    %v639 = vld [vmem:[#allocation2 + $0x540] sm:$0xff]
    %v640 = vld [vmem:[#allocation2 + $0x548] sm:$0xff]
    %v641 = vld [vmem:[#allocation2 + $0x550] sm:$0xff]
    %v642 = vld [vmem:[#allocation2 + $0x558] sm:$0xff]
    %v643 = vld [vmem:[#allocation2 + $0x560] sm:$0xff]
    %v644 = vld [vmem:[#allocation2 + $0x568] sm:$0xff]
    %v645 = vld [vmem:[#allocation2 + $0x570] sm:$0xff]
    %v646 = vld [vmem:[#allocation2 + $0x578] sm:$0xff]
    %v647 = vld [vmem:[#allocation2 + $0x580] sm:$0xff]
    %v648 = vld [vmem:[#allocation2 + $0x588] sm:$0xff]
    %v649 = vld [vmem:[#allocation2 + $0x590] sm:$0xff]
    %v650 = vld [vmem:[#allocation2 + $0x598] sm:$0xff]
    %v651 = vld [vmem:[#allocation2 + $0x5a0] sm:$0xff]
    %v652 = vld [vmem:[#allocation2 + $0x5a8] sm:$0xff]
    %v653 = vld [vmem:[#allocation2 + $0x5b0] sm:$0xff]
    %v654 = vld [vmem:[#allocation2 + $0x5b8] sm:$0xff]
    %v655 = vld [vmem:[#allocation2 + $0x5c0] sm:$0xff]
    %v656 = vld [vmem:[#allocation2 + $0x5c8] sm:$0xff]
    %v657 = vld [vmem:[#allocation2 + $0x5d0] sm:$0xff]
    %v658 = vld [vmem:[#allocation2 + $0x5d8] sm:$0xff]
    %v659 = vld [vmem:[#allocation2 + $0x5e0] sm:$0xff]
    %v660 = vld [vmem:[#allocation2 + $0x5e8] sm:$0xff]
    %v661 = vld [vmem:[#allocation2 + $0x5f0] sm:$0xff]
    %v662 = vld [vmem:[#allocation2 + $0x5f8] sm:$0xff]
    %v663 = vld [vmem:[#allocation2 + $0x600] sm:$0xff]
    %v664 = vld [vmem:[#allocation2 + $0x608] sm:$0xff]
    %v665 = vld [vmem:[#allocation2 + $0x610] sm:$0xff]
    %v666 = vld [vmem:[#allocation2 + $0x618] sm:$0xff]
    %v667 = vld [vmem:[#allocation2 + $0x620] sm:$0xff]
    %v668 = vld [vmem:[#allocation2 + $0x628] sm:$0xff]
    %v669 = vld [vmem:[#allocation2 + $0x630] sm:$0xff]
    %v670 = vld [vmem:[#allocation2 + $0x638] sm:$0xff]
    %v671 = vld [vmem:[#allocation2 + $0x640] sm:$0xff]
    %v672 = vld [vmem:[#allocation2 + $0x648] sm:$0xff]
    %v673 = vld [vmem:[#allocation2 + $0x650] sm:$0xff]
    %v674 = vld [vmem:[#allocation2 + $0x658] sm:$0xff]
    %v675 = vld [vmem:[#allocation2 + $0x660] sm:$0xff]
    %v676 = vld [vmem:[#allocation2 + $0x668] sm:$0xff]
    %v677 = vld [vmem:[#allocation2 + $0x670] sm:$0xff]
    %v678 = vld [vmem:[#allocation2 + $0x678] sm:$0xff]
    %v679 = vld [vmem:[#allocation2 + $0x680] sm:$0xff]
    %v680 = vld [vmem:[#allocation2 + $0x688] sm:$0xff]
    %v681 = vld [vmem:[#allocation2 + $0x690] sm:$0xff]
    %v682 = vld [vmem:[#allocation2 + $0x698] sm:$0xff]
    %v683 = vld [vmem:[#allocation2 + $0x6a0] sm:$0xff]
    %v684 = vld [vmem:[#allocation2 + $0x6a8] sm:$0xff]
    %v685 = vld [vmem:[#allocation2 + $0x6b0] sm:$0xff]
    %v686 = vld [vmem:[#allocation2 + $0x6b8] sm:$0xff]
    %v687 = vld [vmem:[#allocation2 + $0x6c0] sm:$0xff]
    %v688 = vld [vmem:[#allocation2 + $0x6c8] sm:$0xff]
    %v689 = vld [vmem:[#allocation2 + $0x6d0] sm:$0xff]
    %v690 = vld [vmem:[#allocation2 + $0x6d8] sm:$0xff]
    %v691 = vld [vmem:[#allocation2 + $0x6e0] sm:$0xff]
    %v692 = vld [vmem:[#allocation2 + $0x6e8] sm:$0xff]
    %v693 = vld [vmem:[#allocation2 + $0x6f0] sm:$0xff]
    %v694 = vld [vmem:[#allocation2 + $0x6f8] sm:$0xff]
    %v695 = vld [vmem:[#allocation2 + $0x700] sm:$0xff]
    %v696 = vld [vmem:[#allocation2 + $0x708] sm:$0xff]
    %v697 = vld [vmem:[#allocation2 + $0x710] sm:$0xff]
    %v698 = vld [vmem:[#allocation2 + $0x718] sm:$0xff]
    %v699 = vld [vmem:[#allocation2 + $0x720] sm:$0xff]
    %v700 = vld [vmem:[#allocation2 + $0x728] sm:$0xff]
    %v701 = vld [vmem:[#allocation2 + $0x730] sm:$0xff]
    %v702 = vld [vmem:[#allocation2 + $0x738] sm:$0xff]
    %v703 = vld [vmem:[#allocation2 + $0x740] sm:$0xff]
    %v704 = vld [vmem:[#allocation2 + $0x748] sm:$0xff]
    %v705 = vld [vmem:[#allocation2 + $0x750] sm:$0xff]
    %v706 = vld [vmem:[#allocation2 + $0x758] sm:$0xff]
    %v707 = vld [vmem:[#allocation2 + $0x760] sm:$0xff]
    %v708 = vld [vmem:[#allocation2 + $0x768] sm:$0xff]
    %v709 = vld [vmem:[#allocation2 + $0x770] sm:$0xff]
    %v710 = vld [vmem:[#allocation2 + $0x778] sm:$0xff]
    %v711 = vld [vmem:[#allocation2 + $0x780] sm:$0xff]
    %v712 = vld [vmem:[#allocation2 + $0x788] sm:$0xff]
    %v713 = vld [vmem:[#allocation2 + $0x790] sm:$0xff]
    %v714 = vld [vmem:[#allocation2 + $0x798] sm:$0xff]
    %v715 = vld [vmem:[#allocation2 + $0x7a0] sm:$0xff]
    %v716 = vld [vmem:[#allocation2 + $0x7a8] sm:$0xff]
    %v717 = vld [vmem:[#allocation2 + $0x7b0] sm:$0xff]
    %v718 = vld [vmem:[#allocation2 + $0x7b8] sm:$0xff]
    %v719 = vld [vmem:[#allocation2 + $0x7c0] sm:$0xff]
    %v720 = vld [vmem:[#allocation2 + $0x7c8] sm:$0xff]
    %v721 = vld [vmem:[#allocation2 + $0x7d0] sm:$0xff]
    %v722 = vld [vmem:[#allocation2 + $0x7d8] sm:$0xff]
    %v723 = vld [vmem:[#allocation2 + $0x7e0] sm:$0xff]
    %v724 = vld [vmem:[#allocation2 + $0x7e8] sm:$0xff]
    %v725 = vld [vmem:[#allocation2 + $0x7f0] sm:$0xff]
    %v726 = vld [vmem:[#allocation2 + $0x7f8] sm:$0xff]
    %v727 = vld [vmem:[#allocation2 + $0x800] sm:$0xff]
    %v728 = vld [vmem:[#allocation2 + $0x808] sm:$0xff]
    %v729 = vld [vmem:[#allocation2 + $0x810] sm:$0xff]
    %v730 = vld [vmem:[#allocation2 + $0x818] sm:$0xff]
    %v731 = vld [vmem:[#allocation2 + $0x820] sm:$0xff]
    %v732 = vld [vmem:[#allocation2 + $0x828] sm:$0xff]
    %v733 = vld [vmem:[#allocation2 + $0x830] sm:$0xff]
    %v734 = vld [vmem:[#allocation2 + $0x838] sm:$0xff]
    %v735 = vld [vmem:[#allocation2 + $0x840] sm:$0xff]
    %v736 = vld [vmem:[#allocation2 + $0x848] sm:$0xff]
    %v737 = vld [vmem:[#allocation2 + $0x850] sm:$0xff]
    %v738 = vld [vmem:[#allocation2 + $0x858] sm:$0xff]
    %v739 = vld [vmem:[#allocation2 + $0x860] sm:$0xff]
    %v740 = vld [vmem:[#allocation2 + $0x868] sm:$0xff]
    %v741 = vld [vmem:[#allocation2 + $0x870] sm:$0xff]
    %v742 = vld [vmem:[#allocation2 + $0x878] sm:$0xff]
    %v743 = vld [vmem:[#allocation2 + $0x880] sm:$0xff]
    %v744 = vld [vmem:[#allocation2 + $0x888] sm:$0xff]
    %v745 = vld [vmem:[#allocation2 + $0x890] sm:$0xff]
    %v746 = vld [vmem:[#allocation2 + $0x898] sm:$0xff]
    %v747 = vld [vmem:[#allocation2 + $0x8a0] sm:$0xff]
    %v748 = vld [vmem:[#allocation2 + $0x8a8] sm:$0xff]
    %v749 = vld [vmem:[#allocation2 + $0x8b0] sm:$0xff]
    %v750 = vld [vmem:[#allocation2 + $0x8b8] sm:$0xff]
    %v751 = vld [vmem:[#allocation2 + $0x8c0] sm:$0xff]
    %v752 = vld [vmem:[#allocation2 + $0x8c8] sm:$0xff]
    %v753 = vld [vmem:[#allocation2 + $0x8d0] sm:$0xff]
    %v754 = vld [vmem:[#allocation2 + $0x8d8] sm:$0xff]
    %v755 = vld [vmem:[#allocation2 + $0x8e0] sm:$0xff]
    %v756 = vld [vmem:[#allocation2 + $0x8e8] sm:$0xff]
    %v757 = vld [vmem:[#allocation2 + $0x8f0] sm:$0xff]
    %v758 = vld [vmem:[#allocation2 + $0x8f8] sm:$0xff]
    %v759 = vld [vmem:[#allocation2 + $0x900] sm:$0xff]
    %v760 = vld [vmem:[#allocation2 + $0x908] sm:$0xff]
    %v761 = vld [vmem:[#allocation2 + $0x910] sm:$0xff]
    %v762 = vld [vmem:[#allocation2 + $0x918] sm:$0xff]
    %v763 = vld [vmem:[#allocation2 + $0x920] sm:$0xff]
    %v764 = vld [vmem:[#allocation2 + $0x928] sm:$0xff]
    %v765 = vld [vmem:[#allocation2 + $0x930] sm:$0xff]
    %v766 = vld [vmem:[#allocation2 + $0x938] sm:$0xff]
    %v767 = vld [vmem:[#allocation2 + $0x940] sm:$0xff]
    %v768 = vld [vmem:[#allocation2 + $0x948] sm:$0xff]
    %v769 = vld [vmem:[#allocation2 + $0x950] sm:$0xff]
    %v770 = vld [vmem:[#allocation2 + $0x958] sm:$0xff]
    %v771 = vld [vmem:[#allocation2 + $0x960] sm:$0xff]
    %v772 = vld [vmem:[#allocation2 + $0x968] sm:$0xff]
    %v773 = vld [vmem:[#allocation2 + $0x970] sm:$0xff]
    %v774 = vld [vmem:[#allocation2 + $0x978] sm:$0xff]
    %v775 = vld [vmem:[#allocation2 + $0x980] sm:$0xff]
    %v776 = vld [vmem:[#allocation2 + $0x988] sm:$0xff]
    %v777 = vld [vmem:[#allocation2 + $0x990] sm:$0xff]
    %v778 = vld [vmem:[#allocation2 + $0x998] sm:$0xff]
    %v779 = vld [vmem:[#allocation2 + $0x9a0] sm:$0xff]
    %v780 = vld [vmem:[#allocation2 + $0x9a8] sm:$0xff]
    %v781 = vld [vmem:[#allocation2 + $0x9b0] sm:$0xff]
    %v782 = vld [vmem:[#allocation2 + $0x9b8] sm:$0xff]
    %v783 = vld [vmem:[#allocation2 + $0x9c0] sm:$0xff]
    %v784 = vld [vmem:[#allocation2 + $0x9c8] sm:$0xff]
    %v785 = vld [vmem:[#allocation2 + $0x9d0] sm:$0xff]
    %v786 = vld [vmem:[#allocation2 + $0x9d8] sm:$0xff]
    %v787 = vld [vmem:[#allocation2 + $0x9e0] sm:$0xff]
    %v788 = vld [vmem:[#allocation2 + $0x9e8] sm:$0xff]
    %v789 = vld [vmem:[#allocation2 + $0x9f0] sm:$0xff]
    %v790 = vld [vmem:[#allocation2 + $0x9f8] sm:$0xff]
    %v791 = vld [vmem:[#allocation2 + $0xa00] sm:$0xff]
    %v792 = vld [vmem:[#allocation2 + $0xa08] sm:$0xff]
    %v793 = vld [vmem:[#allocation2 + $0xa10] sm:$0xff]
    %v794 = vld [vmem:[#allocation2 + $0xa18] sm:$0xff]
    %v795 = vld [vmem:[#allocation2 + $0xa20] sm:$0xff]
    %v796 = vld [vmem:[#allocation2 + $0xa28] sm:$0xff]
    %v797 = vld [vmem:[#allocation2 + $0xa30] sm:$0xff]
    %v798 = vld [vmem:[#allocation2 + $0xa38] sm:$0xff]
    %v799 = vld [vmem:[#allocation2 + $0xa40] sm:$0xff]
    %v800 = vld [vmem:[#allocation2 + $0xa48] sm:$0xff]
    %v801 = vld [vmem:[#allocation2 + $0xa50] sm:$0xff]
    %v802 = vld [vmem:[#allocation2 + $0xa58] sm:$0xff]
    %v803 = vld [vmem:[#allocation2 + $0xa60] sm:$0xff]
    %v804 = vld [vmem:[#allocation2 + $0xa68] sm:$0xff]
    %v805 = vld [vmem:[#allocation2 + $0xa70] sm:$0xff]
    %v806 = vld [vmem:[#allocation2 + $0xa78] sm:$0xff]
    %v807 = vld [vmem:[#allocation2 + $0xa80] sm:$0xff]
    %v808 = vld [vmem:[#allocation2 + $0xa88] sm:$0xff]
    %v809 = vld [vmem:[#allocation2 + $0xa90] sm:$0xff]
    %v810 = vld [vmem:[#allocation2 + $0xa98] sm:$0xff]
    %v811 = vld [vmem:[#allocation2 + $0xaa0] sm:$0xff]
    %v812 = vld [vmem:[#allocation2 + $0xaa8] sm:$0xff]
    %v813 = vld [vmem:[#allocation2 + $0xab0] sm:$0xff]
    %v814 = vld [vmem:[#allocation2 + $0xab8] sm:$0xff]
    %v815 = vld [vmem:[#allocation2 + $0xac0] sm:$0xff]
    %v816 = vld [vmem:[#allocation2 + $0xac8] sm:$0xff]
    %v817 = vld [vmem:[#allocation2 + $0xad0] sm:$0xff]
    %v818 = vld [vmem:[#allocation2 + $0xad8] sm:$0xff]
    %v819 = vld [vmem:[#allocation2 + $0xae0] sm:$0xff]
    %v820 = vld [vmem:[#allocation2 + $0xae8] sm:$0xff]
    %v821 = vld [vmem:[#allocation2 + $0xaf0] sm:$0xff]
    %v822 = vld [vmem:[#allocation2 + $0xaf8] sm:$0xff]
    %v823 = vld [vmem:[#allocation2 + $0xb00] sm:$0xff]
    %v824 = vld [vmem:[#allocation2 + $0xb08] sm:$0xff]
    %v825 = vld [vmem:[#allocation2 + $0xb10] sm:$0xff]
    %v826 = vld [vmem:[#allocation2 + $0xb18] sm:$0xff]
    %v827 = vld [vmem:[#allocation2 + $0xb20] sm:$0xff]
    %v828 = vld [vmem:[#allocation2 + $0xb28] sm:$0xff]
    %v829 = vld [vmem:[#allocation2 + $0xb30] sm:$0xff]
    %v830 = vld [vmem:[#allocation2 + $0xb38] sm:$0xff]
    %v831 = vld [vmem:[#allocation2 + $0xb40] sm:$0xff]
    %v832 = vld [vmem:[#allocation2 + $0xb48] sm:$0xff]
    %v833 = vld [vmem:[#allocation2 + $0xb50] sm:$0xff]
    %v834 = vld [vmem:[#allocation2 + $0xb58] sm:$0xff]
    %v835 = vld [vmem:[#allocation2 + $0xb60] sm:$0xff]
    %v836 = vld [vmem:[#allocation2 + $0xb68] sm:$0xff]
    %v837 = vld [vmem:[#allocation2 + $0xb70] sm:$0xff]
    %v838 = vld [vmem:[#allocation2 + $0xb78] sm:$0xff]
    %v839 = vld [vmem:[#allocation2 + $0xb80] sm:$0xff]
    %v840 = vld [vmem:[#allocation2 + $0xb88] sm:$0xff]
    %v841 = vld [vmem:[#allocation2 + $0xb90] sm:$0xff]
    %v842 = vld [vmem:[#allocation2 + $0xb98] sm:$0xff]
    %v843 = vld [vmem:[#allocation2 + $0xba0] sm:$0xff]
    %v844 = vld [vmem:[#allocation2 + $0xba8] sm:$0xff]
    %v845 = vld [vmem:[#allocation2 + $0xbb0] sm:$0xff]
    %v846 = vld [vmem:[#allocation2 + $0xbb8] sm:$0xff]
    %v847 = vld [vmem:[#allocation2 + $0xbc0] sm:$0xff]
    %v848 = vld [vmem:[#allocation2 + $0xbc8] sm:$0xff]
    %v849 = vld [vmem:[#allocation2 + $0xbd0] sm:$0xff]
    %v850 = vld [vmem:[#allocation2 + $0xbd8] sm:$0xff]
    %v851 = vld [vmem:[#allocation2 + $0xbe0] sm:$0xff]
    %v852 = vld [vmem:[#allocation2 + $0xbe8] sm:$0xff]
    %v853 = vld [vmem:[#allocation2 + $0xbf0] sm:$0xff]
    %v854 = vld [vmem:[#allocation2 + $0xbf8] sm:$0xff]
    %v855 = vld [vmem:[#allocation2 + $0xc00] sm:$0xff]
    %v856 = vld [vmem:[#allocation2 + $0xc08] sm:$0xff]
    %v857 = vld [vmem:[#allocation2 + $0xc10] sm:$0xff]
    %v858 = vld [vmem:[#allocation2 + $0xc18] sm:$0xff]
    %v859 = vld [vmem:[#allocation2 + $0xc20] sm:$0xff]
    %v860 = vld [vmem:[#allocation2 + $0xc28] sm:$0xff]
    %v861 = vld [vmem:[#allocation2 + $0xc30] sm:$0xff]
    %v862 = vld [vmem:[#allocation2 + $0xc38] sm:$0xff]
    %v863 = vld [vmem:[#allocation2 + $0xc40] sm:$0xff]
    %v864 = vld [vmem:[#allocation2 + $0xc48] sm:$0xff]
    %v865 = vld [vmem:[#allocation2 + $0xc50] sm:$0xff]
    %v866 = vld [vmem:[#allocation2 + $0xc58] sm:$0xff]
    %v867 = vld [vmem:[#allocation2 + $0xc60] sm:$0xff]
    %v868 = vld [vmem:[#allocation2 + $0xc68] sm:$0xff]
    %v869 = vld [vmem:[#allocation2 + $0xc70] sm:$0xff]
    %v870 = vld [vmem:[#allocation2 + $0xc78] sm:$0xff]
    %v871 = vld [vmem:[#allocation2 + $0xc80] sm:$0xff]
    %v872 = vld [vmem:[#allocation2 + $0xc88] sm:$0xff]
    %v873 = vld [vmem:[#allocation2 + $0xc90] sm:$0xff]
    %v874 = vld [vmem:[#allocation2 + $0xc98] sm:$0xff]
    %v875 = vld [vmem:[#allocation2 + $0xca0] sm:$0xff]
    %v876 = vld [vmem:[#allocation2 + $0xca8] sm:$0xff]
    %v877 = vld [vmem:[#allocation2 + $0xcb0] sm:$0xff]
    %v878 = vld [vmem:[#allocation2 + $0xcb8] sm:$0xff]
    %v879 = vld [vmem:[#allocation2 + $0xcc0] sm:$0xff]
    %v880 = vld [vmem:[#allocation2 + $0xcc8] sm:$0xff]
    %v881 = vld [vmem:[#allocation2 + $0xcd0] sm:$0xff]
    %v882 = vld [vmem:[#allocation2 + $0xcd8] sm:$0xff]
    %v883 = vld [vmem:[#allocation2 + $0xce0] sm:$0xff]
    %v884 = vld [vmem:[#allocation2 + $0xce8] sm:$0xff]
    %v885 = vld [vmem:[#allocation2 + $0xcf0] sm:$0xff]
    %v886 = vld [vmem:[#allocation2 + $0xcf8] sm:$0xff]
    %v887 = vld [vmem:[#allocation2 + $0xd00] sm:$0xff]
    %v888 = vld [vmem:[#allocation2 + $0xd08] sm:$0xff]
    %v889 = vld [vmem:[#allocation2 + $0xd10] sm:$0xff]
    %v890 = vld [vmem:[#allocation2 + $0xd18] sm:$0xff]
    %v891 = vld [vmem:[#allocation2 + $0xd20] sm:$0xff]
    %v892 = vld [vmem:[#allocation2 + $0xd28] sm:$0xff]
    %v893 = vld [vmem:[#allocation2 + $0xd30] sm:$0xff]
    %v894 = vld [vmem:[#allocation2 + $0xd38] sm:$0xff]
    %v895 = vld [vmem:[#allocation2 + $0xd40] sm:$0xff]
    %v896 = vld [vmem:[#allocation2 + $0xd48] sm:$0xff]
    %v897 = vld [vmem:[#allocation2 + $0xd50] sm:$0xff]
    %v898 = vld [vmem:[#allocation2 + $0xd58] sm:$0xff]
    %v899 = vld [vmem:[#allocation2 + $0xd60] sm:$0xff]
    %v900 = vld [vmem:[#allocation2 + $0xd68] sm:$0xff]
    %v901 = vld [vmem:[#allocation2 + $0xd70] sm:$0xff]
    %v902 = vld [vmem:[#allocation2 + $0xd78] sm:$0xff]
    %v903 = vld [vmem:[#allocation2 + $0xd80] sm:$0xff]
    %v904 = vld [vmem:[#allocation2 + $0xd88] sm:$0xff]
    %v905 = vld [vmem:[#allocation2 + $0xd90] sm:$0xff]
    %v906 = vld [vmem:[#allocation2 + $0xd98] sm:$0xff]
    %v907 = vld [vmem:[#allocation2 + $0xda0] sm:$0xff]
    %v908 = vld [vmem:[#allocation2 + $0xda8] sm:$0xff]
    %v909 = vld [vmem:[#allocation2 + $0xdb0] sm:$0xff]
    %v910 = vld [vmem:[#allocation2 + $0xdb8] sm:$0xff]
    %v911 = vld [vmem:[#allocation2 + $0xdc0] sm:$0xff]
    %v912 = vld [vmem:[#allocation2 + $0xdc8] sm:$0xff]
    %v913 = vld [vmem:[#allocation2 + $0xdd0] sm:$0xff]
    %v914 = vld [vmem:[#allocation2 + $0xdd8] sm:$0xff]
    %v915 = vld [vmem:[#allocation2 + $0xde0] sm:$0xff]
    %v916 = vld [vmem:[#allocation2 + $0xde8] sm:$0xff]
    %v917 = vld [vmem:[#allocation2 + $0xdf0] sm:$0xff]
    %v918 = vld [vmem:[#allocation2 + $0xdf8] sm:$0xff]
    %v919 = vld [vmem:[#allocation2 + $0xe00] sm:$0xff]
    %v920 = vld [vmem:[#allocation2 + $0xe08] sm:$0xff]
    %v921 = vld [vmem:[#allocation2 + $0xe10] sm:$0xff]
    %v922 = vld [vmem:[#allocation2 + $0xe18] sm:$0xff]
    %v923 = vld [vmem:[#allocation2 + $0xe20] sm:$0xff]
    %v924 = vld [vmem:[#allocation2 + $0xe28] sm:$0xff]
    %v925 = vld [vmem:[#allocation2 + $0xe30] sm:$0xff]
    %v926 = vld [vmem:[#allocation2 + $0xe38] sm:$0xff]
    %v927 = vld [vmem:[#allocation2 + $0xe40] sm:$0xff]
    %v928 = vld [vmem:[#allocation2 + $0xe48] sm:$0xff]
    %v929 = vld [vmem:[#allocation2 + $0xe50] sm:$0xff]
    %v930 = vld [vmem:[#allocation2 + $0xe58] sm:$0xff]
    %v931 = vld [vmem:[#allocation2 + $0xe60] sm:$0xff]
    %v932 = vld [vmem:[#allocation2 + $0xe68] sm:$0xff]
    %v933 = vld [vmem:[#allocation2 + $0xe70] sm:$0xff]
    %v934 = vld [vmem:[#allocation2 + $0xe78] sm:$0xff]
    %v935 = vld [vmem:[#allocation2 + $0xe80] sm:$0xff]
    %v936 = vld [vmem:[#allocation2 + $0xe88] sm:$0xff]
    %v937 = vld [vmem:[#allocation2 + $0xe90] sm:$0xff]
    %v938 = vld [vmem:[#allocation2 + $0xe98] sm:$0xff]
    %v939 = vld [vmem:[#allocation2 + $0xea0] sm:$0xff]
    %v940 = vld [vmem:[#allocation2 + $0xea8] sm:$0xff]
    %v941 = vld [vmem:[#allocation2 + $0xeb0] sm:$0xff]
    %v942 = vld [vmem:[#allocation2 + $0xeb8] sm:$0xff]
    %v943 = vld [vmem:[#allocation2 + $0xec0] sm:$0xff]
    %v944 = vld [vmem:[#allocation2 + $0xec8] sm:$0xff]
    %v945 = vld [vmem:[#allocation2 + $0xed0] sm:$0xff]
    %v946 = vld [vmem:[#allocation2 + $0xed8] sm:$0xff]
    %v947 = vld [vmem:[#allocation2 + $0xee0] sm:$0xff]
    %v948 = vld [vmem:[#allocation2 + $0xee8] sm:$0xff]
    %v949 = vld [vmem:[#allocation2 + $0xef0] sm:$0xff]
    %v950 = vld [vmem:[#allocation2 + $0xef8] sm:$0xff]
    %v951 = vld [vmem:[#allocation2 + $0xf00] sm:$0xff]
    %v952 = vld [vmem:[#allocation2 + $0xf08] sm:$0xff]
    %v953 = vld [vmem:[#allocation2 + $0xf10] sm:$0xff]
    %v954 = vld [vmem:[#allocation2 + $0xf18] sm:$0xff]
    %v955 = vld [vmem:[#allocation2 + $0xf20] sm:$0xff]
    %v956 = vld [vmem:[#allocation2 + $0xf28] sm:$0xff]
    %v957 = vld [vmem:[#allocation2 + $0xf30] sm:$0xff]
    %v958 = vld [vmem:[#allocation2 + $0xf38] sm:$0xff]
    %v959 = vld [vmem:[#allocation2 + $0xf40] sm:$0xff]
    %v960 = vld [vmem:[#allocation2 + $0xf48] sm:$0xff]
    %v961 = vld [vmem:[#allocation2 + $0xf50] sm:$0xff]
    %v962 = vld [vmem:[#allocation2 + $0xf58] sm:$0xff]
    %v963 = vld [vmem:[#allocation2 + $0xf60] sm:$0xff]
    %v964 = vld [vmem:[#allocation2 + $0xf68] sm:$0xff]
    %v965 = vld [vmem:[#allocation2 + $0xf70] sm:$0xff]
    %v966 = vld [vmem:[#allocation2 + $0xf78] sm:$0xff]
    %v967 = vld [vmem:[#allocation2 + $0xf80] sm:$0xff]
    %v968 = vld [vmem:[#allocation2 + $0xf88] sm:$0xff]
    %v969 = vld [vmem:[#allocation2 + $0xf90] sm:$0xff]
    %v970 = vld [vmem:[#allocation2 + $0xf98] sm:$0xff]
    %v971 = vld [vmem:[#allocation2 + $0xfa0] sm:$0xff]
    %v972 = vld [vmem:[#allocation2 + $0xfa8] sm:$0xff]
    %v973 = vld [vmem:[#allocation2 + $0xfb0] sm:$0xff]
    %v974 = vld [vmem:[#allocation2 + $0xfb8] sm:$0xff]
    %v975 = vld [vmem:[#allocation2 + $0xfc0] sm:$0xff]
    %v976 = vld [vmem:[#allocation2 + $0xfc8] sm:$0xff]
    %v977 = vld [vmem:[#allocation2 + $0xfd0] sm:$0xff]
    %v978 = vld [vmem:[#allocation2 + $0xfd8] sm:$0xff]
    %v979 = vld [vmem:[#allocation2 + $0xfe0] sm:$0xff]
    %v980 = vld [vmem:[#allocation2 + $0xfe8] sm:$0xff]
    %v981 = vld [vmem:[#allocation2 + $0xff0] sm:$0xff]
    %v982 = vld [vmem:[#allocation2 + $0xff8] sm:$0xff]
    %v983 = vld [vmem:[#allocation2 + $0x1000] sm:$0xff]
    %v984 = vld [vmem:[#allocation2 + $0x1008] sm:$0xff]
    %v985 = vld [vmem:[#allocation2 + $0x1010] sm:$0xff]
    %v986 = vld [vmem:[#allocation2 + $0x1018] sm:$0xff]
    %v987 = vld [vmem:[#allocation2 + $0x1020] sm:$0xff]
    %v988 = vld [vmem:[#allocation2 + $0x1028] sm:$0xff]
    %v989 = vld [vmem:[#allocation2 + $0x1030] sm:$0xff]
    %v990 = vld [vmem:[#allocation2 + $0x1038] sm:$0xff]
    %v991 = vld [vmem:[#allocation2 + $0x1040] sm:$0xff]
    %v992 = vld [vmem:[#allocation2 + $0x1048] sm:$0xff]
    %v993 = vld [vmem:[#allocation2 + $0x1050] sm:$0xff]
    %v994 = vld [vmem:[#allocation2 + $0x1058] sm:$0xff]
    %v995 = vld [vmem:[#allocation2 + $0x1060] sm:$0xff]
    %v996 = vld [vmem:[#allocation2 + $0x1068] sm:$0xff]
    %v997 = vld [vmem:[#allocation2 + $0x1070] sm:$0xff]
    %v998 = vld [vmem:[#allocation2 + $0x1078] sm:$0xff]
    %v999 = vld [vmem:[#allocation2 + $0x1080] sm:$0xff]
    %v1000 = vld [vmem:[#allocation2 + $0x1088] sm:$0xff]
    %v1001 = vld [vmem:[#allocation2 + $0x1090] sm:$0xff]
    %v1002 = vld [vmem:[#allocation2 + $0x1098] sm:$0xff]
    %v1003 = vld [vmem:[#allocation2 + $0x10a0] sm:$0xff]
    %v1004 = vld [vmem:[#allocation2 + $0x10a8] sm:$0xff]
    %v1005 = vld [vmem:[#allocation2 + $0x10b0] sm:$0xff]
    %v1006 = vld [vmem:[#allocation2 + $0x10b8] sm:$0xff]
    %v1007 = vld [vmem:[#allocation2 + $0x10c0] sm:$0xff]
    %v1008 = vld [vmem:[#allocation2 + $0x10c8] sm:$0xff]
    %v1009 = vld [vmem:[#allocation2 + $0x10d0] sm:$0xff]
    %v1010 = vld [vmem:[#allocation2 + $0x10d8] sm:$0xff]
    %v1011 = vld [vmem:[#allocation2 + $0x10e0] sm:$0xff]
    %v1012 = vld [vmem:[#allocation2 + $0x10e8] sm:$0xff]
    %v1013 = vld [vmem:[#allocation2 + $0x10f0] sm:$0xff]
    %v1014 = vld [vmem:[#allocation2 + $0x10f8] sm:$0xff]
    %v1015 = vld [vmem:[#allocation2 + $0x1100] sm:$0xff]
    %v1016 = vld [vmem:[#allocation2 + $0x1108] sm:$0xff]
    %v1017 = vld [vmem:[#allocation2 + $0x1110] sm:$0xff]
    %v1018 = vld [vmem:[#allocation2 + $0x1118] sm:$0xff]
    %v1019 = vld [vmem:[#allocation2 + $0x1120] sm:$0xff]
    %v1020 = vld [vmem:[#allocation2 + $0x1128] sm:$0xff]
    %v1021 = vld [vmem:[#allocation2 + $0x1130] sm:$0xff]
    %v1022 = vld [vmem:[#allocation2 + $0x1138] sm:$0xff]
    %v1023 = vld [vmem:[#allocation2 + $0x1140] sm:$0xff]
    %v1024 = vld [vmem:[#allocation2 + $0x1148] sm:$0xff]
    %v1025 = vld [vmem:[#allocation2 + $0x1150] sm:$0xff]
    %v1026 = vld [vmem:[#allocation2 + $0x1158] sm:$0xff]
    %v1027 = vld [vmem:[#allocation2 + $0x1160] sm:$0xff]
    %v1028 = vld [vmem:[#allocation2 + $0x1168] sm:$0xff]
    %v1029 = vld [vmem:[#allocation2 + $0x1170] sm:$0xff]
    %v1030 = vld [vmem:[#allocation2 + $0x1178] sm:$0xff]
    %v1031 = vld [vmem:[#allocation2 + $0x1180] sm:$0xff]
    %v1032 = vld [vmem:[#allocation2 + $0x1188] sm:$0xff]
    %v1033 = vld [vmem:[#allocation2 + $0x1190] sm:$0xff]
    %v1034 = vld [vmem:[#allocation2 + $0x1198] sm:$0xff]
    %v1035 = vld [vmem:[#allocation2 + $0x11a0] sm:$0xff]
    %v1036 = vld [vmem:[#allocation2 + $0x11a8] sm:$0xff]
    %v1037 = vld [vmem:[#allocation2 + $0x11b0] sm:$0xff]
    %v1038 = vld [vmem:[#allocation2 + $0x11b8] sm:$0xff]
    %v1039 = vld [vmem:[#allocation2 + $0x11c0] sm:$0xff]
    %v1040 = vld [vmem:[#allocation2 + $0x11c8] sm:$0xff]
    %v1041 = vld [vmem:[#allocation2 + $0x11d0] sm:$0xff]
    %v1042 = vld [vmem:[#allocation2 + $0x11d8] sm:$0xff]
    %v1043 = vld [vmem:[#allocation2 + $0x11e0] sm:$0xff]
    %v1044 = vld [vmem:[#allocation2 + $0x11e8] sm:$0xff]
    %v1045 = vld [vmem:[#allocation2 + $0x11f0] sm:$0xff]
    %v1046 = vld [vmem:[#allocation2 + $0x11f8] sm:$0xff]
    %v1047 = vld [vmem:[#allocation2 + $0x1200] sm:$0xff]
    %v1048 = vld [vmem:[#allocation2 + $0x1208] sm:$0xff]
    %v1049 = vld [vmem:[#allocation2 + $0x1210] sm:$0xff]
    %v1050 = vld [vmem:[#allocation2 + $0x1218] sm:$0xff]
    %v1051 = vld [vmem:[#allocation2 + $0x1220] sm:$0xff]
    %v1052 = vld [vmem:[#allocation2 + $0x1228] sm:$0xff]
    %v1053 = vld [vmem:[#allocation2 + $0x1230] sm:$0xff]
    %v1054 = vld [vmem:[#allocation2 + $0x1238] sm:$0xff]
    %v1055 = vld [vmem:[#allocation2 + $0x1240] sm:$0xff]
    %v1056 = vld [vmem:[#allocation2 + $0x1248] sm:$0xff]
    %v1057 = vld [vmem:[#allocation2 + $0x1250] sm:$0xff]
    %v1058 = vld [vmem:[#allocation2 + $0x1258] sm:$0xff]
    %v1059 = vld [vmem:[#allocation2 + $0x1260] sm:$0xff]
    %v1060 = vld [vmem:[#allocation2 + $0x1268] sm:$0xff]
    %v1061 = vld [vmem:[#allocation2 + $0x1270] sm:$0xff]
    %v1062 = vld [vmem:[#allocation2 + $0x1278] sm:$0xff]
    %v1063 = vld [vmem:[#allocation2 + $0x1280] sm:$0xff]
    %v1064 = vld [vmem:[#allocation2 + $0x1288] sm:$0xff]
    %v1065 = vld [vmem:[#allocation2 + $0x1290] sm:$0xff]
    %v1066 = vld [vmem:[#allocation2 + $0x1298] sm:$0xff]
    %v1067 = vld [vmem:[#allocation2 + $0x12a0] sm:$0xff]
    %v1068 = vld [vmem:[#allocation2 + $0x12a8] sm:$0xff]
    %v1069 = vld [vmem:[#allocation2 + $0x12b0] sm:$0xff]
    %v1070 = vld [vmem:[#allocation2 + $0x12b8] sm:$0xff]
    %v1071 = vld [vmem:[#allocation2 + $0x12c0] sm:$0xff]
    %v1072 = vld [vmem:[#allocation2 + $0x12c8] sm:$0xff]
    %v1073 = vld [vmem:[#allocation2 + $0x12d0] sm:$0xff]
    %v1074 = vld [vmem:[#allocation2 + $0x12d8] sm:$0xff]
    %v1075 = vld [vmem:[#allocation2 + $0x12e0] sm:$0xff]
    %v1076 = vld [vmem:[#allocation2 + $0x12e8] sm:$0xff]
    %v1077 = vld [vmem:[#allocation2 + $0x12f0] sm:$0xff]
    %v1078 = vld [vmem:[#allocation2 + $0x12f8] sm:$0xff]
    %v1079 = vld [vmem:[#allocation2 + $0x1300] sm:$0xff]
    %v1080 = vld [vmem:[#allocation2 + $0x1308] sm:$0xff]
    %v1081 = vld [vmem:[#allocation2 + $0x1310] sm:$0xff]
    %v1082 = vld [vmem:[#allocation2 + $0x1318] sm:$0xff]
    %v1083 = vld [vmem:[#allocation2 + $0x1320] sm:$0xff]
    %v1084 = vld [vmem:[#allocation2 + $0x1328] sm:$0xff]
    %v1085 = vld [vmem:[#allocation2 + $0x1330] sm:$0xff]
    %v1086 = vld [vmem:[#allocation2 + $0x1338] sm:$0xff]
    %v1087 = vld [vmem:[#allocation2 + $0x1340] sm:$0xff]
    %v1088 = vld [vmem:[#allocation2 + $0x1348] sm:$0xff]
    %v1089 = vld [vmem:[#allocation2 + $0x1350] sm:$0xff]
    %v1090 = vld [vmem:[#allocation2 + $0x1358] sm:$0xff]
    %v1091 = vld [vmem:[#allocation2 + $0x1360] sm:$0xff]
    %v1092 = vld [vmem:[#allocation2 + $0x1368] sm:$0xff]
    %v1093 = vld [vmem:[#allocation2 + $0x1370] sm:$0xff]
    %v1094 = vld [vmem:[#allocation2 + $0x1378] sm:$0xff]
    %v1095 = vld [vmem:[#allocation2 + $0x1380] sm:$0xff]
    %v1096 = vld [vmem:[#allocation2 + $0x1388] sm:$0xff]
    %v1097 = vld [vmem:[#allocation2 + $0x1390] sm:$0xff]
    %v1098 = vld [vmem:[#allocation2 + $0x1398] sm:$0xff]
    %v1099 = vld [vmem:[#allocation2 + $0x13a0] sm:$0xff]
    %v1100 = vld [vmem:[#allocation2 + $0x13a8] sm:$0xff]
    %v1101 = vld [vmem:[#allocation2 + $0x13b0] sm:$0xff]
    %v1102 = vld [vmem:[#allocation2 + $0x13b8] sm:$0xff]
    %v1103 = vld [vmem:[#allocation2 + $0x13c0] sm:$0xff]
    %v1104 = vld [vmem:[#allocation2 + $0x13c8] sm:$0xff]
    %v1105 = vld [vmem:[#allocation2 + $0x13d0] sm:$0xff]
    %v1106 = vld [vmem:[#allocation2 + $0x13d8] sm:$0xff]
    %v1107 = vld [vmem:[#allocation2 + $0x13e0] sm:$0xff]
    %v1108 = vld [vmem:[#allocation2 + $0x13e8] sm:$0xff]
    %v1109 = vld [vmem:[#allocation2 + $0x13f0] sm:$0xff]
    %v1110 = vld [vmem:[#allocation2 + $0x13f8] sm:$0xff]
    %v1111 = vld [vmem:[#allocation2 + $0x1400] sm:$0xff]
    %v1112 = vld [vmem:[#allocation2 + $0x1408] sm:$0xff]
    %v1113 = vld [vmem:[#allocation2 + $0x1410] sm:$0xff]
    %v1114 = vld [vmem:[#allocation2 + $0x1418] sm:$0xff]
    %v1115 = vld [vmem:[#allocation2 + $0x1420] sm:$0xff]
    %v1116 = vld [vmem:[#allocation2 + $0x1428] sm:$0xff]
    %v1117 = vld [vmem:[#allocation2 + $0x1430] sm:$0xff]
    %v1118 = vld [vmem:[#allocation2 + $0x1438] sm:$0xff]
    %v1119 = vld [vmem:[#allocation2 + $0x1440] sm:$0xff]
    %v1120 = vld [vmem:[#allocation2 + $0x1448] sm:$0xff]
    %v1121 = vld [vmem:[#allocation2 + $0x1450] sm:$0xff]
    %v1122 = vld [vmem:[#allocation2 + $0x1458] sm:$0xff]
    %v1123 = vld [vmem:[#allocation2 + $0x1460] sm:$0xff]
    %v1124 = vld [vmem:[#allocation2 + $0x1468] sm:$0xff]
    %v1125 = vld [vmem:[#allocation2 + $0x1470] sm:$0xff]
    %v1126 = vld [vmem:[#allocation2 + $0x1478] sm:$0xff]
    %v1127 = vld [vmem:[#allocation2 + $0x1480] sm:$0xff]
    %v1128 = vld [vmem:[#allocation2 + $0x1488] sm:$0xff]
    %v1129 = vld [vmem:[#allocation2 + $0x1490] sm:$0xff]
    %v1130 = vld [vmem:[#allocation2 + $0x1498] sm:$0xff]
    %v1131 = vld [vmem:[#allocation2 + $0x14a0] sm:$0xff]
    %v1132 = vld [vmem:[#allocation2 + $0x14a8] sm:$0xff]
    %v1133 = vld [vmem:[#allocation2 + $0x14b0] sm:$0xff]
    %v1134 = vld [vmem:[#allocation2 + $0x14b8] sm:$0xff]
    %v1135 = vld [vmem:[#allocation2 + $0x14c0] sm:$0xff]
    %v1136 = vld [vmem:[#allocation2 + $0x14c8] sm:$0xff]
    %v1137 = vld [vmem:[#allocation2 + $0x14d0] sm:$0xff]
    %v1138 = vld [vmem:[#allocation2 + $0x14d8] sm:$0xff]
    %v1139 = vld [vmem:[#allocation2 + $0x14e0] sm:$0xff]
    %v1140 = vld [vmem:[#allocation2 + $0x14e8] sm:$0xff]
    %v1141 = vld [vmem:[#allocation2 + $0x14f0] sm:$0xff]
    %v1142 = vld [vmem:[#allocation2 + $0x14f8] sm:$0xff]
    %v1143 = vld [vmem:[#allocation2 + $0x1500] sm:$0xff]
    %v1144 = vld [vmem:[#allocation2 + $0x1508] sm:$0xff]
    %v1145 = vld [vmem:[#allocation2 + $0x1510] sm:$0xff]
    %v1146 = vld [vmem:[#allocation2 + $0x1518] sm:$0xff]
    %v1147 = vld [vmem:[#allocation2 + $0x1520] sm:$0xff]
    %v1148 = vld [vmem:[#allocation2 + $0x1528] sm:$0xff]
    %v1149 = vld [vmem:[#allocation2 + $0x1530] sm:$0xff]
    %v1150 = vld [vmem:[#allocation2 + $0x1538] sm:$0xff]
    %v1151 = vld [vmem:[#allocation2 + $0x1540] sm:$0xff]
    %v1152 = vld [vmem:[#allocation2 + $0x1548] sm:$0xff]
    %v1153 = vld [vmem:[#allocation2 + $0x1550] sm:$0xff]
    %v1154 = vld [vmem:[#allocation2 + $0x1558] sm:$0xff]
    %v1155 = vld [vmem:[#allocation2 + $0x1560] sm:$0xff]
    %v1156 = vld [vmem:[#allocation2 + $0x1568] sm:$0xff]
    %v1157 = vld [vmem:[#allocation2 + $0x1570] sm:$0xff]
    %v1158 = vld [vmem:[#allocation2 + $0x1578] sm:$0xff]
    %v1159 = vld [vmem:[#allocation2 + $0x1580] sm:$0xff]
    %v1160 = vld [vmem:[#allocation2 + $0x1588] sm:$0xff]
    %v1161 = vld [vmem:[#allocation2 + $0x1590] sm:$0xff]
    %v1162 = vld [vmem:[#allocation2 + $0x1598] sm:$0xff]
    %v1163 = vld [vmem:[#allocation2 + $0x15a0] sm:$0xff]
    %v1164 = vld [vmem:[#allocation2 + $0x15a8] sm:$0xff]
    %v1165 = vld [vmem:[#allocation2 + $0x15b0] sm:$0xff]
    %v1166 = vld [vmem:[#allocation2 + $0x15b8] sm:$0xff]
    %v1167 = vld [vmem:[#allocation2 + $0x15c0] sm:$0xff]
    %v1168 = vld [vmem:[#allocation2 + $0x15c8] sm:$0xff]
    %v1169 = vld [vmem:[#allocation2 + $0x15d0] sm:$0xff]
    %v1170 = vld [vmem:[#allocation2 + $0x15d8] sm:$0xff]
    %v1171 = vld [vmem:[#allocation2 + $0x15e0] sm:$0xff]
    %v1172 = vld [vmem:[#allocation2 + $0x15e8] sm:$0xff]
    %v1173 = vld [vmem:[#allocation2 + $0x15f0] sm:$0xff]
    %v1174 = vld [vmem:[#allocation2 + $0x15f8] sm:$0xff]
    %v1175 = vld [vmem:[#allocation2 + $0x1600] sm:$0xff]
    %v1176 = vld [vmem:[#allocation2 + $0x1608] sm:$0xff]
    %v1177 = vld [vmem:[#allocation2 + $0x1610] sm:$0xff]
    %v1178 = vld [vmem:[#allocation2 + $0x1618] sm:$0xff]
    %v1179 = vld [vmem:[#allocation2 + $0x1620] sm:$0xff]
    %v1180 = vld [vmem:[#allocation2 + $0x1628] sm:$0xff]
    %v1181 = vld [vmem:[#allocation2 + $0x1630] sm:$0xff]
    %v1182 = vld [vmem:[#allocation2 + $0x1638] sm:$0xff]
    %v1183 = vld [vmem:[#allocation2 + $0x1640] sm:$0xff]
    %v1184 = vld [vmem:[#allocation2 + $0x1648] sm:$0xff]
    %v1185 = vld [vmem:[#allocation2 + $0x1650] sm:$0xff]
    %v1186 = vld [vmem:[#allocation2 + $0x1658] sm:$0xff]
    %v1187 = vld [vmem:[#allocation2 + $0x1660] sm:$0xff]
    %v1188 = vld [vmem:[#allocation2 + $0x1668] sm:$0xff]
    %v1189 = vld [vmem:[#allocation2 + $0x1670] sm:$0xff]
    %v1190 = vld [vmem:[#allocation2 + $0x1678] sm:$0xff]
    %v1191 = vld [vmem:[#allocation2 + $0x1680] sm:$0xff]
    %v1192 = vld [vmem:[#allocation2 + $0x1688] sm:$0xff]
    %v1193 = vld [vmem:[#allocation2 + $0x1690] sm:$0xff]
    %v1194 = vld [vmem:[#allocation2 + $0x1698] sm:$0xff]
    %v1195 = vld [vmem:[#allocation2 + $0x16a0] sm:$0xff]
    %v1196 = vld [vmem:[#allocation2 + $0x16a8] sm:$0xff]
    %v1197 = vld [vmem:[#allocation2 + $0x16b0] sm:$0xff]
    %v1198 = vld [vmem:[#allocation2 + $0x16b8] sm:$0xff]
    %v1199 = vld [vmem:[#allocation2 + $0x16c0] sm:$0xff]
    %v1200 = vld [vmem:[#allocation2 + $0x16c8] sm:$0xff]
    %v1201 = vld [vmem:[#allocation2 + $0x16d0] sm:$0xff]
    %v1202 = vld [vmem:[#allocation2 + $0x16d8] sm:$0xff]
    %v1203 = vld [vmem:[#allocation2 + $0x16e0] sm:$0xff]
    %v1204 = vld [vmem:[#allocation2 + $0x16e8] sm:$0xff]
    %v1205 = vld [vmem:[#allocation2 + $0x16f0] sm:$0xff]
    %v1206 = vld [vmem:[#allocation2 + $0x16f8] sm:$0xff]
    %v1207 = vld [vmem:[#allocation2 + $0x1700] sm:$0xff]
    %v1208 = vld [vmem:[#allocation2 + $0x1708] sm:$0xff]
    %v1209 = vld [vmem:[#allocation2 + $0x1710] sm:$0xff]
    %v1210 = vld [vmem:[#allocation2 + $0x1718] sm:$0xff]
    %v1211 = vld [vmem:[#allocation2 + $0x1720] sm:$0xff]
    %v1212 = vld [vmem:[#allocation2 + $0x1728] sm:$0xff]
    %v1213 = vld [vmem:[#allocation2 + $0x1730] sm:$0xff]
    %v1214 = vld [vmem:[#allocation2 + $0x1738] sm:$0xff]
    %v1215 = vld [vmem:[#allocation2 + $0x1740] sm:$0xff]
    %v1216 = vld [vmem:[#allocation2 + $0x1748] sm:$0xff]
    %v1217 = vld [vmem:[#allocation2 + $0x1750] sm:$0xff]
    %v1218 = vld [vmem:[#allocation2 + $0x1758] sm:$0xff]
    %v1219 = vld [vmem:[#allocation2 + $0x1760] sm:$0xff]
    %v1220 = vld [vmem:[#allocation2 + $0x1768] sm:$0xff]
    %v1221 = vld [vmem:[#allocation2 + $0x1770] sm:$0xff]
    %v1222 = vld [vmem:[#allocation2 + $0x1778] sm:$0xff]
    %v1223 = vld [vmem:[#allocation2 + $0x1780] sm:$0xff]
    %v1224 = vld [vmem:[#allocation2 + $0x1788] sm:$0xff]
    %v1225 = vld [vmem:[#allocation2 + $0x1790] sm:$0xff]
    %v1226 = vld [vmem:[#allocation2 + $0x1798] sm:$0xff]
    %v1227 = vld [vmem:[#allocation2 + $0x17a0] sm:$0xff]
    %v1228 = vld [vmem:[#allocation2 + $0x17a8] sm:$0xff]
    %v1229 = vld [vmem:[#allocation2 + $0x17b0] sm:$0xff]
    %v1230 = vld [vmem:[#allocation2 + $0x17b8] sm:$0xff]
    %v1231 = vld [vmem:[#allocation2 + $0x17c0] sm:$0xff]
    %v1232 = vld [vmem:[#allocation2 + $0x17c8] sm:$0xff]
    %v1233 = vld [vmem:[#allocation2 + $0x17d0] sm:$0xff]
    %v1234 = vld [vmem:[#allocation2 + $0x17d8] sm:$0xff]
    %v1235 = vld [vmem:[#allocation2 + $0x17e0] sm:$0xff]
    %v1236 = vld [vmem:[#allocation2 + $0x17e8] sm:$0xff]
    %v1237 = vld [vmem:[#allocation2 + $0x17f0] sm:$0xff]
    %v1238 = vld [vmem:[#allocation2 + $0x17f8] sm:$0xff]
    %v1239 = vld [vmem:[#allocation2 + $0x1800] sm:$0xff]
    %v1240 = vld [vmem:[#allocation2 + $0x1808] sm:$0xff]
    %v1241 = vld [vmem:[#allocation2 + $0x1810] sm:$0xff]
    %v1242 = vld [vmem:[#allocation2 + $0x1818] sm:$0xff]
    %v1243 = vld [vmem:[#allocation2 + $0x1820] sm:$0xff]
    %v1244 = vld [vmem:[#allocation2 + $0x1828] sm:$0xff]
    %v1245 = vld [vmem:[#allocation2 + $0x1830] sm:$0xff]
    %v1246 = vld [vmem:[#allocation2 + $0x1838] sm:$0xff]
    %v1247 = vld [vmem:[#allocation2 + $0x1840] sm:$0xff]
    %v1248 = vld [vmem:[#allocation2 + $0x1848] sm:$0xff]
    %v1249 = vld [vmem:[#allocation2 + $0x1850] sm:$0xff]
    %v1250 = vld [vmem:[#allocation2 + $0x1858] sm:$0xff]
    %v1251 = vld [vmem:[#allocation2 + $0x1860] sm:$0xff]
    %v1252 = vld [vmem:[#allocation2 + $0x1868] sm:$0xff]
    %v1253 = vld [vmem:[#allocation2 + $0x1870] sm:$0xff]
    %v1254 = vld [vmem:[#allocation2 + $0x1878] sm:$0xff]
    %v1255 = vld [vmem:[#allocation2 + $0x1880] sm:$0xff]
    %v1256 = vld [vmem:[#allocation2 + $0x1888] sm:$0xff]
    %v1257 = vld [vmem:[#allocation2 + $0x1890] sm:$0xff]
    %v1258 = vld [vmem:[#allocation2 + $0x1898] sm:$0xff]
    %v1259 = vld [vmem:[#allocation2 + $0x18a0] sm:$0xff]
    %v1260 = vld [vmem:[#allocation2 + $0x18a8] sm:$0xff]
    %v1261 = vld [vmem:[#allocation2 + $0x18b0] sm:$0xff]
    %v1262 = vld [vmem:[#allocation2 + $0x18b8] sm:$0xff]
    %v1263 = vld [vmem:[#allocation2 + $0x18c0] sm:$0xff]
    %v1264 = vld [vmem:[#allocation2 + $0x18c8] sm:$0xff]
    %v1265 = vld [vmem:[#allocation2 + $0x18d0] sm:$0xff]
    %v1266 = vld [vmem:[#allocation2 + $0x18d8] sm:$0xff]
    %v1267 = vld [vmem:[#allocation2 + $0x18e0] sm:$0xff]
    %v1268 = vld [vmem:[#allocation2 + $0x18e8] sm:$0xff]
    %v1269 = vld [vmem:[#allocation2 + $0x18f0] sm:$0xff]
    %v1270 = vld [vmem:[#allocation2 + $0x18f8] sm:$0xff]
    %v1271 = vld [vmem:[#allocation2 + $0x1900] sm:$0xff]
    %v1272 = vld [vmem:[#allocation2 + $0x1908] sm:$0xff]
    %v1273 = vld [vmem:[#allocation2 + $0x1910] sm:$0xff]
    %v1274 = vld [vmem:[#allocation2 + $0x1918] sm:$0xff]
    %v1275 = vld [vmem:[#allocation2 + $0x1920] sm:$0xff]
    %v1276 = vld [vmem:[#allocation2 + $0x1928] sm:$0xff]
    %v1277 = vld [vmem:[#allocation2 + $0x1930] sm:$0xff]
    %v1278 = vld [vmem:[#allocation2 + $0x1938] sm:$0xff]
    %v1279 = vld [vmem:[#allocation2 + $0x1940] sm:$0xff]
    %v1280 = vld [vmem:[#allocation2 + $0x1948] sm:$0xff]
    %v1281 = vld [vmem:[#allocation2 + $0x1950] sm:$0xff]
    %v1282 = vld [vmem:[#allocation2 + $0x1958] sm:$0xff]
    %v1283 = vld [vmem:[#allocation2 + $0x1960] sm:$0xff]
    %v1284 = vld [vmem:[#allocation2 + $0x1968] sm:$0xff]
    %v1285 = vld [vmem:[#allocation2 + $0x1970] sm:$0xff]
    %v1286 = vld [vmem:[#allocation2 + $0x1978] sm:$0xff]
    %v1287 = vld [vmem:[#allocation2 + $0x1980] sm:$0xff]
    %v1288 = vld [vmem:[#allocation2 + $0x1988] sm:$0xff]
    %v1289 = vld [vmem:[#allocation2 + $0x1990] sm:$0xff]
    %v1290 = vld [vmem:[#allocation2 + $0x1998] sm:$0xff]
    %v1291 = vld [vmem:[#allocation2 + $0x19a0] sm:$0xff]
    %v1292 = vld [vmem:[#allocation2 + $0x19a8] sm:$0xff]
    %v1293 = vld [vmem:[#allocation2 + $0x19b0] sm:$0xff]
    %v1294 = vld [vmem:[#allocation2 + $0x19b8] sm:$0xff]
    %v1295 = vld [vmem:[#allocation2 + $0x19c0] sm:$0xff]
    %v1296 = vld [vmem:[#allocation2 + $0x19c8] sm:$0xff]
    %v1297 = vld [vmem:[#allocation2 + $0x19d0] sm:$0xff]
    %v1298 = vld [vmem:[#allocation2 + $0x19d8] sm:$0xff]
    %v1299 = vld [vmem:[#allocation2 + $0x19e0] sm:$0xff]
    %v1300 = vld [vmem:[#allocation2 + $0x19e8] sm:$0xff]
    %v1301 = vld [vmem:[#allocation2 + $0x19f0] sm:$0xff]
    %v1302 = vld [vmem:[#allocation2 + $0x19f8] sm:$0xff]
    %v1303 = vld [vmem:[#allocation2 + $0x1a00] sm:$0xff]
    %v1304 = vld [vmem:[#allocation2 + $0x1a08] sm:$0xff]
    %v1305 = vld [vmem:[#allocation2 + $0x1a10] sm:$0xff]
    %v1306 = vld [vmem:[#allocation2 + $0x1a18] sm:$0xff]
    %v1307 = vld [vmem:[#allocation2 + $0x1a20] sm:$0xff]
    %v1308 = vld [vmem:[#allocation2 + $0x1a28] sm:$0xff]
    %v1309 = vld [vmem:[#allocation2 + $0x1a30] sm:$0xff]
    %v1310 = vld [vmem:[#allocation2 + $0x1a38] sm:$0xff]
    %v1311 = vld [vmem:[#allocation2 + $0x1a40] sm:$0xff]
    %v1312 = vld [vmem:[#allocation2 + $0x1a48] sm:$0xff]
    %v1313 = vld [vmem:[#allocation2 + $0x1a50] sm:$0xff]
    %v1314 = vld [vmem:[#allocation2 + $0x1a58] sm:$0xff]
    %v1315 = vld [vmem:[#allocation2 + $0x1a60] sm:$0xff]
    %v1316 = vld [vmem:[#allocation2 + $0x1a68] sm:$0xff]
    %v1317 = vld [vmem:[#allocation2 + $0x1a70] sm:$0xff]
    %v1318 = vld [vmem:[#allocation2 + $0x1a78] sm:$0xff]
    %v1319 = vld [vmem:[#allocation2 + $0x1a80] sm:$0xff]
    %v1320 = vld [vmem:[#allocation2 + $0x1a88] sm:$0xff]
    %v1321 = vld [vmem:[#allocation2 + $0x1a90] sm:$0xff]
    %v1322 = vld [vmem:[#allocation2 + $0x1a98] sm:$0xff]
    %v1323 = vld [vmem:[#allocation2 + $0x1aa0] sm:$0xff]
    %v1324 = vld [vmem:[#allocation2 + $0x1aa8] sm:$0xff]
    %v1325 = vld [vmem:[#allocation2 + $0x1ab0] sm:$0xff]
    %v1326 = vld [vmem:[#allocation2 + $0x1ab8] sm:$0xff]
    %v1327 = vld [vmem:[#allocation2 + $0x1ac0] sm:$0xff]
    %v1328 = vld [vmem:[#allocation2 + $0x1ac8] sm:$0xff]
    %v1329 = vld [vmem:[#allocation2 + $0x1ad0] sm:$0xff]
    %v1330 = vld [vmem:[#allocation2 + $0x1ad8] sm:$0xff]
    %v1331 = vld [vmem:[#allocation2 + $0x1ae0] sm:$0xff]
    %v1332 = vld [vmem:[#allocation2 + $0x1ae8] sm:$0xff]
    %v1333 = vld [vmem:[#allocation2 + $0x1af0] sm:$0xff]
    %v1334 = vld [vmem:[#allocation2 + $0x1af8] sm:$0xff]
    %v1335 = vld [vmem:[#allocation2 + $0x1b00] sm:$0xff]
    %v1336 = vld [vmem:[#allocation2 + $0x1b08] sm:$0xff]
    %v1337 = vld [vmem:[#allocation2 + $0x1b10] sm:$0xff]
    %v1338 = vld [vmem:[#allocation2 + $0x1b18] sm:$0xff]
    %v1339 = vld [vmem:[#allocation2 + $0x1b20] sm:$0xff]
    %v1340 = vld [vmem:[#allocation2 + $0x1b28] sm:$0xff]
    %v1341 = vld [vmem:[#allocation2 + $0x1b30] sm:$0xff]
    %v1342 = vld [vmem:[#allocation2 + $0x1b38] sm:$0xff]
    %v1343 = vld [vmem:[#allocation2 + $0x1b40] sm:$0xff]
    %v1344 = vld [vmem:[#allocation2 + $0x1b48] sm:$0xff]
    %v1345 = vld [vmem:[#allocation2 + $0x1b50] sm:$0xff]
    %v1346 = vld [vmem:[#allocation2 + $0x1b58] sm:$0xff]
    %v1347 = vld [vmem:[#allocation2 + $0x1b60] sm:$0xff]
    %v1348 = vld [vmem:[#allocation2 + $0x1b68] sm:$0xff]
    %v1349 = vld [vmem:[#allocation2 + $0x1b70] sm:$0xff]
    %v1350 = vld [vmem:[#allocation2 + $0x1b78] sm:$0xff]
    %v1351 = vld [vmem:[#allocation2 + $0x1b80] sm:$0xff]
    %v1352 = vld [vmem:[#allocation2 + $0x1b88] sm:$0xff]
    %v1353 = vld [vmem:[#allocation2 + $0x1b90] sm:$0xff]
    %v1354 = vld [vmem:[#allocation2 + $0x1b98] sm:$0xff]
    %v1355 = vld [vmem:[#allocation2 + $0x1ba0] sm:$0xff]
    %v1356 = vld [vmem:[#allocation2 + $0x1ba8] sm:$0xff]
    %v1357 = vld [vmem:[#allocation2 + $0x1bb0] sm:$0xff]
    %v1358 = vld [vmem:[#allocation2 + $0x1bb8] sm:$0xff]
    %v1359 = vld [vmem:[#allocation2 + $0x1bc0] sm:$0xff]
    %v1360 = vld [vmem:[#allocation2 + $0x1bc8] sm:$0xff]
    %v1361 = vld [vmem:[#allocation2 + $0x1bd0] sm:$0xff]
    %v1362 = vld [vmem:[#allocation2 + $0x1bd8] sm:$0xff]
    %v1363 = vld [vmem:[#allocation2 + $0x1be0] sm:$0xff]
    %v1364 = vld [vmem:[#allocation2 + $0x1be8] sm:$0xff]
    %v1365 = vld [vmem:[#allocation2 + $0x1bf0] sm:$0xff]
    %v1366 = vld [vmem:[#allocation2 + $0x1bf8] sm:$0xff]
    %v1367 = vld [vmem:[#allocation2 + $0x1c00] sm:$0xff]
    %v1368 = vld [vmem:[#allocation2 + $0x1c08] sm:$0xff]
    %v1369 = vld [vmem:[#allocation2 + $0x1c10] sm:$0xff]
    %v1370 = vld [vmem:[#allocation2 + $0x1c18] sm:$0xff]
    %v1371 = vld [vmem:[#allocation2 + $0x1c20] sm:$0xff]
    %v1372 = vld [vmem:[#allocation2 + $0x1c28] sm:$0xff]
    %v1373 = vld [vmem:[#allocation2 + $0x1c30] sm:$0xff]
    %v1374 = vld [vmem:[#allocation2 + $0x1c38] sm:$0xff]
    %v1375 = vld [vmem:[#allocation2 + $0x1c40] sm:$0xff]
    %v1376 = vld [vmem:[#allocation2 + $0x1c48] sm:$0xff]
    %v1377 = vld [vmem:[#allocation2 + $0x1c50] sm:$0xff]
    %v1378 = vld [vmem:[#allocation2 + $0x1c58] sm:$0xff]
    %v1379 = vld [vmem:[#allocation2 + $0x1c60] sm:$0xff]
    %v1380 = vld [vmem:[#allocation2 + $0x1c68] sm:$0xff]
    %v1381 = vld [vmem:[#allocation2 + $0x1c70] sm:$0xff]
    %v1382 = vld [vmem:[#allocation2 + $0x1c78] sm:$0xff]
    %v1383 = vld [vmem:[#allocation2 + $0x1c80] sm:$0xff]
    %v1384 = vld [vmem:[#allocation2 + $0x1c88] sm:$0xff]
    %v1385 = vld [vmem:[#allocation2 + $0x1c90] sm:$0xff]
    %v1386 = vld [vmem:[#allocation2 + $0x1c98] sm:$0xff]
    %v1387 = vld [vmem:[#allocation2 + $0x1ca0] sm:$0xff]
    %v1388 = vld [vmem:[#allocation2 + $0x1ca8] sm:$0xff]
    %v1389 = vld [vmem:[#allocation2 + $0x1cb0] sm:$0xff]
    %v1390 = vld [vmem:[#allocation2 + $0x1cb8] sm:$0xff]
    %v1391 = vld [vmem:[#allocation2 + $0x1cc0] sm:$0xff]
    %v1392 = vld [vmem:[#allocation2 + $0x1cc8] sm:$0xff]
    %v1393 = vld [vmem:[#allocation2 + $0x1cd0] sm:$0xff]
    %v1394 = vld [vmem:[#allocation2 + $0x1cd8] sm:$0xff]
    %v1395 = vld [vmem:[#allocation2 + $0x1ce0] sm:$0xff]
    %v1396 = vld [vmem:[#allocation2 + $0x1ce8] sm:$0xff]
    %v1397 = vld [vmem:[#allocation2 + $0x1cf0] sm:$0xff]
    %v1398 = vld [vmem:[#allocation2 + $0x1cf8] sm:$0xff]
    %v1399 = vld [vmem:[#allocation2 + $0x1d00] sm:$0xff]
    %v1400 = vld [vmem:[#allocation2 + $0x1d08] sm:$0xff]
    %v1401 = vld [vmem:[#allocation2 + $0x1d10] sm:$0xff]
    %v1402 = vld [vmem:[#allocation2 + $0x1d18] sm:$0xff]
    %v1403 = vld [vmem:[#allocation2 + $0x1d20] sm:$0xff]
    %v1404 = vld [vmem:[#allocation2 + $0x1d28] sm:$0xff]
    %v1405 = vld [vmem:[#allocation2 + $0x1d30] sm:$0xff]
    %v1406 = vld [vmem:[#allocation2 + $0x1d38] sm:$0xff]
    %v1407 = vld [vmem:[#allocation2 + $0x1d40] sm:$0xff]
    %v1408 = vld [vmem:[#allocation2 + $0x1d48] sm:$0xff]
    %v1409 = vld [vmem:[#allocation2 + $0x1d50] sm:$0xff]
    %v1410 = vld [vmem:[#allocation2 + $0x1d58] sm:$0xff]
    %v1411 = vld [vmem:[#allocation2 + $0x1d60] sm:$0xff]
    %v1412 = vld [vmem:[#allocation2 + $0x1d68] sm:$0xff]
    %v1413 = vld [vmem:[#allocation2 + $0x1d70] sm:$0xff]
    %v1414 = vld [vmem:[#allocation2 + $0x1d78] sm:$0xff]
    %v1415 = vld [vmem:[#allocation2 + $0x1d80] sm:$0xff]
    %v1416 = vld [vmem:[#allocation2 + $0x1d88] sm:$0xff]
    %v1417 = vld [vmem:[#allocation2 + $0x1d90] sm:$0xff]
    %v1418 = vld [vmem:[#allocation2 + $0x1d98] sm:$0xff]
    %v1419 = vld [vmem:[#allocation2 + $0x1da0] sm:$0xff]
    %v1420 = vld [vmem:[#allocation2 + $0x1da8] sm:$0xff]
    %v1421 = vld [vmem:[#allocation2 + $0x1db0] sm:$0xff]
    %v1422 = vld [vmem:[#allocation2 + $0x1db8] sm:$0xff]
    %v1423 = vld [vmem:[#allocation2 + $0x1dc0] sm:$0xff]
    %v1424 = vld [vmem:[#allocation2 + $0x1dc8] sm:$0xff]
    %v1425 = vld [vmem:[#allocation2 + $0x1dd0] sm:$0xff]
    %v1426 = vld [vmem:[#allocation2 + $0x1dd8] sm:$0xff]
    %v1427 = vld [vmem:[#allocation2 + $0x1de0] sm:$0xff]
    %v1428 = vld [vmem:[#allocation2 + $0x1de8] sm:$0xff]
    %v1429 = vld [vmem:[#allocation2 + $0x1df0] sm:$0xff]
    %v1430 = vld [vmem:[#allocation2 + $0x1df8] sm:$0xff]
    %v1431 = vld [vmem:[#allocation2 + $0x1e00] sm:$0xff]
    %v1432 = vld [vmem:[#allocation2 + $0x1e08] sm:$0xff]
    %v1433 = vld [vmem:[#allocation2 + $0x1e10] sm:$0xff]
    %v1434 = vld [vmem:[#allocation2 + $0x1e18] sm:$0xff]
    %v1435 = vld [vmem:[#allocation2 + $0x1e20] sm:$0xff]
    %v1436 = vld [vmem:[#allocation2 + $0x1e28] sm:$0xff]
    %v1437 = vld [vmem:[#allocation2 + $0x1e30] sm:$0xff]
    %v1438 = vld [vmem:[#allocation2 + $0x1e38] sm:$0xff]
    %v1439 = vld [vmem:[#allocation2 + $0x1e40] sm:$0xff]
    %v1440 = vld [vmem:[#allocation2 + $0x1e48] sm:$0xff]
    %v1441 = vld [vmem:[#allocation2 + $0x1e50] sm:$0xff]
    %v1442 = vld [vmem:[#allocation2 + $0x1e58] sm:$0xff]
    %v1443 = vld [vmem:[#allocation2 + $0x1e60] sm:$0xff]
    %v1444 = vld [vmem:[#allocation2 + $0x1e68] sm:$0xff]
    %v1445 = vld [vmem:[#allocation2 + $0x1e70] sm:$0xff]
    %v1446 = vld [vmem:[#allocation2 + $0x1e78] sm:$0xff]
    %v1447 = vld [vmem:[#allocation2 + $0x1e80] sm:$0xff]
    %v1448 = vld [vmem:[#allocation2 + $0x1e88] sm:$0xff]
    %v1449 = vld [vmem:[#allocation2 + $0x1e90] sm:$0xff]
    %v1450 = vld [vmem:[#allocation2 + $0x1e98] sm:$0xff]
    %v1451 = vld [vmem:[#allocation2 + $0x1ea0] sm:$0xff]
    %v1452 = vld [vmem:[#allocation2 + $0x1ea8] sm:$0xff]
    %v1453 = vld [vmem:[#allocation2 + $0x1eb0] sm:$0xff]
    %v1454 = vld [vmem:[#allocation2 + $0x1eb8] sm:$0xff]
    %v1455 = vld [vmem:[#allocation2 + $0x1ec0] sm:$0xff]
    %v1456 = vld [vmem:[#allocation2 + $0x1ec8] sm:$0xff]
    %v1457 = vld [vmem:[#allocation2 + $0x1ed0] sm:$0xff]
    %v1458 = vld [vmem:[#allocation2 + $0x1ed8] sm:$0xff]
    %v1459 = vld [vmem:[#allocation2 + $0x1ee0] sm:$0xff]
    %v1460 = vld [vmem:[#allocation2 + $0x1ee8] sm:$0xff]
    %v1461 = vld [vmem:[#allocation2 + $0x1ef0] sm:$0xff]
    %v1462 = vld [vmem:[#allocation2 + $0x1ef8] sm:$0xff]
    %v1463 = vld [vmem:[#allocation2 + $0x1f00] sm:$0xff]
    %v1464 = vld [vmem:[#allocation2 + $0x1f08] sm:$0xff]
    %v1465 = vld [vmem:[#allocation2 + $0x1f10] sm:$0xff]
    %v1466 = vld [vmem:[#allocation2 + $0x1f18] sm:$0xff]
    %v1467 = vld [vmem:[#allocation2 + $0x1f20] sm:$0xff]
    %v1468 = vld [vmem:[#allocation2 + $0x1f28] sm:$0xff]
    %v1469 = vld [vmem:[#allocation2 + $0x1f30] sm:$0xff]
    %v1470 = vld [vmem:[#allocation2 + $0x1f38] sm:$0xff]
    %v1471 = vld [vmem:[#allocation2 + $0x1f40] sm:$0xff]
    %v1472 = vld [vmem:[#allocation2 + $0x1f48] sm:$0xff]
    %v1473 = vld [vmem:[#allocation2 + $0x1f50] sm:$0xff]
    %v1474 = vld [vmem:[#allocation2 + $0x1f58] sm:$0xff]
    %v1475 = vld [vmem:[#allocation2 + $0x1f60] sm:$0xff]
    %v1476 = vld [vmem:[#allocation2 + $0x1f68] sm:$0xff]
    %v1477 = vld [vmem:[#allocation2 + $0x1f70] sm:$0xff]
    %v1478 = vld [vmem:[#allocation2 + $0x1f78] sm:$0xff]
    %v1479 = vld [vmem:[#allocation2 + $0x1f80] sm:$0xff]
    %v1480 = vld [vmem:[#allocation2 + $0x1f88] sm:$0xff]
    %v1481 = vld [vmem:[#allocation2 + $0x1f90] sm:$0xff]
    %v1482 = vld [vmem:[#allocation2 + $0x1f98] sm:$0xff]
    %v1483 = vld [vmem:[#allocation2 + $0x1fa0] sm:$0xff]
    %v1484 = vld [vmem:[#allocation2 + $0x1fa8] sm:$0xff]
    %v1485 = vld [vmem:[#allocation2 + $0x1fb0] sm:$0xff]
    %v1486 = vld [vmem:[#allocation2 + $0x1fb8] sm:$0xff]
    %v1487 = vld [vmem:[#allocation2 + $0x1fc0] sm:$0xff]
    %v1488 = vld [vmem:[#allocation2 + $0x1fc8] sm:$0xff]
    %v1489 = vld [vmem:[#allocation2 + $0x1fd0] sm:$0xff]
    %v1490 = vld [vmem:[#allocation2 + $0x1fd8] sm:$0xff]
    %v1491 = vld [vmem:[#allocation2 + $0x1fe0] sm:$0xff]
    %v1492 = vld [vmem:[#allocation2 + $0x1fe8] sm:$0xff]
    %v1493 = vld [vmem:[#allocation2 + $0x1ff0] sm:$0xff]
    %v1494 = vld [vmem:[#allocation2 + $0x1ff8] sm:$0xff]
    %v1495 = vld [vmem:[#allocation2 + $0x2000] sm:$0xff]
    %v1496 = vld [vmem:[#allocation2 + $0x2008] sm:$0xff]
    %v1497 = vld [vmem:[#allocation2 + $0x2010] sm:$0xff]
    %v1498 = vld [vmem:[#allocation2 + $0x2018] sm:$0xff]
    %v1499 = vld [vmem:[#allocation2 + $0x2020] sm:$0xff]
    %v1500 = vld [vmem:[#allocation2 + $0x2028] sm:$0xff]
    %v1501 = vld [vmem:[#allocation2 + $0x2030] sm:$0xff]
    %v1502 = vld [vmem:[#allocation2 + $0x2038] sm:$0xff]
    %v1503 = vld [vmem:[#allocation2 + $0x2040] sm:$0xff]
    %v1504 = vld [vmem:[#allocation2 + $0x2048] sm:$0xff]
    %v1505 = vld [vmem:[#allocation2 + $0x2050] sm:$0xff]
    %v1506 = vld [vmem:[#allocation2 + $0x2058] sm:$0xff]
    %v1507 = vld [vmem:[#allocation2 + $0x2060] sm:$0xff]
    %v1508 = vld [vmem:[#allocation2 + $0x2068] sm:$0xff]
    %v1509 = vld [vmem:[#allocation2 + $0x2070] sm:$0xff]
    %v1510 = vld [vmem:[#allocation2 + $0x2078] sm:$0xff]
    %v1511 = vld [vmem:[#allocation2 + $0x2080] sm:$0xff]
    %v1512 = vld [vmem:[#allocation2 + $0x2088] sm:$0xff]
    %v1513 = vld [vmem:[#allocation2 + $0x2090] sm:$0xff]
    %v1514 = vld [vmem:[#allocation2 + $0x2098] sm:$0xff]
    %v1515 = vld [vmem:[#allocation2 + $0x20a0] sm:$0xff]
    %v1516 = vld [vmem:[#allocation2 + $0x20a8] sm:$0xff]
    %v1517 = vld [vmem:[#allocation2 + $0x20b0] sm:$0xff]
    %v1518 = vld [vmem:[#allocation2 + $0x20b8] sm:$0xff]
    %v1519 = vld [vmem:[#allocation2 + $0x20c0] sm:$0xff]
    %v1520 = vld [vmem:[#allocation2 + $0x20c8] sm:$0xff]
    %v1521 = vld [vmem:[#allocation2 + $0x20d0] sm:$0xff]
    %v1522 = vld [vmem:[#allocation2 + $0x20d8] sm:$0xff]
    %v1523 = vld [vmem:[#allocation2 + $0x20e0] sm:$0xff]
    %v1524 = vld [vmem:[#allocation2 + $0x20e8] sm:$0xff]
    %v1525 = vld [vmem:[#allocation2 + $0x20f0] sm:$0xff]
    %v1526 = vld [vmem:[#allocation2 + $0x20f8] sm:$0xff]
    %v1527 = vld [vmem:[#allocation2 + $0x2100] sm:$0xff]
    %v1528 = vld [vmem:[#allocation2 + $0x2108] sm:$0xff]
    %v1529 = vld [vmem:[#allocation2 + $0x2110] sm:$0xff]
    %v1530 = vld [vmem:[#allocation2 + $0x2118] sm:$0xff]
    %v1531 = vld [vmem:[#allocation2 + $0x2120] sm:$0xff]
    %v1532 = vld [vmem:[#allocation2 + $0x2128] sm:$0xff]
    %v1533 = vld [vmem:[#allocation2 + $0x2130] sm:$0xff]
    %v1534 = vld [vmem:[#allocation2 + $0x2138] sm:$0xff]
    %v1535 = vld [vmem:[#allocation2 + $0x2140] sm:$0xff]
    %v1536 = vld [vmem:[#allocation2 + $0x2148] sm:$0xff]
    %v1537 = vld [vmem:[#allocation2 + $0x2150] sm:$0xff]
    %v1538 = vld [vmem:[#allocation2 + $0x2158] sm:$0xff]
    %v1539 = vld [vmem:[#allocation2 + $0x2160] sm:$0xff]
    %v1540 = vld [vmem:[#allocation2 + $0x2168] sm:$0xff]
    %v1541 = vld [vmem:[#allocation2 + $0x2170] sm:$0xff]
    %v1542 = vld [vmem:[#allocation2 + $0x2178] sm:$0xff]
    %v1543 = vld [vmem:[#allocation2 + $0x2180] sm:$0xff]
    %v1544 = vld [vmem:[#allocation2 + $0x2188] sm:$0xff]
    %v1545 = vld [vmem:[#allocation2 + $0x2190] sm:$0xff]
    %v1546 = vld [vmem:[#allocation2 + $0x2198] sm:$0xff]
    %v1547 = vld [vmem:[#allocation2 + $0x21a0] sm:$0xff]
    %v1548 = vld [vmem:[#allocation2 + $0x21a8] sm:$0xff]
    %v1549 = vld [vmem:[#allocation2 + $0x21b0] sm:$0xff]
    %v1550 = vld [vmem:[#allocation2 + $0x21b8] sm:$0xff]
    %v1551 = vld [vmem:[#allocation2 + $0x21c0] sm:$0xff]
    %v1552 = vld [vmem:[#allocation2 + $0x21c8] sm:$0xff]
    %v1553 = vld [vmem:[#allocation2 + $0x21d0] sm:$0xff]
    %v1554 = vld [vmem:[#allocation2 + $0x21d8] sm:$0xff]
    %v1555 = vld [vmem:[#allocation2 + $0x21e0] sm:$0xff]
    %v1556 = vld [vmem:[#allocation2 + $0x21e8] sm:$0xff]
    %v1557 = vld [vmem:[#allocation2 + $0x21f0] sm:$0xff]
    %v1558 = vld [vmem:[#allocation2 + $0x21f8] sm:$0xff]
    %v1559 = vld [vmem:[#allocation2 + $0x2200] sm:$0xff]
    %v1560 = vld [vmem:[#allocation2 + $0x2208] sm:$0xff]
    %v1561 = vld [vmem:[#allocation2 + $0x2210] sm:$0xff]
    %v1562 = vld [vmem:[#allocation2 + $0x2218] sm:$0xff]
    %v1563 = vld [vmem:[#allocation2 + $0x2220] sm:$0xff]
    %v1564 = vld [vmem:[#allocation2 + $0x2228] sm:$0xff]
    %v1565 = vld [vmem:[#allocation2 + $0x2230] sm:$0xff]
    %v1566 = vld [vmem:[#allocation2 + $0x2238] sm:$0xff]
    %v1567 = vld [vmem:[#allocation2 + $0x2240] sm:$0xff]
    %v1568 = vld [vmem:[#allocation2 + $0x2248] sm:$0xff]
    %v1569 = vld [vmem:[#allocation2 + $0x2250] sm:$0xff]
    %v1570 = vld [vmem:[#allocation2 + $0x2258] sm:$0xff]
    %v1571 = vld [vmem:[#allocation2 + $0x2260] sm:$0xff]
    %v1572 = vld [vmem:[#allocation2 + $0x2268] sm:$0xff]
    %v1573 = vld [vmem:[#allocation2 + $0x2270] sm:$0xff]
    %v1574 = vld [vmem:[#allocation2 + $0x2278] sm:$0xff]
    %v1575 = vld [vmem:[#allocation2 + $0x2280] sm:$0xff]
    %v1576 = vld [vmem:[#allocation2 + $0x2288] sm:$0xff]
    %v1577 = vld [vmem:[#allocation2 + $0x2290] sm:$0xff]
    %v1578 = vld [vmem:[#allocation2 + $0x2298] sm:$0xff]
    %v1579 = vld [vmem:[#allocation2 + $0x22a0] sm:$0xff]
    %v1580 = vld [vmem:[#allocation2 + $0x22a8] sm:$0xff]
    %v1581 = vld [vmem:[#allocation2 + $0x22b0] sm:$0xff]
    %v1582 = vld [vmem:[#allocation2 + $0x22b8] sm:$0xff]
    %v1583 = vld [vmem:[#allocation2 + $0x22c0] sm:$0xff]
    %v1584 = vld [vmem:[#allocation2 + $0x22c8] sm:$0xff]
    %v1585 = vld [vmem:[#allocation2 + $0x22d0] sm:$0xff]
    %v1586 = vld [vmem:[#allocation2 + $0x22d8] sm:$0xff]
    %v1587 = vld [vmem:[#allocation2 + $0x22e0] sm:$0xff]
    %v1588 = vld [vmem:[#allocation2 + $0x22e8] sm:$0xff]
    %v1589 = vld [vmem:[#allocation2 + $0x22f0] sm:$0xff]
    %v1590 = vld [vmem:[#allocation2 + $0x22f8] sm:$0xff]
    %v1591 = vld [vmem:[#allocation2 + $0x2300] sm:$0xff]
    %v1592 = vld [vmem:[#allocation2 + $0x2308] sm:$0xff]
    %v1593 = vld [vmem:[#allocation2 + $0x2310] sm:$0xff]
    %v1594 = vld [vmem:[#allocation2 + $0x2318] sm:$0xff]
    %v1595 = vld [vmem:[#allocation2 + $0x2320] sm:$0xff]
    %v1596 = vld [vmem:[#allocation2 + $0x2328] sm:$0xff]
    %v1597 = vld [vmem:[#allocation2 + $0x2330] sm:$0xff]
    %v1598 = vld [vmem:[#allocation2 + $0x2338] sm:$0xff]
    %v1599 = vld [vmem:[#allocation2 + $0x2340] sm:$0xff]
    %v1600 = vld [vmem:[#allocation2 + $0x2348] sm:$0xff]
    %v1601 = vld [vmem:[#allocation2 + $0x2350] sm:$0xff]
    %v1602 = vld [vmem:[#allocation2 + $0x2358] sm:$0xff]
    %v1603 = vld [vmem:[#allocation2 + $0x2360] sm:$0xff]
    %v1604 = vld [vmem:[#allocation2 + $0x2368] sm:$0xff]
    %v1605 = vld [vmem:[#allocation2 + $0x2370] sm:$0xff]
    %v1606 = vld [vmem:[#allocation2 + $0x2378] sm:$0xff]
    %v1607 = vld [vmem:[#allocation2 + $0x2380] sm:$0xff]
    %v1608 = vld [vmem:[#allocation2 + $0x2388] sm:$0xff]
    %v1609 = vld [vmem:[#allocation2 + $0x2390] sm:$0xff]
    %v1610 = vld [vmem:[#allocation2 + $0x2398] sm:$0xff]
    %v1611 = vld [vmem:[#allocation2 + $0x23a0] sm:$0xff]
    %v1612 = vld [vmem:[#allocation2 + $0x23a8] sm:$0xff]
    %v1613 = vld [vmem:[#allocation2 + $0x23b0] sm:$0xff]
    %v1614 = vld [vmem:[#allocation2 + $0x23b8] sm:$0xff]
    %v1615 = vld [vmem:[#allocation2 + $0x23c0] sm:$0xff]
    %v1616 = vld [vmem:[#allocation2 + $0x23c8] sm:$0xff]
    %v1617 = vld [vmem:[#allocation2 + $0x23d0] sm:$0xff]
    %v1618 = vld [vmem:[#allocation2 + $0x23d8] sm:$0xff]
    %v1619 = vld [vmem:[#allocation2 + $0x23e0] sm:$0xff]
    %v1620 = vld [vmem:[#allocation2 + $0x23e8] sm:$0xff]
    %v1621 = vld [vmem:[#allocation2 + $0x23f0] sm:$0xff]
    %v1622 = vld [vmem:[#allocation2 + $0x23f8] sm:$0xff]
    %v1623 = vld [vmem:[#allocation2 + $0x2400] sm:$0xff]
    %v1624 = vld [vmem:[#allocation2 + $0x2408] sm:$0xff]
    %v1625 = vld [vmem:[#allocation2 + $0x2410] sm:$0xff]
    %v1626 = vld [vmem:[#allocation2 + $0x2418] sm:$0xff]
    %v1627 = vld [vmem:[#allocation2 + $0x2420] sm:$0xff]
    %v1628 = vld [vmem:[#allocation2 + $0x2428] sm:$0xff]
    %v1629 = vld [vmem:[#allocation2 + $0x2430] sm:$0xff]
    %v1630 = vld [vmem:[#allocation2 + $0x2438] sm:$0xff]
    %v1631 = vld [vmem:[#allocation2 + $0x2440] sm:$0xff]
    %v1632 = vld [vmem:[#allocation2 + $0x2448] sm:$0xff]
    %v1633 = vld [vmem:[#allocation2 + $0x2450] sm:$0xff]
    %v1634 = vld [vmem:[#allocation2 + $0x2458] sm:$0xff]
    %v1635 = vld [vmem:[#allocation2 + $0x2460] sm:$0xff]
    %v1636 = vld [vmem:[#allocation2 + $0x2468] sm:$0xff]
    %v1637 = vld [vmem:[#allocation2 + $0x2470] sm:$0xff]
    %v1638 = vld [vmem:[#allocation2 + $0x2478] sm:$0xff]
    %v1639 = vld [vmem:[#allocation2 + $0x2480] sm:$0xff]
    %v1640 = vld [vmem:[#allocation2 + $0x2488] sm:$0xff]
    %v1641 = vld [vmem:[#allocation2 + $0x2490] sm:$0xff]
    %v1642 = vld [vmem:[#allocation2 + $0x2498] sm:$0xff]
    %v1643 = vld [vmem:[#allocation2 + $0x24a0] sm:$0xff]
    %v1644 = vld [vmem:[#allocation2 + $0x24a8] sm:$0xff]
    %v1645 = vld [vmem:[#allocation2 + $0x24b0] sm:$0xff]
    %v1646 = vld [vmem:[#allocation2 + $0x24b8] sm:$0xff]
    %v1647 = vld [vmem:[#allocation2 + $0x24c0] sm:$0xff]
    %v1648 = vld [vmem:[#allocation2 + $0x24c8] sm:$0xff]
    %v1649 = vld [vmem:[#allocation2 + $0x24d0] sm:$0xff]
    %v1650 = vld [vmem:[#allocation2 + $0x24d8] sm:$0xff]
    %v1651 = vld [vmem:[#allocation2 + $0x24e0] sm:$0xff]
    %v1652 = vld [vmem:[#allocation2 + $0x24e8] sm:$0xff]
    %v1653 = vld [vmem:[#allocation2 + $0x24f0] sm:$0xff]
    %v1654 = vld [vmem:[#allocation2 + $0x24f8] sm:$0xff]
    %v1655 = vld [vmem:[#allocation2 + $0x2500] sm:$0xff]
    %v1656 = vld [vmem:[#allocation2 + $0x2508] sm:$0xff]
    %v1657 = vld [vmem:[#allocation2 + $0x2510] sm:$0xff]
    %v1658 = vld [vmem:[#allocation2 + $0x2518] sm:$0xff]
    %v1659 = vld [vmem:[#allocation2 + $0x2520] sm:$0xff]
    %v1660 = vld [vmem:[#allocation2 + $0x2528] sm:$0xff]
    %v1661 = vld [vmem:[#allocation2 + $0x2530] sm:$0xff]
    %v1662 = vld [vmem:[#allocation2 + $0x2538] sm:$0xff]
    %v1663 = vld [vmem:[#allocation2 + $0x2540] sm:$0xff]
    %v1664 = vld [vmem:[#allocation2 + $0x2548] sm:$0xff]
    %v1665 = vld [vmem:[#allocation2 + $0x2550] sm:$0xff]
    %v1666 = vld [vmem:[#allocation2 + $0x2558] sm:$0xff]
    %v1667 = vld [vmem:[#allocation2 + $0x2560] sm:$0xff]
    %v1668 = vld [vmem:[#allocation2 + $0x2568] sm:$0xff]
    %v1669 = vld [vmem:[#allocation2 + $0x2570] sm:$0xff]
    %v1670 = vld [vmem:[#allocation2 + $0x2578] sm:$0xff]
    %v1671 = vld [vmem:[#allocation2 + $0x2580] sm:$0xff]
    %v1672 = vld [vmem:[#allocation2 + $0x2588] sm:$0xff]
    %v1673 = vld [vmem:[#allocation2 + $0x2590] sm:$0xff]
    %v1674 = vld [vmem:[#allocation2 + $0x2598] sm:$0xff]
    %v1675 = vld [vmem:[#allocation2 + $0x25a0] sm:$0xff]
    %v1676 = vld [vmem:[#allocation2 + $0x25a8] sm:$0xff]
    %v1677 = vld [vmem:[#allocation2 + $0x25b0] sm:$0xff]
    %v1678 = vld [vmem:[#allocation2 + $0x25b8] sm:$0xff]
    %v1679 = vld [vmem:[#allocation2 + $0x25c0] sm:$0xff]
    %v1680 = vld [vmem:[#allocation2 + $0x25c8] sm:$0xff]
    %v1681 = vld [vmem:[#allocation2 + $0x25d0] sm:$0xff]
    %v1682 = vld [vmem:[#allocation2 + $0x25d8] sm:$0xff]
    %v1683 = vld [vmem:[#allocation2 + $0x25e0] sm:$0xff]
    %v1684 = vld [vmem:[#allocation2 + $0x25e8] sm:$0xff]
    %v1685 = vld [vmem:[#allocation2 + $0x25f0] sm:$0xff]
    %v1686 = vld [vmem:[#allocation2 + $0x25f8] sm:$0xff]
    %v1687 = vld [vmem:[#allocation2 + $0x2600] sm:$0xff]
    %v1688 = vld [vmem:[#allocation2 + $0x2608] sm:$0xff]
    %v1689 = vld [vmem:[#allocation2 + $0x2610] sm:$0xff]
    %v1690 = vld [vmem:[#allocation2 + $0x2618] sm:$0xff]
    %v1691 = vld [vmem:[#allocation2 + $0x2620] sm:$0xff]
    %v1692 = vld [vmem:[#allocation2 + $0x2628] sm:$0xff]
    %v1693 = vld [vmem:[#allocation2 + $0x2630] sm:$0xff]
    %v1694 = vld [vmem:[#allocation2 + $0x2638] sm:$0xff]
    %v1695 = vld [vmem:[#allocation2 + $0x2640] sm:$0xff]
    %v1696 = vld [vmem:[#allocation2 + $0x2648] sm:$0xff]
    %v1697 = vld [vmem:[#allocation2 + $0x2650] sm:$0xff]
    %v1698 = vld [vmem:[#allocation2 + $0x2658] sm:$0xff]
    %v1699 = vld [vmem:[#allocation2 + $0x2660] sm:$0xff]
    %v1700 = vld [vmem:[#allocation2 + $0x2668] sm:$0xff]
    %v1701 = vld [vmem:[#allocation2 + $0x2670] sm:$0xff]
    %v1702 = vld [vmem:[#allocation2 + $0x2678] sm:$0xff]
    %v1703 = vld [vmem:[#allocation2 + $0x2680] sm:$0xff]
    %v1704 = vld [vmem:[#allocation2 + $0x2688] sm:$0xff]
    %v1705 = vld [vmem:[#allocation2 + $0x2690] sm:$0xff]
    %v1706 = vld [vmem:[#allocation2 + $0x2698] sm:$0xff]
    %v1707 = vld [vmem:[#allocation2 + $0x26a0] sm:$0xff]
    %v1708 = vld [vmem:[#allocation2 + $0x26a8] sm:$0xff]
    %v1709 = vld [vmem:[#allocation2 + $0x26b0] sm:$0xff]
    %v1710 = vld [vmem:[#allocation2 + $0x26b8] sm:$0xff]
    %v1711 = vld [vmem:[#allocation2 + $0x26c0] sm:$0xff]
    %v1712 = vld [vmem:[#allocation2 + $0x26c8] sm:$0xff]
    %v1713 = vld [vmem:[#allocation2 + $0x26d0] sm:$0xff]
    %v1714 = vld [vmem:[#allocation2 + $0x26d8] sm:$0xff]
    %v1715 = vld [vmem:[#allocation2 + $0x26e0] sm:$0xff]
    %v1716 = vld [vmem:[#allocation2 + $0x26e8] sm:$0xff]
    %v1717 = vld [vmem:[#allocation2 + $0x26f0] sm:$0xff]
    %v1718 = vld [vmem:[#allocation2 + $0x26f8] sm:$0xff]
    %v1719 = vld [vmem:[#allocation2 + $0x2700] sm:$0xff]
    %v1720 = vld [vmem:[#allocation2 + $0x2708] sm:$0xff]
    %v1721 = vld [vmem:[#allocation2 + $0x2710] sm:$0xff]
    %v1722 = vld [vmem:[#allocation2 + $0x2718] sm:$0xff]
    %v1723 = vld [vmem:[#allocation2 + $0x2720] sm:$0xff]
    %v1724 = vld [vmem:[#allocation2 + $0x2728] sm:$0xff]
    %v1725 = vld [vmem:[#allocation2 + $0x2730] sm:$0xff]
    %v1726 = vld [vmem:[#allocation2 + $0x2738] sm:$0xff]
    %v1727 = vld [vmem:[#allocation2 + $0x2740] sm:$0xff]
    %v1728 = vld [vmem:[#allocation2 + $0x2748] sm:$0xff]
    %v1729 = vld [vmem:[#allocation2 + $0x2750] sm:$0xff]
    %v1730 = vld [vmem:[#allocation2 + $0x2758] sm:$0xff]
    %v1731 = vld [vmem:[#allocation2 + $0x2760] sm:$0xff]
    %v1732 = vld [vmem:[#allocation2 + $0x2768] sm:$0xff]
    %v1733 = vld [vmem:[#allocation2 + $0x2770] sm:$0xff]
    %v1734 = vld [vmem:[#allocation2 + $0x2778] sm:$0xff]
    %v1735 = vld [vmem:[#allocation2 + $0x2780] sm:$0xff]
    %v1736 = vld [vmem:[#allocation2 + $0x2788] sm:$0xff]
    %v1737 = vld [vmem:[#allocation2 + $0x2790] sm:$0xff]
    %v1738 = vld [vmem:[#allocation2 + $0x2798] sm:$0xff]
    %v1739 = vld [vmem:[#allocation2 + $0x27a0] sm:$0xff]
    %v1740 = vld [vmem:[#allocation2 + $0x27a8] sm:$0xff]
    %v1741 = vld [vmem:[#allocation2 + $0x27b0] sm:$0xff]
    %v1742 = vld [vmem:[#allocation2 + $0x27b8] sm:$0xff]
    %v1743 = vld [vmem:[#allocation2 + $0x27c0] sm:$0xff]
    %v1744 = vld [vmem:[#allocation2 + $0x27c8] sm:$0xff]
    %v1745 = vld [vmem:[#allocation2 + $0x27d0] sm:$0xff]
    %v1746 = vld [vmem:[#allocation2 + $0x27d8] sm:$0xff]
    %v1747 = vld [vmem:[#allocation2 + $0x27e0] sm:$0xff]
    %v1748 = vld [vmem:[#allocation2 + $0x27e8] sm:$0xff]
    %v1749 = vld [vmem:[#allocation2 + $0x27f0] sm:$0xff]
    %v1750 = vld [vmem:[#allocation2 + $0x27f8] sm:$0xff]
    %v3031 = vunpack.c.l.b16 %v471
    %v3032 = vunpack.c.h.b16 %v471
    %v3033 = vunpack.c.l.b16 %v472
    %v3034 = vunpack.c.h.b16 %v472
    %v3035 = vunpack.c.l.b16 %v473
    %v3036 = vunpack.c.h.b16 %v473
    %v3037 = vunpack.c.l.b16 %v474
    %v3038 = vunpack.c.h.b16 %v474
    %v3039 = vunpack.c.l.b16 %v475
    %v3040 = vunpack.c.h.b16 %v475
    %v3041 = vunpack.c.l.b16 %v476
    %v3042 = vunpack.c.h.b16 %v476
    %v3043 = vunpack.c.l.b16 %v477
    %v3044 = vunpack.c.h.b16 %v477
    %v3045 = vunpack.c.l.b16 %v478
    %v3046 = vunpack.c.h.b16 %v478
    %v3047 = vunpack.c.l.b16 %v479
    %v3048 = vunpack.c.h.b16 %v479
    %v3049 = vunpack.c.l.b16 %v480
    %v3050 = vunpack.c.h.b16 %v480
    %v3051 = vunpack.c.l.b16 %v481
    %v3052 = vunpack.c.h.b16 %v481
    %v3053 = vunpack.c.l.b16 %v482
    %v3054 = vunpack.c.h.b16 %v482
    %v3055 = vunpack.c.l.b16 %v483
    %v3056 = vunpack.c.h.b16 %v483
    %v3057 = vunpack.c.l.b16 %v484
    %v3058 = vunpack.c.h.b16 %v484
    %v3059 = vunpack.c.l.b16 %v485
    %v3060 = vunpack.c.h.b16 %v485
    %v3061 = vunpack.c.l.b16 %v486
    %v3062 = vunpack.c.h.b16 %v486
    %v3063 = vunpack.c.l.b16 %v487
    %v3064 = vunpack.c.h.b16 %v487
    %v3065 = vunpack.c.l.b16 %v488
    %v3066 = vunpack.c.h.b16 %v488
    %v3067 = vunpack.c.l.b16 %v489
    %v3068 = vunpack.c.h.b16 %v489
    %v3069 = vunpack.c.l.b16 %v490
    %v3070 = vunpack.c.h.b16 %v490
    %v3071 = vunpack.c.l.b16 %v491
    %v3072 = vunpack.c.h.b16 %v491
    %v3073 = vunpack.c.l.b16 %v492
    %v3074 = vunpack.c.h.b16 %v492
    %v3075 = vunpack.c.l.b16 %v493
    %v3076 = vunpack.c.h.b16 %v493
    %v3077 = vunpack.c.l.b16 %v494
    %v3078 = vunpack.c.h.b16 %v494
    %v3079 = vunpack.c.l.b16 %v495
    %v3080 = vunpack.c.h.b16 %v495
    %v3081 = vunpack.c.l.b16 %v496
    %v3082 = vunpack.c.h.b16 %v496
    %v3083 = vunpack.c.l.b16 %v497
    %v3084 = vunpack.c.h.b16 %v497
    %v3085 = vunpack.c.l.b16 %v498
    %v3086 = vunpack.c.h.b16 %v498
    %v3087 = vunpack.c.l.b16 %v499
    %v3088 = vunpack.c.h.b16 %v499
    %v3089 = vunpack.c.l.b16 %v500
    %v3090 = vunpack.c.h.b16 %v500
    %v3091 = vunpack.c.l.b16 %v501
    %v3092 = vunpack.c.h.b16 %v501
    %v3093 = vunpack.c.l.b16 %v502
    %v3094 = vunpack.c.h.b16 %v502
    %v3095 = vunpack.c.l.b16 %v503
    %v3096 = vunpack.c.h.b16 %v503
    %v3097 = vunpack.c.l.b16 %v504
    %v3098 = vunpack.c.h.b16 %v504
    %v3099 = vunpack.c.l.b16 %v505
    %v3100 = vunpack.c.h.b16 %v505
    %v3101 = vunpack.c.l.b16 %v506
    %v3102 = vunpack.c.h.b16 %v506
    %v3103 = vunpack.c.l.b16 %v507
    %v3104 = vunpack.c.h.b16 %v507
    %v3105 = vunpack.c.l.b16 %v508
    %v3106 = vunpack.c.h.b16 %v508
    %v3107 = vunpack.c.l.b16 %v509
    %v3108 = vunpack.c.h.b16 %v509
    %v3109 = vunpack.c.l.b16 %v510
    %v3110 = vunpack.c.h.b16 %v510
    %v3111 = vunpack.c.l.b16 %v511
    %v3112 = vunpack.c.h.b16 %v511
    %v3113 = vunpack.c.l.b16 %v512
    %v3114 = vunpack.c.h.b16 %v512
    %v3115 = vunpack.c.l.b16 %v513
    %v3116 = vunpack.c.h.b16 %v513
    %v3117 = vunpack.c.l.b16 %v514
    %v3118 = vunpack.c.h.b16 %v514
    %v3119 = vunpack.c.l.b16 %v515
    %v3120 = vunpack.c.h.b16 %v515
    %v3121 = vunpack.c.l.b16 %v516
    %v3122 = vunpack.c.h.b16 %v516
    %v3123 = vunpack.c.l.b16 %v517
    %v3124 = vunpack.c.h.b16 %v517
    %v3125 = vunpack.c.l.b16 %v518
    %v3126 = vunpack.c.h.b16 %v518
    %v3127 = vunpack.c.l.b16 %v519
    %v3128 = vunpack.c.h.b16 %v519
    %v3129 = vunpack.c.l.b16 %v520
    %v3130 = vunpack.c.h.b16 %v520
    %v3131 = vunpack.c.l.b16 %v521
    %v3132 = vunpack.c.h.b16 %v521
    %v3133 = vunpack.c.l.b16 %v522
    %v3134 = vunpack.c.h.b16 %v522
    %v3135 = vunpack.c.l.b16 %v523
    %v3136 = vunpack.c.h.b16 %v523
    %v3137 = vunpack.c.l.b16 %v524
    %v3138 = vunpack.c.h.b16 %v524
    %v3139 = vunpack.c.l.b16 %v525
    %v3140 = vunpack.c.h.b16 %v525
    %v3141 = vunpack.c.l.b16 %v526
    %v3142 = vunpack.c.h.b16 %v526
    %v3143 = vunpack.c.l.b16 %v527
    %v3144 = vunpack.c.h.b16 %v527
    %v3145 = vunpack.c.l.b16 %v528
    %v3146 = vunpack.c.h.b16 %v528
    %v3147 = vunpack.c.l.b16 %v529
    %v3148 = vunpack.c.h.b16 %v529
    %v3149 = vunpack.c.l.b16 %v530
    %v3150 = vunpack.c.h.b16 %v530
    %v3151 = vunpack.c.l.b16 %v531
    %v3152 = vunpack.c.h.b16 %v531
    %v3153 = vunpack.c.l.b16 %v532
    %v3154 = vunpack.c.h.b16 %v532
    %v3155 = vunpack.c.l.b16 %v533
    %v3156 = vunpack.c.h.b16 %v533
    %v3157 = vunpack.c.l.b16 %v534
    %v3158 = vunpack.c.h.b16 %v534
    %v3159 = vunpack.c.l.b16 %v535
    %v3160 = vunpack.c.h.b16 %v535
    %v3161 = vunpack.c.l.b16 %v536
    %v3162 = vunpack.c.h.b16 %v536
    %v3163 = vunpack.c.l.b16 %v537
    %v3164 = vunpack.c.h.b16 %v537
    %v3165 = vunpack.c.l.b16 %v538
    %v3166 = vunpack.c.h.b16 %v538
    %v3167 = vunpack.c.l.b16 %v539
    %v3168 = vunpack.c.h.b16 %v539
    %v3169 = vunpack.c.l.b16 %v540
    %v3170 = vunpack.c.h.b16 %v540
    %v3171 = vunpack.c.l.b16 %v541
    %v3172 = vunpack.c.h.b16 %v541
    %v3173 = vunpack.c.l.b16 %v542
    %v3174 = vunpack.c.h.b16 %v542
    %v3175 = vunpack.c.l.b16 %v543
    %v3176 = vunpack.c.h.b16 %v543
    %v3177 = vunpack.c.l.b16 %v544
    %v3178 = vunpack.c.h.b16 %v544
    %v3179 = vunpack.c.l.b16 %v545
    %v3180 = vunpack.c.h.b16 %v545
    %v3181 = vunpack.c.l.b16 %v546
    %v3182 = vunpack.c.h.b16 %v546
    %v3183 = vunpack.c.l.b16 %v547
    %v3184 = vunpack.c.h.b16 %v547
    %v3185 = vunpack.c.l.b16 %v548
    %v3186 = vunpack.c.h.b16 %v548
    %v3187 = vunpack.c.l.b16 %v549
    %v3188 = vunpack.c.h.b16 %v549
    %v3189 = vunpack.c.l.b16 %v550
    %v3190 = vunpack.c.h.b16 %v550
    %v3191 = vunpack.c.l.b16 %v551
    %v3192 = vunpack.c.h.b16 %v551
    %v3193 = vunpack.c.l.b16 %v552
    %v3194 = vunpack.c.h.b16 %v552
    %v3195 = vunpack.c.l.b16 %v553
    %v3196 = vunpack.c.h.b16 %v553
    %v3197 = vunpack.c.l.b16 %v554
    %v3198 = vunpack.c.h.b16 %v554
    %v3199 = vunpack.c.l.b16 %v555
    %v3200 = vunpack.c.h.b16 %v555
    %v3201 = vunpack.c.l.b16 %v556
    %v3202 = vunpack.c.h.b16 %v556
    %v3203 = vunpack.c.l.b16 %v557
    %v3204 = vunpack.c.h.b16 %v557
    %v3205 = vunpack.c.l.b16 %v558
    %v3206 = vunpack.c.h.b16 %v558
    %v3207 = vunpack.c.l.b16 %v559
    %v3208 = vunpack.c.h.b16 %v559
    %v3209 = vunpack.c.l.b16 %v560
    %v3210 = vunpack.c.h.b16 %v560
    %v3211 = vunpack.c.l.b16 %v561
    %v3212 = vunpack.c.h.b16 %v561
    %v3213 = vunpack.c.l.b16 %v562
    %v3214 = vunpack.c.h.b16 %v562
    %v3215 = vunpack.c.l.b16 %v563
    %v3216 = vunpack.c.h.b16 %v563
    %v3217 = vunpack.c.l.b16 %v564
    %v3218 = vunpack.c.h.b16 %v564
    %v3219 = vunpack.c.l.b16 %v565
    %v3220 = vunpack.c.h.b16 %v565
    %v3221 = vunpack.c.l.b16 %v566
    %v3222 = vunpack.c.h.b16 %v566
    %v3223 = vunpack.c.l.b16 %v567
    %v3224 = vunpack.c.h.b16 %v567
    %v3225 = vunpack.c.l.b16 %v568
    %v3226 = vunpack.c.h.b16 %v568
    %v3227 = vunpack.c.l.b16 %v569
    %v3228 = vunpack.c.h.b16 %v569
    %v3229 = vunpack.c.l.b16 %v570
    %v3230 = vunpack.c.h.b16 %v570
    %v3231 = vunpack.c.l.b16 %v571
    %v3232 = vunpack.c.h.b16 %v571
    %v3233 = vunpack.c.l.b16 %v572
    %v3234 = vunpack.c.h.b16 %v572
    %v3235 = vunpack.c.l.b16 %v573
    %v3236 = vunpack.c.h.b16 %v573
    %v3237 = vunpack.c.l.b16 %v574
    %v3238 = vunpack.c.h.b16 %v574
    %v3239 = vunpack.c.l.b16 %v575
    %v3240 = vunpack.c.h.b16 %v575
    %v3241 = vunpack.c.l.b16 %v576
    %v3242 = vunpack.c.h.b16 %v576
    %v3243 = vunpack.c.l.b16 %v577
    %v3244 = vunpack.c.h.b16 %v577
    %v3245 = vunpack.c.l.b16 %v578
    %v3246 = vunpack.c.h.b16 %v578
    %v3247 = vunpack.c.l.b16 %v579
    %v3248 = vunpack.c.h.b16 %v579
    %v3249 = vunpack.c.l.b16 %v580
    %v3250 = vunpack.c.h.b16 %v580
    %v3251 = vunpack.c.l.b16 %v581
    %v3252 = vunpack.c.h.b16 %v581
    %v3253 = vunpack.c.l.b16 %v582
    %v3254 = vunpack.c.h.b16 %v582
    %v3255 = vunpack.c.l.b16 %v583
    %v3256 = vunpack.c.h.b16 %v583
    %v3257 = vunpack.c.l.b16 %v584
    %v3258 = vunpack.c.h.b16 %v584
    %v3259 = vunpack.c.l.b16 %v585
    %v3260 = vunpack.c.h.b16 %v585
    %v3261 = vunpack.c.l.b16 %v586
    %v3262 = vunpack.c.h.b16 %v586
    %v3263 = vunpack.c.l.b16 %v587
    %v3264 = vunpack.c.h.b16 %v587
    %v3265 = vunpack.c.l.b16 %v588
    %v3266 = vunpack.c.h.b16 %v588
    %v3267 = vunpack.c.l.b16 %v589
    %v3268 = vunpack.c.h.b16 %v589
    %v3269 = vunpack.c.l.b16 %v590
    %v3270 = vunpack.c.h.b16 %v590
    %v3271 = vunpack.c.l.b16 %v591
    %v3272 = vunpack.c.h.b16 %v591
    %v3273 = vunpack.c.l.b16 %v592
    %v3274 = vunpack.c.h.b16 %v592
    %v3275 = vunpack.c.l.b16 %v593
    %v3276 = vunpack.c.h.b16 %v593
    %v3277 = vunpack.c.l.b16 %v594
    %v3278 = vunpack.c.h.b16 %v594
    %v3279 = vunpack.c.l.b16 %v595
    %v3280 = vunpack.c.h.b16 %v595
    %v3281 = vunpack.c.l.b16 %v596
    %v3282 = vunpack.c.h.b16 %v596
    %v3283 = vunpack.c.l.b16 %v597
    %v3284 = vunpack.c.h.b16 %v597
    %v3285 = vunpack.c.l.b16 %v598
    %v3286 = vunpack.c.h.b16 %v598
    %v3287 = vunpack.c.l.b16 %v599
    %v3288 = vunpack.c.h.b16 %v599
    %v3289 = vunpack.c.l.b16 %v600
    %v3290 = vunpack.c.h.b16 %v600
    %v3291 = vunpack.c.l.b16 %v601
    %v3292 = vunpack.c.h.b16 %v601
    %v3293 = vunpack.c.l.b16 %v602
    %v3294 = vunpack.c.h.b16 %v602
    %v3295 = vunpack.c.l.b16 %v603
    %v3296 = vunpack.c.h.b16 %v603
    %v3297 = vunpack.c.l.b16 %v604
    %v3298 = vunpack.c.h.b16 %v604
    %v3299 = vunpack.c.l.b16 %v605
    %v3300 = vunpack.c.h.b16 %v605
    %v3301 = vunpack.c.l.b16 %v606
    %v3302 = vunpack.c.h.b16 %v606
    %v3303 = vunpack.c.l.b16 %v607
    %v3304 = vunpack.c.h.b16 %v607
    %v3305 = vunpack.c.l.b16 %v608
    %v3306 = vunpack.c.h.b16 %v608
    %v3307 = vunpack.c.l.b16 %v609
    %v3308 = vunpack.c.h.b16 %v609
    %v3309 = vunpack.c.l.b16 %v610
    %v3310 = vunpack.c.h.b16 %v610
    %v3311 = vunpack.c.l.b16 %v611
    %v3312 = vunpack.c.h.b16 %v611
    %v3313 = vunpack.c.l.b16 %v612
    %v3314 = vunpack.c.h.b16 %v612
    %v3315 = vunpack.c.l.b16 %v613
    %v3316 = vunpack.c.h.b16 %v613
    %v3317 = vunpack.c.l.b16 %v614
    %v3318 = vunpack.c.h.b16 %v614
    %v3319 = vunpack.c.l.b16 %v615
    %v3320 = vunpack.c.h.b16 %v615
    %v3321 = vunpack.c.l.b16 %v616
    %v3322 = vunpack.c.h.b16 %v616
    %v3323 = vunpack.c.l.b16 %v617
    %v3324 = vunpack.c.h.b16 %v617
    %v3325 = vunpack.c.l.b16 %v618
    %v3326 = vunpack.c.h.b16 %v618
    %v3327 = vunpack.c.l.b16 %v619
    %v3328 = vunpack.c.h.b16 %v619
    %v3329 = vunpack.c.l.b16 %v620
    %v3330 = vunpack.c.h.b16 %v620
    %v3331 = vunpack.c.l.b16 %v621
    %v3332 = vunpack.c.h.b16 %v621
    %v3333 = vunpack.c.l.b16 %v622
    %v3334 = vunpack.c.h.b16 %v622
    %v3335 = vunpack.c.l.b16 %v623
    %v3336 = vunpack.c.h.b16 %v623
    %v3337 = vunpack.c.l.b16 %v624
    %v3338 = vunpack.c.h.b16 %v624
    %v3339 = vunpack.c.l.b16 %v625
    %v3340 = vunpack.c.h.b16 %v625
    %v3341 = vunpack.c.l.b16 %v626
    %v3342 = vunpack.c.h.b16 %v626
    %v3343 = vunpack.c.l.b16 %v627
    %v3344 = vunpack.c.h.b16 %v627
    %v3345 = vunpack.c.l.b16 %v628
    %v3346 = vunpack.c.h.b16 %v628
    %v3347 = vunpack.c.l.b16 %v629
    %v3348 = vunpack.c.h.b16 %v629
    %v3349 = vunpack.c.l.b16 %v630
    %v3350 = vunpack.c.h.b16 %v630
    %v3351 = vunpack.c.l.b16 %v631
    %v3352 = vunpack.c.h.b16 %v631
    %v3353 = vunpack.c.l.b16 %v632
    %v3354 = vunpack.c.h.b16 %v632
    %v3355 = vunpack.c.l.b16 %v633
    %v3356 = vunpack.c.h.b16 %v633
    %v3357 = vunpack.c.l.b16 %v634
    %v3358 = vunpack.c.h.b16 %v634
    %v3359 = vunpack.c.l.b16 %v635
    %v3360 = vunpack.c.h.b16 %v635
    %v3361 = vunpack.c.l.b16 %v636
    %v3362 = vunpack.c.h.b16 %v636
    %v3363 = vunpack.c.l.b16 %v637
    %v3364 = vunpack.c.h.b16 %v637
    %v3365 = vunpack.c.l.b16 %v638
    %v3366 = vunpack.c.h.b16 %v638
    %v3367 = vunpack.c.l.b16 %v639
    %v3368 = vunpack.c.h.b16 %v639
    %v3369 = vunpack.c.l.b16 %v640
    %v3370 = vunpack.c.h.b16 %v640
    %v3371 = vunpack.c.l.b16 %v641
    %v3372 = vunpack.c.h.b16 %v641
    %v3373 = vunpack.c.l.b16 %v642
    %v3374 = vunpack.c.h.b16 %v642
    %v3375 = vunpack.c.l.b16 %v643
    %v3376 = vunpack.c.h.b16 %v643
    %v3377 = vunpack.c.l.b16 %v644
    %v3378 = vunpack.c.h.b16 %v644
    %v3379 = vunpack.c.l.b16 %v645
    %v3380 = vunpack.c.h.b16 %v645
    %v3381 = vunpack.c.l.b16 %v646
    %v3382 = vunpack.c.h.b16 %v646
    %v3383 = vunpack.c.l.b16 %v647
    %v3384 = vunpack.c.h.b16 %v647
    %v3385 = vunpack.c.l.b16 %v648
    %v3386 = vunpack.c.h.b16 %v648
    %v3387 = vunpack.c.l.b16 %v649
    %v3388 = vunpack.c.h.b16 %v649
    %v3389 = vunpack.c.l.b16 %v650
    %v3390 = vunpack.c.h.b16 %v650
    %v3391 = vunpack.c.l.b16 %v651
    %v3392 = vunpack.c.h.b16 %v651
    %v3393 = vunpack.c.l.b16 %v652
    %v3394 = vunpack.c.h.b16 %v652
    %v3395 = vunpack.c.l.b16 %v653
    %v3396 = vunpack.c.h.b16 %v653
    %v3397 = vunpack.c.l.b16 %v654
    %v3398 = vunpack.c.h.b16 %v654
    %v3399 = vunpack.c.l.b16 %v655
    %v3400 = vunpack.c.h.b16 %v655
    %v3401 = vunpack.c.l.b16 %v656
    %v3402 = vunpack.c.h.b16 %v656
    %v3403 = vunpack.c.l.b16 %v657
    %v3404 = vunpack.c.h.b16 %v657
    %v3405 = vunpack.c.l.b16 %v658
    %v3406 = vunpack.c.h.b16 %v658
    %v3407 = vunpack.c.l.b16 %v659
    %v3408 = vunpack.c.h.b16 %v659
    %v3409 = vunpack.c.l.b16 %v660
    %v3410 = vunpack.c.h.b16 %v660
    %v3411 = vunpack.c.l.b16 %v661
    %v3412 = vunpack.c.h.b16 %v661
    %v3413 = vunpack.c.l.b16 %v662
    %v3414 = vunpack.c.h.b16 %v662
    %v3415 = vunpack.c.l.b16 %v663
    %v3416 = vunpack.c.h.b16 %v663
    %v3417 = vunpack.c.l.b16 %v664
    %v3418 = vunpack.c.h.b16 %v664
    %v3419 = vunpack.c.l.b16 %v665
    %v3420 = vunpack.c.h.b16 %v665
    %v3421 = vunpack.c.l.b16 %v666
    %v3422 = vunpack.c.h.b16 %v666
    %v3423 = vunpack.c.l.b16 %v667
    %v3424 = vunpack.c.h.b16 %v667
    %v3425 = vunpack.c.l.b16 %v668
    %v3426 = vunpack.c.h.b16 %v668
    %v3427 = vunpack.c.l.b16 %v669
    %v3428 = vunpack.c.h.b16 %v669
    %v3429 = vunpack.c.l.b16 %v670
    %v3430 = vunpack.c.h.b16 %v670
    %v3431 = vunpack.c.l.b16 %v671
    %v3432 = vunpack.c.h.b16 %v671
    %v3433 = vunpack.c.l.b16 %v672
    %v3434 = vunpack.c.h.b16 %v672
    %v3435 = vunpack.c.l.b16 %v673
    %v3436 = vunpack.c.h.b16 %v673
    %v3437 = vunpack.c.l.b16 %v674
    %v3438 = vunpack.c.h.b16 %v674
    %v3439 = vunpack.c.l.b16 %v675
    %v3440 = vunpack.c.h.b16 %v675
    %v3441 = vunpack.c.l.b16 %v676
    %v3442 = vunpack.c.h.b16 %v676
    %v3443 = vunpack.c.l.b16 %v677
    %v3444 = vunpack.c.h.b16 %v677
    %v3445 = vunpack.c.l.b16 %v678
    %v3446 = vunpack.c.h.b16 %v678
    %v3447 = vunpack.c.l.b16 %v679
    %v3448 = vunpack.c.h.b16 %v679
    %v3449 = vunpack.c.l.b16 %v680
    %v3450 = vunpack.c.h.b16 %v680
    %v3451 = vunpack.c.l.b16 %v681
    %v3452 = vunpack.c.h.b16 %v681
    %v3453 = vunpack.c.l.b16 %v682
    %v3454 = vunpack.c.h.b16 %v682
    %v3455 = vunpack.c.l.b16 %v683
    %v3456 = vunpack.c.h.b16 %v683
    %v3457 = vunpack.c.l.b16 %v684
    %v3458 = vunpack.c.h.b16 %v684
    %v3459 = vunpack.c.l.b16 %v685
    %v3460 = vunpack.c.h.b16 %v685
    %v3461 = vunpack.c.l.b16 %v686
    %v3462 = vunpack.c.h.b16 %v686
    %v3463 = vunpack.c.l.b16 %v687
    %v3464 = vunpack.c.h.b16 %v687
    %v3465 = vunpack.c.l.b16 %v688
    %v3466 = vunpack.c.h.b16 %v688
    %v3467 = vunpack.c.l.b16 %v689
    %v3468 = vunpack.c.h.b16 %v689
    %v3469 = vunpack.c.l.b16 %v690
    %v3470 = vunpack.c.h.b16 %v690
    %v3471 = vunpack.c.l.b16 %v691
    %v3472 = vunpack.c.h.b16 %v691
    %v3473 = vunpack.c.l.b16 %v692
    %v3474 = vunpack.c.h.b16 %v692
    %v3475 = vunpack.c.l.b16 %v693
    %v3476 = vunpack.c.h.b16 %v693
    %v3477 = vunpack.c.l.b16 %v694
    %v3478 = vunpack.c.h.b16 %v694
    %v3479 = vunpack.c.l.b16 %v695
    %v3480 = vunpack.c.h.b16 %v695
    %v3481 = vunpack.c.l.b16 %v696
    %v3482 = vunpack.c.h.b16 %v696
    %v3483 = vunpack.c.l.b16 %v697
    %v3484 = vunpack.c.h.b16 %v697
    %v3485 = vunpack.c.l.b16 %v698
    %v3486 = vunpack.c.h.b16 %v698
    %v3487 = vunpack.c.l.b16 %v699
    %v3488 = vunpack.c.h.b16 %v699
    %v3489 = vunpack.c.l.b16 %v700
    %v3490 = vunpack.c.h.b16 %v700
    %v3491 = vunpack.c.l.b16 %v701
    %v3492 = vunpack.c.h.b16 %v701
    %v3493 = vunpack.c.l.b16 %v702
    %v3494 = vunpack.c.h.b16 %v702
    %v3495 = vunpack.c.l.b16 %v703
    %v3496 = vunpack.c.h.b16 %v703
    %v3497 = vunpack.c.l.b16 %v704
    %v3498 = vunpack.c.h.b16 %v704
    %v3499 = vunpack.c.l.b16 %v705
    %v3500 = vunpack.c.h.b16 %v705
    %v3501 = vunpack.c.l.b16 %v706
    %v3502 = vunpack.c.h.b16 %v706
    %v3503 = vunpack.c.l.b16 %v707
    %v3504 = vunpack.c.h.b16 %v707
    %v3505 = vunpack.c.l.b16 %v708
    %v3506 = vunpack.c.h.b16 %v708
    %v3507 = vunpack.c.l.b16 %v709
    %v3508 = vunpack.c.h.b16 %v709
    %v3509 = vunpack.c.l.b16 %v710
    %v3510 = vunpack.c.h.b16 %v710
    %v3511 = vunpack.c.l.b16 %v711
    %v3512 = vunpack.c.h.b16 %v711
    %v3513 = vunpack.c.l.b16 %v712
    %v3514 = vunpack.c.h.b16 %v712
    %v3515 = vunpack.c.l.b16 %v713
    %v3516 = vunpack.c.h.b16 %v713
    %v3517 = vunpack.c.l.b16 %v714
    %v3518 = vunpack.c.h.b16 %v714
    %v3519 = vunpack.c.l.b16 %v715
    %v3520 = vunpack.c.h.b16 %v715
    %v3521 = vunpack.c.l.b16 %v716
    %v3522 = vunpack.c.h.b16 %v716
    %v3523 = vunpack.c.l.b16 %v717
    %v3524 = vunpack.c.h.b16 %v717
    %v3525 = vunpack.c.l.b16 %v718
    %v3526 = vunpack.c.h.b16 %v718
    %v3527 = vunpack.c.l.b16 %v719
    %v3528 = vunpack.c.h.b16 %v719
    %v3529 = vunpack.c.l.b16 %v720
    %v3530 = vunpack.c.h.b16 %v720
    %v3531 = vunpack.c.l.b16 %v721
    %v3532 = vunpack.c.h.b16 %v721
    %v3533 = vunpack.c.l.b16 %v722
    %v3534 = vunpack.c.h.b16 %v722
    %v3535 = vunpack.c.l.b16 %v723
    %v3536 = vunpack.c.h.b16 %v723
    %v3537 = vunpack.c.l.b16 %v724
    %v3538 = vunpack.c.h.b16 %v724
    %v3539 = vunpack.c.l.b16 %v725
    %v3540 = vunpack.c.h.b16 %v725
    %v3541 = vunpack.c.l.b16 %v726
    %v3542 = vunpack.c.h.b16 %v726
    %v3543 = vunpack.c.l.b16 %v727
    %v3544 = vunpack.c.h.b16 %v727
    %v3545 = vunpack.c.l.b16 %v728
    %v3546 = vunpack.c.h.b16 %v728
    %v3547 = vunpack.c.l.b16 %v729
    %v3548 = vunpack.c.h.b16 %v729
    %v3549 = vunpack.c.l.b16 %v730
    %v3550 = vunpack.c.h.b16 %v730
    %v3551 = vunpack.c.l.b16 %v731
    %v3552 = vunpack.c.h.b16 %v731
    %v3553 = vunpack.c.l.b16 %v732
    %v3554 = vunpack.c.h.b16 %v732
    %v3555 = vunpack.c.l.b16 %v733
    %v3556 = vunpack.c.h.b16 %v733
    %v3557 = vunpack.c.l.b16 %v734
    %v3558 = vunpack.c.h.b16 %v734
    %v3559 = vunpack.c.l.b16 %v735
    %v3560 = vunpack.c.h.b16 %v735
    %v3561 = vunpack.c.l.b16 %v736
    %v3562 = vunpack.c.h.b16 %v736
    %v3563 = vunpack.c.l.b16 %v737
    %v3564 = vunpack.c.h.b16 %v737
    %v3565 = vunpack.c.l.b16 %v738
    %v3566 = vunpack.c.h.b16 %v738
    %v3567 = vunpack.c.l.b16 %v739
    %v3568 = vunpack.c.h.b16 %v739
    %v3569 = vunpack.c.l.b16 %v740
    %v3570 = vunpack.c.h.b16 %v740
    %v3571 = vunpack.c.l.b16 %v741
    %v3572 = vunpack.c.h.b16 %v741
    %v3573 = vunpack.c.l.b16 %v742
    %v3574 = vunpack.c.h.b16 %v742
    %v3575 = vunpack.c.l.b16 %v743
    %v3576 = vunpack.c.h.b16 %v743
    %v3577 = vunpack.c.l.b16 %v744
    %v3578 = vunpack.c.h.b16 %v744
    %v3579 = vunpack.c.l.b16 %v745
    %v3580 = vunpack.c.h.b16 %v745
    %v3581 = vunpack.c.l.b16 %v746
    %v3582 = vunpack.c.h.b16 %v746
    %v3583 = vunpack.c.l.b16 %v747
    %v3584 = vunpack.c.h.b16 %v747
    %v3585 = vunpack.c.l.b16 %v748
    %v3586 = vunpack.c.h.b16 %v748
    %v3587 = vunpack.c.l.b16 %v749
    %v3588 = vunpack.c.h.b16 %v749
    %v3589 = vunpack.c.l.b16 %v750
    %v3590 = vunpack.c.h.b16 %v750
    %v3591 = vunpack.c.l.b16 %v751
    %v3592 = vunpack.c.h.b16 %v751
    %v3593 = vunpack.c.l.b16 %v752
    %v3594 = vunpack.c.h.b16 %v752
    %v3595 = vunpack.c.l.b16 %v753
    %v3596 = vunpack.c.h.b16 %v753
    %v3597 = vunpack.c.l.b16 %v754
    %v3598 = vunpack.c.h.b16 %v754
    %v3599 = vunpack.c.l.b16 %v755
    %v3600 = vunpack.c.h.b16 %v755
    %v3601 = vunpack.c.l.b16 %v756
    %v3602 = vunpack.c.h.b16 %v756
    %v3603 = vunpack.c.l.b16 %v757
    %v3604 = vunpack.c.h.b16 %v757
    %v3605 = vunpack.c.l.b16 %v758
    %v3606 = vunpack.c.h.b16 %v758
    %v3607 = vunpack.c.l.b16 %v759
    %v3608 = vunpack.c.h.b16 %v759
    %v3609 = vunpack.c.l.b16 %v760
    %v3610 = vunpack.c.h.b16 %v760
    %v3611 = vunpack.c.l.b16 %v761
    %v3612 = vunpack.c.h.b16 %v761
    %v3613 = vunpack.c.l.b16 %v762
    %v3614 = vunpack.c.h.b16 %v762
    %v3615 = vunpack.c.l.b16 %v763
    %v3616 = vunpack.c.h.b16 %v763
    %v3617 = vunpack.c.l.b16 %v764
    %v3618 = vunpack.c.h.b16 %v764
    %v3619 = vunpack.c.l.b16 %v765
    %v3620 = vunpack.c.h.b16 %v765
    %v3621 = vunpack.c.l.b16 %v766
    %v3622 = vunpack.c.h.b16 %v766
    %v3623 = vunpack.c.l.b16 %v767
    %v3624 = vunpack.c.h.b16 %v767
    %v3625 = vunpack.c.l.b16 %v768
    %v3626 = vunpack.c.h.b16 %v768
    %v3627 = vunpack.c.l.b16 %v769
    %v3628 = vunpack.c.h.b16 %v769
    %v3629 = vunpack.c.l.b16 %v770
    %v3630 = vunpack.c.h.b16 %v770
    %v3631 = vunpack.c.l.b16 %v771
    %v3632 = vunpack.c.h.b16 %v771
    %v3633 = vunpack.c.l.b16 %v772
    %v3634 = vunpack.c.h.b16 %v772
    %v3635 = vunpack.c.l.b16 %v773
    %v3636 = vunpack.c.h.b16 %v773
    %v3637 = vunpack.c.l.b16 %v774
    %v3638 = vunpack.c.h.b16 %v774
    %v3639 = vunpack.c.l.b16 %v775
    %v3640 = vunpack.c.h.b16 %v775
    %v3641 = vunpack.c.l.b16 %v776
    %v3642 = vunpack.c.h.b16 %v776
    %v3643 = vunpack.c.l.b16 %v777
    %v3644 = vunpack.c.h.b16 %v777
    %v3645 = vunpack.c.l.b16 %v778
    %v3646 = vunpack.c.h.b16 %v778
    %v3647 = vunpack.c.l.b16 %v779
    %v3648 = vunpack.c.h.b16 %v779
    %v3649 = vunpack.c.l.b16 %v780
    %v3650 = vunpack.c.h.b16 %v780
    %v3651 = vunpack.c.l.b16 %v781
    %v3652 = vunpack.c.h.b16 %v781
    %v3653 = vunpack.c.l.b16 %v782
    %v3654 = vunpack.c.h.b16 %v782
    %v3655 = vunpack.c.l.b16 %v783
    %v3656 = vunpack.c.h.b16 %v783
    %v3657 = vunpack.c.l.b16 %v784
    %v3658 = vunpack.c.h.b16 %v784
    %v3659 = vunpack.c.l.b16 %v785
    %v3660 = vunpack.c.h.b16 %v785
    %v3661 = vunpack.c.l.b16 %v786
    %v3662 = vunpack.c.h.b16 %v786
    %v3663 = vunpack.c.l.b16 %v787
    %v3664 = vunpack.c.h.b16 %v787
    %v3665 = vunpack.c.l.b16 %v788
    %v3666 = vunpack.c.h.b16 %v788
    %v3667 = vunpack.c.l.b16 %v789
    %v3668 = vunpack.c.h.b16 %v789
    %v3669 = vunpack.c.l.b16 %v790
    %v3670 = vunpack.c.h.b16 %v790
    %v3671 = vunpack.c.l.b16 %v791
    %v3672 = vunpack.c.h.b16 %v791
    %v3673 = vunpack.c.l.b16 %v792
    %v3674 = vunpack.c.h.b16 %v792
    %v3675 = vunpack.c.l.b16 %v793
    %v3676 = vunpack.c.h.b16 %v793
    %v3677 = vunpack.c.l.b16 %v794
    %v3678 = vunpack.c.h.b16 %v794
    %v3679 = vunpack.c.l.b16 %v795
    %v3680 = vunpack.c.h.b16 %v795
    %v3681 = vunpack.c.l.b16 %v796
    %v3682 = vunpack.c.h.b16 %v796
    %v3683 = vunpack.c.l.b16 %v797
    %v3684 = vunpack.c.h.b16 %v797
    %v3685 = vunpack.c.l.b16 %v798
    %v3686 = vunpack.c.h.b16 %v798
    %v3687 = vunpack.c.l.b16 %v799
    %v3688 = vunpack.c.h.b16 %v799
    %v3689 = vunpack.c.l.b16 %v800
    %v3690 = vunpack.c.h.b16 %v800
    %v3691 = vunpack.c.l.b16 %v801
    %v3692 = vunpack.c.h.b16 %v801
    %v3693 = vunpack.c.l.b16 %v802
    %v3694 = vunpack.c.h.b16 %v802
    %v3695 = vunpack.c.l.b16 %v803
    %v3696 = vunpack.c.h.b16 %v803
    %v3697 = vunpack.c.l.b16 %v804
    %v3698 = vunpack.c.h.b16 %v804
    %v3699 = vunpack.c.l.b16 %v805
    %v3700 = vunpack.c.h.b16 %v805
    %v3701 = vunpack.c.l.b16 %v806
    %v3702 = vunpack.c.h.b16 %v806
    %v3703 = vunpack.c.l.b16 %v807
    %v3704 = vunpack.c.h.b16 %v807
    %v3705 = vunpack.c.l.b16 %v808
    %v3706 = vunpack.c.h.b16 %v808
    %v3707 = vunpack.c.l.b16 %v809
    %v3708 = vunpack.c.h.b16 %v809
    %v3709 = vunpack.c.l.b16 %v810
    %v3710 = vunpack.c.h.b16 %v810
    %v3711 = vunpack.c.l.b16 %v811
    %v3712 = vunpack.c.h.b16 %v811
    %v3713 = vunpack.c.l.b16 %v812
    %v3714 = vunpack.c.h.b16 %v812
    %v3715 = vunpack.c.l.b16 %v813
    %v3716 = vunpack.c.h.b16 %v813
    %v3717 = vunpack.c.l.b16 %v814
    %v3718 = vunpack.c.h.b16 %v814
    %v3719 = vunpack.c.l.b16 %v815
    %v3720 = vunpack.c.h.b16 %v815
    %v3721 = vunpack.c.l.b16 %v816
    %v3722 = vunpack.c.h.b16 %v816
    %v3723 = vunpack.c.l.b16 %v817
    %v3724 = vunpack.c.h.b16 %v817
    %v3725 = vunpack.c.l.b16 %v818
    %v3726 = vunpack.c.h.b16 %v818
    %v3727 = vunpack.c.l.b16 %v819
    %v3728 = vunpack.c.h.b16 %v819
    %v3729 = vunpack.c.l.b16 %v820
    %v3730 = vunpack.c.h.b16 %v820
    %v3731 = vunpack.c.l.b16 %v821
    %v3732 = vunpack.c.h.b16 %v821
    %v3733 = vunpack.c.l.b16 %v822
    %v3734 = vunpack.c.h.b16 %v822
    %v3735 = vunpack.c.l.b16 %v823
    %v3736 = vunpack.c.h.b16 %v823
    %v3737 = vunpack.c.l.b16 %v824
    %v3738 = vunpack.c.h.b16 %v824
    %v3739 = vunpack.c.l.b16 %v825
    %v3740 = vunpack.c.h.b16 %v825
    %v3741 = vunpack.c.l.b16 %v826
    %v3742 = vunpack.c.h.b16 %v826
    %v3743 = vunpack.c.l.b16 %v827
    %v3744 = vunpack.c.h.b16 %v827
    %v3745 = vunpack.c.l.b16 %v828
    %v3746 = vunpack.c.h.b16 %v828
    %v3747 = vunpack.c.l.b16 %v829
    %v3748 = vunpack.c.h.b16 %v829
    %v3749 = vunpack.c.l.b16 %v830
    %v3750 = vunpack.c.h.b16 %v830
    %v3751 = vunpack.c.l.b16 %v831
    %v3752 = vunpack.c.h.b16 %v831
    %v3753 = vunpack.c.l.b16 %v832
    %v3754 = vunpack.c.h.b16 %v832
    %v3755 = vunpack.c.l.b16 %v833
    %v3756 = vunpack.c.h.b16 %v833
    %v3757 = vunpack.c.l.b16 %v834
    %v3758 = vunpack.c.h.b16 %v834
    %v3759 = vunpack.c.l.b16 %v835
    %v3760 = vunpack.c.h.b16 %v835
    %v3761 = vunpack.c.l.b16 %v836
    %v3762 = vunpack.c.h.b16 %v836
    %v3763 = vunpack.c.l.b16 %v837
    %v3764 = vunpack.c.h.b16 %v837
    %v3765 = vunpack.c.l.b16 %v838
    %v3766 = vunpack.c.h.b16 %v838
    %v3767 = vunpack.c.l.b16 %v839
    %v3768 = vunpack.c.h.b16 %v839
    %v3769 = vunpack.c.l.b16 %v840
    %v3770 = vunpack.c.h.b16 %v840
    %v3771 = vunpack.c.l.b16 %v841
    %v3772 = vunpack.c.h.b16 %v841
    %v3773 = vunpack.c.l.b16 %v842
    %v3774 = vunpack.c.h.b16 %v842
    %v3775 = vunpack.c.l.b16 %v843
    %v3776 = vunpack.c.h.b16 %v843
    %v3777 = vunpack.c.l.b16 %v844
    %v3778 = vunpack.c.h.b16 %v844
    %v3779 = vunpack.c.l.b16 %v845
    %v3780 = vunpack.c.h.b16 %v845
    %v3781 = vunpack.c.l.b16 %v846
    %v3782 = vunpack.c.h.b16 %v846
    %v3783 = vunpack.c.l.b16 %v847
    %v3784 = vunpack.c.h.b16 %v847
    %v3785 = vunpack.c.l.b16 %v848
    %v3786 = vunpack.c.h.b16 %v848
    %v3787 = vunpack.c.l.b16 %v849
    %v3788 = vunpack.c.h.b16 %v849
    %v3789 = vunpack.c.l.b16 %v850
    %v3790 = vunpack.c.h.b16 %v850
    %v3791 = vunpack.c.l.b16 %v851
    %v3792 = vunpack.c.h.b16 %v851
    %v3793 = vunpack.c.l.b16 %v852
    %v3794 = vunpack.c.h.b16 %v852
    %v3795 = vunpack.c.l.b16 %v853
    %v3796 = vunpack.c.h.b16 %v853
    %v3797 = vunpack.c.l.b16 %v854
    %v3798 = vunpack.c.h.b16 %v854
    %v3799 = vunpack.c.l.b16 %v855
    %v3800 = vunpack.c.h.b16 %v855
    %v3801 = vunpack.c.l.b16 %v856
    %v3802 = vunpack.c.h.b16 %v856
    %v3803 = vunpack.c.l.b16 %v857
    %v3804 = vunpack.c.h.b16 %v857
    %v3805 = vunpack.c.l.b16 %v858
    %v3806 = vunpack.c.h.b16 %v858
    %v3807 = vunpack.c.l.b16 %v859
    %v3808 = vunpack.c.h.b16 %v859
    %v3809 = vunpack.c.l.b16 %v860
    %v3810 = vunpack.c.h.b16 %v860
    %v3811 = vunpack.c.l.b16 %v861
    %v3812 = vunpack.c.h.b16 %v861
    %v3813 = vunpack.c.l.b16 %v862
    %v3814 = vunpack.c.h.b16 %v862
    %v3815 = vunpack.c.l.b16 %v863
    %v3816 = vunpack.c.h.b16 %v863
    %v3817 = vunpack.c.l.b16 %v864
    %v3818 = vunpack.c.h.b16 %v864
    %v3819 = vunpack.c.l.b16 %v865
    %v3820 = vunpack.c.h.b16 %v865
    %v3821 = vunpack.c.l.b16 %v866
    %v3822 = vunpack.c.h.b16 %v866
    %v3823 = vunpack.c.l.b16 %v867
    %v3824 = vunpack.c.h.b16 %v867
    %v3825 = vunpack.c.l.b16 %v868
    %v3826 = vunpack.c.h.b16 %v868
    %v3827 = vunpack.c.l.b16 %v869
    %v3828 = vunpack.c.h.b16 %v869
    %v3829 = vunpack.c.l.b16 %v870
    %v3830 = vunpack.c.h.b16 %v870
    %v3831 = vunpack.c.l.b16 %v871
    %v3832 = vunpack.c.h.b16 %v871
    %v3833 = vunpack.c.l.b16 %v872
    %v3834 = vunpack.c.h.b16 %v872
    %v3835 = vunpack.c.l.b16 %v873
    %v3836 = vunpack.c.h.b16 %v873
    %v3837 = vunpack.c.l.b16 %v874
    %v3838 = vunpack.c.h.b16 %v874
    %v3839 = vunpack.c.l.b16 %v875
    %v3840 = vunpack.c.h.b16 %v875
    %v3841 = vunpack.c.l.b16 %v876
    %v3842 = vunpack.c.h.b16 %v876
    %v3843 = vunpack.c.l.b16 %v877
    %v3844 = vunpack.c.h.b16 %v877
    %v3845 = vunpack.c.l.b16 %v878
    %v3846 = vunpack.c.h.b16 %v878
    %v3847 = vunpack.c.l.b16 %v879
    %v3848 = vunpack.c.h.b16 %v879
    %v3849 = vunpack.c.l.b16 %v880
    %v3850 = vunpack.c.h.b16 %v880
    %v3851 = vunpack.c.l.b16 %v881
    %v3852 = vunpack.c.h.b16 %v881
    %v3853 = vunpack.c.l.b16 %v882
    %v3854 = vunpack.c.h.b16 %v882
    %v3855 = vunpack.c.l.b16 %v883
    %v3856 = vunpack.c.h.b16 %v883
    %v3857 = vunpack.c.l.b16 %v884
    %v3858 = vunpack.c.h.b16 %v884
    %v3859 = vunpack.c.l.b16 %v885
    %v3860 = vunpack.c.h.b16 %v885
    %v3861 = vunpack.c.l.b16 %v886
    %v3862 = vunpack.c.h.b16 %v886
    %v3863 = vunpack.c.l.b16 %v887
    %v3864 = vunpack.c.h.b16 %v887
    %v3865 = vunpack.c.l.b16 %v888
    %v3866 = vunpack.c.h.b16 %v888
    %v3867 = vunpack.c.l.b16 %v889
    %v3868 = vunpack.c.h.b16 %v889
    %v3869 = vunpack.c.l.b16 %v890
    %v3870 = vunpack.c.h.b16 %v890
    %v3871 = vunpack.c.l.b16 %v891
    %v3872 = vunpack.c.h.b16 %v891
    %v3873 = vunpack.c.l.b16 %v892
    %v3874 = vunpack.c.h.b16 %v892
    %v3875 = vunpack.c.l.b16 %v893
    %v3876 = vunpack.c.h.b16 %v893
    %v3877 = vunpack.c.l.b16 %v894
    %v3878 = vunpack.c.h.b16 %v894
    %v3879 = vunpack.c.l.b16 %v895
    %v3880 = vunpack.c.h.b16 %v895
    %v3881 = vunpack.c.l.b16 %v896
    %v3882 = vunpack.c.h.b16 %v896
    %v3883 = vunpack.c.l.b16 %v897
    %v3884 = vunpack.c.h.b16 %v897
    %v3885 = vunpack.c.l.b16 %v898
    %v3886 = vunpack.c.h.b16 %v898
    %v3887 = vunpack.c.l.b16 %v899
    %v3888 = vunpack.c.h.b16 %v899
    %v3889 = vunpack.c.l.b16 %v900
    %v3890 = vunpack.c.h.b16 %v900
    %v3891 = vunpack.c.l.b16 %v901
    %v3892 = vunpack.c.h.b16 %v901
    %v3893 = vunpack.c.l.b16 %v902
    %v3894 = vunpack.c.h.b16 %v902
    %v3895 = vunpack.c.l.b16 %v903
    %v3896 = vunpack.c.h.b16 %v903
    %v3897 = vunpack.c.l.b16 %v904
    %v3898 = vunpack.c.h.b16 %v904
    %v3899 = vunpack.c.l.b16 %v905
    %v3900 = vunpack.c.h.b16 %v905
    %v3901 = vunpack.c.l.b16 %v906
    %v3902 = vunpack.c.h.b16 %v906
    %v3903 = vunpack.c.l.b16 %v907
    %v3904 = vunpack.c.h.b16 %v907
    %v3905 = vunpack.c.l.b16 %v908
    %v3906 = vunpack.c.h.b16 %v908
    %v3907 = vunpack.c.l.b16 %v909
    %v3908 = vunpack.c.h.b16 %v909
    %v3909 = vunpack.c.l.b16 %v910
    %v3910 = vunpack.c.h.b16 %v910
    %v3911 = vunpack.c.l.b16 %v911
    %v3912 = vunpack.c.h.b16 %v911
    %v3913 = vunpack.c.l.b16 %v912
    %v3914 = vunpack.c.h.b16 %v912
    %v3915 = vunpack.c.l.b16 %v913
    %v3916 = vunpack.c.h.b16 %v913
    %v3917 = vunpack.c.l.b16 %v914
    %v3918 = vunpack.c.h.b16 %v914
    %v3919 = vunpack.c.l.b16 %v915
    %v3920 = vunpack.c.h.b16 %v915
    %v3921 = vunpack.c.l.b16 %v916
    %v3922 = vunpack.c.h.b16 %v916
    %v3923 = vunpack.c.l.b16 %v917
    %v3924 = vunpack.c.h.b16 %v917
    %v3925 = vunpack.c.l.b16 %v918
    %v3926 = vunpack.c.h.b16 %v918
    %v3927 = vunpack.c.l.b16 %v919
    %v3928 = vunpack.c.h.b16 %v919
    %v3929 = vunpack.c.l.b16 %v920
    %v3930 = vunpack.c.h.b16 %v920
    %v3931 = vunpack.c.l.b16 %v921
    %v3932 = vunpack.c.h.b16 %v921
    %v3933 = vunpack.c.l.b16 %v922
    %v3934 = vunpack.c.h.b16 %v922
    %v3935 = vunpack.c.l.b16 %v923
    %v3936 = vunpack.c.h.b16 %v923
    %v3937 = vunpack.c.l.b16 %v924
    %v3938 = vunpack.c.h.b16 %v924
    %v3939 = vunpack.c.l.b16 %v925
    %v3940 = vunpack.c.h.b16 %v925
    %v3941 = vunpack.c.l.b16 %v926
    %v3942 = vunpack.c.h.b16 %v926
    %v3943 = vunpack.c.l.b16 %v927
    %v3944 = vunpack.c.h.b16 %v927
    %v3945 = vunpack.c.l.b16 %v928
    %v3946 = vunpack.c.h.b16 %v928
    %v3947 = vunpack.c.l.b16 %v929
    %v3948 = vunpack.c.h.b16 %v929
    %v3949 = vunpack.c.l.b16 %v930
    %v3950 = vunpack.c.h.b16 %v930
    %v3951 = vunpack.c.l.b16 %v931
    %v3952 = vunpack.c.h.b16 %v931
    %v3953 = vunpack.c.l.b16 %v932
    %v3954 = vunpack.c.h.b16 %v932
    %v3955 = vunpack.c.l.b16 %v933
    %v3956 = vunpack.c.h.b16 %v933
    %v3957 = vunpack.c.l.b16 %v934
    %v3958 = vunpack.c.h.b16 %v934
    %v3959 = vunpack.c.l.b16 %v935
    %v3960 = vunpack.c.h.b16 %v935
    %v3961 = vunpack.c.l.b16 %v936
    %v3962 = vunpack.c.h.b16 %v936
    %v3963 = vunpack.c.l.b16 %v937
    %v3964 = vunpack.c.h.b16 %v937
    %v3965 = vunpack.c.l.b16 %v938
    %v3966 = vunpack.c.h.b16 %v938
    %v3967 = vunpack.c.l.b16 %v939
    %v3968 = vunpack.c.h.b16 %v939
    %v3969 = vunpack.c.l.b16 %v940
    %v3970 = vunpack.c.h.b16 %v940
    %v3971 = vunpack.c.l.b16 %v941
    %v3972 = vunpack.c.h.b16 %v941
    %v3973 = vunpack.c.l.b16 %v942
    %v3974 = vunpack.c.h.b16 %v942
    %v3975 = vunpack.c.l.b16 %v943
    %v3976 = vunpack.c.h.b16 %v943
    %v3977 = vunpack.c.l.b16 %v944
    %v3978 = vunpack.c.h.b16 %v944
    %v3979 = vunpack.c.l.b16 %v945
    %v3980 = vunpack.c.h.b16 %v945
    %v3981 = vunpack.c.l.b16 %v946
    %v3982 = vunpack.c.h.b16 %v946
    %v3983 = vunpack.c.l.b16 %v947
    %v3984 = vunpack.c.h.b16 %v947
    %v3985 = vunpack.c.l.b16 %v948
    %v3986 = vunpack.c.h.b16 %v948
    %v3987 = vunpack.c.l.b16 %v949
    %v3988 = vunpack.c.h.b16 %v949
    %v3989 = vunpack.c.l.b16 %v950
    %v3990 = vunpack.c.h.b16 %v950
    %v3991 = vunpack.c.l.b16 %v951
    %v3992 = vunpack.c.h.b16 %v951
    %v3993 = vunpack.c.l.b16 %v952
    %v3994 = vunpack.c.h.b16 %v952
    %v3995 = vunpack.c.l.b16 %v953
    %v3996 = vunpack.c.h.b16 %v953
    %v3997 = vunpack.c.l.b16 %v954
    %v3998 = vunpack.c.h.b16 %v954
    %v3999 = vunpack.c.l.b16 %v955
    %v4000 = vunpack.c.h.b16 %v955
    %v4001 = vunpack.c.l.b16 %v956
    %v4002 = vunpack.c.h.b16 %v956
    %v4003 = vunpack.c.l.b16 %v957
    %v4004 = vunpack.c.h.b16 %v957
    %v4005 = vunpack.c.l.b16 %v958
    %v4006 = vunpack.c.h.b16 %v958
    %v4007 = vunpack.c.l.b16 %v959
    %v4008 = vunpack.c.h.b16 %v959
    %v4009 = vunpack.c.l.b16 %v960
    %v4010 = vunpack.c.h.b16 %v960
    %v4011 = vunpack.c.l.b16 %v961
    %v4012 = vunpack.c.h.b16 %v961
    %v4013 = vunpack.c.l.b16 %v962
    %v4014 = vunpack.c.h.b16 %v962
    %v4015 = vunpack.c.l.b16 %v963
    %v4016 = vunpack.c.h.b16 %v963
    %v4017 = vunpack.c.l.b16 %v964
    %v4018 = vunpack.c.h.b16 %v964
    %v4019 = vunpack.c.l.b16 %v965
    %v4020 = vunpack.c.h.b16 %v965
    %v4021 = vunpack.c.l.b16 %v966
    %v4022 = vunpack.c.h.b16 %v966
    %v4023 = vunpack.c.l.b16 %v967
    %v4024 = vunpack.c.h.b16 %v967
    %v4025 = vunpack.c.l.b16 %v968
    %v4026 = vunpack.c.h.b16 %v968
    %v4027 = vunpack.c.l.b16 %v969
    %v4028 = vunpack.c.h.b16 %v969
    %v4029 = vunpack.c.l.b16 %v970
    %v4030 = vunpack.c.h.b16 %v970
    %v4031 = vunpack.c.l.b16 %v971
    %v4032 = vunpack.c.h.b16 %v971
    %v4033 = vunpack.c.l.b16 %v972
    %v4034 = vunpack.c.h.b16 %v972
    %v4035 = vunpack.c.l.b16 %v973
    %v4036 = vunpack.c.h.b16 %v973
    %v4037 = vunpack.c.l.b16 %v974
    %v4038 = vunpack.c.h.b16 %v974
    %v4039 = vunpack.c.l.b16 %v975
    %v4040 = vunpack.c.h.b16 %v975
    %v4041 = vunpack.c.l.b16 %v976
    %v4042 = vunpack.c.h.b16 %v976
    %v4043 = vunpack.c.l.b16 %v977
    %v4044 = vunpack.c.h.b16 %v977
    %v4045 = vunpack.c.l.b16 %v978
    %v4046 = vunpack.c.h.b16 %v978
    %v4047 = vunpack.c.l.b16 %v979
    %v4048 = vunpack.c.h.b16 %v979
    %v4049 = vunpack.c.l.b16 %v980
    %v4050 = vunpack.c.h.b16 %v980
    %v4051 = vunpack.c.l.b16 %v981
    %v4052 = vunpack.c.h.b16 %v981
    %v4053 = vunpack.c.l.b16 %v982
    %v4054 = vunpack.c.h.b16 %v982
    %v4055 = vunpack.c.l.b16 %v983
    %v4056 = vunpack.c.h.b16 %v983
    %v4057 = vunpack.c.l.b16 %v984
    %v4058 = vunpack.c.h.b16 %v984
    %v4059 = vunpack.c.l.b16 %v985
    %v4060 = vunpack.c.h.b16 %v985
    %v4061 = vunpack.c.l.b16 %v986
    %v4062 = vunpack.c.h.b16 %v986
    %v4063 = vunpack.c.l.b16 %v987
    %v4064 = vunpack.c.h.b16 %v987
    %v4065 = vunpack.c.l.b16 %v988
    %v4066 = vunpack.c.h.b16 %v988
    %v4067 = vunpack.c.l.b16 %v989
    %v4068 = vunpack.c.h.b16 %v989
    %v4069 = vunpack.c.l.b16 %v990
    %v4070 = vunpack.c.h.b16 %v990
    %v4071 = vunpack.c.l.b16 %v991
    %v4072 = vunpack.c.h.b16 %v991
    %v4073 = vunpack.c.l.b16 %v992
    %v4074 = vunpack.c.h.b16 %v992
    %v4075 = vunpack.c.l.b16 %v993
    %v4076 = vunpack.c.h.b16 %v993
    %v4077 = vunpack.c.l.b16 %v994
    %v4078 = vunpack.c.h.b16 %v994
    %v4079 = vunpack.c.l.b16 %v995
    %v4080 = vunpack.c.h.b16 %v995
    %v4081 = vunpack.c.l.b16 %v996
    %v4082 = vunpack.c.h.b16 %v996
    %v4083 = vunpack.c.l.b16 %v997
    %v4084 = vunpack.c.h.b16 %v997
    %v4085 = vunpack.c.l.b16 %v998
    %v4086 = vunpack.c.h.b16 %v998
    %v4087 = vunpack.c.l.b16 %v999
    %v4088 = vunpack.c.h.b16 %v999
    %v4089 = vunpack.c.l.b16 %v1000
    %v4090 = vunpack.c.h.b16 %v1000
    %v4091 = vunpack.c.l.b16 %v1001
    %v4092 = vunpack.c.h.b16 %v1001
    %v4093 = vunpack.c.l.b16 %v1002
    %v4094 = vunpack.c.h.b16 %v1002
    %v4095 = vunpack.c.l.b16 %v1003
    %v4096 = vunpack.c.h.b16 %v1003
    %v4097 = vunpack.c.l.b16 %v1004
    %v4098 = vunpack.c.h.b16 %v1004
    %v4099 = vunpack.c.l.b16 %v1005
    %v4100 = vunpack.c.h.b16 %v1005
    %v4101 = vunpack.c.l.b16 %v1006
    %v4102 = vunpack.c.h.b16 %v1006
    %v4103 = vunpack.c.l.b16 %v1007
    %v4104 = vunpack.c.h.b16 %v1007
    %v4105 = vunpack.c.l.b16 %v1008
    %v4106 = vunpack.c.h.b16 %v1008
    %v4107 = vunpack.c.l.b16 %v1009
    %v4108 = vunpack.c.h.b16 %v1009
    %v4109 = vunpack.c.l.b16 %v1010
    %v4110 = vunpack.c.h.b16 %v1010
    %v4111 = vunpack.c.l.b16 %v1011
    %v4112 = vunpack.c.h.b16 %v1011
    %v4113 = vunpack.c.l.b16 %v1012
    %v4114 = vunpack.c.h.b16 %v1012
    %v4115 = vunpack.c.l.b16 %v1013
    %v4116 = vunpack.c.h.b16 %v1013
    %v4117 = vunpack.c.l.b16 %v1014
    %v4118 = vunpack.c.h.b16 %v1014
    %v4119 = vunpack.c.l.b16 %v1015
    %v4120 = vunpack.c.h.b16 %v1015
    %v4121 = vunpack.c.l.b16 %v1016
    %v4122 = vunpack.c.h.b16 %v1016
    %v4123 = vunpack.c.l.b16 %v1017
    %v4124 = vunpack.c.h.b16 %v1017
    %v4125 = vunpack.c.l.b16 %v1018
    %v4126 = vunpack.c.h.b16 %v1018
    %v4127 = vunpack.c.l.b16 %v1019
    %v4128 = vunpack.c.h.b16 %v1019
    %v4129 = vunpack.c.l.b16 %v1020
    %v4130 = vunpack.c.h.b16 %v1020
    %v4131 = vunpack.c.l.b16 %v1021
    %v4132 = vunpack.c.h.b16 %v1021
    %v4133 = vunpack.c.l.b16 %v1022
    %v4134 = vunpack.c.h.b16 %v1022
    %v4135 = vunpack.c.l.b16 %v1023
    %v4136 = vunpack.c.h.b16 %v1023
    %v4137 = vunpack.c.l.b16 %v1024
    %v4138 = vunpack.c.h.b16 %v1024
    %v4139 = vunpack.c.l.b16 %v1025
    %v4140 = vunpack.c.h.b16 %v1025
    %v4141 = vunpack.c.l.b16 %v1026
    %v4142 = vunpack.c.h.b16 %v1026
    %v4143 = vunpack.c.l.b16 %v1027
    %v4144 = vunpack.c.h.b16 %v1027
    %v4145 = vunpack.c.l.b16 %v1028
    %v4146 = vunpack.c.h.b16 %v1028
    %v4147 = vunpack.c.l.b16 %v1029
    %v4148 = vunpack.c.h.b16 %v1029
    %v4149 = vunpack.c.l.b16 %v1030
    %v4150 = vunpack.c.h.b16 %v1030
    %v4151 = vunpack.c.l.b16 %v1031
    %v4152 = vunpack.c.h.b16 %v1031
    %v4153 = vunpack.c.l.b16 %v1032
    %v4154 = vunpack.c.h.b16 %v1032
    %v4155 = vunpack.c.l.b16 %v1033
    %v4156 = vunpack.c.h.b16 %v1033
    %v4157 = vunpack.c.l.b16 %v1034
    %v4158 = vunpack.c.h.b16 %v1034
    %v4159 = vunpack.c.l.b16 %v1035
    %v4160 = vunpack.c.h.b16 %v1035
    %v4161 = vunpack.c.l.b16 %v1036
    %v4162 = vunpack.c.h.b16 %v1036
    %v4163 = vunpack.c.l.b16 %v1037
    %v4164 = vunpack.c.h.b16 %v1037
    %v4165 = vunpack.c.l.b16 %v1038
    %v4166 = vunpack.c.h.b16 %v1038
    %v4167 = vunpack.c.l.b16 %v1039
    %v4168 = vunpack.c.h.b16 %v1039
    %v4169 = vunpack.c.l.b16 %v1040
    %v4170 = vunpack.c.h.b16 %v1040
    %v4171 = vunpack.c.l.b16 %v1041
    %v4172 = vunpack.c.h.b16 %v1041
    %v4173 = vunpack.c.l.b16 %v1042
    %v4174 = vunpack.c.h.b16 %v1042
    %v4175 = vunpack.c.l.b16 %v1043
    %v4176 = vunpack.c.h.b16 %v1043
    %v4177 = vunpack.c.l.b16 %v1044
    %v4178 = vunpack.c.h.b16 %v1044
    %v4179 = vunpack.c.l.b16 %v1045
    %v4180 = vunpack.c.h.b16 %v1045
    %v4181 = vunpack.c.l.b16 %v1046
    %v4182 = vunpack.c.h.b16 %v1046
    %v4183 = vunpack.c.l.b16 %v1047
    %v4184 = vunpack.c.h.b16 %v1047
    %v4185 = vunpack.c.l.b16 %v1048
    %v4186 = vunpack.c.h.b16 %v1048
    %v4187 = vunpack.c.l.b16 %v1049
    %v4188 = vunpack.c.h.b16 %v1049
    %v4189 = vunpack.c.l.b16 %v1050
    %v4190 = vunpack.c.h.b16 %v1050
    %v4191 = vunpack.c.l.b16 %v1051
    %v4192 = vunpack.c.h.b16 %v1051
    %v4193 = vunpack.c.l.b16 %v1052
    %v4194 = vunpack.c.h.b16 %v1052
    %v4195 = vunpack.c.l.b16 %v1053
    %v4196 = vunpack.c.h.b16 %v1053
    %v4197 = vunpack.c.l.b16 %v1054
    %v4198 = vunpack.c.h.b16 %v1054
    %v4199 = vunpack.c.l.b16 %v1055
    %v4200 = vunpack.c.h.b16 %v1055
    %v4201 = vunpack.c.l.b16 %v1056
    %v4202 = vunpack.c.h.b16 %v1056
    %v4203 = vunpack.c.l.b16 %v1057
    %v4204 = vunpack.c.h.b16 %v1057
    %v4205 = vunpack.c.l.b16 %v1058
    %v4206 = vunpack.c.h.b16 %v1058
    %v4207 = vunpack.c.l.b16 %v1059
    %v4208 = vunpack.c.h.b16 %v1059
    %v4209 = vunpack.c.l.b16 %v1060
    %v4210 = vunpack.c.h.b16 %v1060
    %v4211 = vunpack.c.l.b16 %v1061
    %v4212 = vunpack.c.h.b16 %v1061
    %v4213 = vunpack.c.l.b16 %v1062
    %v4214 = vunpack.c.h.b16 %v1062
    %v4215 = vunpack.c.l.b16 %v1063
    %v4216 = vunpack.c.h.b16 %v1063
    %v4217 = vunpack.c.l.b16 %v1064
    %v4218 = vunpack.c.h.b16 %v1064
    %v4219 = vunpack.c.l.b16 %v1065
    %v4220 = vunpack.c.h.b16 %v1065
    %v4221 = vunpack.c.l.b16 %v1066
    %v4222 = vunpack.c.h.b16 %v1066
    %v4223 = vunpack.c.l.b16 %v1067
    %v4224 = vunpack.c.h.b16 %v1067
    %v4225 = vunpack.c.l.b16 %v1068
    %v4226 = vunpack.c.h.b16 %v1068
    %v4227 = vunpack.c.l.b16 %v1069
    %v4228 = vunpack.c.h.b16 %v1069
    %v4229 = vunpack.c.l.b16 %v1070
    %v4230 = vunpack.c.h.b16 %v1070
    %v4231 = vunpack.c.l.b16 %v1071
    %v4232 = vunpack.c.h.b16 %v1071
    %v4233 = vunpack.c.l.b16 %v1072
    %v4234 = vunpack.c.h.b16 %v1072
    %v4235 = vunpack.c.l.b16 %v1073
    %v4236 = vunpack.c.h.b16 %v1073
    %v4237 = vunpack.c.l.b16 %v1074
    %v4238 = vunpack.c.h.b16 %v1074
    %v4239 = vunpack.c.l.b16 %v1075
    %v4240 = vunpack.c.h.b16 %v1075
    %v4241 = vunpack.c.l.b16 %v1076
    %v4242 = vunpack.c.h.b16 %v1076
    %v4243 = vunpack.c.l.b16 %v1077
    %v4244 = vunpack.c.h.b16 %v1077
    %v4245 = vunpack.c.l.b16 %v1078
    %v4246 = vunpack.c.h.b16 %v1078
    %v4247 = vunpack.c.l.b16 %v1079
    %v4248 = vunpack.c.h.b16 %v1079
    %v4249 = vunpack.c.l.b16 %v1080
    %v4250 = vunpack.c.h.b16 %v1080
    %v4251 = vunpack.c.l.b16 %v1081
    %v4252 = vunpack.c.h.b16 %v1081
    %v4253 = vunpack.c.l.b16 %v1082
    %v4254 = vunpack.c.h.b16 %v1082
    %v4255 = vunpack.c.l.b16 %v1083
    %v4256 = vunpack.c.h.b16 %v1083
    %v4257 = vunpack.c.l.b16 %v1084
    %v4258 = vunpack.c.h.b16 %v1084
    %v4259 = vunpack.c.l.b16 %v1085
    %v4260 = vunpack.c.h.b16 %v1085
    %v4261 = vunpack.c.l.b16 %v1086
    %v4262 = vunpack.c.h.b16 %v1086
    %v4263 = vunpack.c.l.b16 %v1087
    %v4264 = vunpack.c.h.b16 %v1087
    %v4265 = vunpack.c.l.b16 %v1088
    %v4266 = vunpack.c.h.b16 %v1088
    %v4267 = vunpack.c.l.b16 %v1089
    %v4268 = vunpack.c.h.b16 %v1089
    %v4269 = vunpack.c.l.b16 %v1090
    %v4270 = vunpack.c.h.b16 %v1090
    %v4271 = vunpack.c.l.b16 %v1091
    %v4272 = vunpack.c.h.b16 %v1091
    %v4273 = vunpack.c.l.b16 %v1092
    %v4274 = vunpack.c.h.b16 %v1092
    %v4275 = vunpack.c.l.b16 %v1093
    %v4276 = vunpack.c.h.b16 %v1093
    %v4277 = vunpack.c.l.b16 %v1094
    %v4278 = vunpack.c.h.b16 %v1094
    %v4279 = vunpack.c.l.b16 %v1095
    %v4280 = vunpack.c.h.b16 %v1095
    %v4281 = vunpack.c.l.b16 %v1096
    %v4282 = vunpack.c.h.b16 %v1096
    %v4283 = vunpack.c.l.b16 %v1097
    %v4284 = vunpack.c.h.b16 %v1097
    %v4285 = vunpack.c.l.b16 %v1098
    %v4286 = vunpack.c.h.b16 %v1098
    %v4287 = vunpack.c.l.b16 %v1099
    %v4288 = vunpack.c.h.b16 %v1099
    %v4289 = vunpack.c.l.b16 %v1100
    %v4290 = vunpack.c.h.b16 %v1100
    %v4291 = vunpack.c.l.b16 %v1101
    %v4292 = vunpack.c.h.b16 %v1101
    %v4293 = vunpack.c.l.b16 %v1102
    %v4294 = vunpack.c.h.b16 %v1102
    %v4295 = vunpack.c.l.b16 %v1103
    %v4296 = vunpack.c.h.b16 %v1103
    %v4297 = vunpack.c.l.b16 %v1104
    %v4298 = vunpack.c.h.b16 %v1104
    %v4299 = vunpack.c.l.b16 %v1105
    %v4300 = vunpack.c.h.b16 %v1105
    %v4301 = vunpack.c.l.b16 %v1106
    %v4302 = vunpack.c.h.b16 %v1106
    %v4303 = vunpack.c.l.b16 %v1107
    %v4304 = vunpack.c.h.b16 %v1107
    %v4305 = vunpack.c.l.b16 %v1108
    %v4306 = vunpack.c.h.b16 %v1108
    %v4307 = vunpack.c.l.b16 %v1109
    %v4308 = vunpack.c.h.b16 %v1109
    %v4309 = vunpack.c.l.b16 %v1110
    %v4310 = vunpack.c.h.b16 %v1110
    %v4311 = vunpack.c.l.b16 %v1111
    %v4312 = vunpack.c.h.b16 %v1111
    %v4313 = vunpack.c.l.b16 %v1112
    %v4314 = vunpack.c.h.b16 %v1112
    %v4315 = vunpack.c.l.b16 %v1113
    %v4316 = vunpack.c.h.b16 %v1113
    %v4317 = vunpack.c.l.b16 %v1114
    %v4318 = vunpack.c.h.b16 %v1114
    %v4319 = vunpack.c.l.b16 %v1115
    %v4320 = vunpack.c.h.b16 %v1115
    %v4321 = vunpack.c.l.b16 %v1116
    %v4322 = vunpack.c.h.b16 %v1116
    %v4323 = vunpack.c.l.b16 %v1117
    %v4324 = vunpack.c.h.b16 %v1117
    %v4325 = vunpack.c.l.b16 %v1118
    %v4326 = vunpack.c.h.b16 %v1118
    %v4327 = vunpack.c.l.b16 %v1119
    %v4328 = vunpack.c.h.b16 %v1119
    %v4329 = vunpack.c.l.b16 %v1120
    %v4330 = vunpack.c.h.b16 %v1120
    %v4331 = vunpack.c.l.b16 %v1121
    %v4332 = vunpack.c.h.b16 %v1121
    %v4333 = vunpack.c.l.b16 %v1122
    %v4334 = vunpack.c.h.b16 %v1122
    %v4335 = vunpack.c.l.b16 %v1123
    %v4336 = vunpack.c.h.b16 %v1123
    %v4337 = vunpack.c.l.b16 %v1124
    %v4338 = vunpack.c.h.b16 %v1124
    %v4339 = vunpack.c.l.b16 %v1125
    %v4340 = vunpack.c.h.b16 %v1125
    %v4341 = vunpack.c.l.b16 %v1126
    %v4342 = vunpack.c.h.b16 %v1126
    %v4343 = vunpack.c.l.b16 %v1127
    %v4344 = vunpack.c.h.b16 %v1127
    %v4345 = vunpack.c.l.b16 %v1128
    %v4346 = vunpack.c.h.b16 %v1128
    %v4347 = vunpack.c.l.b16 %v1129
    %v4348 = vunpack.c.h.b16 %v1129
    %v4349 = vunpack.c.l.b16 %v1130
    %v4350 = vunpack.c.h.b16 %v1130
    %v4351 = vunpack.c.l.b16 %v1131
    %v4352 = vunpack.c.h.b16 %v1131
    %v4353 = vunpack.c.l.b16 %v1132
    %v4354 = vunpack.c.h.b16 %v1132
    %v4355 = vunpack.c.l.b16 %v1133
    %v4356 = vunpack.c.h.b16 %v1133
    %v4357 = vunpack.c.l.b16 %v1134
    %v4358 = vunpack.c.h.b16 %v1134
    %v4359 = vunpack.c.l.b16 %v1135
    %v4360 = vunpack.c.h.b16 %v1135
    %v4361 = vunpack.c.l.b16 %v1136
    %v4362 = vunpack.c.h.b16 %v1136
    %v4363 = vunpack.c.l.b16 %v1137
    %v4364 = vunpack.c.h.b16 %v1137
    %v4365 = vunpack.c.l.b16 %v1138
    %v4366 = vunpack.c.h.b16 %v1138
    %v4367 = vunpack.c.l.b16 %v1139
    %v4368 = vunpack.c.h.b16 %v1139
    %v4369 = vunpack.c.l.b16 %v1140
    %v4370 = vunpack.c.h.b16 %v1140
    %v4371 = vunpack.c.l.b16 %v1141
    %v4372 = vunpack.c.h.b16 %v1141
    %v4373 = vunpack.c.l.b16 %v1142
    %v4374 = vunpack.c.h.b16 %v1142
    %v4375 = vunpack.c.l.b16 %v1143
    %v4376 = vunpack.c.h.b16 %v1143
    %v4377 = vunpack.c.l.b16 %v1144
    %v4378 = vunpack.c.h.b16 %v1144
    %v4379 = vunpack.c.l.b16 %v1145
    %v4380 = vunpack.c.h.b16 %v1145
    %v4381 = vunpack.c.l.b16 %v1146
    %v4382 = vunpack.c.h.b16 %v1146
    %v4383 = vunpack.c.l.b16 %v1147
    %v4384 = vunpack.c.h.b16 %v1147
    %v4385 = vunpack.c.l.b16 %v1148
    %v4386 = vunpack.c.h.b16 %v1148
    %v4387 = vunpack.c.l.b16 %v1149
    %v4388 = vunpack.c.h.b16 %v1149
    %v4389 = vunpack.c.l.b16 %v1150
    %v4390 = vunpack.c.h.b16 %v1150
    %v4391 = vunpack.c.l.b16 %v1151
    %v4392 = vunpack.c.h.b16 %v1151
    %v4393 = vunpack.c.l.b16 %v1152
    %v4394 = vunpack.c.h.b16 %v1152
    %v4395 = vunpack.c.l.b16 %v1153
    %v4396 = vunpack.c.h.b16 %v1153
    %v4397 = vunpack.c.l.b16 %v1154
    %v4398 = vunpack.c.h.b16 %v1154
    %v4399 = vunpack.c.l.b16 %v1155
    %v4400 = vunpack.c.h.b16 %v1155
    %v4401 = vunpack.c.l.b16 %v1156
    %v4402 = vunpack.c.h.b16 %v1156
    %v4403 = vunpack.c.l.b16 %v1157
    %v4404 = vunpack.c.h.b16 %v1157
    %v4405 = vunpack.c.l.b16 %v1158
    %v4406 = vunpack.c.h.b16 %v1158
    %v4407 = vunpack.c.l.b16 %v1159
    %v4408 = vunpack.c.h.b16 %v1159
    %v4409 = vunpack.c.l.b16 %v1160
    %v4410 = vunpack.c.h.b16 %v1160
    %v4411 = vunpack.c.l.b16 %v1161
    %v4412 = vunpack.c.h.b16 %v1161
    %v4413 = vunpack.c.l.b16 %v1162
    %v4414 = vunpack.c.h.b16 %v1162
    %v4415 = vunpack.c.l.b16 %v1163
    %v4416 = vunpack.c.h.b16 %v1163
    %v4417 = vunpack.c.l.b16 %v1164
    %v4418 = vunpack.c.h.b16 %v1164
    %v4419 = vunpack.c.l.b16 %v1165
    %v4420 = vunpack.c.h.b16 %v1165
    %v4421 = vunpack.c.l.b16 %v1166
    %v4422 = vunpack.c.h.b16 %v1166
    %v4423 = vunpack.c.l.b16 %v1167
    %v4424 = vunpack.c.h.b16 %v1167
    %v4425 = vunpack.c.l.b16 %v1168
    %v4426 = vunpack.c.h.b16 %v1168
    %v4427 = vunpack.c.l.b16 %v1169
    %v4428 = vunpack.c.h.b16 %v1169
    %v4429 = vunpack.c.l.b16 %v1170
    %v4430 = vunpack.c.h.b16 %v1170
    %v4431 = vunpack.c.l.b16 %v1171
    %v4432 = vunpack.c.h.b16 %v1171
    %v4433 = vunpack.c.l.b16 %v1172
    %v4434 = vunpack.c.h.b16 %v1172
    %v4435 = vunpack.c.l.b16 %v1173
    %v4436 = vunpack.c.h.b16 %v1173
    %v4437 = vunpack.c.l.b16 %v1174
    %v4438 = vunpack.c.h.b16 %v1174
    %v4439 = vunpack.c.l.b16 %v1175
    %v4440 = vunpack.c.h.b16 %v1175
    %v4441 = vunpack.c.l.b16 %v1176
    %v4442 = vunpack.c.h.b16 %v1176
    %v4443 = vunpack.c.l.b16 %v1177
    %v4444 = vunpack.c.h.b16 %v1177
    %v4445 = vunpack.c.l.b16 %v1178
    %v4446 = vunpack.c.h.b16 %v1178
    %v4447 = vunpack.c.l.b16 %v1179
    %v4448 = vunpack.c.h.b16 %v1179
    %v4449 = vunpack.c.l.b16 %v1180
    %v4450 = vunpack.c.h.b16 %v1180
    %v4451 = vunpack.c.l.b16 %v1181
    %v4452 = vunpack.c.h.b16 %v1181
    %v4453 = vunpack.c.l.b16 %v1182
    %v4454 = vunpack.c.h.b16 %v1182
    %v4455 = vunpack.c.l.b16 %v1183
    %v4456 = vunpack.c.h.b16 %v1183
    %v4457 = vunpack.c.l.b16 %v1184
    %v4458 = vunpack.c.h.b16 %v1184
    %v4459 = vunpack.c.l.b16 %v1185
    %v4460 = vunpack.c.h.b16 %v1185
    %v4461 = vunpack.c.l.b16 %v1186
    %v4462 = vunpack.c.h.b16 %v1186
    %v4463 = vunpack.c.l.b16 %v1187
    %v4464 = vunpack.c.h.b16 %v1187
    %v4465 = vunpack.c.l.b16 %v1188
    %v4466 = vunpack.c.h.b16 %v1188
    %v4467 = vunpack.c.l.b16 %v1189
    %v4468 = vunpack.c.h.b16 %v1189
    %v4469 = vunpack.c.l.b16 %v1190
    %v4470 = vunpack.c.h.b16 %v1190
    %v4471 = vunpack.c.l.b16 %v1191
    %v4472 = vunpack.c.h.b16 %v1191
    %v4473 = vunpack.c.l.b16 %v1192
    %v4474 = vunpack.c.h.b16 %v1192
    %v4475 = vunpack.c.l.b16 %v1193
    %v4476 = vunpack.c.h.b16 %v1193
    %v4477 = vunpack.c.l.b16 %v1194
    %v4478 = vunpack.c.h.b16 %v1194
    %v4479 = vunpack.c.l.b16 %v1195
    %v4480 = vunpack.c.h.b16 %v1195
    %v4481 = vunpack.c.l.b16 %v1196
    %v4482 = vunpack.c.h.b16 %v1196
    %v4483 = vunpack.c.l.b16 %v1197
    %v4484 = vunpack.c.h.b16 %v1197
    %v4485 = vunpack.c.l.b16 %v1198
    %v4486 = vunpack.c.h.b16 %v1198
    %v4487 = vunpack.c.l.b16 %v1199
    %v4488 = vunpack.c.h.b16 %v1199
    %v4489 = vunpack.c.l.b16 %v1200
    %v4490 = vunpack.c.h.b16 %v1200
    %v4491 = vunpack.c.l.b16 %v1201
    %v4492 = vunpack.c.h.b16 %v1201
    %v4493 = vunpack.c.l.b16 %v1202
    %v4494 = vunpack.c.h.b16 %v1202
    %v4495 = vunpack.c.l.b16 %v1203
    %v4496 = vunpack.c.h.b16 %v1203
    %v4497 = vunpack.c.l.b16 %v1204
    %v4498 = vunpack.c.h.b16 %v1204
    %v4499 = vunpack.c.l.b16 %v1205
    %v4500 = vunpack.c.h.b16 %v1205
    %v4501 = vunpack.c.l.b16 %v1206
    %v4502 = vunpack.c.h.b16 %v1206
    %v4503 = vunpack.c.l.b16 %v1207
    %v4504 = vunpack.c.h.b16 %v1207
    %v4505 = vunpack.c.l.b16 %v1208
    %v4506 = vunpack.c.h.b16 %v1208
    %v4507 = vunpack.c.l.b16 %v1209
    %v4508 = vunpack.c.h.b16 %v1209
    %v4509 = vunpack.c.l.b16 %v1210
    %v4510 = vunpack.c.h.b16 %v1210
    %v4511 = vunpack.c.l.b16 %v1211
    %v4512 = vunpack.c.h.b16 %v1211
    %v4513 = vunpack.c.l.b16 %v1212
    %v4514 = vunpack.c.h.b16 %v1212
    %v4515 = vunpack.c.l.b16 %v1213
    %v4516 = vunpack.c.h.b16 %v1213
    %v4517 = vunpack.c.l.b16 %v1214
    %v4518 = vunpack.c.h.b16 %v1214
    %v4519 = vunpack.c.l.b16 %v1215
    %v4520 = vunpack.c.h.b16 %v1215
    %v4521 = vunpack.c.l.b16 %v1216
    %v4522 = vunpack.c.h.b16 %v1216
    %v4523 = vunpack.c.l.b16 %v1217
    %v4524 = vunpack.c.h.b16 %v1217
    %v4525 = vunpack.c.l.b16 %v1218
    %v4526 = vunpack.c.h.b16 %v1218
    %v4527 = vunpack.c.l.b16 %v1219
    %v4528 = vunpack.c.h.b16 %v1219
    %v4529 = vunpack.c.l.b16 %v1220
    %v4530 = vunpack.c.h.b16 %v1220
    %v4531 = vunpack.c.l.b16 %v1221
    %v4532 = vunpack.c.h.b16 %v1221
    %v4533 = vunpack.c.l.b16 %v1222
    %v4534 = vunpack.c.h.b16 %v1222
    %v4535 = vunpack.c.l.b16 %v1223
    %v4536 = vunpack.c.h.b16 %v1223
    %v4537 = vunpack.c.l.b16 %v1224
    %v4538 = vunpack.c.h.b16 %v1224
    %v4539 = vunpack.c.l.b16 %v1225
    %v4540 = vunpack.c.h.b16 %v1225
    %v4541 = vunpack.c.l.b16 %v1226
    %v4542 = vunpack.c.h.b16 %v1226
    %v4543 = vunpack.c.l.b16 %v1227
    %v4544 = vunpack.c.h.b16 %v1227
    %v4545 = vunpack.c.l.b16 %v1228
    %v4546 = vunpack.c.h.b16 %v1228
    %v4547 = vunpack.c.l.b16 %v1229
    %v4548 = vunpack.c.h.b16 %v1229
    %v4549 = vunpack.c.l.b16 %v1230
    %v4550 = vunpack.c.h.b16 %v1230
    %v4551 = vunpack.c.l.b16 %v1231
    %v4552 = vunpack.c.h.b16 %v1231
    %v4553 = vunpack.c.l.b16 %v1232
    %v4554 = vunpack.c.h.b16 %v1232
    %v4555 = vunpack.c.l.b16 %v1233
    %v4556 = vunpack.c.h.b16 %v1233
    %v4557 = vunpack.c.l.b16 %v1234
    %v4558 = vunpack.c.h.b16 %v1234
    %v4559 = vunpack.c.l.b16 %v1235
    %v4560 = vunpack.c.h.b16 %v1235
    %v4561 = vunpack.c.l.b16 %v1236
    %v4562 = vunpack.c.h.b16 %v1236
    %v4563 = vunpack.c.l.b16 %v1237
    %v4564 = vunpack.c.h.b16 %v1237
    %v4565 = vunpack.c.l.b16 %v1238
    %v4566 = vunpack.c.h.b16 %v1238
    %v4567 = vunpack.c.l.b16 %v1239
    %v4568 = vunpack.c.h.b16 %v1239
    %v4569 = vunpack.c.l.b16 %v1240
    %v4570 = vunpack.c.h.b16 %v1240
    %v4571 = vunpack.c.l.b16 %v1241
    %v4572 = vunpack.c.h.b16 %v1241
    %v4573 = vunpack.c.l.b16 %v1242
    %v4574 = vunpack.c.h.b16 %v1242
    %v4575 = vunpack.c.l.b16 %v1243
    %v4576 = vunpack.c.h.b16 %v1243
    %v4577 = vunpack.c.l.b16 %v1244
    %v4578 = vunpack.c.h.b16 %v1244
    %v4579 = vunpack.c.l.b16 %v1245
    %v4580 = vunpack.c.h.b16 %v1245
    %v4581 = vunpack.c.l.b16 %v1246
    %v4582 = vunpack.c.h.b16 %v1246
    %v4583 = vunpack.c.l.b16 %v1247
    %v4584 = vunpack.c.h.b16 %v1247
    %v4585 = vunpack.c.l.b16 %v1248
    %v4586 = vunpack.c.h.b16 %v1248
    %v4587 = vunpack.c.l.b16 %v1249
    %v4588 = vunpack.c.h.b16 %v1249
    %v4589 = vunpack.c.l.b16 %v1250
    %v4590 = vunpack.c.h.b16 %v1250
    %v4591 = vunpack.c.l.b16 %v1251
    %v4592 = vunpack.c.h.b16 %v1251
    %v4593 = vunpack.c.l.b16 %v1252
    %v4594 = vunpack.c.h.b16 %v1252
    %v4595 = vunpack.c.l.b16 %v1253
    %v4596 = vunpack.c.h.b16 %v1253
    %v4597 = vunpack.c.l.b16 %v1254
    %v4598 = vunpack.c.h.b16 %v1254
    %v4599 = vunpack.c.l.b16 %v1255
    %v4600 = vunpack.c.h.b16 %v1255
    %v4601 = vunpack.c.l.b16 %v1256
    %v4602 = vunpack.c.h.b16 %v1256
    %v4603 = vunpack.c.l.b16 %v1257
    %v4604 = vunpack.c.h.b16 %v1257
    %v4605 = vunpack.c.l.b16 %v1258
    %v4606 = vunpack.c.h.b16 %v1258
    %v4607 = vunpack.c.l.b16 %v1259
    %v4608 = vunpack.c.h.b16 %v1259
    %v4609 = vunpack.c.l.b16 %v1260
    %v4610 = vunpack.c.h.b16 %v1260
    %v4611 = vunpack.c.l.b16 %v1261
    %v4612 = vunpack.c.h.b16 %v1261
    %v4613 = vunpack.c.l.b16 %v1262
    %v4614 = vunpack.c.h.b16 %v1262
    %v4615 = vunpack.c.l.b16 %v1263
    %v4616 = vunpack.c.h.b16 %v1263
    %v4617 = vunpack.c.l.b16 %v1264
    %v4618 = vunpack.c.h.b16 %v1264
    %v4619 = vunpack.c.l.b16 %v1265
    %v4620 = vunpack.c.h.b16 %v1265
    %v4621 = vunpack.c.l.b16 %v1266
    %v4622 = vunpack.c.h.b16 %v1266
    %v4623 = vunpack.c.l.b16 %v1267
    %v4624 = vunpack.c.h.b16 %v1267
    %v4625 = vunpack.c.l.b16 %v1268
    %v4626 = vunpack.c.h.b16 %v1268
    %v4627 = vunpack.c.l.b16 %v1269
    %v4628 = vunpack.c.h.b16 %v1269
    %v4629 = vunpack.c.l.b16 %v1270
    %v4630 = vunpack.c.h.b16 %v1270
    %v4631 = vunpack.c.l.b16 %v1271
    %v4632 = vunpack.c.h.b16 %v1271
    %v4633 = vunpack.c.l.b16 %v1272
    %v4634 = vunpack.c.h.b16 %v1272
    %v4635 = vunpack.c.l.b16 %v1273
    %v4636 = vunpack.c.h.b16 %v1273
    %v4637 = vunpack.c.l.b16 %v1274
    %v4638 = vunpack.c.h.b16 %v1274
    %v4639 = vunpack.c.l.b16 %v1275
    %v4640 = vunpack.c.h.b16 %v1275
    %v4641 = vunpack.c.l.b16 %v1276
    %v4642 = vunpack.c.h.b16 %v1276
    %v4643 = vunpack.c.l.b16 %v1277
    %v4644 = vunpack.c.h.b16 %v1277
    %v4645 = vunpack.c.l.b16 %v1278
    %v4646 = vunpack.c.h.b16 %v1278
    %v4647 = vunpack.c.l.b16 %v1279
    %v4648 = vunpack.c.h.b16 %v1279
    %v4649 = vunpack.c.l.b16 %v1280
    %v4650 = vunpack.c.h.b16 %v1280
    %v4651 = vunpack.c.l.b16 %v1281
    %v4652 = vunpack.c.h.b16 %v1281
    %v4653 = vunpack.c.l.b16 %v1282
    %v4654 = vunpack.c.h.b16 %v1282
    %v4655 = vunpack.c.l.b16 %v1283
    %v4656 = vunpack.c.h.b16 %v1283
    %v4657 = vunpack.c.l.b16 %v1284
    %v4658 = vunpack.c.h.b16 %v1284
    %v4659 = vunpack.c.l.b16 %v1285
    %v4660 = vunpack.c.h.b16 %v1285
    %v4661 = vunpack.c.l.b16 %v1286
    %v4662 = vunpack.c.h.b16 %v1286
    %v4663 = vunpack.c.l.b16 %v1287
    %v4664 = vunpack.c.h.b16 %v1287
    %v4665 = vunpack.c.l.b16 %v1288
    %v4666 = vunpack.c.h.b16 %v1288
    %v4667 = vunpack.c.l.b16 %v1289
    %v4668 = vunpack.c.h.b16 %v1289
    %v4669 = vunpack.c.l.b16 %v1290
    %v4670 = vunpack.c.h.b16 %v1290
    %v4671 = vunpack.c.l.b16 %v1291
    %v4672 = vunpack.c.h.b16 %v1291
    %v4673 = vunpack.c.l.b16 %v1292
    %v4674 = vunpack.c.h.b16 %v1292
    %v4675 = vunpack.c.l.b16 %v1293
    %v4676 = vunpack.c.h.b16 %v1293
    %v4677 = vunpack.c.l.b16 %v1294
    %v4678 = vunpack.c.h.b16 %v1294
    %v4679 = vunpack.c.l.b16 %v1295
    %v4680 = vunpack.c.h.b16 %v1295
    %v4681 = vunpack.c.l.b16 %v1296
    %v4682 = vunpack.c.h.b16 %v1296
    %v4683 = vunpack.c.l.b16 %v1297
    %v4684 = vunpack.c.h.b16 %v1297
    %v4685 = vunpack.c.l.b16 %v1298
    %v4686 = vunpack.c.h.b16 %v1298
    %v4687 = vunpack.c.l.b16 %v1299
    %v4688 = vunpack.c.h.b16 %v1299
    %v4689 = vunpack.c.l.b16 %v1300
    %v4690 = vunpack.c.h.b16 %v1300
    %v4691 = vunpack.c.l.b16 %v1301
    %v4692 = vunpack.c.h.b16 %v1301
    %v4693 = vunpack.c.l.b16 %v1302
    %v4694 = vunpack.c.h.b16 %v1302
    %v4695 = vunpack.c.l.b16 %v1303
    %v4696 = vunpack.c.h.b16 %v1303
    %v4697 = vunpack.c.l.b16 %v1304
    %v4698 = vunpack.c.h.b16 %v1304
    %v4699 = vunpack.c.l.b16 %v1305
    %v4700 = vunpack.c.h.b16 %v1305
    %v4701 = vunpack.c.l.b16 %v1306
    %v4702 = vunpack.c.h.b16 %v1306
    %v4703 = vunpack.c.l.b16 %v1307
    %v4704 = vunpack.c.h.b16 %v1307
    %v4705 = vunpack.c.l.b16 %v1308
    %v4706 = vunpack.c.h.b16 %v1308
    %v4707 = vunpack.c.l.b16 %v1309
    %v4708 = vunpack.c.h.b16 %v1309
    %v4709 = vunpack.c.l.b16 %v1310
    %v4710 = vunpack.c.h.b16 %v1310
    %v4711 = vunpack.c.l.b16 %v1311
    %v4712 = vunpack.c.h.b16 %v1311
    %v4713 = vunpack.c.l.b16 %v1312
    %v4714 = vunpack.c.h.b16 %v1312
    %v4715 = vunpack.c.l.b16 %v1313
    %v4716 = vunpack.c.h.b16 %v1313
    %v4717 = vunpack.c.l.b16 %v1314
    %v4718 = vunpack.c.h.b16 %v1314
    %v4719 = vunpack.c.l.b16 %v1315
    %v4720 = vunpack.c.h.b16 %v1315
    %v4721 = vunpack.c.l.b16 %v1316
    %v4722 = vunpack.c.h.b16 %v1316
    %v4723 = vunpack.c.l.b16 %v1317
    %v4724 = vunpack.c.h.b16 %v1317
    %v4725 = vunpack.c.l.b16 %v1318
    %v4726 = vunpack.c.h.b16 %v1318
    %v4727 = vunpack.c.l.b16 %v1319
    %v4728 = vunpack.c.h.b16 %v1319
    %v4729 = vunpack.c.l.b16 %v1320
    %v4730 = vunpack.c.h.b16 %v1320
    %v4731 = vunpack.c.l.b16 %v1321
    %v4732 = vunpack.c.h.b16 %v1321
    %v4733 = vunpack.c.l.b16 %v1322
    %v4734 = vunpack.c.h.b16 %v1322
    %v4735 = vunpack.c.l.b16 %v1323
    %v4736 = vunpack.c.h.b16 %v1323
    %v4737 = vunpack.c.l.b16 %v1324
    %v4738 = vunpack.c.h.b16 %v1324
    %v4739 = vunpack.c.l.b16 %v1325
    %v4740 = vunpack.c.h.b16 %v1325
    %v4741 = vunpack.c.l.b16 %v1326
    %v4742 = vunpack.c.h.b16 %v1326
    %v4743 = vunpack.c.l.b16 %v1327
    %v4744 = vunpack.c.h.b16 %v1327
    %v4745 = vunpack.c.l.b16 %v1328
    %v4746 = vunpack.c.h.b16 %v1328
    %v4747 = vunpack.c.l.b16 %v1329
    %v4748 = vunpack.c.h.b16 %v1329
    %v4749 = vunpack.c.l.b16 %v1330
    %v4750 = vunpack.c.h.b16 %v1330
    %v4751 = vunpack.c.l.b16 %v1331
    %v4752 = vunpack.c.h.b16 %v1331
    %v4753 = vunpack.c.l.b16 %v1332
    %v4754 = vunpack.c.h.b16 %v1332
    %v4755 = vunpack.c.l.b16 %v1333
    %v4756 = vunpack.c.h.b16 %v1333
    %v4757 = vunpack.c.l.b16 %v1334
    %v4758 = vunpack.c.h.b16 %v1334
    %v4759 = vunpack.c.l.b16 %v1335
    %v4760 = vunpack.c.h.b16 %v1335
    %v4761 = vunpack.c.l.b16 %v1336
    %v4762 = vunpack.c.h.b16 %v1336
    %v4763 = vunpack.c.l.b16 %v1337
    %v4764 = vunpack.c.h.b16 %v1337
    %v4765 = vunpack.c.l.b16 %v1338
    %v4766 = vunpack.c.h.b16 %v1338
    %v4767 = vunpack.c.l.b16 %v1339
    %v4768 = vunpack.c.h.b16 %v1339
    %v4769 = vunpack.c.l.b16 %v1340
    %v4770 = vunpack.c.h.b16 %v1340
    %v4771 = vunpack.c.l.b16 %v1341
    %v4772 = vunpack.c.h.b16 %v1341
    %v4773 = vunpack.c.l.b16 %v1342
    %v4774 = vunpack.c.h.b16 %v1342
    %v4775 = vunpack.c.l.b16 %v1343
    %v4776 = vunpack.c.h.b16 %v1343
    %v4777 = vunpack.c.l.b16 %v1344
    %v4778 = vunpack.c.h.b16 %v1344
    %v4779 = vunpack.c.l.b16 %v1345
    %v4780 = vunpack.c.h.b16 %v1345
    %v4781 = vunpack.c.l.b16 %v1346
    %v4782 = vunpack.c.h.b16 %v1346
    %v4783 = vunpack.c.l.b16 %v1347
    %v4784 = vunpack.c.h.b16 %v1347
    %v4785 = vunpack.c.l.b16 %v1348
    %v4786 = vunpack.c.h.b16 %v1348
    %v4787 = vunpack.c.l.b16 %v1349
    %v4788 = vunpack.c.h.b16 %v1349
    %v4789 = vunpack.c.l.b16 %v1350
    %v4790 = vunpack.c.h.b16 %v1350
    %v4791 = vunpack.c.l.b16 %v1351
    %v4792 = vunpack.c.h.b16 %v1351
    %v4793 = vunpack.c.l.b16 %v1352
    %v4794 = vunpack.c.h.b16 %v1352
    %v4795 = vunpack.c.l.b16 %v1353
    %v4796 = vunpack.c.h.b16 %v1353
    %v4797 = vunpack.c.l.b16 %v1354
    %v4798 = vunpack.c.h.b16 %v1354
    %v4799 = vunpack.c.l.b16 %v1355
    %v4800 = vunpack.c.h.b16 %v1355
    %v4801 = vunpack.c.l.b16 %v1356
    %v4802 = vunpack.c.h.b16 %v1356
    %v4803 = vunpack.c.l.b16 %v1357
    %v4804 = vunpack.c.h.b16 %v1357
    %v4805 = vunpack.c.l.b16 %v1358
    %v4806 = vunpack.c.h.b16 %v1358
    %v4807 = vunpack.c.l.b16 %v1359
    %v4808 = vunpack.c.h.b16 %v1359
    %v4809 = vunpack.c.l.b16 %v1360
    %v4810 = vunpack.c.h.b16 %v1360
    %v4811 = vunpack.c.l.b16 %v1361
    %v4812 = vunpack.c.h.b16 %v1361
    %v4813 = vunpack.c.l.b16 %v1362
    %v4814 = vunpack.c.h.b16 %v1362
    %v4815 = vunpack.c.l.b16 %v1363
    %v4816 = vunpack.c.h.b16 %v1363
    %v4817 = vunpack.c.l.b16 %v1364
    %v4818 = vunpack.c.h.b16 %v1364
    %v4819 = vunpack.c.l.b16 %v1365
    %v4820 = vunpack.c.h.b16 %v1365
    %v4821 = vunpack.c.l.b16 %v1366
    %v4822 = vunpack.c.h.b16 %v1366
    %v4823 = vunpack.c.l.b16 %v1367
    %v4824 = vunpack.c.h.b16 %v1367
    %v4825 = vunpack.c.l.b16 %v1368
    %v4826 = vunpack.c.h.b16 %v1368
    %v4827 = vunpack.c.l.b16 %v1369
    %v4828 = vunpack.c.h.b16 %v1369
    %v4829 = vunpack.c.l.b16 %v1370
    %v4830 = vunpack.c.h.b16 %v1370
    %v4831 = vunpack.c.l.b16 %v1371
    %v4832 = vunpack.c.h.b16 %v1371
    %v4833 = vunpack.c.l.b16 %v1372
    %v4834 = vunpack.c.h.b16 %v1372
    %v4835 = vunpack.c.l.b16 %v1373
    %v4836 = vunpack.c.h.b16 %v1373
    %v4837 = vunpack.c.l.b16 %v1374
    %v4838 = vunpack.c.h.b16 %v1374
    %v4839 = vunpack.c.l.b16 %v1375
    %v4840 = vunpack.c.h.b16 %v1375
    %v4841 = vunpack.c.l.b16 %v1376
    %v4842 = vunpack.c.h.b16 %v1376
    %v4843 = vunpack.c.l.b16 %v1377
    %v4844 = vunpack.c.h.b16 %v1377
    %v4845 = vunpack.c.l.b16 %v1378
    %v4846 = vunpack.c.h.b16 %v1378
    %v4847 = vunpack.c.l.b16 %v1379
    %v4848 = vunpack.c.h.b16 %v1379
    %v4849 = vunpack.c.l.b16 %v1380
    %v4850 = vunpack.c.h.b16 %v1380
    %v4851 = vunpack.c.l.b16 %v1381
    %v4852 = vunpack.c.h.b16 %v1381
    %v4853 = vunpack.c.l.b16 %v1382
    %v4854 = vunpack.c.h.b16 %v1382
    %v4855 = vunpack.c.l.b16 %v1383
    %v4856 = vunpack.c.h.b16 %v1383
    %v4857 = vunpack.c.l.b16 %v1384
    %v4858 = vunpack.c.h.b16 %v1384
    %v4859 = vunpack.c.l.b16 %v1385
    %v4860 = vunpack.c.h.b16 %v1385
    %v4861 = vunpack.c.l.b16 %v1386
    %v4862 = vunpack.c.h.b16 %v1386
    %v4863 = vunpack.c.l.b16 %v1387
    %v4864 = vunpack.c.h.b16 %v1387
    %v4865 = vunpack.c.l.b16 %v1388
    %v4866 = vunpack.c.h.b16 %v1388
    %v4867 = vunpack.c.l.b16 %v1389
    %v4868 = vunpack.c.h.b16 %v1389
    %v4869 = vunpack.c.l.b16 %v1390
    %v4870 = vunpack.c.h.b16 %v1390
    %v4871 = vunpack.c.l.b16 %v1391
    %v4872 = vunpack.c.h.b16 %v1391
    %v4873 = vunpack.c.l.b16 %v1392
    %v4874 = vunpack.c.h.b16 %v1392
    %v4875 = vunpack.c.l.b16 %v1393
    %v4876 = vunpack.c.h.b16 %v1393
    %v4877 = vunpack.c.l.b16 %v1394
    %v4878 = vunpack.c.h.b16 %v1394
    %v4879 = vunpack.c.l.b16 %v1395
    %v4880 = vunpack.c.h.b16 %v1395
    %v4881 = vunpack.c.l.b16 %v1396
    %v4882 = vunpack.c.h.b16 %v1396
    %v4883 = vunpack.c.l.b16 %v1397
    %v4884 = vunpack.c.h.b16 %v1397
    %v4885 = vunpack.c.l.b16 %v1398
    %v4886 = vunpack.c.h.b16 %v1398
    %v4887 = vunpack.c.l.b16 %v1399
    %v4888 = vunpack.c.h.b16 %v1399
    %v4889 = vunpack.c.l.b16 %v1400
    %v4890 = vunpack.c.h.b16 %v1400
    %v4891 = vunpack.c.l.b16 %v1401
    %v4892 = vunpack.c.h.b16 %v1401
    %v4893 = vunpack.c.l.b16 %v1402
    %v4894 = vunpack.c.h.b16 %v1402
    %v4895 = vunpack.c.l.b16 %v1403
    %v4896 = vunpack.c.h.b16 %v1403
    %v4897 = vunpack.c.l.b16 %v1404
    %v4898 = vunpack.c.h.b16 %v1404
    %v4899 = vunpack.c.l.b16 %v1405
    %v4900 = vunpack.c.h.b16 %v1405
    %v4901 = vunpack.c.l.b16 %v1406
    %v4902 = vunpack.c.h.b16 %v1406
    %v4903 = vunpack.c.l.b16 %v1407
    %v4904 = vunpack.c.h.b16 %v1407
    %v4905 = vunpack.c.l.b16 %v1408
    %v4906 = vunpack.c.h.b16 %v1408
    %v4907 = vunpack.c.l.b16 %v1409
    %v4908 = vunpack.c.h.b16 %v1409
    %v4909 = vunpack.c.l.b16 %v1410
    %v4910 = vunpack.c.h.b16 %v1410
    %v4911 = vunpack.c.l.b16 %v1411
    %v4912 = vunpack.c.h.b16 %v1411
    %v4913 = vunpack.c.l.b16 %v1412
    %v4914 = vunpack.c.h.b16 %v1412
    %v4915 = vunpack.c.l.b16 %v1413
    %v4916 = vunpack.c.h.b16 %v1413
    %v4917 = vunpack.c.l.b16 %v1414
    %v4918 = vunpack.c.h.b16 %v1414
    %v4919 = vunpack.c.l.b16 %v1415
    %v4920 = vunpack.c.h.b16 %v1415
    %v4921 = vunpack.c.l.b16 %v1416
    %v4922 = vunpack.c.h.b16 %v1416
    %v4923 = vunpack.c.l.b16 %v1417
    %v4924 = vunpack.c.h.b16 %v1417
    %v4925 = vunpack.c.l.b16 %v1418
    %v4926 = vunpack.c.h.b16 %v1418
    %v4927 = vunpack.c.l.b16 %v1419
    %v4928 = vunpack.c.h.b16 %v1419
    %v4929 = vunpack.c.l.b16 %v1420
    %v4930 = vunpack.c.h.b16 %v1420
    %v4931 = vunpack.c.l.b16 %v1421
    %v4932 = vunpack.c.h.b16 %v1421
    %v4933 = vunpack.c.l.b16 %v1422
    %v4934 = vunpack.c.h.b16 %v1422
    %v4935 = vunpack.c.l.b16 %v1423
    %v4936 = vunpack.c.h.b16 %v1423
    %v4937 = vunpack.c.l.b16 %v1424
    %v4938 = vunpack.c.h.b16 %v1424
    %v4939 = vunpack.c.l.b16 %v1425
    %v4940 = vunpack.c.h.b16 %v1425
    %v4941 = vunpack.c.l.b16 %v1426
    %v4942 = vunpack.c.h.b16 %v1426
    %v4943 = vunpack.c.l.b16 %v1427
    %v4944 = vunpack.c.h.b16 %v1427
    %v4945 = vunpack.c.l.b16 %v1428
    %v4946 = vunpack.c.h.b16 %v1428
    %v4947 = vunpack.c.l.b16 %v1429
    %v4948 = vunpack.c.h.b16 %v1429
    %v4949 = vunpack.c.l.b16 %v1430
    %v4950 = vunpack.c.h.b16 %v1430
    %v4951 = vunpack.c.l.b16 %v1431
    %v4952 = vunpack.c.h.b16 %v1431
    %v4953 = vunpack.c.l.b16 %v1432
    %v4954 = vunpack.c.h.b16 %v1432
    %v4955 = vunpack.c.l.b16 %v1433
    %v4956 = vunpack.c.h.b16 %v1433
    %v4957 = vunpack.c.l.b16 %v1434
    %v4958 = vunpack.c.h.b16 %v1434
    %v4959 = vunpack.c.l.b16 %v1435
    %v4960 = vunpack.c.h.b16 %v1435
    %v4961 = vunpack.c.l.b16 %v1436
    %v4962 = vunpack.c.h.b16 %v1436
    %v4963 = vunpack.c.l.b16 %v1437
    %v4964 = vunpack.c.h.b16 %v1437
    %v4965 = vunpack.c.l.b16 %v1438
    %v4966 = vunpack.c.h.b16 %v1438
    %v4967 = vunpack.c.l.b16 %v1439
    %v4968 = vunpack.c.h.b16 %v1439
    %v4969 = vunpack.c.l.b16 %v1440
    %v4970 = vunpack.c.h.b16 %v1440
    %v4971 = vunpack.c.l.b16 %v1441
    %v4972 = vunpack.c.h.b16 %v1441
    %v4973 = vunpack.c.l.b16 %v1442
    %v4974 = vunpack.c.h.b16 %v1442
    %v4975 = vunpack.c.l.b16 %v1443
    %v4976 = vunpack.c.h.b16 %v1443
    %v4977 = vunpack.c.l.b16 %v1444
    %v4978 = vunpack.c.h.b16 %v1444
    %v4979 = vunpack.c.l.b16 %v1445
    %v4980 = vunpack.c.h.b16 %v1445
    %v4981 = vunpack.c.l.b16 %v1446
    %v4982 = vunpack.c.h.b16 %v1446
    %v4983 = vunpack.c.l.b16 %v1447
    %v4984 = vunpack.c.h.b16 %v1447
    %v4985 = vunpack.c.l.b16 %v1448
    %v4986 = vunpack.c.h.b16 %v1448
    %v4987 = vunpack.c.l.b16 %v1449
    %v4988 = vunpack.c.h.b16 %v1449
    %v4989 = vunpack.c.l.b16 %v1450
    %v4990 = vunpack.c.h.b16 %v1450
    %v4991 = vunpack.c.l.b16 %v1451
    %v4992 = vunpack.c.h.b16 %v1451
    %v4993 = vunpack.c.l.b16 %v1452
    %v4994 = vunpack.c.h.b16 %v1452
    %v4995 = vunpack.c.l.b16 %v1453
    %v4996 = vunpack.c.h.b16 %v1453
    %v4997 = vunpack.c.l.b16 %v1454
    %v4998 = vunpack.c.h.b16 %v1454
    %v4999 = vunpack.c.l.b16 %v1455
    %v5000 = vunpack.c.h.b16 %v1455
    %v5001 = vunpack.c.l.b16 %v1456
    %v5002 = vunpack.c.h.b16 %v1456
    %v5003 = vunpack.c.l.b16 %v1457
    %v5004 = vunpack.c.h.b16 %v1457
    %v5005 = vunpack.c.l.b16 %v1458
    %v5006 = vunpack.c.h.b16 %v1458
    %v5007 = vunpack.c.l.b16 %v1459
    %v5008 = vunpack.c.h.b16 %v1459
    %v5009 = vunpack.c.l.b16 %v1460
    %v5010 = vunpack.c.h.b16 %v1460
    %v5011 = vunpack.c.l.b16 %v1461
    %v5012 = vunpack.c.h.b16 %v1461
    %v5013 = vunpack.c.l.b16 %v1462
    %v5014 = vunpack.c.h.b16 %v1462
    %v5015 = vunpack.c.l.b16 %v1463
    %v5016 = vunpack.c.h.b16 %v1463
    %v5017 = vunpack.c.l.b16 %v1464
    %v5018 = vunpack.c.h.b16 %v1464
    %v5019 = vunpack.c.l.b16 %v1465
    %v5020 = vunpack.c.h.b16 %v1465
    %v5021 = vunpack.c.l.b16 %v1466
    %v5022 = vunpack.c.h.b16 %v1466
    %v5023 = vunpack.c.l.b16 %v1467
    %v5024 = vunpack.c.h.b16 %v1467
    %v5025 = vunpack.c.l.b16 %v1468
    %v5026 = vunpack.c.h.b16 %v1468
    %v5027 = vunpack.c.l.b16 %v1469
    %v5028 = vunpack.c.h.b16 %v1469
    %v5029 = vunpack.c.l.b16 %v1470
    %v5030 = vunpack.c.h.b16 %v1470
    %v5031 = vunpack.c.l.b16 %v1471
    %v5032 = vunpack.c.h.b16 %v1471
    %v5033 = vunpack.c.l.b16 %v1472
    %v5034 = vunpack.c.h.b16 %v1472
    %v5035 = vunpack.c.l.b16 %v1473
    %v5036 = vunpack.c.h.b16 %v1473
    %v5037 = vunpack.c.l.b16 %v1474
    %v5038 = vunpack.c.h.b16 %v1474
    %v5039 = vunpack.c.l.b16 %v1475
    %v5040 = vunpack.c.h.b16 %v1475
    %v5041 = vunpack.c.l.b16 %v1476
    %v5042 = vunpack.c.h.b16 %v1476
    %v5043 = vunpack.c.l.b16 %v1477
    %v5044 = vunpack.c.h.b16 %v1477
    %v5045 = vunpack.c.l.b16 %v1478
    %v5046 = vunpack.c.h.b16 %v1478
    %v5047 = vunpack.c.l.b16 %v1479
    %v5048 = vunpack.c.h.b16 %v1479
    %v5049 = vunpack.c.l.b16 %v1480
    %v5050 = vunpack.c.h.b16 %v1480
    %v5051 = vunpack.c.l.b16 %v1481
    %v5052 = vunpack.c.h.b16 %v1481
    %v5053 = vunpack.c.l.b16 %v1482
    %v5054 = vunpack.c.h.b16 %v1482
    %v5055 = vunpack.c.l.b16 %v1483
    %v5056 = vunpack.c.h.b16 %v1483
    %v5057 = vunpack.c.l.b16 %v1484
    %v5058 = vunpack.c.h.b16 %v1484
    %v5059 = vunpack.c.l.b16 %v1485
    %v5060 = vunpack.c.h.b16 %v1485
    %v5061 = vunpack.c.l.b16 %v1486
    %v5062 = vunpack.c.h.b16 %v1486
    %v5063 = vunpack.c.l.b16 %v1487
    %v5064 = vunpack.c.h.b16 %v1487
    %v5065 = vunpack.c.l.b16 %v1488
    %v5066 = vunpack.c.h.b16 %v1488
    %v5067 = vunpack.c.l.b16 %v1489
    %v5068 = vunpack.c.h.b16 %v1489
    %v5069 = vunpack.c.l.b16 %v1490
    %v5070 = vunpack.c.h.b16 %v1490
    %v5071 = vunpack.c.l.b16 %v1491
    %v5072 = vunpack.c.h.b16 %v1491
    %v5073 = vunpack.c.l.b16 %v1492
    %v5074 = vunpack.c.h.b16 %v1492
    %v5075 = vunpack.c.l.b16 %v1493
    %v5076 = vunpack.c.h.b16 %v1493
    %v5077 = vunpack.c.l.b16 %v1494
    %v5078 = vunpack.c.h.b16 %v1494
    %v5079 = vunpack.c.l.b16 %v1495
    %v5080 = vunpack.c.h.b16 %v1495
    %v5081 = vunpack.c.l.b16 %v1496
    %v5082 = vunpack.c.h.b16 %v1496
    %v5083 = vunpack.c.l.b16 %v1497
    %v5084 = vunpack.c.h.b16 %v1497
    %v5085 = vunpack.c.l.b16 %v1498
    %v5086 = vunpack.c.h.b16 %v1498
    %v5087 = vunpack.c.l.b16 %v1499
    %v5088 = vunpack.c.h.b16 %v1499
    %v5089 = vunpack.c.l.b16 %v1500
    %v5090 = vunpack.c.h.b16 %v1500
    %v5091 = vunpack.c.l.b16 %v1501
    %v5092 = vunpack.c.h.b16 %v1501
    %v5093 = vunpack.c.l.b16 %v1502
    %v5094 = vunpack.c.h.b16 %v1502
    %v5095 = vunpack.c.l.b16 %v1503
    %v5096 = vunpack.c.h.b16 %v1503
    %v5097 = vunpack.c.l.b16 %v1504
    %v5098 = vunpack.c.h.b16 %v1504
    %v5099 = vunpack.c.l.b16 %v1505
    %v5100 = vunpack.c.h.b16 %v1505
    %v5101 = vunpack.c.l.b16 %v1506
    %v5102 = vunpack.c.h.b16 %v1506
    %v5103 = vunpack.c.l.b16 %v1507
    %v5104 = vunpack.c.h.b16 %v1507
    %v5105 = vunpack.c.l.b16 %v1508
    %v5106 = vunpack.c.h.b16 %v1508
    %v5107 = vunpack.c.l.b16 %v1509
    %v5108 = vunpack.c.h.b16 %v1509
    %v5109 = vunpack.c.l.b16 %v1510
    %v5110 = vunpack.c.h.b16 %v1510
    %v5111 = vunpack.c.l.b16 %v1511
    %v5112 = vunpack.c.h.b16 %v1511
    %v5113 = vunpack.c.l.b16 %v1512
    %v5114 = vunpack.c.h.b16 %v1512
    %v5115 = vunpack.c.l.b16 %v1513
    %v5116 = vunpack.c.h.b16 %v1513
    %v5117 = vunpack.c.l.b16 %v1514
    %v5118 = vunpack.c.h.b16 %v1514
    %v5119 = vunpack.c.l.b16 %v1515
    %v5120 = vunpack.c.h.b16 %v1515
    %v5121 = vunpack.c.l.b16 %v1516
    %v5122 = vunpack.c.h.b16 %v1516
    %v5123 = vunpack.c.l.b16 %v1517
    %v5124 = vunpack.c.h.b16 %v1517
    %v5125 = vunpack.c.l.b16 %v1518
    %v5126 = vunpack.c.h.b16 %v1518
    %v5127 = vunpack.c.l.b16 %v1519
    %v5128 = vunpack.c.h.b16 %v1519
    %v5129 = vunpack.c.l.b16 %v1520
    %v5130 = vunpack.c.h.b16 %v1520
    %v5131 = vunpack.c.l.b16 %v1521
    %v5132 = vunpack.c.h.b16 %v1521
    %v5133 = vunpack.c.l.b16 %v1522
    %v5134 = vunpack.c.h.b16 %v1522
    %v5135 = vunpack.c.l.b16 %v1523
    %v5136 = vunpack.c.h.b16 %v1523
    %v5137 = vunpack.c.l.b16 %v1524
    %v5138 = vunpack.c.h.b16 %v1524
    %v5139 = vunpack.c.l.b16 %v1525
    %v5140 = vunpack.c.h.b16 %v1525
    %v5141 = vunpack.c.l.b16 %v1526
    %v5142 = vunpack.c.h.b16 %v1526
    %v5143 = vunpack.c.l.b16 %v1527
    %v5144 = vunpack.c.h.b16 %v1527
    %v5145 = vunpack.c.l.b16 %v1528
    %v5146 = vunpack.c.h.b16 %v1528
    %v5147 = vunpack.c.l.b16 %v1529
    %v5148 = vunpack.c.h.b16 %v1529
    %v5149 = vunpack.c.l.b16 %v1530
    %v5150 = vunpack.c.h.b16 %v1530
    %v5151 = vunpack.c.l.b16 %v1531
    %v5152 = vunpack.c.h.b16 %v1531
    %v5153 = vunpack.c.l.b16 %v1532
    %v5154 = vunpack.c.h.b16 %v1532
    %v5155 = vunpack.c.l.b16 %v1533
    %v5156 = vunpack.c.h.b16 %v1533
    %v5157 = vunpack.c.l.b16 %v1534
    %v5158 = vunpack.c.h.b16 %v1534
    %v5159 = vunpack.c.l.b16 %v1535
    %v5160 = vunpack.c.h.b16 %v1535
    %v5161 = vunpack.c.l.b16 %v1536
    %v5162 = vunpack.c.h.b16 %v1536
    %v5163 = vunpack.c.l.b16 %v1537
    %v5164 = vunpack.c.h.b16 %v1537
    %v5165 = vunpack.c.l.b16 %v1538
    %v5166 = vunpack.c.h.b16 %v1538
    %v5167 = vunpack.c.l.b16 %v1539
    %v5168 = vunpack.c.h.b16 %v1539
    %v5169 = vunpack.c.l.b16 %v1540
    %v5170 = vunpack.c.h.b16 %v1540
    %v5171 = vunpack.c.l.b16 %v1541
    %v5172 = vunpack.c.h.b16 %v1541
    %v5173 = vunpack.c.l.b16 %v1542
    %v5174 = vunpack.c.h.b16 %v1542
    %v5175 = vunpack.c.l.b16 %v1543
    %v5176 = vunpack.c.h.b16 %v1543
    %v5177 = vunpack.c.l.b16 %v1544
    %v5178 = vunpack.c.h.b16 %v1544
    %v5179 = vunpack.c.l.b16 %v1545
    %v5180 = vunpack.c.h.b16 %v1545
    %v5181 = vunpack.c.l.b16 %v1546
    %v5182 = vunpack.c.h.b16 %v1546
    %v5183 = vunpack.c.l.b16 %v1547
    %v5184 = vunpack.c.h.b16 %v1547
    %v5185 = vunpack.c.l.b16 %v1548
    %v5186 = vunpack.c.h.b16 %v1548
    %v5187 = vunpack.c.l.b16 %v1549
    %v5188 = vunpack.c.h.b16 %v1549
    %v5189 = vunpack.c.l.b16 %v1550
    %v5190 = vunpack.c.h.b16 %v1550
    %v5191 = vunpack.c.l.b16 %v1551
    %v5192 = vunpack.c.h.b16 %v1551
    %v5193 = vunpack.c.l.b16 %v1552
    %v5194 = vunpack.c.h.b16 %v1552
    %v5195 = vunpack.c.l.b16 %v1553
    %v5196 = vunpack.c.h.b16 %v1553
    %v5197 = vunpack.c.l.b16 %v1554
    %v5198 = vunpack.c.h.b16 %v1554
    %v5199 = vunpack.c.l.b16 %v1555
    %v5200 = vunpack.c.h.b16 %v1555
    %v5201 = vunpack.c.l.b16 %v1556
    %v5202 = vunpack.c.h.b16 %v1556
    %v5203 = vunpack.c.l.b16 %v1557
    %v5204 = vunpack.c.h.b16 %v1557
    %v5205 = vunpack.c.l.b16 %v1558
    %v5206 = vunpack.c.h.b16 %v1558
    %v5207 = vunpack.c.l.b16 %v1559
    %v5208 = vunpack.c.h.b16 %v1559
    %v5209 = vunpack.c.l.b16 %v1560
    %v5210 = vunpack.c.h.b16 %v1560
    %v5211 = vunpack.c.l.b16 %v1561
    %v5212 = vunpack.c.h.b16 %v1561
    %v5213 = vunpack.c.l.b16 %v1562
    %v5214 = vunpack.c.h.b16 %v1562
    %v5215 = vunpack.c.l.b16 %v1563
    %v5216 = vunpack.c.h.b16 %v1563
    %v5217 = vunpack.c.l.b16 %v1564
    %v5218 = vunpack.c.h.b16 %v1564
    %v5219 = vunpack.c.l.b16 %v1565
    %v5220 = vunpack.c.h.b16 %v1565
    %v5221 = vunpack.c.l.b16 %v1566
    %v5222 = vunpack.c.h.b16 %v1566
    %v5223 = vunpack.c.l.b16 %v1567
    %v5224 = vunpack.c.h.b16 %v1567
    %v5225 = vunpack.c.l.b16 %v1568
    %v5226 = vunpack.c.h.b16 %v1568
    %v5227 = vunpack.c.l.b16 %v1569
    %v5228 = vunpack.c.h.b16 %v1569
    %v5229 = vunpack.c.l.b16 %v1570
    %v5230 = vunpack.c.h.b16 %v1570
    %v5231 = vunpack.c.l.b16 %v1571
    %v5232 = vunpack.c.h.b16 %v1571
    %v5233 = vunpack.c.l.b16 %v1572
    %v5234 = vunpack.c.h.b16 %v1572
    %v5235 = vunpack.c.l.b16 %v1573
    %v5236 = vunpack.c.h.b16 %v1573
    %v5237 = vunpack.c.l.b16 %v1574
    %v5238 = vunpack.c.h.b16 %v1574
    %v5239 = vunpack.c.l.b16 %v1575
    %v5240 = vunpack.c.h.b16 %v1575
    %v5241 = vunpack.c.l.b16 %v1576
    %v5242 = vunpack.c.h.b16 %v1576
    %v5243 = vunpack.c.l.b16 %v1577
    %v5244 = vunpack.c.h.b16 %v1577
    %v5245 = vunpack.c.l.b16 %v1578
    %v5246 = vunpack.c.h.b16 %v1578
    %v5247 = vunpack.c.l.b16 %v1579
    %v5248 = vunpack.c.h.b16 %v1579
    %v5249 = vunpack.c.l.b16 %v1580
    %v5250 = vunpack.c.h.b16 %v1580
    %v5251 = vunpack.c.l.b16 %v1581
    %v5252 = vunpack.c.h.b16 %v1581
    %v5253 = vunpack.c.l.b16 %v1582
    %v5254 = vunpack.c.h.b16 %v1582
    %v5255 = vunpack.c.l.b16 %v1583
    %v5256 = vunpack.c.h.b16 %v1583
    %v5257 = vunpack.c.l.b16 %v1584
    %v5258 = vunpack.c.h.b16 %v1584
    %v5259 = vunpack.c.l.b16 %v1585
    %v5260 = vunpack.c.h.b16 %v1585
    %v5261 = vunpack.c.l.b16 %v1586
    %v5262 = vunpack.c.h.b16 %v1586
    %v5263 = vunpack.c.l.b16 %v1587
    %v5264 = vunpack.c.h.b16 %v1587
    %v5265 = vunpack.c.l.b16 %v1588
    %v5266 = vunpack.c.h.b16 %v1588
    %v5267 = vunpack.c.l.b16 %v1589
    %v5268 = vunpack.c.h.b16 %v1589
    %v5269 = vunpack.c.l.b16 %v1590
    %v5270 = vunpack.c.h.b16 %v1590
    %v5271 = vunpack.c.l.b16 %v1591
    %v5272 = vunpack.c.h.b16 %v1591
    %v5273 = vunpack.c.l.b16 %v1592
    %v5274 = vunpack.c.h.b16 %v1592
    %v5275 = vunpack.c.l.b16 %v1593
    %v5276 = vunpack.c.h.b16 %v1593
    %v5277 = vunpack.c.l.b16 %v1594
    %v5278 = vunpack.c.h.b16 %v1594
    %v5279 = vunpack.c.l.b16 %v1595
    %v5280 = vunpack.c.h.b16 %v1595
    %v5281 = vunpack.c.l.b16 %v1596
    %v5282 = vunpack.c.h.b16 %v1596
    %v5283 = vunpack.c.l.b16 %v1597
    %v5284 = vunpack.c.h.b16 %v1597
    %v5285 = vunpack.c.l.b16 %v1598
    %v5286 = vunpack.c.h.b16 %v1598
    %v5287 = vunpack.c.l.b16 %v1599
    %v5288 = vunpack.c.h.b16 %v1599
    %v5289 = vunpack.c.l.b16 %v1600
    %v5290 = vunpack.c.h.b16 %v1600
    %v5291 = vunpack.c.l.b16 %v1601
    %v5292 = vunpack.c.h.b16 %v1601
    %v5293 = vunpack.c.l.b16 %v1602
    %v5294 = vunpack.c.h.b16 %v1602
    %v5295 = vunpack.c.l.b16 %v1603
    %v5296 = vunpack.c.h.b16 %v1603
    %v5297 = vunpack.c.l.b16 %v1604
    %v5298 = vunpack.c.h.b16 %v1604
    %v5299 = vunpack.c.l.b16 %v1605
    %v5300 = vunpack.c.h.b16 %v1605
    %v5301 = vunpack.c.l.b16 %v1606
    %v5302 = vunpack.c.h.b16 %v1606
    %v5303 = vunpack.c.l.b16 %v1607
    %v5304 = vunpack.c.h.b16 %v1607
    %v5305 = vunpack.c.l.b16 %v1608
    %v5306 = vunpack.c.h.b16 %v1608
    %v5307 = vunpack.c.l.b16 %v1609
    %v5308 = vunpack.c.h.b16 %v1609
    %v5309 = vunpack.c.l.b16 %v1610
    %v5310 = vunpack.c.h.b16 %v1610
    %v5311 = vunpack.c.l.b16 %v1611
    %v5312 = vunpack.c.h.b16 %v1611
    %v5313 = vunpack.c.l.b16 %v1612
    %v5314 = vunpack.c.h.b16 %v1612
    %v5315 = vunpack.c.l.b16 %v1613
    %v5316 = vunpack.c.h.b16 %v1613
    %v5317 = vunpack.c.l.b16 %v1614
    %v5318 = vunpack.c.h.b16 %v1614
    %v5319 = vunpack.c.l.b16 %v1615
    %v5320 = vunpack.c.h.b16 %v1615
    %v5321 = vunpack.c.l.b16 %v1616
    %v5322 = vunpack.c.h.b16 %v1616
    %v5323 = vunpack.c.l.b16 %v1617
    %v5324 = vunpack.c.h.b16 %v1617
    %v5325 = vunpack.c.l.b16 %v1618
    %v5326 = vunpack.c.h.b16 %v1618
    %v5327 = vunpack.c.l.b16 %v1619
    %v5328 = vunpack.c.h.b16 %v1619
    %v5329 = vunpack.c.l.b16 %v1620
    %v5330 = vunpack.c.h.b16 %v1620
    %v5331 = vunpack.c.l.b16 %v1621
    %v5332 = vunpack.c.h.b16 %v1621
    %v5333 = vunpack.c.l.b16 %v1622
    %v5334 = vunpack.c.h.b16 %v1622
    %v5335 = vunpack.c.l.b16 %v1623
    %v5336 = vunpack.c.h.b16 %v1623
    %v5337 = vunpack.c.l.b16 %v1624
    %v5338 = vunpack.c.h.b16 %v1624
    %v5339 = vunpack.c.l.b16 %v1625
    %v5340 = vunpack.c.h.b16 %v1625
    %v5341 = vunpack.c.l.b16 %v1626
    %v5342 = vunpack.c.h.b16 %v1626
    %v5343 = vunpack.c.l.b16 %v1627
    %v5344 = vunpack.c.h.b16 %v1627
    %v5345 = vunpack.c.l.b16 %v1628
    %v5346 = vunpack.c.h.b16 %v1628
    %v5347 = vunpack.c.l.b16 %v1629
    %v5348 = vunpack.c.h.b16 %v1629
    %v5349 = vunpack.c.l.b16 %v1630
    %v5350 = vunpack.c.h.b16 %v1630
    %v5351 = vunpack.c.l.b16 %v1631
    %v5352 = vunpack.c.h.b16 %v1631
    %v5353 = vunpack.c.l.b16 %v1632
    %v5354 = vunpack.c.h.b16 %v1632
    %v5355 = vunpack.c.l.b16 %v1633
    %v5356 = vunpack.c.h.b16 %v1633
    %v5357 = vunpack.c.l.b16 %v1634
    %v5358 = vunpack.c.h.b16 %v1634
    %v5359 = vunpack.c.l.b16 %v1635
    %v5360 = vunpack.c.h.b16 %v1635
    %v5361 = vunpack.c.l.b16 %v1636
    %v5362 = vunpack.c.h.b16 %v1636
    %v5363 = vunpack.c.l.b16 %v1637
    %v5364 = vunpack.c.h.b16 %v1637
    %v5365 = vunpack.c.l.b16 %v1638
    %v5366 = vunpack.c.h.b16 %v1638
    %v5367 = vunpack.c.l.b16 %v1639
    %v5368 = vunpack.c.h.b16 %v1639
    %v5369 = vunpack.c.l.b16 %v1640
    %v5370 = vunpack.c.h.b16 %v1640
    %v5371 = vunpack.c.l.b16 %v1641
    %v5372 = vunpack.c.h.b16 %v1641
    %v5373 = vunpack.c.l.b16 %v1642
    %v5374 = vunpack.c.h.b16 %v1642
    %v5375 = vunpack.c.l.b16 %v1643
    %v5376 = vunpack.c.h.b16 %v1643
    %v5377 = vunpack.c.l.b16 %v1644
    %v5378 = vunpack.c.h.b16 %v1644
    %v5379 = vunpack.c.l.b16 %v1645
    %v5380 = vunpack.c.h.b16 %v1645
    %v5381 = vunpack.c.l.b16 %v1646
    %v5382 = vunpack.c.h.b16 %v1646
    %v5383 = vunpack.c.l.b16 %v1647
    %v5384 = vunpack.c.h.b16 %v1647
    %v5385 = vunpack.c.l.b16 %v1648
    %v5386 = vunpack.c.h.b16 %v1648
    %v5387 = vunpack.c.l.b16 %v1649
    %v5388 = vunpack.c.h.b16 %v1649
    %v5389 = vunpack.c.l.b16 %v1650
    %v5390 = vunpack.c.h.b16 %v1650
    %v5391 = vunpack.c.l.b16 %v1651
    %v5392 = vunpack.c.h.b16 %v1651
    %v5393 = vunpack.c.l.b16 %v1652
    %v5394 = vunpack.c.h.b16 %v1652
    %v5395 = vunpack.c.l.b16 %v1653
    %v5396 = vunpack.c.h.b16 %v1653
    %v5397 = vunpack.c.l.b16 %v1654
    %v5398 = vunpack.c.h.b16 %v1654
    %v5399 = vunpack.c.l.b16 %v1655
    %v5400 = vunpack.c.h.b16 %v1655
    %v5401 = vunpack.c.l.b16 %v1656
    %v5402 = vunpack.c.h.b16 %v1656
    %v5403 = vunpack.c.l.b16 %v1657
    %v5404 = vunpack.c.h.b16 %v1657
    %v5405 = vunpack.c.l.b16 %v1658
    %v5406 = vunpack.c.h.b16 %v1658
    %v5407 = vunpack.c.l.b16 %v1659
    %v5408 = vunpack.c.h.b16 %v1659
    %v5409 = vunpack.c.l.b16 %v1660
    %v5410 = vunpack.c.h.b16 %v1660
    %v5411 = vunpack.c.l.b16 %v1661
    %v5412 = vunpack.c.h.b16 %v1661
    %v5413 = vunpack.c.l.b16 %v1662
    %v5414 = vunpack.c.h.b16 %v1662
    %v5415 = vunpack.c.l.b16 %v1663
    %v5416 = vunpack.c.h.b16 %v1663
    %v5417 = vunpack.c.l.b16 %v1664
    %v5418 = vunpack.c.h.b16 %v1664
    %v5419 = vunpack.c.l.b16 %v1665
    %v5420 = vunpack.c.h.b16 %v1665
    %v5421 = vunpack.c.l.b16 %v1666
    %v5422 = vunpack.c.h.b16 %v1666
    %v5423 = vunpack.c.l.b16 %v1667
    %v5424 = vunpack.c.h.b16 %v1667
    %v5425 = vunpack.c.l.b16 %v1668
    %v5426 = vunpack.c.h.b16 %v1668
    %v5427 = vunpack.c.l.b16 %v1669
    %v5428 = vunpack.c.h.b16 %v1669
    %v5429 = vunpack.c.l.b16 %v1670
    %v5430 = vunpack.c.h.b16 %v1670
    %v5431 = vunpack.c.l.b16 %v1671
    %v5432 = vunpack.c.h.b16 %v1671
    %v5433 = vunpack.c.l.b16 %v1672
    %v5434 = vunpack.c.h.b16 %v1672
    %v5435 = vunpack.c.l.b16 %v1673
    %v5436 = vunpack.c.h.b16 %v1673
    %v5437 = vunpack.c.l.b16 %v1674
    %v5438 = vunpack.c.h.b16 %v1674
    %v5439 = vunpack.c.l.b16 %v1675
    %v5440 = vunpack.c.h.b16 %v1675
    %v5441 = vunpack.c.l.b16 %v1676
    %v5442 = vunpack.c.h.b16 %v1676
    %v5443 = vunpack.c.l.b16 %v1677
    %v5444 = vunpack.c.h.b16 %v1677
    %v5445 = vunpack.c.l.b16 %v1678
    %v5446 = vunpack.c.h.b16 %v1678
    %v5447 = vunpack.c.l.b16 %v1679
    %v5448 = vunpack.c.h.b16 %v1679
    %v5449 = vunpack.c.l.b16 %v1680
    %v5450 = vunpack.c.h.b16 %v1680
    %v5451 = vunpack.c.l.b16 %v1681
    %v5452 = vunpack.c.h.b16 %v1681
    %v5453 = vunpack.c.l.b16 %v1682
    %v5454 = vunpack.c.h.b16 %v1682
    %v5455 = vunpack.c.l.b16 %v1683
    %v5456 = vunpack.c.h.b16 %v1683
    %v5457 = vunpack.c.l.b16 %v1684
    %v5458 = vunpack.c.h.b16 %v1684
    %v5459 = vunpack.c.l.b16 %v1685
    %v5460 = vunpack.c.h.b16 %v1685
    %v5461 = vunpack.c.l.b16 %v1686
    %v5462 = vunpack.c.h.b16 %v1686
    %v5463 = vunpack.c.l.b16 %v1687
    %v5464 = vunpack.c.h.b16 %v1687
    %v5465 = vunpack.c.l.b16 %v1688
    %v5466 = vunpack.c.h.b16 %v1688
    %v5467 = vunpack.c.l.b16 %v1689
    %v5468 = vunpack.c.h.b16 %v1689
    %v5469 = vunpack.c.l.b16 %v1690
    %v5470 = vunpack.c.h.b16 %v1690
    %v5471 = vunpack.c.l.b16 %v1691
    %v5472 = vunpack.c.h.b16 %v1691
    %v5473 = vunpack.c.l.b16 %v1692
    %v5474 = vunpack.c.h.b16 %v1692
    %v5475 = vunpack.c.l.b16 %v1693
    %v5476 = vunpack.c.h.b16 %v1693
    %v5477 = vunpack.c.l.b16 %v1694
    %v5478 = vunpack.c.h.b16 %v1694
    %v5479 = vunpack.c.l.b16 %v1695
    %v5480 = vunpack.c.h.b16 %v1695
    %v5481 = vunpack.c.l.b16 %v1696
    %v5482 = vunpack.c.h.b16 %v1696
    %v5483 = vunpack.c.l.b16 %v1697
    %v5484 = vunpack.c.h.b16 %v1697
    %v5485 = vunpack.c.l.b16 %v1698
    %v5486 = vunpack.c.h.b16 %v1698
    %v5487 = vunpack.c.l.b16 %v1699
    %v5488 = vunpack.c.h.b16 %v1699
    %v5489 = vunpack.c.l.b16 %v1700
    %v5490 = vunpack.c.h.b16 %v1700
    %v5491 = vunpack.c.l.b16 %v1701
    %v5492 = vunpack.c.h.b16 %v1701
    %v5493 = vunpack.c.l.b16 %v1702
    %v5494 = vunpack.c.h.b16 %v1702
    %v5495 = vunpack.c.l.b16 %v1703
    %v5496 = vunpack.c.h.b16 %v1703
    %v5497 = vunpack.c.l.b16 %v1704
    %v5498 = vunpack.c.h.b16 %v1704
    %v5499 = vunpack.c.l.b16 %v1705
    %v5500 = vunpack.c.h.b16 %v1705
    %v5501 = vunpack.c.l.b16 %v1706
    %v5502 = vunpack.c.h.b16 %v1706
    %v5503 = vunpack.c.l.b16 %v1707
    %v5504 = vunpack.c.h.b16 %v1707
    %v5505 = vunpack.c.l.b16 %v1708
    %v5506 = vunpack.c.h.b16 %v1708
    %v5507 = vunpack.c.l.b16 %v1709
    %v5508 = vunpack.c.h.b16 %v1709
    %v5509 = vunpack.c.l.b16 %v1710
    %v5510 = vunpack.c.h.b16 %v1710
    %v5511 = vunpack.c.l.b16 %v1711
    %v5512 = vunpack.c.h.b16 %v1711
    %v5513 = vunpack.c.l.b16 %v1712
    %v5514 = vunpack.c.h.b16 %v1712
    %v5515 = vunpack.c.l.b16 %v1713
    %v5516 = vunpack.c.h.b16 %v1713
    %v5517 = vunpack.c.l.b16 %v1714
    %v5518 = vunpack.c.h.b16 %v1714
    %v5519 = vunpack.c.l.b16 %v1715
    %v5520 = vunpack.c.h.b16 %v1715
    %v5521 = vunpack.c.l.b16 %v1716
    %v5522 = vunpack.c.h.b16 %v1716
    %v5523 = vunpack.c.l.b16 %v1717
    %v5524 = vunpack.c.h.b16 %v1717
    %v5525 = vunpack.c.l.b16 %v1718
    %v5526 = vunpack.c.h.b16 %v1718
    %v5527 = vunpack.c.l.b16 %v1719
    %v5528 = vunpack.c.h.b16 %v1719
    %v5529 = vunpack.c.l.b16 %v1720
    %v5530 = vunpack.c.h.b16 %v1720
    %v5531 = vunpack.c.l.b16 %v1721
    %v5532 = vunpack.c.h.b16 %v1721
    %v5533 = vunpack.c.l.b16 %v1722
    %v5534 = vunpack.c.h.b16 %v1722
    %v5535 = vunpack.c.l.b16 %v1723
    %v5536 = vunpack.c.h.b16 %v1723
    %v5537 = vunpack.c.l.b16 %v1724
    %v5538 = vunpack.c.h.b16 %v1724
    %v5539 = vunpack.c.l.b16 %v1725
    %v5540 = vunpack.c.h.b16 %v1725
    %v5541 = vunpack.c.l.b16 %v1726
    %v5542 = vunpack.c.h.b16 %v1726
    %v5543 = vunpack.c.l.b16 %v1727
    %v5544 = vunpack.c.h.b16 %v1727
    %v5545 = vunpack.c.l.b16 %v1728
    %v5546 = vunpack.c.h.b16 %v1728
    %v5547 = vunpack.c.l.b16 %v1729
    %v5548 = vunpack.c.h.b16 %v1729
    %v5549 = vunpack.c.l.b16 %v1730
    %v5550 = vunpack.c.h.b16 %v1730
    %v5551 = vunpack.c.l.b16 %v1731
    %v5552 = vunpack.c.h.b16 %v1731
    %v5553 = vunpack.c.l.b16 %v1732
    %v5554 = vunpack.c.h.b16 %v1732
    %v5555 = vunpack.c.l.b16 %v1733
    %v5556 = vunpack.c.h.b16 %v1733
    %v5557 = vunpack.c.l.b16 %v1734
    %v5558 = vunpack.c.h.b16 %v1734
    %v5559 = vunpack.c.l.b16 %v1735
    %v5560 = vunpack.c.h.b16 %v1735
    %v5561 = vunpack.c.l.b16 %v1736
    %v5562 = vunpack.c.h.b16 %v1736
    %v5563 = vunpack.c.l.b16 %v1737
    %v5564 = vunpack.c.h.b16 %v1737
    %v5565 = vunpack.c.l.b16 %v1738
    %v5566 = vunpack.c.h.b16 %v1738
    %v5567 = vunpack.c.l.b16 %v1739
    %v5568 = vunpack.c.h.b16 %v1739
    %v5569 = vunpack.c.l.b16 %v1740
    %v5570 = vunpack.c.h.b16 %v1740
    %v5571 = vunpack.c.l.b16 %v1741
    %v5572 = vunpack.c.h.b16 %v1741
    %v5573 = vunpack.c.l.b16 %v1742
    %v5574 = vunpack.c.h.b16 %v1742
    %v5575 = vunpack.c.l.b16 %v1743
    %v5576 = vunpack.c.h.b16 %v1743
    %v5577 = vunpack.c.l.b16 %v1744
    %v5578 = vunpack.c.h.b16 %v1744
    %v5579 = vunpack.c.l.b16 %v1745
    %v5580 = vunpack.c.h.b16 %v1745
    %v5581 = vunpack.c.l.b16 %v1746
    %v5582 = vunpack.c.h.b16 %v1746
    %v5583 = vunpack.c.l.b16 %v1747
    %v5584 = vunpack.c.h.b16 %v1747
    %v5585 = vunpack.c.l.b16 %v1748
    %v5586 = vunpack.c.h.b16 %v1748
    %v5587 = vunpack.c.l.b16 %v1749
    %v5588 = vunpack.c.h.b16 %v1749
    %v5589 = vunpack.c.l.b16 %v1750
    %v5590 = vunpack.c.h.b16 %v1750
    %v5591 = vpack.c.b16 %v3035, %v3031
    %v5592 = vpack.c.b16 %v3036, %v3032
    %v5593 = vpack.c.b16 %v3037, %v3033
    %v5594 = vpack.c.b16 %v3038, %v3034
    %v5595 = vpack.c.b16 %v3043, %v3039
    %v5596 = vpack.c.b16 %v3044, %v3040
    %v5597 = vpack.c.b16 %v3045, %v3041
    %v5598 = vpack.c.b16 %v3046, %v3042
    %v5599 = vpack.c.b16 %v3051, %v3047
    %v5600 = vpack.c.b16 %v3052, %v3048
    %v5601 = vpack.c.b16 %v3053, %v3049
    %v5602 = vpack.c.b16 %v3054, %v3050
    %v5603 = vpack.c.b16 %v3059, %v3055
    %v5604 = vpack.c.b16 %v3060, %v3056
    %v5605 = vpack.c.b16 %v3061, %v3057
    %v5606 = vpack.c.b16 %v3062, %v3058
    %v5607 = vpack.c.b16 %v3067, %v3063
    %v5608 = vpack.c.b16 %v3068, %v3064
    %v5609 = vpack.c.b16 %v3069, %v3065
    %v5610 = vpack.c.b16 %v3070, %v3066
    %v5611 = vpack.c.b16 %v3075, %v3071
    %v5612 = vpack.c.b16 %v3076, %v3072
    %v5613 = vpack.c.b16 %v3077, %v3073
    %v5614 = vpack.c.b16 %v3078, %v3074
    %v5615 = vpack.c.b16 %v3083, %v3079
    %v5616 = vpack.c.b16 %v3084, %v3080
    %v5617 = vpack.c.b16 %v3085, %v3081
    %v5618 = vpack.c.b16 %v3086, %v3082
    %v5619 = vpack.c.b16 %v3091, %v3087
    %v5620 = vpack.c.b16 %v3092, %v3088
    %v5621 = vpack.c.b16 %v3093, %v3089
    %v5622 = vpack.c.b16 %v3094, %v3090
    %v5623 = vpack.c.b16 %v3099, %v3095
    %v5624 = vpack.c.b16 %v3100, %v3096
    %v5625 = vpack.c.b16 %v3101, %v3097
    %v5626 = vpack.c.b16 %v3102, %v3098
    %v5627 = vpack.c.b16 %v3107, %v3103
    %v5628 = vpack.c.b16 %v3108, %v3104
    %v5629 = vpack.c.b16 %v3109, %v3105
    %v5630 = vpack.c.b16 %v3110, %v3106
    %v5631 = vpack.c.b16 %v3115, %v3111
    %v5632 = vpack.c.b16 %v3116, %v3112
    %v5633 = vpack.c.b16 %v3117, %v3113
    %v5634 = vpack.c.b16 %v3118, %v3114
    %v5635 = vpack.c.b16 %v3123, %v3119
    %v5636 = vpack.c.b16 %v3124, %v3120
    %v5637 = vpack.c.b16 %v3125, %v3121
    %v5638 = vpack.c.b16 %v3126, %v3122
    %v5639 = vpack.c.b16 %v3131, %v3127
    %v5640 = vpack.c.b16 %v3132, %v3128
    %v5641 = vpack.c.b16 %v3133, %v3129
    %v5642 = vpack.c.b16 %v3134, %v3130
    %v5643 = vpack.c.b16 %v3139, %v3135
    %v5644 = vpack.c.b16 %v3140, %v3136
    %v5645 = vpack.c.b16 %v3141, %v3137
    %v5646 = vpack.c.b16 %v3142, %v3138
    %v5647 = vpack.c.b16 %v3147, %v3143
    %v5648 = vpack.c.b16 %v3148, %v3144
    %v5649 = vpack.c.b16 %v3149, %v3145
    %v5650 = vpack.c.b16 %v3150, %v3146
    %v5651 = vpack.c.b16 %v3155, %v3151
    %v5652 = vpack.c.b16 %v3156, %v3152
    %v5653 = vpack.c.b16 %v3157, %v3153
    %v5654 = vpack.c.b16 %v3158, %v3154
    %v5655 = vpack.c.b16 %v3163, %v3159
    %v5656 = vpack.c.b16 %v3164, %v3160
    %v5657 = vpack.c.b16 %v3165, %v3161
    %v5658 = vpack.c.b16 %v3166, %v3162
    %v5659 = vpack.c.b16 %v3171, %v3167
    %v5660 = vpack.c.b16 %v3172, %v3168
    %v5661 = vpack.c.b16 %v3173, %v3169
    %v5662 = vpack.c.b16 %v3174, %v3170
    %v5663 = vpack.c.b16 %v3179, %v3175
    %v5664 = vpack.c.b16 %v3180, %v3176
    %v5665 = vpack.c.b16 %v3181, %v3177
    %v5666 = vpack.c.b16 %v3182, %v3178
    %v5667 = vpack.c.b16 %v3187, %v3183
    %v5668 = vpack.c.b16 %v3188, %v3184
    %v5669 = vpack.c.b16 %v3189, %v3185
    %v5670 = vpack.c.b16 %v3190, %v3186
    %v5671 = vpack.c.b16 %v3195, %v3191
    %v5672 = vpack.c.b16 %v3196, %v3192
    %v5673 = vpack.c.b16 %v3197, %v3193
    %v5674 = vpack.c.b16 %v3198, %v3194
    %v5675 = vpack.c.b16 %v3203, %v3199
    %v5676 = vpack.c.b16 %v3204, %v3200
    %v5677 = vpack.c.b16 %v3205, %v3201
    %v5678 = vpack.c.b16 %v3206, %v3202
    %v5679 = vpack.c.b16 %v3211, %v3207
    %v5680 = vpack.c.b16 %v3212, %v3208
    %v5681 = vpack.c.b16 %v3213, %v3209
    %v5682 = vpack.c.b16 %v3214, %v3210
    %v5683 = vpack.c.b16 %v3219, %v3215
    %v5684 = vpack.c.b16 %v3220, %v3216
    %v5685 = vpack.c.b16 %v3221, %v3217
    %v5686 = vpack.c.b16 %v3222, %v3218
    %v5687 = vpack.c.b16 %v3227, %v3223
    %v5688 = vpack.c.b16 %v3228, %v3224
    %v5689 = vpack.c.b16 %v3229, %v3225
    %v5690 = vpack.c.b16 %v3230, %v3226
    %v5691 = vpack.c.b16 %v3235, %v3231
    %v5692 = vpack.c.b16 %v3236, %v3232
    %v5693 = vpack.c.b16 %v3237, %v3233
    %v5694 = vpack.c.b16 %v3238, %v3234
    %v5695 = vpack.c.b16 %v3243, %v3239
    %v5696 = vpack.c.b16 %v3244, %v3240
    %v5697 = vpack.c.b16 %v3245, %v3241
    %v5698 = vpack.c.b16 %v3246, %v3242
    %v5699 = vpack.c.b16 %v3251, %v3247
    %v5700 = vpack.c.b16 %v3252, %v3248
    %v5701 = vpack.c.b16 %v3253, %v3249
    %v5702 = vpack.c.b16 %v3254, %v3250
    %v5703 = vpack.c.b16 %v3259, %v3255
    %v5704 = vpack.c.b16 %v3260, %v3256
    %v5705 = vpack.c.b16 %v3261, %v3257
    %v5706 = vpack.c.b16 %v3262, %v3258
    %v5707 = vpack.c.b16 %v3267, %v3263
    %v5708 = vpack.c.b16 %v3268, %v3264
    %v5709 = vpack.c.b16 %v3269, %v3265
    %v5710 = vpack.c.b16 %v3270, %v3266
    %v5711 = vpack.c.b16 %v3275, %v3271
    %v5712 = vpack.c.b16 %v3276, %v3272
    %v5713 = vpack.c.b16 %v3277, %v3273
    %v5714 = vpack.c.b16 %v3278, %v3274
    %v5715 = vpack.c.b16 %v3283, %v3279
    %v5716 = vpack.c.b16 %v3284, %v3280
    %v5717 = vpack.c.b16 %v3285, %v3281
    %v5718 = vpack.c.b16 %v3286, %v3282
    %v5719 = vpack.c.b16 %v3291, %v3287
    %v5720 = vpack.c.b16 %v3292, %v3288
    %v5721 = vpack.c.b16 %v3293, %v3289
    %v5722 = vpack.c.b16 %v3294, %v3290
    %v5723 = vpack.c.b16 %v3299, %v3295
    %v5724 = vpack.c.b16 %v3300, %v3296
    %v5725 = vpack.c.b16 %v3301, %v3297
    %v5726 = vpack.c.b16 %v3302, %v3298
    %v5727 = vpack.c.b16 %v3307, %v3303
    %v5728 = vpack.c.b16 %v3308, %v3304
    %v5729 = vpack.c.b16 %v3309, %v3305
    %v5730 = vpack.c.b16 %v3310, %v3306
    %v5731 = vpack.c.b16 %v3315, %v3311
    %v5732 = vpack.c.b16 %v3316, %v3312
    %v5733 = vpack.c.b16 %v3317, %v3313
    %v5734 = vpack.c.b16 %v3318, %v3314
    %v5735 = vpack.c.b16 %v3323, %v3319
    %v5736 = vpack.c.b16 %v3324, %v3320
    %v5737 = vpack.c.b16 %v3325, %v3321
    %v5738 = vpack.c.b16 %v3326, %v3322
    %v5739 = vpack.c.b16 %v3331, %v3327
    %v5740 = vpack.c.b16 %v3332, %v3328
    %v5741 = vpack.c.b16 %v3333, %v3329
    %v5742 = vpack.c.b16 %v3334, %v3330
    %v5743 = vpack.c.b16 %v3339, %v3335
    %v5744 = vpack.c.b16 %v3340, %v3336
    %v5745 = vpack.c.b16 %v3341, %v3337
    %v5746 = vpack.c.b16 %v3342, %v3338
    %v5747 = vpack.c.b16 %v3347, %v3343
    %v5748 = vpack.c.b16 %v3348, %v3344
    %v5749 = vpack.c.b16 %v3349, %v3345
    %v5750 = vpack.c.b16 %v3350, %v3346
    %v5751 = vpack.c.b16 %v3355, %v3351
    %v5752 = vpack.c.b16 %v3356, %v3352
    %v5753 = vpack.c.b16 %v3357, %v3353
    %v5754 = vpack.c.b16 %v3358, %v3354
    %v5755 = vpack.c.b16 %v3363, %v3359
    %v5756 = vpack.c.b16 %v3364, %v3360
    %v5757 = vpack.c.b16 %v3365, %v3361
    %v5758 = vpack.c.b16 %v3366, %v3362
    %v5759 = vpack.c.b16 %v3371, %v3367
    %v5760 = vpack.c.b16 %v3372, %v3368
    %v5761 = vpack.c.b16 %v3373, %v3369
    %v5762 = vpack.c.b16 %v3374, %v3370
    %v5763 = vpack.c.b16 %v3379, %v3375
    %v5764 = vpack.c.b16 %v3380, %v3376
    %v5765 = vpack.c.b16 %v3381, %v3377
    %v5766 = vpack.c.b16 %v3382, %v3378
    %v5767 = vpack.c.b16 %v3387, %v3383
    %v5768 = vpack.c.b16 %v3388, %v3384
    %v5769 = vpack.c.b16 %v3389, %v3385
    %v5770 = vpack.c.b16 %v3390, %v3386
    %v5771 = vpack.c.b16 %v3395, %v3391
    %v5772 = vpack.c.b16 %v3396, %v3392
    %v5773 = vpack.c.b16 %v3397, %v3393
    %v5774 = vpack.c.b16 %v3398, %v3394
    %v5775 = vpack.c.b16 %v3403, %v3399
    %v5776 = vpack.c.b16 %v3404, %v3400
    %v5777 = vpack.c.b16 %v3405, %v3401
    %v5778 = vpack.c.b16 %v3406, %v3402
    %v5779 = vpack.c.b16 %v3411, %v3407
    %v5780 = vpack.c.b16 %v3412, %v3408
    %v5781 = vpack.c.b16 %v3413, %v3409
    %v5782 = vpack.c.b16 %v3414, %v3410
    %v5783 = vpack.c.b16 %v3419, %v3415
    %v5784 = vpack.c.b16 %v3420, %v3416
    %v5785 = vpack.c.b16 %v3421, %v3417
    %v5786 = vpack.c.b16 %v3422, %v3418
    %v5787 = vpack.c.b16 %v3427, %v3423
    %v5788 = vpack.c.b16 %v3428, %v3424
    %v5789 = vpack.c.b16 %v3429, %v3425
    %v5790 = vpack.c.b16 %v3430, %v3426
    %v5791 = vpack.c.b16 %v3435, %v3431
    %v5792 = vpack.c.b16 %v3436, %v3432
    %v5793 = vpack.c.b16 %v3437, %v3433
    %v5794 = vpack.c.b16 %v3438, %v3434
    %v5795 = vpack.c.b16 %v3443, %v3439
    %v5796 = vpack.c.b16 %v3444, %v3440
    %v5797 = vpack.c.b16 %v3445, %v3441
    %v5798 = vpack.c.b16 %v3446, %v3442
    %v5799 = vpack.c.b16 %v3451, %v3447
    %v5800 = vpack.c.b16 %v3452, %v3448
    %v5801 = vpack.c.b16 %v3453, %v3449
    %v5802 = vpack.c.b16 %v3454, %v3450
    %v5803 = vpack.c.b16 %v3459, %v3455
    %v5804 = vpack.c.b16 %v3460, %v3456
    %v5805 = vpack.c.b16 %v3461, %v3457
    %v5806 = vpack.c.b16 %v3462, %v3458
    %v5807 = vpack.c.b16 %v3467, %v3463
    %v5808 = vpack.c.b16 %v3468, %v3464
    %v5809 = vpack.c.b16 %v3469, %v3465
    %v5810 = vpack.c.b16 %v3470, %v3466
    %v5811 = vpack.c.b16 %v3475, %v3471
    %v5812 = vpack.c.b16 %v3476, %v3472
    %v5813 = vpack.c.b16 %v3477, %v3473
    %v5814 = vpack.c.b16 %v3478, %v3474
    %v5815 = vpack.c.b16 %v3483, %v3479
    %v5816 = vpack.c.b16 %v3484, %v3480
    %v5817 = vpack.c.b16 %v3485, %v3481
    %v5818 = vpack.c.b16 %v3486, %v3482
    %v5819 = vpack.c.b16 %v3491, %v3487
    %v5820 = vpack.c.b16 %v3492, %v3488
    %v5821 = vpack.c.b16 %v3493, %v3489
    %v5822 = vpack.c.b16 %v3494, %v3490
    %v5823 = vpack.c.b16 %v3499, %v3495
    %v5824 = vpack.c.b16 %v3500, %v3496
    %v5825 = vpack.c.b16 %v3501, %v3497
    %v5826 = vpack.c.b16 %v3502, %v3498
    %v5827 = vpack.c.b16 %v3507, %v3503
    %v5828 = vpack.c.b16 %v3508, %v3504
    %v5829 = vpack.c.b16 %v3509, %v3505
    %v5830 = vpack.c.b16 %v3510, %v3506
    %v5831 = vpack.c.b16 %v3515, %v3511
    %v5832 = vpack.c.b16 %v3516, %v3512
    %v5833 = vpack.c.b16 %v3517, %v3513
    %v5834 = vpack.c.b16 %v3518, %v3514
    %v5835 = vpack.c.b16 %v3523, %v3519
    %v5836 = vpack.c.b16 %v3524, %v3520
    %v5837 = vpack.c.b16 %v3525, %v3521
    %v5838 = vpack.c.b16 %v3526, %v3522
    %v5839 = vpack.c.b16 %v3531, %v3527
    %v5840 = vpack.c.b16 %v3532, %v3528
    %v5841 = vpack.c.b16 %v3533, %v3529
    %v5842 = vpack.c.b16 %v3534, %v3530
    %v5843 = vpack.c.b16 %v3539, %v3535
    %v5844 = vpack.c.b16 %v3540, %v3536
    %v5845 = vpack.c.b16 %v3541, %v3537
    %v5846 = vpack.c.b16 %v3542, %v3538
    %v5847 = vpack.c.b16 %v3547, %v3543
    %v5848 = vpack.c.b16 %v3548, %v3544
    %v5849 = vpack.c.b16 %v3549, %v3545
    %v5850 = vpack.c.b16 %v3550, %v3546
    %v5851 = vpack.c.b16 %v3555, %v3551
    %v5852 = vpack.c.b16 %v3556, %v3552
    %v5853 = vpack.c.b16 %v3557, %v3553
    %v5854 = vpack.c.b16 %v3558, %v3554
    %v5855 = vpack.c.b16 %v3563, %v3559
    %v5856 = vpack.c.b16 %v3564, %v3560
    %v5857 = vpack.c.b16 %v3565, %v3561
    %v5858 = vpack.c.b16 %v3566, %v3562
    %v5859 = vpack.c.b16 %v3571, %v3567
    %v5860 = vpack.c.b16 %v3572, %v3568
    %v5861 = vpack.c.b16 %v3573, %v3569
    %v5862 = vpack.c.b16 %v3574, %v3570
    %v5863 = vpack.c.b16 %v3579, %v3575
    %v5864 = vpack.c.b16 %v3580, %v3576
    %v5865 = vpack.c.b16 %v3581, %v3577
    %v5866 = vpack.c.b16 %v3582, %v3578
    %v5867 = vpack.c.b16 %v3587, %v3583
    %v5868 = vpack.c.b16 %v3588, %v3584
    %v5869 = vpack.c.b16 %v3589, %v3585
    %v5870 = vpack.c.b16 %v3590, %v3586
    %v5871 = vpack.c.b16 %v3595, %v3591
    %v5872 = vpack.c.b16 %v3596, %v3592
    %v5873 = vpack.c.b16 %v3597, %v3593
    %v5874 = vpack.c.b16 %v3598, %v3594
    %v5875 = vpack.c.b16 %v3603, %v3599
    %v5876 = vpack.c.b16 %v3604, %v3600
    %v5877 = vpack.c.b16 %v3605, %v3601
    %v5878 = vpack.c.b16 %v3606, %v3602
    %v5879 = vpack.c.b16 %v3611, %v3607
    %v5880 = vpack.c.b16 %v3612, %v3608
    %v5881 = vpack.c.b16 %v3613, %v3609
    %v5882 = vpack.c.b16 %v3614, %v3610
    %v5883 = vpack.c.b16 %v3619, %v3615
    %v5884 = vpack.c.b16 %v3620, %v3616
    %v5885 = vpack.c.b16 %v3621, %v3617
    %v5886 = vpack.c.b16 %v3622, %v3618
    %v5887 = vpack.c.b16 %v3627, %v3623
    %v5888 = vpack.c.b16 %v3628, %v3624
    %v5889 = vpack.c.b16 %v3629, %v3625
    %v5890 = vpack.c.b16 %v3630, %v3626
    %v5891 = vpack.c.b16 %v3635, %v3631
    %v5892 = vpack.c.b16 %v3636, %v3632
    %v5893 = vpack.c.b16 %v3637, %v3633
    %v5894 = vpack.c.b16 %v3638, %v3634
    %v5895 = vpack.c.b16 %v3643, %v3639
    %v5896 = vpack.c.b16 %v3644, %v3640
    %v5897 = vpack.c.b16 %v3645, %v3641
    %v5898 = vpack.c.b16 %v3646, %v3642
    %v5899 = vpack.c.b16 %v3651, %v3647
    %v5900 = vpack.c.b16 %v3652, %v3648
    %v5901 = vpack.c.b16 %v3653, %v3649
    %v5902 = vpack.c.b16 %v3654, %v3650
    %v5903 = vpack.c.b16 %v3659, %v3655
    %v5904 = vpack.c.b16 %v3660, %v3656
    %v5905 = vpack.c.b16 %v3661, %v3657
    %v5906 = vpack.c.b16 %v3662, %v3658
    %v5907 = vpack.c.b16 %v3667, %v3663
    %v5908 = vpack.c.b16 %v3668, %v3664
    %v5909 = vpack.c.b16 %v3669, %v3665
    %v5910 = vpack.c.b16 %v3670, %v3666
    %v5911 = vpack.c.b16 %v3675, %v3671
    %v5912 = vpack.c.b16 %v3676, %v3672
    %v5913 = vpack.c.b16 %v3677, %v3673
    %v5914 = vpack.c.b16 %v3678, %v3674
    %v5915 = vpack.c.b16 %v3683, %v3679
    %v5916 = vpack.c.b16 %v3684, %v3680
    %v5917 = vpack.c.b16 %v3685, %v3681
    %v5918 = vpack.c.b16 %v3686, %v3682
    %v5919 = vpack.c.b16 %v3691, %v3687
    %v5920 = vpack.c.b16 %v3692, %v3688
    %v5921 = vpack.c.b16 %v3693, %v3689
    %v5922 = vpack.c.b16 %v3694, %v3690
    %v5923 = vpack.c.b16 %v3699, %v3695
    %v5924 = vpack.c.b16 %v3700, %v3696
    %v5925 = vpack.c.b16 %v3701, %v3697
    %v5926 = vpack.c.b16 %v3702, %v3698
    %v5927 = vpack.c.b16 %v3707, %v3703
    %v5928 = vpack.c.b16 %v3708, %v3704
    %v5929 = vpack.c.b16 %v3709, %v3705
    %v5930 = vpack.c.b16 %v3710, %v3706
    %v5931 = vpack.c.b16 %v3715, %v3711
    %v5932 = vpack.c.b16 %v3716, %v3712
    %v5933 = vpack.c.b16 %v3717, %v3713
    %v5934 = vpack.c.b16 %v3718, %v3714
    %v5935 = vpack.c.b16 %v3723, %v3719
    %v5936 = vpack.c.b16 %v3724, %v3720
    %v5937 = vpack.c.b16 %v3725, %v3721
    %v5938 = vpack.c.b16 %v3726, %v3722
    %v5939 = vpack.c.b16 %v3731, %v3727
    %v5940 = vpack.c.b16 %v3732, %v3728
    %v5941 = vpack.c.b16 %v3733, %v3729
    %v5942 = vpack.c.b16 %v3734, %v3730
    %v5943 = vpack.c.b16 %v3739, %v3735
    %v5944 = vpack.c.b16 %v3740, %v3736
    %v5945 = vpack.c.b16 %v3741, %v3737
    %v5946 = vpack.c.b16 %v3742, %v3738
    %v5947 = vpack.c.b16 %v3747, %v3743
    %v5948 = vpack.c.b16 %v3748, %v3744
    %v5949 = vpack.c.b16 %v3749, %v3745
    %v5950 = vpack.c.b16 %v3750, %v3746
    %v5951 = vpack.c.b16 %v3755, %v3751
    %v5952 = vpack.c.b16 %v3756, %v3752
    %v5953 = vpack.c.b16 %v3757, %v3753
    %v5954 = vpack.c.b16 %v3758, %v3754
    %v5955 = vpack.c.b16 %v3763, %v3759
    %v5956 = vpack.c.b16 %v3764, %v3760
    %v5957 = vpack.c.b16 %v3765, %v3761
    %v5958 = vpack.c.b16 %v3766, %v3762
    %v5959 = vpack.c.b16 %v3771, %v3767
    %v5960 = vpack.c.b16 %v3772, %v3768
    %v5961 = vpack.c.b16 %v3773, %v3769
    %v5962 = vpack.c.b16 %v3774, %v3770
    %v5963 = vpack.c.b16 %v3779, %v3775
    %v5964 = vpack.c.b16 %v3780, %v3776
    %v5965 = vpack.c.b16 %v3781, %v3777
    %v5966 = vpack.c.b16 %v3782, %v3778
    %v5967 = vpack.c.b16 %v3787, %v3783
    %v5968 = vpack.c.b16 %v3788, %v3784
    %v5969 = vpack.c.b16 %v3789, %v3785
    %v5970 = vpack.c.b16 %v3790, %v3786
    %v5971 = vpack.c.b16 %v3795, %v3791
    %v5972 = vpack.c.b16 %v3796, %v3792
    %v5973 = vpack.c.b16 %v3797, %v3793
    %v5974 = vpack.c.b16 %v3798, %v3794
    %v5975 = vpack.c.b16 %v3803, %v3799
    %v5976 = vpack.c.b16 %v3804, %v3800
    %v5977 = vpack.c.b16 %v3805, %v3801
    %v5978 = vpack.c.b16 %v3806, %v3802
    %v5979 = vpack.c.b16 %v3811, %v3807
    %v5980 = vpack.c.b16 %v3812, %v3808
    %v5981 = vpack.c.b16 %v3813, %v3809
    %v5982 = vpack.c.b16 %v3814, %v3810
    %v5983 = vpack.c.b16 %v3819, %v3815
    %v5984 = vpack.c.b16 %v3820, %v3816
    %v5985 = vpack.c.b16 %v3821, %v3817
    %v5986 = vpack.c.b16 %v3822, %v3818
    %v5987 = vpack.c.b16 %v3827, %v3823
    %v5988 = vpack.c.b16 %v3828, %v3824
    %v5989 = vpack.c.b16 %v3829, %v3825
    %v5990 = vpack.c.b16 %v3830, %v3826
    %v5991 = vpack.c.b16 %v3835, %v3831
    %v5992 = vpack.c.b16 %v3836, %v3832
    %v5993 = vpack.c.b16 %v3837, %v3833
    %v5994 = vpack.c.b16 %v3838, %v3834
    %v5995 = vpack.c.b16 %v3843, %v3839
    %v5996 = vpack.c.b16 %v3844, %v3840
    %v5997 = vpack.c.b16 %v3845, %v3841
    %v5998 = vpack.c.b16 %v3846, %v3842
    %v5999 = vpack.c.b16 %v3851, %v3847
    %v6000 = vpack.c.b16 %v3852, %v3848
    %v6001 = vpack.c.b16 %v3853, %v3849
    %v6002 = vpack.c.b16 %v3854, %v3850
    %v6003 = vpack.c.b16 %v3859, %v3855
    %v6004 = vpack.c.b16 %v3860, %v3856
    %v6005 = vpack.c.b16 %v3861, %v3857
    %v6006 = vpack.c.b16 %v3862, %v3858
    %v6007 = vpack.c.b16 %v3867, %v3863
    %v6008 = vpack.c.b16 %v3868, %v3864
    %v6009 = vpack.c.b16 %v3869, %v3865
    %v6010 = vpack.c.b16 %v3870, %v3866
    %v6011 = vpack.c.b16 %v3875, %v3871
    %v6012 = vpack.c.b16 %v3876, %v3872
    %v6013 = vpack.c.b16 %v3877, %v3873
    %v6014 = vpack.c.b16 %v3878, %v3874
    %v6015 = vpack.c.b16 %v3883, %v3879
    %v6016 = vpack.c.b16 %v3884, %v3880
    %v6017 = vpack.c.b16 %v3885, %v3881
    %v6018 = vpack.c.b16 %v3886, %v3882
    %v6019 = vpack.c.b16 %v3891, %v3887
    %v6020 = vpack.c.b16 %v3892, %v3888
    %v6021 = vpack.c.b16 %v3893, %v3889
    %v6022 = vpack.c.b16 %v3894, %v3890
    %v6023 = vpack.c.b16 %v3899, %v3895
    %v6024 = vpack.c.b16 %v3900, %v3896
    %v6025 = vpack.c.b16 %v3901, %v3897
    %v6026 = vpack.c.b16 %v3902, %v3898
    %v6027 = vpack.c.b16 %v3907, %v3903
    %v6028 = vpack.c.b16 %v3908, %v3904
    %v6029 = vpack.c.b16 %v3909, %v3905
    %v6030 = vpack.c.b16 %v3910, %v3906
    %v6031 = vpack.c.b16 %v3915, %v3911
    %v6032 = vpack.c.b16 %v3916, %v3912
    %v6033 = vpack.c.b16 %v3917, %v3913
    %v6034 = vpack.c.b16 %v3918, %v3914
    %v6035 = vpack.c.b16 %v3923, %v3919
    %v6036 = vpack.c.b16 %v3924, %v3920
    %v6037 = vpack.c.b16 %v3925, %v3921
    %v6038 = vpack.c.b16 %v3926, %v3922
    %v6039 = vpack.c.b16 %v3931, %v3927
    %v6040 = vpack.c.b16 %v3932, %v3928
    %v6041 = vpack.c.b16 %v3933, %v3929
    %v6042 = vpack.c.b16 %v3934, %v3930
    %v6043 = vpack.c.b16 %v3939, %v3935
    %v6044 = vpack.c.b16 %v3940, %v3936
    %v6045 = vpack.c.b16 %v3941, %v3937
    %v6046 = vpack.c.b16 %v3942, %v3938
    %v6047 = vpack.c.b16 %v3947, %v3943
    %v6048 = vpack.c.b16 %v3948, %v3944
    %v6049 = vpack.c.b16 %v3949, %v3945
    %v6050 = vpack.c.b16 %v3950, %v3946
    %v6051 = vpack.c.b16 %v3955, %v3951
    %v6052 = vpack.c.b16 %v3956, %v3952
    %v6053 = vpack.c.b16 %v3957, %v3953
    %v6054 = vpack.c.b16 %v3958, %v3954
    %v6055 = vpack.c.b16 %v3963, %v3959
    %v6056 = vpack.c.b16 %v3964, %v3960
    %v6057 = vpack.c.b16 %v3965, %v3961
    %v6058 = vpack.c.b16 %v3966, %v3962
    %v6059 = vpack.c.b16 %v3971, %v3967
    %v6060 = vpack.c.b16 %v3972, %v3968
    %v6061 = vpack.c.b16 %v3973, %v3969
    %v6062 = vpack.c.b16 %v3974, %v3970
    %v6063 = vpack.c.b16 %v3979, %v3975
    %v6064 = vpack.c.b16 %v3980, %v3976
    %v6065 = vpack.c.b16 %v3981, %v3977
    %v6066 = vpack.c.b16 %v3982, %v3978
    %v6067 = vpack.c.b16 %v3987, %v3983
    %v6068 = vpack.c.b16 %v3988, %v3984
    %v6069 = vpack.c.b16 %v3989, %v3985
    %v6070 = vpack.c.b16 %v3990, %v3986
    %v6071 = vpack.c.b16 %v3995, %v3991
    %v6072 = vpack.c.b16 %v3996, %v3992
    %v6073 = vpack.c.b16 %v3997, %v3993
    %v6074 = vpack.c.b16 %v3998, %v3994
    %v6075 = vpack.c.b16 %v4003, %v3999
    %v6076 = vpack.c.b16 %v4004, %v4000
    %v6077 = vpack.c.b16 %v4005, %v4001
    %v6078 = vpack.c.b16 %v4006, %v4002
    %v6079 = vpack.c.b16 %v4011, %v4007
    %v6080 = vpack.c.b16 %v4012, %v4008
    %v6081 = vpack.c.b16 %v4013, %v4009
    %v6082 = vpack.c.b16 %v4014, %v4010
    %v6083 = vpack.c.b16 %v4019, %v4015
    %v6084 = vpack.c.b16 %v4020, %v4016
    %v6085 = vpack.c.b16 %v4021, %v4017
    %v6086 = vpack.c.b16 %v4022, %v4018
    %v6087 = vpack.c.b16 %v4027, %v4023
    %v6088 = vpack.c.b16 %v4028, %v4024
    %v6089 = vpack.c.b16 %v4029, %v4025
    %v6090 = vpack.c.b16 %v4030, %v4026
    %v6091 = vpack.c.b16 %v4035, %v4031
    %v6092 = vpack.c.b16 %v4036, %v4032
    %v6093 = vpack.c.b16 %v4037, %v4033
    %v6094 = vpack.c.b16 %v4038, %v4034
    %v6095 = vpack.c.b16 %v4043, %v4039
    %v6096 = vpack.c.b16 %v4044, %v4040
    %v6097 = vpack.c.b16 %v4045, %v4041
    %v6098 = vpack.c.b16 %v4046, %v4042
    %v6099 = vpack.c.b16 %v4051, %v4047
    %v6100 = vpack.c.b16 %v4052, %v4048
    %v6101 = vpack.c.b16 %v4053, %v4049
    %v6102 = vpack.c.b16 %v4054, %v4050
    %v6103 = vpack.c.b16 %v4059, %v4055
    %v6104 = vpack.c.b16 %v4060, %v4056
    %v6105 = vpack.c.b16 %v4061, %v4057
    %v6106 = vpack.c.b16 %v4062, %v4058
    %v6107 = vpack.c.b16 %v4067, %v4063
    %v6108 = vpack.c.b16 %v4068, %v4064
    %v6109 = vpack.c.b16 %v4069, %v4065
    %v6110 = vpack.c.b16 %v4070, %v4066
    %v6111 = vpack.c.b16 %v4075, %v4071
    %v6112 = vpack.c.b16 %v4076, %v4072
    %v6113 = vpack.c.b16 %v4077, %v4073
    %v6114 = vpack.c.b16 %v4078, %v4074
    %v6115 = vpack.c.b16 %v4083, %v4079
    %v6116 = vpack.c.b16 %v4084, %v4080
    %v6117 = vpack.c.b16 %v4085, %v4081
    %v6118 = vpack.c.b16 %v4086, %v4082
    %v6119 = vpack.c.b16 %v4091, %v4087
    %v6120 = vpack.c.b16 %v4092, %v4088
    %v6121 = vpack.c.b16 %v4093, %v4089
    %v6122 = vpack.c.b16 %v4094, %v4090
    %v6123 = vpack.c.b16 %v4099, %v4095
    %v6124 = vpack.c.b16 %v4100, %v4096
    %v6125 = vpack.c.b16 %v4101, %v4097
    %v6126 = vpack.c.b16 %v4102, %v4098
    %v6127 = vpack.c.b16 %v4107, %v4103
    %v6128 = vpack.c.b16 %v4108, %v4104
    %v6129 = vpack.c.b16 %v4109, %v4105
    %v6130 = vpack.c.b16 %v4110, %v4106
    %v6131 = vpack.c.b16 %v4115, %v4111
    %v6132 = vpack.c.b16 %v4116, %v4112
    %v6133 = vpack.c.b16 %v4117, %v4113
    %v6134 = vpack.c.b16 %v4118, %v4114
    %v6135 = vpack.c.b16 %v4123, %v4119
    %v6136 = vpack.c.b16 %v4124, %v4120
    %v6137 = vpack.c.b16 %v4125, %v4121
    %v6138 = vpack.c.b16 %v4126, %v4122
    %v6139 = vpack.c.b16 %v4131, %v4127
    %v6140 = vpack.c.b16 %v4132, %v4128
    %v6141 = vpack.c.b16 %v4133, %v4129
    %v6142 = vpack.c.b16 %v4134, %v4130
    %v6143 = vpack.c.b16 %v4139, %v4135
    %v6144 = vpack.c.b16 %v4140, %v4136
    %v6145 = vpack.c.b16 %v4141, %v4137
    %v6146 = vpack.c.b16 %v4142, %v4138
    %v6147 = vpack.c.b16 %v4147, %v4143
    %v6148 = vpack.c.b16 %v4148, %v4144
    %v6149 = vpack.c.b16 %v4149, %v4145
    %v6150 = vpack.c.b16 %v4150, %v4146
    %v6151 = vpack.c.b16 %v4155, %v4151
    %v6152 = vpack.c.b16 %v4156, %v4152
    %v6153 = vpack.c.b16 %v4157, %v4153
    %v6154 = vpack.c.b16 %v4158, %v4154
    %v6155 = vpack.c.b16 %v4163, %v4159
    %v6156 = vpack.c.b16 %v4164, %v4160
    %v6157 = vpack.c.b16 %v4165, %v4161
    %v6158 = vpack.c.b16 %v4166, %v4162
    %v6159 = vpack.c.b16 %v4171, %v4167
    %v6160 = vpack.c.b16 %v4172, %v4168
    %v6161 = vpack.c.b16 %v4173, %v4169
    %v6162 = vpack.c.b16 %v4174, %v4170
    %v6163 = vpack.c.b16 %v4179, %v4175
    %v6164 = vpack.c.b16 %v4180, %v4176
    %v6165 = vpack.c.b16 %v4181, %v4177
    %v6166 = vpack.c.b16 %v4182, %v4178
    %v6167 = vpack.c.b16 %v4187, %v4183
    %v6168 = vpack.c.b16 %v4188, %v4184
    %v6169 = vpack.c.b16 %v4189, %v4185
    %v6170 = vpack.c.b16 %v4190, %v4186
    %v6171 = vpack.c.b16 %v4195, %v4191
    %v6172 = vpack.c.b16 %v4196, %v4192
    %v6173 = vpack.c.b16 %v4197, %v4193
    %v6174 = vpack.c.b16 %v4198, %v4194
    %v6175 = vpack.c.b16 %v4203, %v4199
    %v6176 = vpack.c.b16 %v4204, %v4200
    %v6177 = vpack.c.b16 %v4205, %v4201
    %v6178 = vpack.c.b16 %v4206, %v4202
    %v6179 = vpack.c.b16 %v4211, %v4207
    %v6180 = vpack.c.b16 %v4212, %v4208
    %v6181 = vpack.c.b16 %v4213, %v4209
    %v6182 = vpack.c.b16 %v4214, %v4210
    %v6183 = vpack.c.b16 %v4219, %v4215
    %v6184 = vpack.c.b16 %v4220, %v4216
    %v6185 = vpack.c.b16 %v4221, %v4217
    %v6186 = vpack.c.b16 %v4222, %v4218
    %v6187 = vpack.c.b16 %v4227, %v4223
    %v6188 = vpack.c.b16 %v4228, %v4224
    %v6189 = vpack.c.b16 %v4229, %v4225
    %v6190 = vpack.c.b16 %v4230, %v4226
    %v6191 = vpack.c.b16 %v4235, %v4231
    %v6192 = vpack.c.b16 %v4236, %v4232
    %v6193 = vpack.c.b16 %v4237, %v4233
    %v6194 = vpack.c.b16 %v4238, %v4234
    %v6195 = vpack.c.b16 %v4243, %v4239
    %v6196 = vpack.c.b16 %v4244, %v4240
    %v6197 = vpack.c.b16 %v4245, %v4241
    %v6198 = vpack.c.b16 %v4246, %v4242
    %v6199 = vpack.c.b16 %v4251, %v4247
    %v6200 = vpack.c.b16 %v4252, %v4248
    %v6201 = vpack.c.b16 %v4253, %v4249
    %v6202 = vpack.c.b16 %v4254, %v4250
    %v6203 = vpack.c.b16 %v4259, %v4255
    %v6204 = vpack.c.b16 %v4260, %v4256
    %v6205 = vpack.c.b16 %v4261, %v4257
    %v6206 = vpack.c.b16 %v4262, %v4258
    %v6207 = vpack.c.b16 %v4267, %v4263
    %v6208 = vpack.c.b16 %v4268, %v4264
    %v6209 = vpack.c.b16 %v4269, %v4265
    %v6210 = vpack.c.b16 %v4270, %v4266
    %v6211 = vpack.c.b16 %v4275, %v4271
    %v6212 = vpack.c.b16 %v4276, %v4272
    %v6213 = vpack.c.b16 %v4277, %v4273
    %v6214 = vpack.c.b16 %v4278, %v4274
    %v6215 = vpack.c.b16 %v4283, %v4279
    %v6216 = vpack.c.b16 %v4284, %v4280
    %v6217 = vpack.c.b16 %v4285, %v4281
    %v6218 = vpack.c.b16 %v4286, %v4282
    %v6219 = vpack.c.b16 %v4291, %v4287
    %v6220 = vpack.c.b16 %v4292, %v4288
    %v6221 = vpack.c.b16 %v4293, %v4289
    %v6222 = vpack.c.b16 %v4294, %v4290
    %v6223 = vpack.c.b16 %v4299, %v4295
    %v6224 = vpack.c.b16 %v4300, %v4296
    %v6225 = vpack.c.b16 %v4301, %v4297
    %v6226 = vpack.c.b16 %v4302, %v4298
    %v6227 = vpack.c.b16 %v4307, %v4303
    %v6228 = vpack.c.b16 %v4308, %v4304
    %v6229 = vpack.c.b16 %v4309, %v4305
    %v6230 = vpack.c.b16 %v4310, %v4306
    %v6231 = vpack.c.b16 %v4315, %v4311
    %v6232 = vpack.c.b16 %v4316, %v4312
    %v6233 = vpack.c.b16 %v4317, %v4313
    %v6234 = vpack.c.b16 %v4318, %v4314
    %v6235 = vpack.c.b16 %v4323, %v4319
    %v6236 = vpack.c.b16 %v4324, %v4320
    %v6237 = vpack.c.b16 %v4325, %v4321
    %v6238 = vpack.c.b16 %v4326, %v4322
    %v6239 = vpack.c.b16 %v4331, %v4327
    %v6240 = vpack.c.b16 %v4332, %v4328
    %v6241 = vpack.c.b16 %v4333, %v4329
    %v6242 = vpack.c.b16 %v4334, %v4330
    %v6243 = vpack.c.b16 %v4339, %v4335
    %v6244 = vpack.c.b16 %v4340, %v4336
    %v6245 = vpack.c.b16 %v4341, %v4337
    %v6246 = vpack.c.b16 %v4342, %v4338
    %v6247 = vpack.c.b16 %v4347, %v4343
    %v6248 = vpack.c.b16 %v4348, %v4344
    %v6249 = vpack.c.b16 %v4349, %v4345
    %v6250 = vpack.c.b16 %v4350, %v4346
    %v6251 = vpack.c.b16 %v4355, %v4351
    %v6252 = vpack.c.b16 %v4356, %v4352
    %v6253 = vpack.c.b16 %v4357, %v4353
    %v6254 = vpack.c.b16 %v4358, %v4354
    %v6255 = vpack.c.b16 %v4363, %v4359
    %v6256 = vpack.c.b16 %v4364, %v4360
    %v6257 = vpack.c.b16 %v4365, %v4361
    %v6258 = vpack.c.b16 %v4366, %v4362
    %v6259 = vpack.c.b16 %v4371, %v4367
    %v6260 = vpack.c.b16 %v4372, %v4368
    %v6261 = vpack.c.b16 %v4373, %v4369
    %v6262 = vpack.c.b16 %v4374, %v4370
    %v6263 = vpack.c.b16 %v4379, %v4375
    %v6264 = vpack.c.b16 %v4380, %v4376
    %v6265 = vpack.c.b16 %v4381, %v4377
    %v6266 = vpack.c.b16 %v4382, %v4378
    %v6267 = vpack.c.b16 %v4387, %v4383
    %v6268 = vpack.c.b16 %v4388, %v4384
    %v6269 = vpack.c.b16 %v4389, %v4385
    %v6270 = vpack.c.b16 %v4390, %v4386
    %v6271 = vpack.c.b16 %v4395, %v4391
    %v6272 = vpack.c.b16 %v4396, %v4392
    %v6273 = vpack.c.b16 %v4397, %v4393
    %v6274 = vpack.c.b16 %v4398, %v4394
    %v6275 = vpack.c.b16 %v4403, %v4399
    %v6276 = vpack.c.b16 %v4404, %v4400
    %v6277 = vpack.c.b16 %v4405, %v4401
    %v6278 = vpack.c.b16 %v4406, %v4402
    %v6279 = vpack.c.b16 %v4411, %v4407
    %v6280 = vpack.c.b16 %v4412, %v4408
    %v6281 = vpack.c.b16 %v4413, %v4409
    %v6282 = vpack.c.b16 %v4414, %v4410
    %v6283 = vpack.c.b16 %v4419, %v4415
    %v6284 = vpack.c.b16 %v4420, %v4416
    %v6285 = vpack.c.b16 %v4421, %v4417
    %v6286 = vpack.c.b16 %v4422, %v4418
    %v6287 = vpack.c.b16 %v4427, %v4423
    %v6288 = vpack.c.b16 %v4428, %v4424
    %v6289 = vpack.c.b16 %v4429, %v4425
    %v6290 = vpack.c.b16 %v4430, %v4426
    %v6291 = vpack.c.b16 %v4435, %v4431
    %v6292 = vpack.c.b16 %v4436, %v4432
    %v6293 = vpack.c.b16 %v4437, %v4433
    %v6294 = vpack.c.b16 %v4438, %v4434
    %v6295 = vpack.c.b16 %v4443, %v4439
    %v6296 = vpack.c.b16 %v4444, %v4440
    %v6297 = vpack.c.b16 %v4445, %v4441
    %v6298 = vpack.c.b16 %v4446, %v4442
    %v6299 = vpack.c.b16 %v4451, %v4447
    %v6300 = vpack.c.b16 %v4452, %v4448
    %v6301 = vpack.c.b16 %v4453, %v4449
    %v6302 = vpack.c.b16 %v4454, %v4450
    %v6303 = vpack.c.b16 %v4459, %v4455
    %v6304 = vpack.c.b16 %v4460, %v4456
    %v6305 = vpack.c.b16 %v4461, %v4457
    %v6306 = vpack.c.b16 %v4462, %v4458
    %v6307 = vpack.c.b16 %v4467, %v4463
    %v6308 = vpack.c.b16 %v4468, %v4464
    %v6309 = vpack.c.b16 %v4469, %v4465
    %v6310 = vpack.c.b16 %v4470, %v4466
    %v6311 = vpack.c.b16 %v4475, %v4471
    %v6312 = vpack.c.b16 %v4476, %v4472
    %v6313 = vpack.c.b16 %v4477, %v4473
    %v6314 = vpack.c.b16 %v4478, %v4474
    %v6315 = vpack.c.b16 %v4483, %v4479
    %v6316 = vpack.c.b16 %v4484, %v4480
    %v6317 = vpack.c.b16 %v4485, %v4481
    %v6318 = vpack.c.b16 %v4486, %v4482
    %v6319 = vpack.c.b16 %v4491, %v4487
    %v6320 = vpack.c.b16 %v4492, %v4488
    %v6321 = vpack.c.b16 %v4493, %v4489
    %v6322 = vpack.c.b16 %v4494, %v4490
    %v6323 = vpack.c.b16 %v4499, %v4495
    %v6324 = vpack.c.b16 %v4500, %v4496
    %v6325 = vpack.c.b16 %v4501, %v4497
    %v6326 = vpack.c.b16 %v4502, %v4498
    %v6327 = vpack.c.b16 %v4507, %v4503
    %v6328 = vpack.c.b16 %v4508, %v4504
    %v6329 = vpack.c.b16 %v4509, %v4505
    %v6330 = vpack.c.b16 %v4510, %v4506
    %v6331 = vpack.c.b16 %v4515, %v4511
    %v6332 = vpack.c.b16 %v4516, %v4512
    %v6333 = vpack.c.b16 %v4517, %v4513
    %v6334 = vpack.c.b16 %v4518, %v4514
    %v6335 = vpack.c.b16 %v4523, %v4519
    %v6336 = vpack.c.b16 %v4524, %v4520
    %v6337 = vpack.c.b16 %v4525, %v4521
    %v6338 = vpack.c.b16 %v4526, %v4522
    %v6339 = vpack.c.b16 %v4531, %v4527
    %v6340 = vpack.c.b16 %v4532, %v4528
    %v6341 = vpack.c.b16 %v4533, %v4529
    %v6342 = vpack.c.b16 %v4534, %v4530
    %v6343 = vpack.c.b16 %v4539, %v4535
    %v6344 = vpack.c.b16 %v4540, %v4536
    %v6345 = vpack.c.b16 %v4541, %v4537
    %v6346 = vpack.c.b16 %v4542, %v4538
    %v6347 = vpack.c.b16 %v4547, %v4543
    %v6348 = vpack.c.b16 %v4548, %v4544
    %v6349 = vpack.c.b16 %v4549, %v4545
    %v6350 = vpack.c.b16 %v4550, %v4546
    %v6351 = vpack.c.b16 %v4555, %v4551
    %v6352 = vpack.c.b16 %v4556, %v4552
    %v6353 = vpack.c.b16 %v4557, %v4553
    %v6354 = vpack.c.b16 %v4558, %v4554
    %v6355 = vpack.c.b16 %v4563, %v4559
    %v6356 = vpack.c.b16 %v4564, %v4560
    %v6357 = vpack.c.b16 %v4565, %v4561
    %v6358 = vpack.c.b16 %v4566, %v4562
    %v6359 = vpack.c.b16 %v4571, %v4567
    %v6360 = vpack.c.b16 %v4572, %v4568
    %v6361 = vpack.c.b16 %v4573, %v4569
    %v6362 = vpack.c.b16 %v4574, %v4570
    %v6363 = vpack.c.b16 %v4579, %v4575
    %v6364 = vpack.c.b16 %v4580, %v4576
    %v6365 = vpack.c.b16 %v4581, %v4577
    %v6366 = vpack.c.b16 %v4582, %v4578
    %v6367 = vpack.c.b16 %v4587, %v4583
    %v6368 = vpack.c.b16 %v4588, %v4584
    %v6369 = vpack.c.b16 %v4589, %v4585
    %v6370 = vpack.c.b16 %v4590, %v4586
    %v6371 = vpack.c.b16 %v4595, %v4591
    %v6372 = vpack.c.b16 %v4596, %v4592
    %v6373 = vpack.c.b16 %v4597, %v4593
    %v6374 = vpack.c.b16 %v4598, %v4594
    %v6375 = vpack.c.b16 %v4603, %v4599
    %v6376 = vpack.c.b16 %v4604, %v4600
    %v6377 = vpack.c.b16 %v4605, %v4601
    %v6378 = vpack.c.b16 %v4606, %v4602
    %v6379 = vpack.c.b16 %v4611, %v4607
    %v6380 = vpack.c.b16 %v4612, %v4608
    %v6381 = vpack.c.b16 %v4613, %v4609
    %v6382 = vpack.c.b16 %v4614, %v4610
    %v6383 = vpack.c.b16 %v4619, %v4615
    %v6384 = vpack.c.b16 %v4620, %v4616
    %v6385 = vpack.c.b16 %v4621, %v4617
    %v6386 = vpack.c.b16 %v4622, %v4618
    %v6387 = vpack.c.b16 %v4627, %v4623
    %v6388 = vpack.c.b16 %v4628, %v4624
    %v6389 = vpack.c.b16 %v4629, %v4625
    %v6390 = vpack.c.b16 %v4630, %v4626
    %v6391 = vpack.c.b16 %v4635, %v4631
    %v6392 = vpack.c.b16 %v4636, %v4632
    %v6393 = vpack.c.b16 %v4637, %v4633
    %v6394 = vpack.c.b16 %v4638, %v4634
    %v6395 = vpack.c.b16 %v4643, %v4639
    %v6396 = vpack.c.b16 %v4644, %v4640
    %v6397 = vpack.c.b16 %v4645, %v4641
    %v6398 = vpack.c.b16 %v4646, %v4642
    %v6399 = vpack.c.b16 %v4651, %v4647
    %v6400 = vpack.c.b16 %v4652, %v4648
    %v6401 = vpack.c.b16 %v4653, %v4649
    %v6402 = vpack.c.b16 %v4654, %v4650
    %v6403 = vpack.c.b16 %v4659, %v4655
    %v6404 = vpack.c.b16 %v4660, %v4656
    %v6405 = vpack.c.b16 %v4661, %v4657
    %v6406 = vpack.c.b16 %v4662, %v4658
    %v6407 = vpack.c.b16 %v4667, %v4663
    %v6408 = vpack.c.b16 %v4668, %v4664
    %v6409 = vpack.c.b16 %v4669, %v4665
    %v6410 = vpack.c.b16 %v4670, %v4666
    %v6411 = vpack.c.b16 %v4675, %v4671
    %v6412 = vpack.c.b16 %v4676, %v4672
    %v6413 = vpack.c.b16 %v4677, %v4673
    %v6414 = vpack.c.b16 %v4678, %v4674
    %v6415 = vpack.c.b16 %v4683, %v4679
    %v6416 = vpack.c.b16 %v4684, %v4680
    %v6417 = vpack.c.b16 %v4685, %v4681
    %v6418 = vpack.c.b16 %v4686, %v4682
    %v6419 = vpack.c.b16 %v4691, %v4687
    %v6420 = vpack.c.b16 %v4692, %v4688
    %v6421 = vpack.c.b16 %v4693, %v4689
    %v6422 = vpack.c.b16 %v4694, %v4690
    %v6423 = vpack.c.b16 %v4699, %v4695
    %v6424 = vpack.c.b16 %v4700, %v4696
    %v6425 = vpack.c.b16 %v4701, %v4697
    %v6426 = vpack.c.b16 %v4702, %v4698
    %v6427 = vpack.c.b16 %v4707, %v4703
    %v6428 = vpack.c.b16 %v4708, %v4704
    %v6429 = vpack.c.b16 %v4709, %v4705
    %v6430 = vpack.c.b16 %v4710, %v4706
    %v6431 = vpack.c.b16 %v4715, %v4711
    %v6432 = vpack.c.b16 %v4716, %v4712
    %v6433 = vpack.c.b16 %v4717, %v4713
    %v6434 = vpack.c.b16 %v4718, %v4714
    %v6435 = vpack.c.b16 %v4723, %v4719
    %v6436 = vpack.c.b16 %v4724, %v4720
    %v6437 = vpack.c.b16 %v4725, %v4721
    %v6438 = vpack.c.b16 %v4726, %v4722
    %v6439 = vpack.c.b16 %v4731, %v4727
    %v6440 = vpack.c.b16 %v4732, %v4728
    %v6441 = vpack.c.b16 %v4733, %v4729
    %v6442 = vpack.c.b16 %v4734, %v4730
    %v6443 = vpack.c.b16 %v4739, %v4735
    %v6444 = vpack.c.b16 %v4740, %v4736
    %v6445 = vpack.c.b16 %v4741, %v4737
    %v6446 = vpack.c.b16 %v4742, %v4738
    %v6447 = vpack.c.b16 %v4747, %v4743
    %v6448 = vpack.c.b16 %v4748, %v4744
    %v6449 = vpack.c.b16 %v4749, %v4745
    %v6450 = vpack.c.b16 %v4750, %v4746
    %v6451 = vpack.c.b16 %v4755, %v4751
    %v6452 = vpack.c.b16 %v4756, %v4752
    %v6453 = vpack.c.b16 %v4757, %v4753
    %v6454 = vpack.c.b16 %v4758, %v4754
    %v6455 = vpack.c.b16 %v4763, %v4759
    %v6456 = vpack.c.b16 %v4764, %v4760
    %v6457 = vpack.c.b16 %v4765, %v4761
    %v6458 = vpack.c.b16 %v4766, %v4762
    %v6459 = vpack.c.b16 %v4771, %v4767
    %v6460 = vpack.c.b16 %v4772, %v4768
    %v6461 = vpack.c.b16 %v4773, %v4769
    %v6462 = vpack.c.b16 %v4774, %v4770
    %v6463 = vpack.c.b16 %v4779, %v4775
    %v6464 = vpack.c.b16 %v4780, %v4776
    %v6465 = vpack.c.b16 %v4781, %v4777
    %v6466 = vpack.c.b16 %v4782, %v4778
    %v6467 = vpack.c.b16 %v4787, %v4783
    %v6468 = vpack.c.b16 %v4788, %v4784
    %v6469 = vpack.c.b16 %v4789, %v4785
    %v6470 = vpack.c.b16 %v4790, %v4786
    %v6471 = vpack.c.b16 %v4795, %v4791
    %v6472 = vpack.c.b16 %v4796, %v4792
    %v6473 = vpack.c.b16 %v4797, %v4793
    %v6474 = vpack.c.b16 %v4798, %v4794
    %v6475 = vpack.c.b16 %v4803, %v4799
    %v6476 = vpack.c.b16 %v4804, %v4800
    %v6477 = vpack.c.b16 %v4805, %v4801
    %v6478 = vpack.c.b16 %v4806, %v4802
    %v6479 = vpack.c.b16 %v4811, %v4807
    %v6480 = vpack.c.b16 %v4812, %v4808
    %v6481 = vpack.c.b16 %v4813, %v4809
    %v6482 = vpack.c.b16 %v4814, %v4810
    %v6483 = vpack.c.b16 %v4819, %v4815
    %v6484 = vpack.c.b16 %v4820, %v4816
    %v6485 = vpack.c.b16 %v4821, %v4817
    %v6486 = vpack.c.b16 %v4822, %v4818
    %v6487 = vpack.c.b16 %v4827, %v4823
    %v6488 = vpack.c.b16 %v4828, %v4824
    %v6489 = vpack.c.b16 %v4829, %v4825
    %v6490 = vpack.c.b16 %v4830, %v4826
    %v6491 = vpack.c.b16 %v4835, %v4831
    %v6492 = vpack.c.b16 %v4836, %v4832
    %v6493 = vpack.c.b16 %v4837, %v4833
    %v6494 = vpack.c.b16 %v4838, %v4834
    %v6495 = vpack.c.b16 %v4843, %v4839
    %v6496 = vpack.c.b16 %v4844, %v4840
    %v6497 = vpack.c.b16 %v4845, %v4841
    %v6498 = vpack.c.b16 %v4846, %v4842
    %v6499 = vpack.c.b16 %v4851, %v4847
    %v6500 = vpack.c.b16 %v4852, %v4848
    %v6501 = vpack.c.b16 %v4853, %v4849
    %v6502 = vpack.c.b16 %v4854, %v4850
    %v6503 = vpack.c.b16 %v4859, %v4855
    %v6504 = vpack.c.b16 %v4860, %v4856
    %v6505 = vpack.c.b16 %v4861, %v4857
    %v6506 = vpack.c.b16 %v4862, %v4858
    %v6507 = vpack.c.b16 %v4867, %v4863
    %v6508 = vpack.c.b16 %v4868, %v4864
    %v6509 = vpack.c.b16 %v4869, %v4865
    %v6510 = vpack.c.b16 %v4870, %v4866
    %v6511 = vpack.c.b16 %v4875, %v4871
    %v6512 = vpack.c.b16 %v4876, %v4872
    %v6513 = vpack.c.b16 %v4877, %v4873
    %v6514 = vpack.c.b16 %v4878, %v4874
    %v6515 = vpack.c.b16 %v4883, %v4879
    %v6516 = vpack.c.b16 %v4884, %v4880
    %v6517 = vpack.c.b16 %v4885, %v4881
    %v6518 = vpack.c.b16 %v4886, %v4882
    %v6519 = vpack.c.b16 %v4891, %v4887
    %v6520 = vpack.c.b16 %v4892, %v4888
    %v6521 = vpack.c.b16 %v4893, %v4889
    %v6522 = vpack.c.b16 %v4894, %v4890
    %v6523 = vpack.c.b16 %v4899, %v4895
    %v6524 = vpack.c.b16 %v4900, %v4896
    %v6525 = vpack.c.b16 %v4901, %v4897
    %v6526 = vpack.c.b16 %v4902, %v4898
    %v6527 = vpack.c.b16 %v4907, %v4903
    %v6528 = vpack.c.b16 %v4908, %v4904
    %v6529 = vpack.c.b16 %v4909, %v4905
    %v6530 = vpack.c.b16 %v4910, %v4906
    %v6531 = vpack.c.b16 %v4915, %v4911
    %v6532 = vpack.c.b16 %v4916, %v4912
    %v6533 = vpack.c.b16 %v4917, %v4913
    %v6534 = vpack.c.b16 %v4918, %v4914
    %v6535 = vpack.c.b16 %v4923, %v4919
    %v6536 = vpack.c.b16 %v4924, %v4920
    %v6537 = vpack.c.b16 %v4925, %v4921
    %v6538 = vpack.c.b16 %v4926, %v4922
    %v6539 = vpack.c.b16 %v4931, %v4927
    %v6540 = vpack.c.b16 %v4932, %v4928
    %v6541 = vpack.c.b16 %v4933, %v4929
    %v6542 = vpack.c.b16 %v4934, %v4930
    %v6543 = vpack.c.b16 %v4939, %v4935
    %v6544 = vpack.c.b16 %v4940, %v4936
    %v6545 = vpack.c.b16 %v4941, %v4937
    %v6546 = vpack.c.b16 %v4942, %v4938
    %v6547 = vpack.c.b16 %v4947, %v4943
    %v6548 = vpack.c.b16 %v4948, %v4944
    %v6549 = vpack.c.b16 %v4949, %v4945
    %v6550 = vpack.c.b16 %v4950, %v4946
    %v6551 = vpack.c.b16 %v4955, %v4951
    %v6552 = vpack.c.b16 %v4956, %v4952
    %v6553 = vpack.c.b16 %v4957, %v4953
    %v6554 = vpack.c.b16 %v4958, %v4954
    %v6555 = vpack.c.b16 %v4963, %v4959
    %v6556 = vpack.c.b16 %v4964, %v4960
    %v6557 = vpack.c.b16 %v4965, %v4961
    %v6558 = vpack.c.b16 %v4966, %v4962
    %v6559 = vpack.c.b16 %v4971, %v4967
    %v6560 = vpack.c.b16 %v4972, %v4968
    %v6561 = vpack.c.b16 %v4973, %v4969
    %v6562 = vpack.c.b16 %v4974, %v4970
    %v6563 = vpack.c.b16 %v4979, %v4975
    %v6564 = vpack.c.b16 %v4980, %v4976
    %v6565 = vpack.c.b16 %v4981, %v4977
    %v6566 = vpack.c.b16 %v4982, %v4978
    %v6567 = vpack.c.b16 %v4987, %v4983
    %v6568 = vpack.c.b16 %v4988, %v4984
    %v6569 = vpack.c.b16 %v4989, %v4985
    %v6570 = vpack.c.b16 %v4990, %v4986
    %v6571 = vpack.c.b16 %v4995, %v4991
    %v6572 = vpack.c.b16 %v4996, %v4992
    %v6573 = vpack.c.b16 %v4997, %v4993
    %v6574 = vpack.c.b16 %v4998, %v4994
    %v6575 = vpack.c.b16 %v5003, %v4999
    %v6576 = vpack.c.b16 %v5004, %v5000
    %v6577 = vpack.c.b16 %v5005, %v5001
    %v6578 = vpack.c.b16 %v5006, %v5002
    %v6579 = vpack.c.b16 %v5011, %v5007
    %v6580 = vpack.c.b16 %v5012, %v5008
    %v6581 = vpack.c.b16 %v5013, %v5009
    %v6582 = vpack.c.b16 %v5014, %v5010
    %v6583 = vpack.c.b16 %v5019, %v5015
    %v6584 = vpack.c.b16 %v5020, %v5016
    %v6585 = vpack.c.b16 %v5021, %v5017
    %v6586 = vpack.c.b16 %v5022, %v5018
    %v6587 = vpack.c.b16 %v5027, %v5023
    %v6588 = vpack.c.b16 %v5028, %v5024
    %v6589 = vpack.c.b16 %v5029, %v5025
    %v6590 = vpack.c.b16 %v5030, %v5026
    %v6591 = vpack.c.b16 %v5035, %v5031
    %v6592 = vpack.c.b16 %v5036, %v5032
    %v6593 = vpack.c.b16 %v5037, %v5033
    %v6594 = vpack.c.b16 %v5038, %v5034
    %v6595 = vpack.c.b16 %v5043, %v5039
    %v6596 = vpack.c.b16 %v5044, %v5040
    %v6597 = vpack.c.b16 %v5045, %v5041
    %v6598 = vpack.c.b16 %v5046, %v5042
    %v6599 = vpack.c.b16 %v5051, %v5047
    %v6600 = vpack.c.b16 %v5052, %v5048
    %v6601 = vpack.c.b16 %v5053, %v5049
    %v6602 = vpack.c.b16 %v5054, %v5050
    %v6603 = vpack.c.b16 %v5059, %v5055
    %v6604 = vpack.c.b16 %v5060, %v5056
    %v6605 = vpack.c.b16 %v5061, %v5057
    %v6606 = vpack.c.b16 %v5062, %v5058
    %v6607 = vpack.c.b16 %v5067, %v5063
    %v6608 = vpack.c.b16 %v5068, %v5064
    %v6609 = vpack.c.b16 %v5069, %v5065
    %v6610 = vpack.c.b16 %v5070, %v5066
    %v6611 = vpack.c.b16 %v5075, %v5071
    %v6612 = vpack.c.b16 %v5076, %v5072
    %v6613 = vpack.c.b16 %v5077, %v5073
    %v6614 = vpack.c.b16 %v5078, %v5074
    %v6615 = vpack.c.b16 %v5083, %v5079
    %v6616 = vpack.c.b16 %v5084, %v5080
    %v6617 = vpack.c.b16 %v5085, %v5081
    %v6618 = vpack.c.b16 %v5086, %v5082
    %v6619 = vpack.c.b16 %v5091, %v5087
    %v6620 = vpack.c.b16 %v5092, %v5088
    %v6621 = vpack.c.b16 %v5093, %v5089
    %v6622 = vpack.c.b16 %v5094, %v5090
    %v6623 = vpack.c.b16 %v5099, %v5095
    %v6624 = vpack.c.b16 %v5100, %v5096
    %v6625 = vpack.c.b16 %v5101, %v5097
    %v6626 = vpack.c.b16 %v5102, %v5098
    %v6627 = vpack.c.b16 %v5107, %v5103
    %v6628 = vpack.c.b16 %v5108, %v5104
    %v6629 = vpack.c.b16 %v5109, %v5105
    %v6630 = vpack.c.b16 %v5110, %v5106
    %v6631 = vpack.c.b16 %v5115, %v5111
    %v6632 = vpack.c.b16 %v5116, %v5112
    %v6633 = vpack.c.b16 %v5117, %v5113
    %v6634 = vpack.c.b16 %v5118, %v5114
    %v6635 = vpack.c.b16 %v5123, %v5119
    %v6636 = vpack.c.b16 %v5124, %v5120
    %v6637 = vpack.c.b16 %v5125, %v5121
    %v6638 = vpack.c.b16 %v5126, %v5122
    %v6639 = vpack.c.b16 %v5131, %v5127
    %v6640 = vpack.c.b16 %v5132, %v5128
    %v6641 = vpack.c.b16 %v5133, %v5129
    %v6642 = vpack.c.b16 %v5134, %v5130
    %v6643 = vpack.c.b16 %v5139, %v5135
    %v6644 = vpack.c.b16 %v5140, %v5136
    %v6645 = vpack.c.b16 %v5141, %v5137
    %v6646 = vpack.c.b16 %v5142, %v5138
    %v6647 = vpack.c.b16 %v5147, %v5143
    %v6648 = vpack.c.b16 %v5148, %v5144
    %v6649 = vpack.c.b16 %v5149, %v5145
    %v6650 = vpack.c.b16 %v5150, %v5146
    %v6651 = vpack.c.b16 %v5155, %v5151
    %v6652 = vpack.c.b16 %v5156, %v5152
    %v6653 = vpack.c.b16 %v5157, %v5153
    %v6654 = vpack.c.b16 %v5158, %v5154
    %v6655 = vpack.c.b16 %v5163, %v5159
    %v6656 = vpack.c.b16 %v5164, %v5160
    %v6657 = vpack.c.b16 %v5165, %v5161
    %v6658 = vpack.c.b16 %v5166, %v5162
    %v6659 = vpack.c.b16 %v5171, %v5167
    %v6660 = vpack.c.b16 %v5172, %v5168
    %v6661 = vpack.c.b16 %v5173, %v5169
    %v6662 = vpack.c.b16 %v5174, %v5170
    %v6663 = vpack.c.b16 %v5179, %v5175
    %v6664 = vpack.c.b16 %v5180, %v5176
    %v6665 = vpack.c.b16 %v5181, %v5177
    %v6666 = vpack.c.b16 %v5182, %v5178
    %v6667 = vpack.c.b16 %v5187, %v5183
    %v6668 = vpack.c.b16 %v5188, %v5184
    %v6669 = vpack.c.b16 %v5189, %v5185
    %v6670 = vpack.c.b16 %v5190, %v5186
    %v6671 = vpack.c.b16 %v5195, %v5191
    %v6672 = vpack.c.b16 %v5196, %v5192
    %v6673 = vpack.c.b16 %v5197, %v5193
    %v6674 = vpack.c.b16 %v5198, %v5194
    %v6675 = vpack.c.b16 %v5203, %v5199
    %v6676 = vpack.c.b16 %v5204, %v5200
    %v6677 = vpack.c.b16 %v5205, %v5201
    %v6678 = vpack.c.b16 %v5206, %v5202
    %v6679 = vpack.c.b16 %v5211, %v5207
    %v6680 = vpack.c.b16 %v5212, %v5208
    %v6681 = vpack.c.b16 %v5213, %v5209
    %v6682 = vpack.c.b16 %v5214, %v5210
    %v6683 = vpack.c.b16 %v5219, %v5215
    %v6684 = vpack.c.b16 %v5220, %v5216
    %v6685 = vpack.c.b16 %v5221, %v5217
    %v6686 = vpack.c.b16 %v5222, %v5218
    %v6687 = vpack.c.b16 %v5227, %v5223
    %v6688 = vpack.c.b16 %v5228, %v5224
    %v6689 = vpack.c.b16 %v5229, %v5225
    %v6690 = vpack.c.b16 %v5230, %v5226
    %v6691 = vpack.c.b16 %v5235, %v5231
    %v6692 = vpack.c.b16 %v5236, %v5232
    %v6693 = vpack.c.b16 %v5237, %v5233
    %v6694 = vpack.c.b16 %v5238, %v5234
    %v6695 = vpack.c.b16 %v5243, %v5239
    %v6696 = vpack.c.b16 %v5244, %v5240
    %v6697 = vpack.c.b16 %v5245, %v5241
    %v6698 = vpack.c.b16 %v5246, %v5242
    %v6699 = vpack.c.b16 %v5251, %v5247
    %v6700 = vpack.c.b16 %v5252, %v5248
    %v6701 = vpack.c.b16 %v5253, %v5249
    %v6702 = vpack.c.b16 %v5254, %v5250
    %v6703 = vpack.c.b16 %v5259, %v5255
    %v6704 = vpack.c.b16 %v5260, %v5256
    %v6705 = vpack.c.b16 %v5261, %v5257
    %v6706 = vpack.c.b16 %v5262, %v5258
    %v6707 = vpack.c.b16 %v5267, %v5263
    %v6708 = vpack.c.b16 %v5268, %v5264
    %v6709 = vpack.c.b16 %v5269, %v5265
    %v6710 = vpack.c.b16 %v5270, %v5266
    %v6711 = vpack.c.b16 %v5275, %v5271
    %v6712 = vpack.c.b16 %v5276, %v5272
    %v6713 = vpack.c.b16 %v5277, %v5273
    %v6714 = vpack.c.b16 %v5278, %v5274
    %v6715 = vpack.c.b16 %v5283, %v5279
    %v6716 = vpack.c.b16 %v5284, %v5280
    %v6717 = vpack.c.b16 %v5285, %v5281
    %v6718 = vpack.c.b16 %v5286, %v5282
    %v6719 = vpack.c.b16 %v5291, %v5287
    %v6720 = vpack.c.b16 %v5292, %v5288
    %v6721 = vpack.c.b16 %v5293, %v5289
    %v6722 = vpack.c.b16 %v5294, %v5290
    %v6723 = vpack.c.b16 %v5299, %v5295
    %v6724 = vpack.c.b16 %v5300, %v5296
    %v6725 = vpack.c.b16 %v5301, %v5297
    %v6726 = vpack.c.b16 %v5302, %v5298
    %v6727 = vpack.c.b16 %v5307, %v5303
    %v6728 = vpack.c.b16 %v5308, %v5304
    %v6729 = vpack.c.b16 %v5309, %v5305
    %v6730 = vpack.c.b16 %v5310, %v5306
    %v6731 = vpack.c.b16 %v5315, %v5311
    %v6732 = vpack.c.b16 %v5316, %v5312
    %v6733 = vpack.c.b16 %v5317, %v5313
    %v6734 = vpack.c.b16 %v5318, %v5314
    %v6735 = vpack.c.b16 %v5323, %v5319
    %v6736 = vpack.c.b16 %v5324, %v5320
    %v6737 = vpack.c.b16 %v5325, %v5321
    %v6738 = vpack.c.b16 %v5326, %v5322
    %v6739 = vpack.c.b16 %v5331, %v5327
    %v6740 = vpack.c.b16 %v5332, %v5328
    %v6741 = vpack.c.b16 %v5333, %v5329
    %v6742 = vpack.c.b16 %v5334, %v5330
    %v6743 = vpack.c.b16 %v5339, %v5335
    %v6744 = vpack.c.b16 %v5340, %v5336
    %v6745 = vpack.c.b16 %v5341, %v5337
    %v6746 = vpack.c.b16 %v5342, %v5338
    %v6747 = vpack.c.b16 %v5347, %v5343
    %v6748 = vpack.c.b16 %v5348, %v5344
    %v6749 = vpack.c.b16 %v5349, %v5345
    %v6750 = vpack.c.b16 %v5350, %v5346
    %v6751 = vpack.c.b16 %v5355, %v5351
    %v6752 = vpack.c.b16 %v5356, %v5352
    %v6753 = vpack.c.b16 %v5357, %v5353
    %v6754 = vpack.c.b16 %v5358, %v5354
    %v6755 = vpack.c.b16 %v5363, %v5359
    %v6756 = vpack.c.b16 %v5364, %v5360
    %v6757 = vpack.c.b16 %v5365, %v5361
    %v6758 = vpack.c.b16 %v5366, %v5362
    %v6759 = vpack.c.b16 %v5371, %v5367
    %v6760 = vpack.c.b16 %v5372, %v5368
    %v6761 = vpack.c.b16 %v5373, %v5369
    %v6762 = vpack.c.b16 %v5374, %v5370
    %v6763 = vpack.c.b16 %v5379, %v5375
    %v6764 = vpack.c.b16 %v5380, %v5376
    %v6765 = vpack.c.b16 %v5381, %v5377
    %v6766 = vpack.c.b16 %v5382, %v5378
    %v6767 = vpack.c.b16 %v5387, %v5383
    %v6768 = vpack.c.b16 %v5388, %v5384
    %v6769 = vpack.c.b16 %v5389, %v5385
    %v6770 = vpack.c.b16 %v5390, %v5386
    %v6771 = vpack.c.b16 %v5395, %v5391
    %v6772 = vpack.c.b16 %v5396, %v5392
    %v6773 = vpack.c.b16 %v5397, %v5393
    %v6774 = vpack.c.b16 %v5398, %v5394
    %v6775 = vpack.c.b16 %v5403, %v5399
    %v6776 = vpack.c.b16 %v5404, %v5400
    %v6777 = vpack.c.b16 %v5405, %v5401
    %v6778 = vpack.c.b16 %v5406, %v5402
    %v6779 = vpack.c.b16 %v5411, %v5407
    %v6780 = vpack.c.b16 %v5412, %v5408
    %v6781 = vpack.c.b16 %v5413, %v5409
    %v6782 = vpack.c.b16 %v5414, %v5410
    %v6783 = vpack.c.b16 %v5419, %v5415
    %v6784 = vpack.c.b16 %v5420, %v5416
    %v6785 = vpack.c.b16 %v5421, %v5417
    %v6786 = vpack.c.b16 %v5422, %v5418
    %v6787 = vpack.c.b16 %v5427, %v5423
    %v6788 = vpack.c.b16 %v5428, %v5424
    %v6789 = vpack.c.b16 %v5429, %v5425
    %v6790 = vpack.c.b16 %v5430, %v5426
    %v6791 = vpack.c.b16 %v5435, %v5431
    %v6792 = vpack.c.b16 %v5436, %v5432
    %v6793 = vpack.c.b16 %v5437, %v5433
    %v6794 = vpack.c.b16 %v5438, %v5434
    %v6795 = vpack.c.b16 %v5443, %v5439
    %v6796 = vpack.c.b16 %v5444, %v5440
    %v6797 = vpack.c.b16 %v5445, %v5441
    %v6798 = vpack.c.b16 %v5446, %v5442
    %v6799 = vpack.c.b16 %v5451, %v5447
    %v6800 = vpack.c.b16 %v5452, %v5448
    %v6801 = vpack.c.b16 %v5453, %v5449
    %v6802 = vpack.c.b16 %v5454, %v5450
    %v6803 = vpack.c.b16 %v5459, %v5455
    %v6804 = vpack.c.b16 %v5460, %v5456
    %v6805 = vpack.c.b16 %v5461, %v5457
    %v6806 = vpack.c.b16 %v5462, %v5458
    %v6807 = vpack.c.b16 %v5467, %v5463
    %v6808 = vpack.c.b16 %v5468, %v5464
    %v6809 = vpack.c.b16 %v5469, %v5465
    %v6810 = vpack.c.b16 %v5470, %v5466
    %v6811 = vpack.c.b16 %v5475, %v5471
    %v6812 = vpack.c.b16 %v5476, %v5472
    %v6813 = vpack.c.b16 %v5477, %v5473
    %v6814 = vpack.c.b16 %v5478, %v5474
    %v6815 = vpack.c.b16 %v5483, %v5479
    %v6816 = vpack.c.b16 %v5484, %v5480
    %v6817 = vpack.c.b16 %v5485, %v5481
    %v6818 = vpack.c.b16 %v5486, %v5482
    %v6819 = vpack.c.b16 %v5491, %v5487
    %v6820 = vpack.c.b16 %v5492, %v5488
    %v6821 = vpack.c.b16 %v5493, %v5489
    %v6822 = vpack.c.b16 %v5494, %v5490
    %v6823 = vpack.c.b16 %v5499, %v5495
    %v6824 = vpack.c.b16 %v5500, %v5496
    %v6825 = vpack.c.b16 %v5501, %v5497
    %v6826 = vpack.c.b16 %v5502, %v5498
    %v6827 = vpack.c.b16 %v5507, %v5503
    %v6828 = vpack.c.b16 %v5508, %v5504
    %v6829 = vpack.c.b16 %v5509, %v5505
    %v6830 = vpack.c.b16 %v5510, %v5506
    %v6831 = vpack.c.b16 %v5515, %v5511
    %v6832 = vpack.c.b16 %v5516, %v5512
    %v6833 = vpack.c.b16 %v5517, %v5513
    %v6834 = vpack.c.b16 %v5518, %v5514
    %v6835 = vpack.c.b16 %v5523, %v5519
    %v6836 = vpack.c.b16 %v5524, %v5520
    %v6837 = vpack.c.b16 %v5525, %v5521
    %v6838 = vpack.c.b16 %v5526, %v5522
    %v6839 = vpack.c.b16 %v5531, %v5527
    %v6840 = vpack.c.b16 %v5532, %v5528
    %v6841 = vpack.c.b16 %v5533, %v5529
    %v6842 = vpack.c.b16 %v5534, %v5530
    %v6843 = vpack.c.b16 %v5539, %v5535
    %v6844 = vpack.c.b16 %v5540, %v5536
    %v6845 = vpack.c.b16 %v5541, %v5537
    %v6846 = vpack.c.b16 %v5542, %v5538
    %v6847 = vpack.c.b16 %v5547, %v5543
    %v6848 = vpack.c.b16 %v5548, %v5544
    %v6849 = vpack.c.b16 %v5549, %v5545
    %v6850 = vpack.c.b16 %v5550, %v5546
    %v6851 = vpack.c.b16 %v5555, %v5551
    %v6852 = vpack.c.b16 %v5556, %v5552
    %v6853 = vpack.c.b16 %v5557, %v5553
    %v6854 = vpack.c.b16 %v5558, %v5554
    %v6855 = vpack.c.b16 %v5563, %v5559
    %v6856 = vpack.c.b16 %v5564, %v5560
    %v6857 = vpack.c.b16 %v5565, %v5561
    %v6858 = vpack.c.b16 %v5566, %v5562
    %v6859 = vpack.c.b16 %v5571, %v5567
    %v6860 = vpack.c.b16 %v5572, %v5568
    %v6861 = vpack.c.b16 %v5573, %v5569
    %v6862 = vpack.c.b16 %v5574, %v5570
    %v6863 = vpack.c.b16 %v5579, %v5575
    %v6864 = vpack.c.b16 %v5580, %v5576
    %v6865 = vpack.c.b16 %v5581, %v5577
    %v6866 = vpack.c.b16 %v5582, %v5578
    %v6867 = vpack.c.b16 %v5587, %v5583
    %v6868 = vpack.c.b16 %v5588, %v5584
    %v6869 = vpack.c.b16 %v5589, %v5585
    %v6870 = vpack.c.b16 %v5590, %v5586
    %8151 = vmatpush.bf16.msra.mxu0 %v5619
    %8152 = vmatpush.bf16.msra.mxu0 %v5615
    %8153 = vmatpush.bf16.msra.mxu0 %v5611
    %8154 = vmatpush.bf16.msra.mxu0 %v5607
    %8155 = vmatpush.bf16.msra.mxu0 %v5603
    %8156 = vmatpush.bf16.msra.mxu0 %v5599
    %8157 = vmatpush.bf16.msra.mxu0 %v5595
    %8158 = vmatpush.bf16.msra.mxu0 %v5591
    %8159 = vmatmul.bf16.gmra.mxu0 %v175
    %v8160 = vpop.f32.mrf.mxu0
    %v8161 = vadd.f32 0.0, %v8160
    %v8162 = vpop.f32.mrf.mxu0
    %8163 = vdwg.mxu0
    %8164 = vmatpush.bf16.msra.mxu0 %v5651
    %8165 = vmatpush.bf16.msra.mxu0 %v5647
    %8166 = vmatpush.bf16.msra.mxu0 %v5643
    %8167 = vmatpush.bf16.msra.mxu0 %v5639
    %8168 = vmatpush.bf16.msra.mxu0 %v5635
    %8169 = vmatpush.bf16.msra.mxu0 %v5631
    %8170 = vmatpush.bf16.msra.mxu0 %v5627
    %8171 = vmatpush.bf16.msra.mxu0 %v5623
    %8172 = vmatmul.bf16.gmra.mxu0 %v176
    %v8173 = vpop.f32.mrf.mxu0
    %v8174 = vadd.f32 %v8161, %v8173
    %v8175 = vpop.f32.mrf.mxu0
    %8176 = vdwg.mxu0
    %8177 = vmatpush.bf16.msra.mxu0 %v5683
    %8178 = vmatpush.bf16.msra.mxu0 %v5679
    %8179 = vmatpush.bf16.msra.mxu0 %v5675
    %8180 = vmatpush.bf16.msra.mxu0 %v5671
    %8181 = vmatpush.bf16.msra.mxu0 %v5667
    %8182 = vmatpush.bf16.msra.mxu0 %v5663
    %8183 = vmatpush.bf16.msra.mxu0 %v5659
    %8184 = vmatpush.bf16.msra.mxu0 %v5655
    %8185 = vmatmul.bf16.gmra.mxu0 %v177
    %v8186 = vpop.f32.mrf.mxu0
    %v8187 = vadd.f32 %v8174, %v8186
    %v8188 = vpop.f32.mrf.mxu0
    %8189 = vdwg.mxu0
    %8190 = vmatpush.bf16.msra.mxu0 %v5715
    %8191 = vmatpush.bf16.msra.mxu0 %v5711
    %8192 = vmatpush.bf16.msra.mxu0 %v5707
    %8193 = vmatpush.bf16.msra.mxu0 %v5703
    %8194 = vmatpush.bf16.msra.mxu0 %v5699
    %8195 = vmatpush.bf16.msra.mxu0 %v5695
    %8196 = vmatpush.bf16.msra.mxu0 %v5691
    %8197 = vmatpush.bf16.msra.mxu0 %v5687
    %8198 = vmatmul.bf16.gmra.mxu0 %v178
    %v8199 = vpop.f32.mrf.mxu0
    %v8200 = vadd.f32 %v8187, %v8199
    %v8201 = vpop.f32.mrf.mxu0
    %8202 = vdwg.mxu0
    %8203 = vmatpush.bf16.msra.mxu0 %v5747
    %8204 = vmatpush.bf16.msra.mxu0 %v5743
    %8205 = vmatpush.bf16.msra.mxu0 %v5739
    %8206 = vmatpush.bf16.msra.mxu0 %v5735
    %8207 = vmatpush.bf16.msra.mxu0 %v5731
    %8208 = vmatpush.bf16.msra.mxu0 %v5727
    %8209 = vmatpush.bf16.msra.mxu0 %v5723
    %8210 = vmatpush.bf16.msra.mxu0 %v5719
    %8211 = vmatmul.bf16.gmra.mxu0 %v179
    %v8212 = vpop.f32.mrf.mxu0
    %v8213 = vadd.f32 %v8200, %v8212
    %v8214 = vpop.f32.mrf.mxu0
    %8215 = vdwg.mxu0
    %8216 = vmatpush.bf16.msra.mxu0 %v5779
    %8217 = vmatpush.bf16.msra.mxu0 %v5775
    %8218 = vmatpush.bf16.msra.mxu0 %v5771
    %8219 = vmatpush.bf16.msra.mxu0 %v5767
    %8220 = vmatpush.bf16.msra.mxu0 %v5763
    %8221 = vmatpush.bf16.msra.mxu0 %v5759
    %8222 = vmatpush.bf16.msra.mxu0 %v5755
    %8223 = vmatpush.bf16.msra.mxu0 %v5751
    %8224 = vmatmul.bf16.gmra.mxu0 %v180
    %v8225 = vpop.f32.mrf.mxu0
    %v8226 = vadd.f32 %v8213, %v8225
    %v8227 = vpop.f32.mrf.mxu0
    %8228 = vdwg.mxu0
    %8229 = vmatpush.bf16.msra.mxu0 %v5811
    %8230 = vmatpush.bf16.msra.mxu0 %v5807
    %8231 = vmatpush.bf16.msra.mxu0 %v5803
    %8232 = vmatpush.bf16.msra.mxu0 %v5799
    %8233 = vmatpush.bf16.msra.mxu0 %v5795
    %8234 = vmatpush.bf16.msra.mxu0 %v5791
    %8235 = vmatpush.bf16.msra.mxu0 %v5787
    %8236 = vmatpush.bf16.msra.mxu0 %v5783
    %8237 = vmatmul.bf16.gmra.mxu0 %v181
    %v8238 = vpop.f32.mrf.mxu0
    %v8239 = vadd.f32 %v8226, %v8238
    %v8240 = vpop.f32.mrf.mxu0
    %8241 = vdwg.mxu0
    %8242 = vmatpush.bf16.msra.mxu0 %v5843
    %8243 = vmatpush.bf16.msra.mxu0 %v5839
    %8244 = vmatpush.bf16.msra.mxu0 %v5835
    %8245 = vmatpush.bf16.msra.mxu0 %v5831
    %8246 = vmatpush.bf16.msra.mxu0 %v5827
    %8247 = vmatpush.bf16.msra.mxu0 %v5823
    %8248 = vmatpush.bf16.msra.mxu0 %v5819
    %8249 = vmatpush.bf16.msra.mxu0 %v5815
    %8250 = vmatmul.bf16.gmra.mxu0 %v182
    %v8251 = vpop.f32.mrf.mxu0
    %v8252 = vadd.f32 %v8239, %v8251
    %v8253 = vpop.f32.mrf.mxu0
    %8254 = vdwg.mxu0
    %8255 = vmatpush.bf16.msra.mxu0 %v5875
    %8256 = vmatpush.bf16.msra.mxu0 %v5871
    %8257 = vmatpush.bf16.msra.mxu0 %v5867
    %8258 = vmatpush.bf16.msra.mxu0 %v5863
    %8259 = vmatpush.bf16.msra.mxu0 %v5859
    %8260 = vmatpush.bf16.msra.mxu0 %v5855
    %8261 = vmatpush.bf16.msra.mxu0 %v5851
    %8262 = vmatpush.bf16.msra.mxu0 %v5847
    %8263 = vmatmul.bf16.gmra.mxu0 %v183
    %v8264 = vpop.f32.mrf.mxu0
    %v8265 = vadd.f32 %v8252, %v8264
    %v8266 = vpop.f32.mrf.mxu0
    %8267 = vdwg.mxu0
    %8268 = vmatpush.bf16.msra.mxu0 %v5907
    %8269 = vmatpush.bf16.msra.mxu0 %v5903
    %8270 = vmatpush.bf16.msra.mxu0 %v5899
    %8271 = vmatpush.bf16.msra.mxu0 %v5895
    %8272 = vmatpush.bf16.msra.mxu0 %v5891
    %8273 = vmatpush.bf16.msra.mxu0 %v5887
    %8274 = vmatpush.bf16.msra.mxu0 %v5883
    %8275 = vmatpush.bf16.msra.mxu0 %v5879
    %8276 = vmatmul.bf16.gmra.mxu0 %v184
    %v8277 = vpop.f32.mrf.mxu0
    %v8278 = vadd.f32 %v8265, %v8277
    %v8279 = vpop.f32.mrf.mxu0
    %8280 = vdwg.mxu0
    %8281 = vmatpush.bf16.msra.mxu0 %v5939
    %8282 = vmatpush.bf16.msra.mxu0 %v5935
    %8283 = vmatpush.bf16.msra.mxu0 %v5931
    %8284 = vmatpush.bf16.msra.mxu0 %v5927
    %8285 = vmatpush.bf16.msra.mxu0 %v5923
    %8286 = vmatpush.bf16.msra.mxu0 %v5919
    %8287 = vmatpush.bf16.msra.mxu0 %v5915
    %8288 = vmatpush.bf16.msra.mxu0 %v5911
    %8289 = vmatmul.bf16.gmra.mxu0 %v185
    %v8290 = vpop.f32.mrf.mxu0
    %v8291 = vadd.f32 %v8278, %v8290
    %v8292 = vpop.f32.mrf.mxu0
    %8293 = vdwg.mxu0
    %8294 = vmatpush.bf16.msra.mxu0 %v5971
    %8295 = vmatpush.bf16.msra.mxu0 %v5967
    %8296 = vmatpush.bf16.msra.mxu0 %v5963
    %8297 = vmatpush.bf16.msra.mxu0 %v5959
    %8298 = vmatpush.bf16.msra.mxu0 %v5955
    %8299 = vmatpush.bf16.msra.mxu0 %v5951
    %8300 = vmatpush.bf16.msra.mxu0 %v5947
    %8301 = vmatpush.bf16.msra.mxu0 %v5943
    %8302 = vmatmul.bf16.gmra.mxu0 %v186
    %v8303 = vpop.f32.mrf.mxu0
    %v8304 = vadd.f32 %v8291, %v8303
    %v8305 = vpop.f32.mrf.mxu0
    %8306 = vdwg.mxu0
    %8307 = vmatpush.bf16.msra.mxu0 %v6003
    %8308 = vmatpush.bf16.msra.mxu0 %v5999
    %8309 = vmatpush.bf16.msra.mxu0 %v5995
    %8310 = vmatpush.bf16.msra.mxu0 %v5991
    %8311 = vmatpush.bf16.msra.mxu0 %v5987
    %8312 = vmatpush.bf16.msra.mxu0 %v5983
    %8313 = vmatpush.bf16.msra.mxu0 %v5979
    %8314 = vmatpush.bf16.msra.mxu0 %v5975
    %8315 = vmatmul.bf16.gmra.mxu0 %v187
    %v8316 = vpop.f32.mrf.mxu0
    %v8317 = vadd.f32 %v8304, %v8316
    %v8318 = vpop.f32.mrf.mxu0
    %8319 = vdwg.mxu0
    %8320 = vmatpush.bf16.msra.mxu0 %v6035
    %8321 = vmatpush.bf16.msra.mxu0 %v6031
    %8322 = vmatpush.bf16.msra.mxu0 %v6027
    %8323 = vmatpush.bf16.msra.mxu0 %v6023
    %8324 = vmatpush.bf16.msra.mxu0 %v6019
    %8325 = vmatpush.bf16.msra.mxu0 %v6015
    %8326 = vmatpush.bf16.msra.mxu0 %v6011
    %8327 = vmatpush.bf16.msra.mxu0 %v6007
    %8328 = vmatmul.bf16.gmra.mxu0 %v188
    %v8329 = vpop.f32.mrf.mxu0
    %v8330 = vadd.f32 %v8317, %v8329
    %v8331 = vpop.f32.mrf.mxu0
    %8332 = vdwg.mxu0
    %8333 = vmatpush.bf16.msra.mxu0 %v6067
    %8334 = vmatpush.bf16.msra.mxu0 %v6063
    %8335 = vmatpush.bf16.msra.mxu0 %v6059
    %8336 = vmatpush.bf16.msra.mxu0 %v6055
    %8337 = vmatpush.bf16.msra.mxu0 %v6051
    %8338 = vmatpush.bf16.msra.mxu0 %v6047
    %8339 = vmatpush.bf16.msra.mxu0 %v6043
    %8340 = vmatpush.bf16.msra.mxu0 %v6039
    %8341 = vmatmul.bf16.gmra.mxu0 %v189
    %v8342 = vpop.f32.mrf.mxu0
    %v8343 = vadd.f32 %v8330, %v8342
    %v8344 = vpop.f32.mrf.mxu0
    %8345 = vdwg.mxu0
    %8346 = vmatpush.bf16.msra.mxu0 %v6099
    %8347 = vmatpush.bf16.msra.mxu0 %v6095
    %8348 = vmatpush.bf16.msra.mxu0 %v6091
    %8349 = vmatpush.bf16.msra.mxu0 %v6087
    %8350 = vmatpush.bf16.msra.mxu0 %v6083
    %8351 = vmatpush.bf16.msra.mxu0 %v6079
    %8352 = vmatpush.bf16.msra.mxu0 %v6075
    %8353 = vmatpush.bf16.msra.mxu0 %v6071
    %8354 = vmatmul.bf16.gmra.mxu0 %v190
    %v8355 = vpop.f32.mrf.mxu0
    %v8356 = vadd.f32 %v8343, %v8355
    %v8357 = vpop.f32.mrf.mxu0
    %8358 = vdwg.mxu0
    %8359 = vmatpush.bf16.msra.mxu0 %v6131
    %8360 = vmatpush.bf16.msra.mxu0 %v6127
    %8361 = vmatpush.bf16.msra.mxu0 %v6123
    %8362 = vmatpush.bf16.msra.mxu0 %v6119
    %8363 = vmatpush.bf16.msra.mxu0 %v6115
    %8364 = vmatpush.bf16.msra.mxu0 %v6111
    %8365 = vmatpush.bf16.msra.mxu0 %v6107
    %8366 = vmatpush.bf16.msra.mxu0 %v6103
    %8367 = vmatmul.bf16.gmra.mxu0 %v191
    %v8368 = vpop.f32.mrf.mxu0
    %v8369 = vadd.f32 %v8356, %v8368
    %v8370 = vpop.f32.mrf.mxu0
    %8371 = vdwg.mxu0
    %8372 = vmatpush.bf16.msra.mxu0 %v6163
    %8373 = vmatpush.bf16.msra.mxu0 %v6159
    %8374 = vmatpush.bf16.msra.mxu0 %v6155
    %8375 = vmatpush.bf16.msra.mxu0 %v6151
    %8376 = vmatpush.bf16.msra.mxu0 %v6147
    %8377 = vmatpush.bf16.msra.mxu0 %v6143
    %8378 = vmatpush.bf16.msra.mxu0 %v6139
    %8379 = vmatpush.bf16.msra.mxu0 %v6135
    %8380 = vmatmul.bf16.gmra.mxu0 %v192
    %v8381 = vpop.f32.mrf.mxu0
    %v8382 = vadd.f32 %v8369, %v8381
    %v8383 = vpop.f32.mrf.mxu0
    %8384 = vdwg.mxu0
    %8385 = vmatpush.bf16.msra.mxu0 %v6195
    %8386 = vmatpush.bf16.msra.mxu0 %v6191
    %8387 = vmatpush.bf16.msra.mxu0 %v6187
    %8388 = vmatpush.bf16.msra.mxu0 %v6183
    %8389 = vmatpush.bf16.msra.mxu0 %v6179
    %8390 = vmatpush.bf16.msra.mxu0 %v6175
    %8391 = vmatpush.bf16.msra.mxu0 %v6171
    %8392 = vmatpush.bf16.msra.mxu0 %v6167
    %8393 = vmatmul.bf16.gmra.mxu0 %v193
    %v8394 = vpop.f32.mrf.mxu0
    %v8395 = vadd.f32 %v8382, %v8394
    %v8396 = vpop.f32.mrf.mxu0
    %8397 = vdwg.mxu0
    %8398 = vmatpush.bf16.msra.mxu0 %v6227
    %8399 = vmatpush.bf16.msra.mxu0 %v6223
    %8400 = vmatpush.bf16.msra.mxu0 %v6219
    %8401 = vmatpush.bf16.msra.mxu0 %v6215
    %8402 = vmatpush.bf16.msra.mxu0 %v6211
    %8403 = vmatpush.bf16.msra.mxu0 %v6207
    %8404 = vmatpush.bf16.msra.mxu0 %v6203
    %8405 = vmatpush.bf16.msra.mxu0 %v6199
    %8406 = vmatmul.bf16.gmra.mxu0 %v194
    %v8407 = vpop.f32.mrf.mxu0
    %v8408 = vadd.f32 %v8395, %v8407
    %v8409 = vpop.f32.mrf.mxu0
    %8410 = vdwg.mxu0
    %8411 = vmatpush.bf16.msra.mxu0 %v6259
    %8412 = vmatpush.bf16.msra.mxu0 %v6255
    %8413 = vmatpush.bf16.msra.mxu0 %v6251
    %8414 = vmatpush.bf16.msra.mxu0 %v6247
    %8415 = vmatpush.bf16.msra.mxu0 %v6243
    %8416 = vmatpush.bf16.msra.mxu0 %v6239
    %8417 = vmatpush.bf16.msra.mxu0 %v6235
    %8418 = vmatpush.bf16.msra.mxu0 %v6231
    %8419 = vmatmul.bf16.gmra.mxu0 %v195
    %v8420 = vpop.f32.mrf.mxu0
    %v8421 = vadd.f32 %v8408, %v8420
    %v8422 = vpop.f32.mrf.mxu0
    %8423 = vdwg.mxu0
    %8424 = vmatpush.bf16.msra.mxu0 %v6291
    %8425 = vmatpush.bf16.msra.mxu0 %v6287
    %8426 = vmatpush.bf16.msra.mxu0 %v6283
    %8427 = vmatpush.bf16.msra.mxu0 %v6279
    %8428 = vmatpush.bf16.msra.mxu0 %v6275
    %8429 = vmatpush.bf16.msra.mxu0 %v6271
    %8430 = vmatpush.bf16.msra.mxu0 %v6267
    %8431 = vmatpush.bf16.msra.mxu0 %v6263
    %8432 = vmatmul.bf16.gmra.mxu0 %v196
    %v8433 = vpop.f32.mrf.mxu0
    %v8434 = vadd.f32 %v8421, %v8433
    %v8435 = vpop.f32.mrf.mxu0
    %8436 = vdwg.mxu0
    %8437 = vmatpush.bf16.msra.mxu0 %v6323
    %8438 = vmatpush.bf16.msra.mxu0 %v6319
    %8439 = vmatpush.bf16.msra.mxu0 %v6315
    %8440 = vmatpush.bf16.msra.mxu0 %v6311
    %8441 = vmatpush.bf16.msra.mxu0 %v6307
    %8442 = vmatpush.bf16.msra.mxu0 %v6303
    %8443 = vmatpush.bf16.msra.mxu0 %v6299
    %8444 = vmatpush.bf16.msra.mxu0 %v6295
    %8445 = vmatmul.bf16.gmra.mxu0 %v197
    %v8446 = vpop.f32.mrf.mxu0
    %v8447 = vadd.f32 %v8434, %v8446
    %v8448 = vpop.f32.mrf.mxu0
    %8449 = vdwg.mxu0
    %8450 = vmatpush.bf16.msra.mxu0 %v6355
    %8451 = vmatpush.bf16.msra.mxu0 %v6351
    %8452 = vmatpush.bf16.msra.mxu0 %v6347
    %8453 = vmatpush.bf16.msra.mxu0 %v6343
    %8454 = vmatpush.bf16.msra.mxu0 %v6339
    %8455 = vmatpush.bf16.msra.mxu0 %v6335
    %8456 = vmatpush.bf16.msra.mxu0 %v6331
    %8457 = vmatpush.bf16.msra.mxu0 %v6327
    %8458 = vmatmul.bf16.gmra.mxu0 %v198
    %v8459 = vpop.f32.mrf.mxu0
    %v8460 = vadd.f32 %v8447, %v8459
    %v8461 = vpop.f32.mrf.mxu0
    %8462 = vdwg.mxu0
    %8463 = vmatpush.bf16.msra.mxu0 %v6387
    %8464 = vmatpush.bf16.msra.mxu0 %v6383
    %8465 = vmatpush.bf16.msra.mxu0 %v6379
    %8466 = vmatpush.bf16.msra.mxu0 %v6375
    %8467 = vmatpush.bf16.msra.mxu0 %v6371
    %8468 = vmatpush.bf16.msra.mxu0 %v6367
    %8469 = vmatpush.bf16.msra.mxu0 %v6363
    %8470 = vmatpush.bf16.msra.mxu0 %v6359
    %8471 = vmatmul.bf16.gmra.mxu0 %v199
    %v8472 = vpop.f32.mrf.mxu0
    %v8473 = vadd.f32 %v8460, %v8472
    %v8474 = vpop.f32.mrf.mxu0
    %8475 = vdwg.mxu0
    %8476 = vmatpush.bf16.msra.mxu0 %v6419
    %8477 = vmatpush.bf16.msra.mxu0 %v6415
    %8478 = vmatpush.bf16.msra.mxu0 %v6411
    %8479 = vmatpush.bf16.msra.mxu0 %v6407
    %8480 = vmatpush.bf16.msra.mxu0 %v6403
    %8481 = vmatpush.bf16.msra.mxu0 %v6399
    %8482 = vmatpush.bf16.msra.mxu0 %v6395
    %8483 = vmatpush.bf16.msra.mxu0 %v6391
    %8484 = vmatmul.bf16.gmra.mxu0 %v200
    %v8485 = vpop.f32.mrf.mxu0
    %v8486 = vadd.f32 %v8473, %v8485
    %v8487 = vpop.f32.mrf.mxu0
    %8488 = vdwg.mxu0
    %8489 = vmatpush.bf16.msra.mxu0 %v6451
    %8490 = vmatpush.bf16.msra.mxu0 %v6447
    %8491 = vmatpush.bf16.msra.mxu0 %v6443
    %8492 = vmatpush.bf16.msra.mxu0 %v6439
    %8493 = vmatpush.bf16.msra.mxu0 %v6435
    %8494 = vmatpush.bf16.msra.mxu0 %v6431
    %8495 = vmatpush.bf16.msra.mxu0 %v6427
    %8496 = vmatpush.bf16.msra.mxu0 %v6423
    %8497 = vmatmul.bf16.gmra.mxu0 %v201
    %v8498 = vpop.f32.mrf.mxu0
    %v8499 = vadd.f32 %v8486, %v8498
    %v8500 = vpop.f32.mrf.mxu0
    %8501 = vdwg.mxu0
    %8502 = vmatpush.bf16.msra.mxu0 %v6483
    %8503 = vmatpush.bf16.msra.mxu0 %v6479
    %8504 = vmatpush.bf16.msra.mxu0 %v6475
    %8505 = vmatpush.bf16.msra.mxu0 %v6471
    %8506 = vmatpush.bf16.msra.mxu0 %v6467
    %8507 = vmatpush.bf16.msra.mxu0 %v6463
    %8508 = vmatpush.bf16.msra.mxu0 %v6459
    %8509 = vmatpush.bf16.msra.mxu0 %v6455
    %8510 = vmatmul.bf16.gmra.mxu0 %v202
    %v8511 = vpop.f32.mrf.mxu0
    %v8512 = vadd.f32 %v8499, %v8511
    %v8513 = vpop.f32.mrf.mxu0
    %8514 = vdwg.mxu0
    %8515 = vmatpush.bf16.msra.mxu0 %v6515
    %8516 = vmatpush.bf16.msra.mxu0 %v6511
    %8517 = vmatpush.bf16.msra.mxu0 %v6507
    %8518 = vmatpush.bf16.msra.mxu0 %v6503
    %8519 = vmatpush.bf16.msra.mxu0 %v6499
    %8520 = vmatpush.bf16.msra.mxu0 %v6495
    %8521 = vmatpush.bf16.msra.mxu0 %v6491
    %8522 = vmatpush.bf16.msra.mxu0 %v6487
    %8523 = vmatmul.bf16.gmra.mxu0 %v203
    %v8524 = vpop.f32.mrf.mxu0
    %v8525 = vadd.f32 %v8512, %v8524
    %v8526 = vpop.f32.mrf.mxu0
    %8527 = vdwg.mxu0
    %8528 = vmatpush.bf16.msra.mxu0 %v6547
    %8529 = vmatpush.bf16.msra.mxu0 %v6543
    %8530 = vmatpush.bf16.msra.mxu0 %v6539
    %8531 = vmatpush.bf16.msra.mxu0 %v6535
    %8532 = vmatpush.bf16.msra.mxu0 %v6531
    %8533 = vmatpush.bf16.msra.mxu0 %v6527
    %8534 = vmatpush.bf16.msra.mxu0 %v6523
    %8535 = vmatpush.bf16.msra.mxu0 %v6519
    %8536 = vmatmul.bf16.gmra.mxu0 %v204
    %v8537 = vpop.f32.mrf.mxu0
    %v8538 = vadd.f32 %v8525, %v8537
    %v8539 = vpop.f32.mrf.mxu0
    %8540 = vdwg.mxu0
    %8541 = vmatpush.bf16.msra.mxu0 %v6579
    %8542 = vmatpush.bf16.msra.mxu0 %v6575
    %8543 = vmatpush.bf16.msra.mxu0 %v6571
    %8544 = vmatpush.bf16.msra.mxu0 %v6567
    %8545 = vmatpush.bf16.msra.mxu0 %v6563
    %8546 = vmatpush.bf16.msra.mxu0 %v6559
    %8547 = vmatpush.bf16.msra.mxu0 %v6555
    %8548 = vmatpush.bf16.msra.mxu0 %v6551
    %8549 = vmatmul.bf16.gmra.mxu0 %v205
    %v8550 = vpop.f32.mrf.mxu0
    %v8551 = vadd.f32 %v8538, %v8550
    %v8552 = vpop.f32.mrf.mxu0
    %8553 = vdwg.mxu0
    %8554 = vmatpush.bf16.msra.mxu0 %v6611
    %8555 = vmatpush.bf16.msra.mxu0 %v6607
    %8556 = vmatpush.bf16.msra.mxu0 %v6603
    %8557 = vmatpush.bf16.msra.mxu0 %v6599
    %8558 = vmatpush.bf16.msra.mxu0 %v6595
    %8559 = vmatpush.bf16.msra.mxu0 %v6591
    %8560 = vmatpush.bf16.msra.mxu0 %v6587
    %8561 = vmatpush.bf16.msra.mxu0 %v6583
    %8562 = vmatmul.bf16.gmra.mxu0 %v206
    %v8563 = vpop.f32.mrf.mxu0
    %v8564 = vadd.f32 %v8551, %v8563
    %v8565 = vpop.f32.mrf.mxu0
    %8566 = vdwg.mxu0
    %8567 = vmatpush.bf16.msra.mxu0 %v6643
    %8568 = vmatpush.bf16.msra.mxu0 %v6639
    %8569 = vmatpush.bf16.msra.mxu0 %v6635
    %8570 = vmatpush.bf16.msra.mxu0 %v6631
    %8571 = vmatpush.bf16.msra.mxu0 %v6627
    %8572 = vmatpush.bf16.msra.mxu0 %v6623
    %8573 = vmatpush.bf16.msra.mxu0 %v6619
    %8574 = vmatpush.bf16.msra.mxu0 %v6615
    %8575 = vmatmul.bf16.gmra.mxu0 %v207
    %v8576 = vpop.f32.mrf.mxu0
    %v8577 = vadd.f32 %v8564, %v8576
    %v8578 = vpop.f32.mrf.mxu0
    %8579 = vdwg.mxu0
    %8580 = vmatpush.bf16.msra.mxu0 %v6675
    %8581 = vmatpush.bf16.msra.mxu0 %v6671
    %8582 = vmatpush.bf16.msra.mxu0 %v6667
    %8583 = vmatpush.bf16.msra.mxu0 %v6663
    %8584 = vmatpush.bf16.msra.mxu0 %v6659
    %8585 = vmatpush.bf16.msra.mxu0 %v6655
    %8586 = vmatpush.bf16.msra.mxu0 %v6651
    %8587 = vmatpush.bf16.msra.mxu0 %v6647
    %8588 = vmatmul.bf16.gmra.mxu0 %v208
    %v8589 = vpop.f32.mrf.mxu0
    %v8590 = vadd.f32 %v8577, %v8589
    %v8591 = vpop.f32.mrf.mxu0
    %8592 = vdwg.mxu0
    %8593 = vmatpush.bf16.msra.mxu0 %v6707
    %8594 = vmatpush.bf16.msra.mxu0 %v6703
    %8595 = vmatpush.bf16.msra.mxu0 %v6699
    %8596 = vmatpush.bf16.msra.mxu0 %v6695
    %8597 = vmatpush.bf16.msra.mxu0 %v6691
    %8598 = vmatpush.bf16.msra.mxu0 %v6687
    %8599 = vmatpush.bf16.msra.mxu0 %v6683
    %8600 = vmatpush.bf16.msra.mxu0 %v6679
    %8601 = vmatmul.bf16.gmra.mxu0 %v209
    %v8602 = vpop.f32.mrf.mxu0
    %v8603 = vadd.f32 %v8590, %v8602
    %v8604 = vpop.f32.mrf.mxu0
    %8605 = vdwg.mxu0
    %8606 = vmatpush.bf16.msra.mxu0 %v6739
    %8607 = vmatpush.bf16.msra.mxu0 %v6735
    %8608 = vmatpush.bf16.msra.mxu0 %v6731
    %8609 = vmatpush.bf16.msra.mxu0 %v6727
    %8610 = vmatpush.bf16.msra.mxu0 %v6723
    %8611 = vmatpush.bf16.msra.mxu0 %v6719
    %8612 = vmatpush.bf16.msra.mxu0 %v6715
    %8613 = vmatpush.bf16.msra.mxu0 %v6711
    %8614 = vmatmul.bf16.gmra.mxu0 %v210
    %v8615 = vpop.f32.mrf.mxu0
    %v8616 = vadd.f32 %v8603, %v8615
    %v8617 = vpop.f32.mrf.mxu0
    %8618 = vdwg.mxu0
    %8619 = vmatpush.bf16.msra.mxu0 %v6771
    %8620 = vmatpush.bf16.msra.mxu0 %v6767
    %8621 = vmatpush.bf16.msra.mxu0 %v6763
    %8622 = vmatpush.bf16.msra.mxu0 %v6759
    %8623 = vmatpush.bf16.msra.mxu0 %v6755
    %8624 = vmatpush.bf16.msra.mxu0 %v6751
    %8625 = vmatpush.bf16.msra.mxu0 %v6747
    %8626 = vmatpush.bf16.msra.mxu0 %v6743
    %8627 = vmatmul.bf16.gmra.mxu0 %v211
    %v8628 = vpop.f32.mrf.mxu0
    %v8629 = vadd.f32 %v8616, %v8628
    %v8630 = vpop.f32.mrf.mxu0
    %8631 = vdwg.mxu0
    %8632 = vmatpush.bf16.msra.mxu0 %v6803
    %8633 = vmatpush.bf16.msra.mxu0 %v6799
    %8634 = vmatpush.bf16.msra.mxu0 %v6795
    %8635 = vmatpush.bf16.msra.mxu0 %v6791
    %8636 = vmatpush.bf16.msra.mxu0 %v6787
    %8637 = vmatpush.bf16.msra.mxu0 %v6783
    %8638 = vmatpush.bf16.msra.mxu0 %v6779
    %8639 = vmatpush.bf16.msra.mxu0 %v6775
    %8640 = vmatmul.bf16.gmra.mxu0 %v212
    %v8641 = vpop.f32.mrf.mxu0
    %v8642 = vadd.f32 %v8629, %v8641
    %v8643 = vpop.f32.mrf.mxu0
    %8644 = vdwg.mxu0
    %8645 = vmatpush.bf16.msra.mxu0 %v6835
    %8646 = vmatpush.bf16.msra.mxu0 %v6831
    %8647 = vmatpush.bf16.msra.mxu0 %v6827
    %8648 = vmatpush.bf16.msra.mxu0 %v6823
    %8649 = vmatpush.bf16.msra.mxu0 %v6819
    %8650 = vmatpush.bf16.msra.mxu0 %v6815
    %8651 = vmatpush.bf16.msra.mxu0 %v6811
    %8652 = vmatpush.bf16.msra.mxu0 %v6807
    %8653 = vmatmul.bf16.gmra.mxu0 %v213
    %v8654 = vpop.f32.mrf.mxu0
    %v8655 = vadd.f32 %v8642, %v8654
    %v8656 = vpop.f32.mrf.mxu0
    %8657 = vdwg.mxu0
    %8658 = vmatpush.bf16.msra.mxu0 %v6867
    %8659 = vmatpush.bf16.msra.mxu0 %v6863
    %8660 = vmatpush.bf16.msra.mxu0 %v6859
    %8661 = vmatpush.bf16.msra.mxu0 %v6855
    %8662 = vmatpush.bf16.msra.mxu0 %v6851
    %8663 = vmatpush.bf16.msra.mxu0 %v6847
    %8664 = vmatpush.bf16.msra.mxu0 %v6843
    %8665 = vmatpush.bf16.msra.mxu0 %v6839
    %8666 = vmatmul.bf16.gmra.mxu0 %v214
    %v8667 = vpop.f32.mrf.mxu0
    %v8668 = vadd.f32 %v8655, %v8667
    %v8669 = vpop.f32.mrf.mxu0
    %8670 = vdwg.mxu0
    %8671 = vmatpush.bf16.msra.mxu0 %v5620
    %8672 = vmatpush.bf16.msra.mxu0 %v5616
    %8673 = vmatpush.bf16.msra.mxu0 %v5612
    %8674 = vmatpush.bf16.msra.mxu0 %v5608
    %8675 = vmatpush.bf16.msra.mxu0 %v5604
    %8676 = vmatpush.bf16.msra.mxu0 %v5600
    %8677 = vmatpush.bf16.msra.mxu0 %v5596
    %8678 = vmatpush.bf16.msra.mxu0 %v5592
    %8679 = vmatmul.bf16.gmra.mxu0 %v175
    %v8680 = vpop.f32.mrf.mxu0
    %v8681 = vadd.f32 0.0, %v8680
    %v8682 = vpop.f32.mrf.mxu0
    %8683 = vdwg.mxu0
    %8684 = vmatpush.bf16.msra.mxu0 %v5652
    %8685 = vmatpush.bf16.msra.mxu0 %v5648
    %8686 = vmatpush.bf16.msra.mxu0 %v5644
    %8687 = vmatpush.bf16.msra.mxu0 %v5640
    %8688 = vmatpush.bf16.msra.mxu0 %v5636
    %8689 = vmatpush.bf16.msra.mxu0 %v5632
    %8690 = vmatpush.bf16.msra.mxu0 %v5628
    %8691 = vmatpush.bf16.msra.mxu0 %v5624
    %8692 = vmatmul.bf16.gmra.mxu0 %v176
    %v8693 = vpop.f32.mrf.mxu0
    %v8694 = vadd.f32 %v8681, %v8693
    %v8695 = vpop.f32.mrf.mxu0
    %8696 = vdwg.mxu0
    %8697 = vmatpush.bf16.msra.mxu0 %v5684
    %8698 = vmatpush.bf16.msra.mxu0 %v5680
    %8699 = vmatpush.bf16.msra.mxu0 %v5676
    %8700 = vmatpush.bf16.msra.mxu0 %v5672
    %8701 = vmatpush.bf16.msra.mxu0 %v5668
    %8702 = vmatpush.bf16.msra.mxu0 %v5664
    %8703 = vmatpush.bf16.msra.mxu0 %v5660
    %8704 = vmatpush.bf16.msra.mxu0 %v5656
    %8705 = vmatmul.bf16.gmra.mxu0 %v177
    %v8706 = vpop.f32.mrf.mxu0
    %v8707 = vadd.f32 %v8694, %v8706
    %v8708 = vpop.f32.mrf.mxu0
    %8709 = vdwg.mxu0
    %8710 = vmatpush.bf16.msra.mxu0 %v5716
    %8711 = vmatpush.bf16.msra.mxu0 %v5712
    %8712 = vmatpush.bf16.msra.mxu0 %v5708
    %8713 = vmatpush.bf16.msra.mxu0 %v5704
    %8714 = vmatpush.bf16.msra.mxu0 %v5700
    %8715 = vmatpush.bf16.msra.mxu0 %v5696
    %8716 = vmatpush.bf16.msra.mxu0 %v5692
    %8717 = vmatpush.bf16.msra.mxu0 %v5688
    %8718 = vmatmul.bf16.gmra.mxu0 %v178
    %v8719 = vpop.f32.mrf.mxu0
    %v8720 = vadd.f32 %v8707, %v8719
    %v8721 = vpop.f32.mrf.mxu0
    %8722 = vdwg.mxu0
    %8723 = vmatpush.bf16.msra.mxu0 %v5748
    %8724 = vmatpush.bf16.msra.mxu0 %v5744
    %8725 = vmatpush.bf16.msra.mxu0 %v5740
    %8726 = vmatpush.bf16.msra.mxu0 %v5736
    %8727 = vmatpush.bf16.msra.mxu0 %v5732
    %8728 = vmatpush.bf16.msra.mxu0 %v5728
    %8729 = vmatpush.bf16.msra.mxu0 %v5724
    %8730 = vmatpush.bf16.msra.mxu0 %v5720
    %8731 = vmatmul.bf16.gmra.mxu0 %v179
    %v8732 = vpop.f32.mrf.mxu0
    %v8733 = vadd.f32 %v8720, %v8732
    %v8734 = vpop.f32.mrf.mxu0
    %8735 = vdwg.mxu0
    %8736 = vmatpush.bf16.msra.mxu0 %v5780
    %8737 = vmatpush.bf16.msra.mxu0 %v5776
    %8738 = vmatpush.bf16.msra.mxu0 %v5772
    %8739 = vmatpush.bf16.msra.mxu0 %v5768
    %8740 = vmatpush.bf16.msra.mxu0 %v5764
    %8741 = vmatpush.bf16.msra.mxu0 %v5760
    %8742 = vmatpush.bf16.msra.mxu0 %v5756
    %8743 = vmatpush.bf16.msra.mxu0 %v5752
    %8744 = vmatmul.bf16.gmra.mxu0 %v180
    %v8745 = vpop.f32.mrf.mxu0
    %v8746 = vadd.f32 %v8733, %v8745
    %v8747 = vpop.f32.mrf.mxu0
    %8748 = vdwg.mxu0
    %8749 = vmatpush.bf16.msra.mxu0 %v5812
    %8750 = vmatpush.bf16.msra.mxu0 %v5808
    %8751 = vmatpush.bf16.msra.mxu0 %v5804
    %8752 = vmatpush.bf16.msra.mxu0 %v5800
    %8753 = vmatpush.bf16.msra.mxu0 %v5796
    %8754 = vmatpush.bf16.msra.mxu0 %v5792
    %8755 = vmatpush.bf16.msra.mxu0 %v5788
    %8756 = vmatpush.bf16.msra.mxu0 %v5784
    %8757 = vmatmul.bf16.gmra.mxu0 %v181
    %v8758 = vpop.f32.mrf.mxu0
    %v8759 = vadd.f32 %v8746, %v8758
    %v8760 = vpop.f32.mrf.mxu0
    %8761 = vdwg.mxu0
    %8762 = vmatpush.bf16.msra.mxu0 %v5844
    %8763 = vmatpush.bf16.msra.mxu0 %v5840
    %8764 = vmatpush.bf16.msra.mxu0 %v5836
    %8765 = vmatpush.bf16.msra.mxu0 %v5832
    %8766 = vmatpush.bf16.msra.mxu0 %v5828
    %8767 = vmatpush.bf16.msra.mxu0 %v5824
    %8768 = vmatpush.bf16.msra.mxu0 %v5820
    %8769 = vmatpush.bf16.msra.mxu0 %v5816
    %8770 = vmatmul.bf16.gmra.mxu0 %v182
    %v8771 = vpop.f32.mrf.mxu0
    %v8772 = vadd.f32 %v8759, %v8771
    %v8773 = vpop.f32.mrf.mxu0
    %8774 = vdwg.mxu0
    %8775 = vmatpush.bf16.msra.mxu0 %v5876
    %8776 = vmatpush.bf16.msra.mxu0 %v5872
    %8777 = vmatpush.bf16.msra.mxu0 %v5868
    %8778 = vmatpush.bf16.msra.mxu0 %v5864
    %8779 = vmatpush.bf16.msra.mxu0 %v5860
    %8780 = vmatpush.bf16.msra.mxu0 %v5856
    %8781 = vmatpush.bf16.msra.mxu0 %v5852
    %8782 = vmatpush.bf16.msra.mxu0 %v5848
    %8783 = vmatmul.bf16.gmra.mxu0 %v183
    %v8784 = vpop.f32.mrf.mxu0
    %v8785 = vadd.f32 %v8772, %v8784
    %v8786 = vpop.f32.mrf.mxu0
    %8787 = vdwg.mxu0
    %8788 = vmatpush.bf16.msra.mxu0 %v5908
    %8789 = vmatpush.bf16.msra.mxu0 %v5904
    %8790 = vmatpush.bf16.msra.mxu0 %v5900
    %8791 = vmatpush.bf16.msra.mxu0 %v5896
    %8792 = vmatpush.bf16.msra.mxu0 %v5892
    %8793 = vmatpush.bf16.msra.mxu0 %v5888
    %8794 = vmatpush.bf16.msra.mxu0 %v5884
    %8795 = vmatpush.bf16.msra.mxu0 %v5880
    %8796 = vmatmul.bf16.gmra.mxu0 %v184
    %v8797 = vpop.f32.mrf.mxu0
    %v8798 = vadd.f32 %v8785, %v8797
    %v8799 = vpop.f32.mrf.mxu0
    %8800 = vdwg.mxu0
    %8801 = vmatpush.bf16.msra.mxu0 %v5940
    %8802 = vmatpush.bf16.msra.mxu0 %v5936
    %8803 = vmatpush.bf16.msra.mxu0 %v5932
    %8804 = vmatpush.bf16.msra.mxu0 %v5928
    %8805 = vmatpush.bf16.msra.mxu0 %v5924
    %8806 = vmatpush.bf16.msra.mxu0 %v5920
    %8807 = vmatpush.bf16.msra.mxu0 %v5916
    %8808 = vmatpush.bf16.msra.mxu0 %v5912
    %8809 = vmatmul.bf16.gmra.mxu0 %v185
    %v8810 = vpop.f32.mrf.mxu0
    %v8811 = vadd.f32 %v8798, %v8810
    %v8812 = vpop.f32.mrf.mxu0
    %8813 = vdwg.mxu0
    %8814 = vmatpush.bf16.msra.mxu0 %v5972
    %8815 = vmatpush.bf16.msra.mxu0 %v5968
    %8816 = vmatpush.bf16.msra.mxu0 %v5964
    %8817 = vmatpush.bf16.msra.mxu0 %v5960
    %8818 = vmatpush.bf16.msra.mxu0 %v5956
    %8819 = vmatpush.bf16.msra.mxu0 %v5952
    %8820 = vmatpush.bf16.msra.mxu0 %v5948
    %8821 = vmatpush.bf16.msra.mxu0 %v5944
    %8822 = vmatmul.bf16.gmra.mxu0 %v186
    %v8823 = vpop.f32.mrf.mxu0
    %v8824 = vadd.f32 %v8811, %v8823
    %v8825 = vpop.f32.mrf.mxu0
    %8826 = vdwg.mxu0
    %8827 = vmatpush.bf16.msra.mxu0 %v6004
    %8828 = vmatpush.bf16.msra.mxu0 %v6000
    %8829 = vmatpush.bf16.msra.mxu0 %v5996
    %8830 = vmatpush.bf16.msra.mxu0 %v5992
    %8831 = vmatpush.bf16.msra.mxu0 %v5988
    %8832 = vmatpush.bf16.msra.mxu0 %v5984
    %8833 = vmatpush.bf16.msra.mxu0 %v5980
    %8834 = vmatpush.bf16.msra.mxu0 %v5976
    %8835 = vmatmul.bf16.gmra.mxu0 %v187
    %v8836 = vpop.f32.mrf.mxu0
    %v8837 = vadd.f32 %v8824, %v8836
    %v8838 = vpop.f32.mrf.mxu0
    %8839 = vdwg.mxu0
    %8840 = vmatpush.bf16.msra.mxu0 %v6036
    %8841 = vmatpush.bf16.msra.mxu0 %v6032
    %8842 = vmatpush.bf16.msra.mxu0 %v6028
    %8843 = vmatpush.bf16.msra.mxu0 %v6024
    %8844 = vmatpush.bf16.msra.mxu0 %v6020
    %8845 = vmatpush.bf16.msra.mxu0 %v6016
    %8846 = vmatpush.bf16.msra.mxu0 %v6012
    %8847 = vmatpush.bf16.msra.mxu0 %v6008
    %8848 = vmatmul.bf16.gmra.mxu0 %v188
    %v8849 = vpop.f32.mrf.mxu0
    %v8850 = vadd.f32 %v8837, %v8849
    %v8851 = vpop.f32.mrf.mxu0
    %8852 = vdwg.mxu0
    %8853 = vmatpush.bf16.msra.mxu0 %v6068
    %8854 = vmatpush.bf16.msra.mxu0 %v6064
    %8855 = vmatpush.bf16.msra.mxu0 %v6060
    %8856 = vmatpush.bf16.msra.mxu0 %v6056
    %8857 = vmatpush.bf16.msra.mxu0 %v6052
    %8858 = vmatpush.bf16.msra.mxu0 %v6048
    %8859 = vmatpush.bf16.msra.mxu0 %v6044
    %8860 = vmatpush.bf16.msra.mxu0 %v6040
    %8861 = vmatmul.bf16.gmra.mxu0 %v189
    %v8862 = vpop.f32.mrf.mxu0
    %v8863 = vadd.f32 %v8850, %v8862
    %v8864 = vpop.f32.mrf.mxu0
    %8865 = vdwg.mxu0
    %8866 = vmatpush.bf16.msra.mxu0 %v6100
    %8867 = vmatpush.bf16.msra.mxu0 %v6096
    %8868 = vmatpush.bf16.msra.mxu0 %v6092
    %8869 = vmatpush.bf16.msra.mxu0 %v6088
    %8870 = vmatpush.bf16.msra.mxu0 %v6084
    %8871 = vmatpush.bf16.msra.mxu0 %v6080
    %8872 = vmatpush.bf16.msra.mxu0 %v6076
    %8873 = vmatpush.bf16.msra.mxu0 %v6072
    %8874 = vmatmul.bf16.gmra.mxu0 %v190
    %v8875 = vpop.f32.mrf.mxu0
    %v8876 = vadd.f32 %v8863, %v8875
    %v8877 = vpop.f32.mrf.mxu0
    %8878 = vdwg.mxu0
    %8879 = vmatpush.bf16.msra.mxu0 %v6132
    %8880 = vmatpush.bf16.msra.mxu0 %v6128
    %8881 = vmatpush.bf16.msra.mxu0 %v6124
    %8882 = vmatpush.bf16.msra.mxu0 %v6120
    %8883 = vmatpush.bf16.msra.mxu0 %v6116
    %8884 = vmatpush.bf16.msra.mxu0 %v6112
    %8885 = vmatpush.bf16.msra.mxu0 %v6108
    %8886 = vmatpush.bf16.msra.mxu0 %v6104
    %8887 = vmatmul.bf16.gmra.mxu0 %v191
    %v8888 = vpop.f32.mrf.mxu0
    %v8889 = vadd.f32 %v8876, %v8888
    %v8890 = vpop.f32.mrf.mxu0
    %8891 = vdwg.mxu0
    %8892 = vmatpush.bf16.msra.mxu0 %v6164
    %8893 = vmatpush.bf16.msra.mxu0 %v6160
    %8894 = vmatpush.bf16.msra.mxu0 %v6156
    %8895 = vmatpush.bf16.msra.mxu0 %v6152
    %8896 = vmatpush.bf16.msra.mxu0 %v6148
    %8897 = vmatpush.bf16.msra.mxu0 %v6144
    %8898 = vmatpush.bf16.msra.mxu0 %v6140
    %8899 = vmatpush.bf16.msra.mxu0 %v6136
    %8900 = vmatmul.bf16.gmra.mxu0 %v192
    %v8901 = vpop.f32.mrf.mxu0
    %v8902 = vadd.f32 %v8889, %v8901
    %v8903 = vpop.f32.mrf.mxu0
    %8904 = vdwg.mxu0
    %8905 = vmatpush.bf16.msra.mxu0 %v6196
    %8906 = vmatpush.bf16.msra.mxu0 %v6192
    %8907 = vmatpush.bf16.msra.mxu0 %v6188
    %8908 = vmatpush.bf16.msra.mxu0 %v6184
    %8909 = vmatpush.bf16.msra.mxu0 %v6180
    %8910 = vmatpush.bf16.msra.mxu0 %v6176
    %8911 = vmatpush.bf16.msra.mxu0 %v6172
    %8912 = vmatpush.bf16.msra.mxu0 %v6168
    %8913 = vmatmul.bf16.gmra.mxu0 %v193
    %v8914 = vpop.f32.mrf.mxu0
    %v8915 = vadd.f32 %v8902, %v8914
    %v8916 = vpop.f32.mrf.mxu0
    %8917 = vdwg.mxu0
    %8918 = vmatpush.bf16.msra.mxu0 %v6228
    %8919 = vmatpush.bf16.msra.mxu0 %v6224
    %8920 = vmatpush.bf16.msra.mxu0 %v6220
    %8921 = vmatpush.bf16.msra.mxu0 %v6216
    %8922 = vmatpush.bf16.msra.mxu0 %v6212
    %8923 = vmatpush.bf16.msra.mxu0 %v6208
    %8924 = vmatpush.bf16.msra.mxu0 %v6204
    %8925 = vmatpush.bf16.msra.mxu0 %v6200
    %8926 = vmatmul.bf16.gmra.mxu0 %v194
    %v8927 = vpop.f32.mrf.mxu0
    %v8928 = vadd.f32 %v8915, %v8927
    %v8929 = vpop.f32.mrf.mxu0
    %8930 = vdwg.mxu0
    %8931 = vmatpush.bf16.msra.mxu0 %v6260
    %8932 = vmatpush.bf16.msra.mxu0 %v6256
    %8933 = vmatpush.bf16.msra.mxu0 %v6252
    %8934 = vmatpush.bf16.msra.mxu0 %v6248
    %8935 = vmatpush.bf16.msra.mxu0 %v6244
    %8936 = vmatpush.bf16.msra.mxu0 %v6240
    %8937 = vmatpush.bf16.msra.mxu0 %v6236
    %8938 = vmatpush.bf16.msra.mxu0 %v6232
    %8939 = vmatmul.bf16.gmra.mxu0 %v195
    %v8940 = vpop.f32.mrf.mxu0
    %v8941 = vadd.f32 %v8928, %v8940
    %v8942 = vpop.f32.mrf.mxu0
    %8943 = vdwg.mxu0
    %8944 = vmatpush.bf16.msra.mxu0 %v6292
    %8945 = vmatpush.bf16.msra.mxu0 %v6288
    %8946 = vmatpush.bf16.msra.mxu0 %v6284
    %8947 = vmatpush.bf16.msra.mxu0 %v6280
    %8948 = vmatpush.bf16.msra.mxu0 %v6276
    %8949 = vmatpush.bf16.msra.mxu0 %v6272
    %8950 = vmatpush.bf16.msra.mxu0 %v6268
    %8951 = vmatpush.bf16.msra.mxu0 %v6264
    %8952 = vmatmul.bf16.gmra.mxu0 %v196
    %v8953 = vpop.f32.mrf.mxu0
    %v8954 = vadd.f32 %v8941, %v8953
    %v8955 = vpop.f32.mrf.mxu0
    %8956 = vdwg.mxu0
    %8957 = vmatpush.bf16.msra.mxu0 %v6324
    %8958 = vmatpush.bf16.msra.mxu0 %v6320
    %8959 = vmatpush.bf16.msra.mxu0 %v6316
    %8960 = vmatpush.bf16.msra.mxu0 %v6312
    %8961 = vmatpush.bf16.msra.mxu0 %v6308
    %8962 = vmatpush.bf16.msra.mxu0 %v6304
    %8963 = vmatpush.bf16.msra.mxu0 %v6300
    %8964 = vmatpush.bf16.msra.mxu0 %v6296
    %8965 = vmatmul.bf16.gmra.mxu0 %v197
    %v8966 = vpop.f32.mrf.mxu0
    %v8967 = vadd.f32 %v8954, %v8966
    %v8968 = vpop.f32.mrf.mxu0
    %8969 = vdwg.mxu0
    %8970 = vmatpush.bf16.msra.mxu0 %v6356
    %8971 = vmatpush.bf16.msra.mxu0 %v6352
    %8972 = vmatpush.bf16.msra.mxu0 %v6348
    %8973 = vmatpush.bf16.msra.mxu0 %v6344
    %8974 = vmatpush.bf16.msra.mxu0 %v6340
    %8975 = vmatpush.bf16.msra.mxu0 %v6336
    %8976 = vmatpush.bf16.msra.mxu0 %v6332
    %8977 = vmatpush.bf16.msra.mxu0 %v6328
    %8978 = vmatmul.bf16.gmra.mxu0 %v198
    %v8979 = vpop.f32.mrf.mxu0
    %v8980 = vadd.f32 %v8967, %v8979
    %v8981 = vpop.f32.mrf.mxu0
    %8982 = vdwg.mxu0
    %8983 = vmatpush.bf16.msra.mxu0 %v6388
    %8984 = vmatpush.bf16.msra.mxu0 %v6384
    %8985 = vmatpush.bf16.msra.mxu0 %v6380
    %8986 = vmatpush.bf16.msra.mxu0 %v6376
    %8987 = vmatpush.bf16.msra.mxu0 %v6372
    %8988 = vmatpush.bf16.msra.mxu0 %v6368
    %8989 = vmatpush.bf16.msra.mxu0 %v6364
    %8990 = vmatpush.bf16.msra.mxu0 %v6360
    %8991 = vmatmul.bf16.gmra.mxu0 %v199
    %v8992 = vpop.f32.mrf.mxu0
    %v8993 = vadd.f32 %v8980, %v8992
    %v8994 = vpop.f32.mrf.mxu0
    %8995 = vdwg.mxu0
    %8996 = vmatpush.bf16.msra.mxu0 %v6420
    %8997 = vmatpush.bf16.msra.mxu0 %v6416
    %8998 = vmatpush.bf16.msra.mxu0 %v6412
    %8999 = vmatpush.bf16.msra.mxu0 %v6408
    %9000 = vmatpush.bf16.msra.mxu0 %v6404
    %9001 = vmatpush.bf16.msra.mxu0 %v6400
    %9002 = vmatpush.bf16.msra.mxu0 %v6396
    %9003 = vmatpush.bf16.msra.mxu0 %v6392
    %9004 = vmatmul.bf16.gmra.mxu0 %v200
    %v9005 = vpop.f32.mrf.mxu0
    %v9006 = vadd.f32 %v8993, %v9005
    %v9007 = vpop.f32.mrf.mxu0
    %9008 = vdwg.mxu0
    %9009 = vmatpush.bf16.msra.mxu0 %v6452
    %9010 = vmatpush.bf16.msra.mxu0 %v6448
    %9011 = vmatpush.bf16.msra.mxu0 %v6444
    %9012 = vmatpush.bf16.msra.mxu0 %v6440
    %9013 = vmatpush.bf16.msra.mxu0 %v6436
    %9014 = vmatpush.bf16.msra.mxu0 %v6432
    %9015 = vmatpush.bf16.msra.mxu0 %v6428
    %9016 = vmatpush.bf16.msra.mxu0 %v6424
    %9017 = vmatmul.bf16.gmra.mxu0 %v201
    %v9018 = vpop.f32.mrf.mxu0
    %v9019 = vadd.f32 %v9006, %v9018
    %v9020 = vpop.f32.mrf.mxu0
    %9021 = vdwg.mxu0
    %9022 = vmatpush.bf16.msra.mxu0 %v6484
    %9023 = vmatpush.bf16.msra.mxu0 %v6480
    %9024 = vmatpush.bf16.msra.mxu0 %v6476
    %9025 = vmatpush.bf16.msra.mxu0 %v6472
    %9026 = vmatpush.bf16.msra.mxu0 %v6468
    %9027 = vmatpush.bf16.msra.mxu0 %v6464
    %9028 = vmatpush.bf16.msra.mxu0 %v6460
    %9029 = vmatpush.bf16.msra.mxu0 %v6456
    %9030 = vmatmul.bf16.gmra.mxu0 %v202
    %v9031 = vpop.f32.mrf.mxu0
    %v9032 = vadd.f32 %v9019, %v9031
    %v9033 = vpop.f32.mrf.mxu0
    %9034 = vdwg.mxu0
    %9035 = vmatpush.bf16.msra.mxu0 %v6516
    %9036 = vmatpush.bf16.msra.mxu0 %v6512
    %9037 = vmatpush.bf16.msra.mxu0 %v6508
    %9038 = vmatpush.bf16.msra.mxu0 %v6504
    %9039 = vmatpush.bf16.msra.mxu0 %v6500
    %9040 = vmatpush.bf16.msra.mxu0 %v6496
    %9041 = vmatpush.bf16.msra.mxu0 %v6492
    %9042 = vmatpush.bf16.msra.mxu0 %v6488
    %9043 = vmatmul.bf16.gmra.mxu0 %v203
    %v9044 = vpop.f32.mrf.mxu0
    %v9045 = vadd.f32 %v9032, %v9044
    %v9046 = vpop.f32.mrf.mxu0
    %9047 = vdwg.mxu0
    %9048 = vmatpush.bf16.msra.mxu0 %v6548
    %9049 = vmatpush.bf16.msra.mxu0 %v6544
    %9050 = vmatpush.bf16.msra.mxu0 %v6540
    %9051 = vmatpush.bf16.msra.mxu0 %v6536
    %9052 = vmatpush.bf16.msra.mxu0 %v6532
    %9053 = vmatpush.bf16.msra.mxu0 %v6528
    %9054 = vmatpush.bf16.msra.mxu0 %v6524
    %9055 = vmatpush.bf16.msra.mxu0 %v6520
    %9056 = vmatmul.bf16.gmra.mxu0 %v204
    %v9057 = vpop.f32.mrf.mxu0
    %v9058 = vadd.f32 %v9045, %v9057
    %v9059 = vpop.f32.mrf.mxu0
    %9060 = vdwg.mxu0
    %9061 = vmatpush.bf16.msra.mxu0 %v6580
    %9062 = vmatpush.bf16.msra.mxu0 %v6576
    %9063 = vmatpush.bf16.msra.mxu0 %v6572
    %9064 = vmatpush.bf16.msra.mxu0 %v6568
    %9065 = vmatpush.bf16.msra.mxu0 %v6564
    %9066 = vmatpush.bf16.msra.mxu0 %v6560
    %9067 = vmatpush.bf16.msra.mxu0 %v6556
    %9068 = vmatpush.bf16.msra.mxu0 %v6552
    %9069 = vmatmul.bf16.gmra.mxu0 %v205
    %v9070 = vpop.f32.mrf.mxu0
    %v9071 = vadd.f32 %v9058, %v9070
    %v9072 = vpop.f32.mrf.mxu0
    %9073 = vdwg.mxu0
    %9074 = vmatpush.bf16.msra.mxu0 %v6612
    %9075 = vmatpush.bf16.msra.mxu0 %v6608
    %9076 = vmatpush.bf16.msra.mxu0 %v6604
    %9077 = vmatpush.bf16.msra.mxu0 %v6600
    %9078 = vmatpush.bf16.msra.mxu0 %v6596
    %9079 = vmatpush.bf16.msra.mxu0 %v6592
    %9080 = vmatpush.bf16.msra.mxu0 %v6588
    %9081 = vmatpush.bf16.msra.mxu0 %v6584
    %9082 = vmatmul.bf16.gmra.mxu0 %v206
    %v9083 = vpop.f32.mrf.mxu0
    %v9084 = vadd.f32 %v9071, %v9083
    %v9085 = vpop.f32.mrf.mxu0
    %9086 = vdwg.mxu0
    %9087 = vmatpush.bf16.msra.mxu0 %v6644
    %9088 = vmatpush.bf16.msra.mxu0 %v6640
    %9089 = vmatpush.bf16.msra.mxu0 %v6636
    %9090 = vmatpush.bf16.msra.mxu0 %v6632
    %9091 = vmatpush.bf16.msra.mxu0 %v6628
    %9092 = vmatpush.bf16.msra.mxu0 %v6624
    %9093 = vmatpush.bf16.msra.mxu0 %v6620
    %9094 = vmatpush.bf16.msra.mxu0 %v6616
    %9095 = vmatmul.bf16.gmra.mxu0 %v207
    %v9096 = vpop.f32.mrf.mxu0
    %v9097 = vadd.f32 %v9084, %v9096
    %v9098 = vpop.f32.mrf.mxu0
    %9099 = vdwg.mxu0
    %9100 = vmatpush.bf16.msra.mxu0 %v6676
    %9101 = vmatpush.bf16.msra.mxu0 %v6672
    %9102 = vmatpush.bf16.msra.mxu0 %v6668
    %9103 = vmatpush.bf16.msra.mxu0 %v6664
    %9104 = vmatpush.bf16.msra.mxu0 %v6660
    %9105 = vmatpush.bf16.msra.mxu0 %v6656
    %9106 = vmatpush.bf16.msra.mxu0 %v6652
    %9107 = vmatpush.bf16.msra.mxu0 %v6648
    %9108 = vmatmul.bf16.gmra.mxu0 %v208
    %v9109 = vpop.f32.mrf.mxu0
    %v9110 = vadd.f32 %v9097, %v9109
    %v9111 = vpop.f32.mrf.mxu0
    %9112 = vdwg.mxu0
    %9113 = vmatpush.bf16.msra.mxu0 %v6708
    %9114 = vmatpush.bf16.msra.mxu0 %v6704
    %9115 = vmatpush.bf16.msra.mxu0 %v6700
    %9116 = vmatpush.bf16.msra.mxu0 %v6696
    %9117 = vmatpush.bf16.msra.mxu0 %v6692
    %9118 = vmatpush.bf16.msra.mxu0 %v6688
    %9119 = vmatpush.bf16.msra.mxu0 %v6684
    %9120 = vmatpush.bf16.msra.mxu0 %v6680
    %9121 = vmatmul.bf16.gmra.mxu0 %v209
    %v9122 = vpop.f32.mrf.mxu0
    %v9123 = vadd.f32 %v9110, %v9122
    %v9124 = vpop.f32.mrf.mxu0
    %9125 = vdwg.mxu0
    %9126 = vmatpush.bf16.msra.mxu0 %v6740
    %9127 = vmatpush.bf16.msra.mxu0 %v6736
    %9128 = vmatpush.bf16.msra.mxu0 %v6732
    %9129 = vmatpush.bf16.msra.mxu0 %v6728
    %9130 = vmatpush.bf16.msra.mxu0 %v6724
    %9131 = vmatpush.bf16.msra.mxu0 %v6720
    %9132 = vmatpush.bf16.msra.mxu0 %v6716
    %9133 = vmatpush.bf16.msra.mxu0 %v6712
    %9134 = vmatmul.bf16.gmra.mxu0 %v210
    %v9135 = vpop.f32.mrf.mxu0
    %v9136 = vadd.f32 %v9123, %v9135
    %v9137 = vpop.f32.mrf.mxu0
    %9138 = vdwg.mxu0
    %9139 = vmatpush.bf16.msra.mxu0 %v6772
    %9140 = vmatpush.bf16.msra.mxu0 %v6768
    %9141 = vmatpush.bf16.msra.mxu0 %v6764
    %9142 = vmatpush.bf16.msra.mxu0 %v6760
    %9143 = vmatpush.bf16.msra.mxu0 %v6756
    %9144 = vmatpush.bf16.msra.mxu0 %v6752
    %9145 = vmatpush.bf16.msra.mxu0 %v6748
    %9146 = vmatpush.bf16.msra.mxu0 %v6744
    %9147 = vmatmul.bf16.gmra.mxu0 %v211
    %v9148 = vpop.f32.mrf.mxu0
    %v9149 = vadd.f32 %v9136, %v9148
    %v9150 = vpop.f32.mrf.mxu0
    %9151 = vdwg.mxu0
    %9152 = vmatpush.bf16.msra.mxu0 %v6804
    %9153 = vmatpush.bf16.msra.mxu0 %v6800
    %9154 = vmatpush.bf16.msra.mxu0 %v6796
    %9155 = vmatpush.bf16.msra.mxu0 %v6792
    %9156 = vmatpush.bf16.msra.mxu0 %v6788
    %9157 = vmatpush.bf16.msra.mxu0 %v6784
    %9158 = vmatpush.bf16.msra.mxu0 %v6780
    %9159 = vmatpush.bf16.msra.mxu0 %v6776
    %9160 = vmatmul.bf16.gmra.mxu0 %v212
    %v9161 = vpop.f32.mrf.mxu0
    %v9162 = vadd.f32 %v9149, %v9161
    %v9163 = vpop.f32.mrf.mxu0
    %9164 = vdwg.mxu0
    %9165 = vmatpush.bf16.msra.mxu0 %v6836
    %9166 = vmatpush.bf16.msra.mxu0 %v6832
    %9167 = vmatpush.bf16.msra.mxu0 %v6828
    %9168 = vmatpush.bf16.msra.mxu0 %v6824
    %9169 = vmatpush.bf16.msra.mxu0 %v6820
    %9170 = vmatpush.bf16.msra.mxu0 %v6816
    %9171 = vmatpush.bf16.msra.mxu0 %v6812
    %9172 = vmatpush.bf16.msra.mxu0 %v6808
    %9173 = vmatmul.bf16.gmra.mxu0 %v213
    %v9174 = vpop.f32.mrf.mxu0
    %v9175 = vadd.f32 %v9162, %v9174
    %v9176 = vpop.f32.mrf.mxu0
    %9177 = vdwg.mxu0
    %9178 = vmatpush.bf16.msra.mxu0 %v6868
    %9179 = vmatpush.bf16.msra.mxu0 %v6864
    %9180 = vmatpush.bf16.msra.mxu0 %v6860
    %9181 = vmatpush.bf16.msra.mxu0 %v6856
    %9182 = vmatpush.bf16.msra.mxu0 %v6852
    %9183 = vmatpush.bf16.msra.mxu0 %v6848
    %9184 = vmatpush.bf16.msra.mxu0 %v6844
    %9185 = vmatpush.bf16.msra.mxu0 %v6840
    %9186 = vmatmul.bf16.gmra.mxu0 %v214
    %v9187 = vpop.f32.mrf.mxu0
    %v9188 = vadd.f32 %v9175, %v9187
    %v9189 = vpop.f32.mrf.mxu0
    %9190 = vdwg.mxu0
    %9191 = vmatpush.bf16.msra.mxu0 %v5621
    %9192 = vmatpush.bf16.msra.mxu0 %v5617
    %9193 = vmatpush.bf16.msra.mxu0 %v5613
    %9194 = vmatpush.bf16.msra.mxu0 %v5609
    %9195 = vmatpush.bf16.msra.mxu0 %v5605
    %9196 = vmatpush.bf16.msra.mxu0 %v5601
    %9197 = vmatpush.bf16.msra.mxu0 %v5597
    %9198 = vmatpush.bf16.msra.mxu0 %v5593
    %9199 = vmatmul.bf16.gmra.mxu0 %v175
    %v9200 = vpop.f32.mrf.mxu0
    %v9201 = vadd.f32 0.0, %v9200
    %v9202 = vpop.f32.mrf.mxu0
    %9203 = vdwg.mxu0
    %9204 = vmatpush.bf16.msra.mxu0 %v5653
    %9205 = vmatpush.bf16.msra.mxu0 %v5649
    %9206 = vmatpush.bf16.msra.mxu0 %v5645
    %9207 = vmatpush.bf16.msra.mxu0 %v5641
    %9208 = vmatpush.bf16.msra.mxu0 %v5637
    %9209 = vmatpush.bf16.msra.mxu0 %v5633
    %9210 = vmatpush.bf16.msra.mxu0 %v5629
    %9211 = vmatpush.bf16.msra.mxu0 %v5625
    %9212 = vmatmul.bf16.gmra.mxu0 %v176
    %v9213 = vpop.f32.mrf.mxu0
    %v9214 = vadd.f32 %v9201, %v9213
    %v9215 = vpop.f32.mrf.mxu0
    %9216 = vdwg.mxu0
    %9217 = vmatpush.bf16.msra.mxu0 %v5685
    %9218 = vmatpush.bf16.msra.mxu0 %v5681
    %9219 = vmatpush.bf16.msra.mxu0 %v5677
    %9220 = vmatpush.bf16.msra.mxu0 %v5673
    %9221 = vmatpush.bf16.msra.mxu0 %v5669
    %9222 = vmatpush.bf16.msra.mxu0 %v5665
    %9223 = vmatpush.bf16.msra.mxu0 %v5661
    %9224 = vmatpush.bf16.msra.mxu0 %v5657
    %9225 = vmatmul.bf16.gmra.mxu0 %v177
    %v9226 = vpop.f32.mrf.mxu0
    %v9227 = vadd.f32 %v9214, %v9226
    %v9228 = vpop.f32.mrf.mxu0
    %9229 = vdwg.mxu0
    %9230 = vmatpush.bf16.msra.mxu0 %v5717
    %9231 = vmatpush.bf16.msra.mxu0 %v5713
    %9232 = vmatpush.bf16.msra.mxu0 %v5709
    %9233 = vmatpush.bf16.msra.mxu0 %v5705
    %9234 = vmatpush.bf16.msra.mxu0 %v5701
    %9235 = vmatpush.bf16.msra.mxu0 %v5697
    %9236 = vmatpush.bf16.msra.mxu0 %v5693
    %9237 = vmatpush.bf16.msra.mxu0 %v5689
    %9238 = vmatmul.bf16.gmra.mxu0 %v178
    %v9239 = vpop.f32.mrf.mxu0
    %v9240 = vadd.f32 %v9227, %v9239
    %v9241 = vpop.f32.mrf.mxu0
    %9242 = vdwg.mxu0
    %9243 = vmatpush.bf16.msra.mxu0 %v5749
    %9244 = vmatpush.bf16.msra.mxu0 %v5745
    %9245 = vmatpush.bf16.msra.mxu0 %v5741
    %9246 = vmatpush.bf16.msra.mxu0 %v5737
    %9247 = vmatpush.bf16.msra.mxu0 %v5733
    %9248 = vmatpush.bf16.msra.mxu0 %v5729
    %9249 = vmatpush.bf16.msra.mxu0 %v5725
    %9250 = vmatpush.bf16.msra.mxu0 %v5721
    %9251 = vmatmul.bf16.gmra.mxu0 %v179
    %v9252 = vpop.f32.mrf.mxu0
    %v9253 = vadd.f32 %v9240, %v9252
    %v9254 = vpop.f32.mrf.mxu0
    %9255 = vdwg.mxu0
    %9256 = vmatpush.bf16.msra.mxu0 %v5781
    %9257 = vmatpush.bf16.msra.mxu0 %v5777
    %9258 = vmatpush.bf16.msra.mxu0 %v5773
    %9259 = vmatpush.bf16.msra.mxu0 %v5769
    %9260 = vmatpush.bf16.msra.mxu0 %v5765
    %9261 = vmatpush.bf16.msra.mxu0 %v5761
    %9262 = vmatpush.bf16.msra.mxu0 %v5757
    %9263 = vmatpush.bf16.msra.mxu0 %v5753
    %9264 = vmatmul.bf16.gmra.mxu0 %v180
    %v9265 = vpop.f32.mrf.mxu0
    %v9266 = vadd.f32 %v9253, %v9265
    %v9267 = vpop.f32.mrf.mxu0
    %9268 = vdwg.mxu0
    %9269 = vmatpush.bf16.msra.mxu0 %v5813
    %9270 = vmatpush.bf16.msra.mxu0 %v5809
    %9271 = vmatpush.bf16.msra.mxu0 %v5805
    %9272 = vmatpush.bf16.msra.mxu0 %v5801
    %9273 = vmatpush.bf16.msra.mxu0 %v5797
    %9274 = vmatpush.bf16.msra.mxu0 %v5793
    %9275 = vmatpush.bf16.msra.mxu0 %v5789
    %9276 = vmatpush.bf16.msra.mxu0 %v5785
    %9277 = vmatmul.bf16.gmra.mxu0 %v181
    %v9278 = vpop.f32.mrf.mxu0
    %v9279 = vadd.f32 %v9266, %v9278
    %v9280 = vpop.f32.mrf.mxu0
    %9281 = vdwg.mxu0
    %9282 = vmatpush.bf16.msra.mxu0 %v5845
    %9283 = vmatpush.bf16.msra.mxu0 %v5841
    %9284 = vmatpush.bf16.msra.mxu0 %v5837
    %9285 = vmatpush.bf16.msra.mxu0 %v5833
    %9286 = vmatpush.bf16.msra.mxu0 %v5829
    %9287 = vmatpush.bf16.msra.mxu0 %v5825
    %9288 = vmatpush.bf16.msra.mxu0 %v5821
    %9289 = vmatpush.bf16.msra.mxu0 %v5817
    %9290 = vmatmul.bf16.gmra.mxu0 %v182
    %v9291 = vpop.f32.mrf.mxu0
    %v9292 = vadd.f32 %v9279, %v9291
    %v9293 = vpop.f32.mrf.mxu0
    %9294 = vdwg.mxu0
    %9295 = vmatpush.bf16.msra.mxu0 %v5877
    %9296 = vmatpush.bf16.msra.mxu0 %v5873
    %9297 = vmatpush.bf16.msra.mxu0 %v5869
    %9298 = vmatpush.bf16.msra.mxu0 %v5865
    %9299 = vmatpush.bf16.msra.mxu0 %v5861
    %9300 = vmatpush.bf16.msra.mxu0 %v5857
    %9301 = vmatpush.bf16.msra.mxu0 %v5853
    %9302 = vmatpush.bf16.msra.mxu0 %v5849
    %9303 = vmatmul.bf16.gmra.mxu0 %v183
    %v9304 = vpop.f32.mrf.mxu0
    %v9305 = vadd.f32 %v9292, %v9304
    %v9306 = vpop.f32.mrf.mxu0
    %9307 = vdwg.mxu0
    %9308 = vmatpush.bf16.msra.mxu0 %v5909
    %9309 = vmatpush.bf16.msra.mxu0 %v5905
    %9310 = vmatpush.bf16.msra.mxu0 %v5901
    %9311 = vmatpush.bf16.msra.mxu0 %v5897
    %9312 = vmatpush.bf16.msra.mxu0 %v5893
    %9313 = vmatpush.bf16.msra.mxu0 %v5889
    %9314 = vmatpush.bf16.msra.mxu0 %v5885
    %9315 = vmatpush.bf16.msra.mxu0 %v5881
    %9316 = vmatmul.bf16.gmra.mxu0 %v184
    %v9317 = vpop.f32.mrf.mxu0
    %v9318 = vadd.f32 %v9305, %v9317
    %v9319 = vpop.f32.mrf.mxu0
    %9320 = vdwg.mxu0
    %9321 = vmatpush.bf16.msra.mxu0 %v5941
    %9322 = vmatpush.bf16.msra.mxu0 %v5937
    %9323 = vmatpush.bf16.msra.mxu0 %v5933
    %9324 = vmatpush.bf16.msra.mxu0 %v5929
    %9325 = vmatpush.bf16.msra.mxu0 %v5925
    %9326 = vmatpush.bf16.msra.mxu0 %v5921
    %9327 = vmatpush.bf16.msra.mxu0 %v5917
    %9328 = vmatpush.bf16.msra.mxu0 %v5913
    %9329 = vmatmul.bf16.gmra.mxu0 %v185
    %v9330 = vpop.f32.mrf.mxu0
    %v9331 = vadd.f32 %v9318, %v9330
    %v9332 = vpop.f32.mrf.mxu0
    %9333 = vdwg.mxu0
    %9334 = vmatpush.bf16.msra.mxu0 %v5973
    %9335 = vmatpush.bf16.msra.mxu0 %v5969
    %9336 = vmatpush.bf16.msra.mxu0 %v5965
    %9337 = vmatpush.bf16.msra.mxu0 %v5961
    %9338 = vmatpush.bf16.msra.mxu0 %v5957
    %9339 = vmatpush.bf16.msra.mxu0 %v5953
    %9340 = vmatpush.bf16.msra.mxu0 %v5949
    %9341 = vmatpush.bf16.msra.mxu0 %v5945
    %9342 = vmatmul.bf16.gmra.mxu0 %v186
    %v9343 = vpop.f32.mrf.mxu0
    %v9344 = vadd.f32 %v9331, %v9343
    %v9345 = vpop.f32.mrf.mxu0
    %9346 = vdwg.mxu0
    %9347 = vmatpush.bf16.msra.mxu0 %v6005
    %9348 = vmatpush.bf16.msra.mxu0 %v6001
    %9349 = vmatpush.bf16.msra.mxu0 %v5997
    %9350 = vmatpush.bf16.msra.mxu0 %v5993
    %9351 = vmatpush.bf16.msra.mxu0 %v5989
    %9352 = vmatpush.bf16.msra.mxu0 %v5985
    %9353 = vmatpush.bf16.msra.mxu0 %v5981
    %9354 = vmatpush.bf16.msra.mxu0 %v5977
    %9355 = vmatmul.bf16.gmra.mxu0 %v187
    %v9356 = vpop.f32.mrf.mxu0
    %v9357 = vadd.f32 %v9344, %v9356
    %v9358 = vpop.f32.mrf.mxu0
    %9359 = vdwg.mxu0
    %9360 = vmatpush.bf16.msra.mxu0 %v6037
    %9361 = vmatpush.bf16.msra.mxu0 %v6033
    %9362 = vmatpush.bf16.msra.mxu0 %v6029
    %9363 = vmatpush.bf16.msra.mxu0 %v6025
    %9364 = vmatpush.bf16.msra.mxu0 %v6021
    %9365 = vmatpush.bf16.msra.mxu0 %v6017
    %9366 = vmatpush.bf16.msra.mxu0 %v6013
    %9367 = vmatpush.bf16.msra.mxu0 %v6009
    %9368 = vmatmul.bf16.gmra.mxu0 %v188
    %v9369 = vpop.f32.mrf.mxu0
    %v9370 = vadd.f32 %v9357, %v9369
    %v9371 = vpop.f32.mrf.mxu0
    %9372 = vdwg.mxu0
    %9373 = vmatpush.bf16.msra.mxu0 %v6069
    %9374 = vmatpush.bf16.msra.mxu0 %v6065
    %9375 = vmatpush.bf16.msra.mxu0 %v6061
    %9376 = vmatpush.bf16.msra.mxu0 %v6057
    %9377 = vmatpush.bf16.msra.mxu0 %v6053
    %9378 = vmatpush.bf16.msra.mxu0 %v6049
    %9379 = vmatpush.bf16.msra.mxu0 %v6045
    %9380 = vmatpush.bf16.msra.mxu0 %v6041
    %9381 = vmatmul.bf16.gmra.mxu0 %v189
    %v9382 = vpop.f32.mrf.mxu0
    %v9383 = vadd.f32 %v9370, %v9382
    %v9384 = vpop.f32.mrf.mxu0
    %9385 = vdwg.mxu0
    %9386 = vmatpush.bf16.msra.mxu0 %v6101
    %9387 = vmatpush.bf16.msra.mxu0 %v6097
    %9388 = vmatpush.bf16.msra.mxu0 %v6093
    %9389 = vmatpush.bf16.msra.mxu0 %v6089
    %9390 = vmatpush.bf16.msra.mxu0 %v6085
    %9391 = vmatpush.bf16.msra.mxu0 %v6081
    %9392 = vmatpush.bf16.msra.mxu0 %v6077
    %9393 = vmatpush.bf16.msra.mxu0 %v6073
    %9394 = vmatmul.bf16.gmra.mxu0 %v190
    %v9395 = vpop.f32.mrf.mxu0
    %v9396 = vadd.f32 %v9383, %v9395
    %v9397 = vpop.f32.mrf.mxu0
    %9398 = vdwg.mxu0
    %9399 = vmatpush.bf16.msra.mxu0 %v6133
    %9400 = vmatpush.bf16.msra.mxu0 %v6129
    %9401 = vmatpush.bf16.msra.mxu0 %v6125
    %9402 = vmatpush.bf16.msra.mxu0 %v6121
    %9403 = vmatpush.bf16.msra.mxu0 %v6117
    %9404 = vmatpush.bf16.msra.mxu0 %v6113
    %9405 = vmatpush.bf16.msra.mxu0 %v6109
    %9406 = vmatpush.bf16.msra.mxu0 %v6105
    %9407 = vmatmul.bf16.gmra.mxu0 %v191
    %v9408 = vpop.f32.mrf.mxu0
    %v9409 = vadd.f32 %v9396, %v9408
    %v9410 = vpop.f32.mrf.mxu0
    %9411 = vdwg.mxu0
    %9412 = vmatpush.bf16.msra.mxu0 %v6165
    %9413 = vmatpush.bf16.msra.mxu0 %v6161
    %9414 = vmatpush.bf16.msra.mxu0 %v6157
    %9415 = vmatpush.bf16.msra.mxu0 %v6153
    %9416 = vmatpush.bf16.msra.mxu0 %v6149
    %9417 = vmatpush.bf16.msra.mxu0 %v6145
    %9418 = vmatpush.bf16.msra.mxu0 %v6141
    %9419 = vmatpush.bf16.msra.mxu0 %v6137
    %9420 = vmatmul.bf16.gmra.mxu0 %v192
    %v9421 = vpop.f32.mrf.mxu0
    %v9422 = vadd.f32 %v9409, %v9421
    %v9423 = vpop.f32.mrf.mxu0
    %9424 = vdwg.mxu0
    %9425 = vmatpush.bf16.msra.mxu0 %v6197
    %9426 = vmatpush.bf16.msra.mxu0 %v6193
    %9427 = vmatpush.bf16.msra.mxu0 %v6189
    %9428 = vmatpush.bf16.msra.mxu0 %v6185
    %9429 = vmatpush.bf16.msra.mxu0 %v6181
    %9430 = vmatpush.bf16.msra.mxu0 %v6177
    %9431 = vmatpush.bf16.msra.mxu0 %v6173
    %9432 = vmatpush.bf16.msra.mxu0 %v6169
    %9433 = vmatmul.bf16.gmra.mxu0 %v193
    %v9434 = vpop.f32.mrf.mxu0
    %v9435 = vadd.f32 %v9422, %v9434
    %v9436 = vpop.f32.mrf.mxu0
    %9437 = vdwg.mxu0
    %9438 = vmatpush.bf16.msra.mxu0 %v6229
    %9439 = vmatpush.bf16.msra.mxu0 %v6225
    %9440 = vmatpush.bf16.msra.mxu0 %v6221
    %9441 = vmatpush.bf16.msra.mxu0 %v6217
    %9442 = vmatpush.bf16.msra.mxu0 %v6213
    %9443 = vmatpush.bf16.msra.mxu0 %v6209
    %9444 = vmatpush.bf16.msra.mxu0 %v6205
    %9445 = vmatpush.bf16.msra.mxu0 %v6201
    %9446 = vmatmul.bf16.gmra.mxu0 %v194
    %v9447 = vpop.f32.mrf.mxu0
    %v9448 = vadd.f32 %v9435, %v9447
    %v9449 = vpop.f32.mrf.mxu0
    %9450 = vdwg.mxu0
    %9451 = vmatpush.bf16.msra.mxu0 %v6261
    %9452 = vmatpush.bf16.msra.mxu0 %v6257
    %9453 = vmatpush.bf16.msra.mxu0 %v6253
    %9454 = vmatpush.bf16.msra.mxu0 %v6249
    %9455 = vmatpush.bf16.msra.mxu0 %v6245
    %9456 = vmatpush.bf16.msra.mxu0 %v6241
    %9457 = vmatpush.bf16.msra.mxu0 %v6237
    %9458 = vmatpush.bf16.msra.mxu0 %v6233
    %9459 = vmatmul.bf16.gmra.mxu0 %v195
    %v9460 = vpop.f32.mrf.mxu0
    %v9461 = vadd.f32 %v9448, %v9460
    %v9462 = vpop.f32.mrf.mxu0
    %9463 = vdwg.mxu0
    %9464 = vmatpush.bf16.msra.mxu0 %v6293
    %9465 = vmatpush.bf16.msra.mxu0 %v6289
    %9466 = vmatpush.bf16.msra.mxu0 %v6285
    %9467 = vmatpush.bf16.msra.mxu0 %v6281
    %9468 = vmatpush.bf16.msra.mxu0 %v6277
    %9469 = vmatpush.bf16.msra.mxu0 %v6273
    %9470 = vmatpush.bf16.msra.mxu0 %v6269
    %9471 = vmatpush.bf16.msra.mxu0 %v6265
    %9472 = vmatmul.bf16.gmra.mxu0 %v196
    %v9473 = vpop.f32.mrf.mxu0
    %v9474 = vadd.f32 %v9461, %v9473
    %v9475 = vpop.f32.mrf.mxu0
    %9476 = vdwg.mxu0
    %9477 = vmatpush.bf16.msra.mxu0 %v6325
    %9478 = vmatpush.bf16.msra.mxu0 %v6321
    %9479 = vmatpush.bf16.msra.mxu0 %v6317
    %9480 = vmatpush.bf16.msra.mxu0 %v6313
    %9481 = vmatpush.bf16.msra.mxu0 %v6309
    %9482 = vmatpush.bf16.msra.mxu0 %v6305
    %9483 = vmatpush.bf16.msra.mxu0 %v6301
    %9484 = vmatpush.bf16.msra.mxu0 %v6297
    %9485 = vmatmul.bf16.gmra.mxu0 %v197
    %v9486 = vpop.f32.mrf.mxu0
    %v9487 = vadd.f32 %v9474, %v9486
    %v9488 = vpop.f32.mrf.mxu0
    %9489 = vdwg.mxu0
    %9490 = vmatpush.bf16.msra.mxu0 %v6357
    %9491 = vmatpush.bf16.msra.mxu0 %v6353
    %9492 = vmatpush.bf16.msra.mxu0 %v6349
    %9493 = vmatpush.bf16.msra.mxu0 %v6345
    %9494 = vmatpush.bf16.msra.mxu0 %v6341
    %9495 = vmatpush.bf16.msra.mxu0 %v6337
    %9496 = vmatpush.bf16.msra.mxu0 %v6333
    %9497 = vmatpush.bf16.msra.mxu0 %v6329
    %9498 = vmatmul.bf16.gmra.mxu0 %v198
    %v9499 = vpop.f32.mrf.mxu0
    %v9500 = vadd.f32 %v9487, %v9499
    %v9501 = vpop.f32.mrf.mxu0
    %9502 = vdwg.mxu0
    %9503 = vmatpush.bf16.msra.mxu0 %v6389
    %9504 = vmatpush.bf16.msra.mxu0 %v6385
    %9505 = vmatpush.bf16.msra.mxu0 %v6381
    %9506 = vmatpush.bf16.msra.mxu0 %v6377
    %9507 = vmatpush.bf16.msra.mxu0 %v6373
    %9508 = vmatpush.bf16.msra.mxu0 %v6369
    %9509 = vmatpush.bf16.msra.mxu0 %v6365
    %9510 = vmatpush.bf16.msra.mxu0 %v6361
    %9511 = vmatmul.bf16.gmra.mxu0 %v199
    %v9512 = vpop.f32.mrf.mxu0
    %v9513 = vadd.f32 %v9500, %v9512
    %v9514 = vpop.f32.mrf.mxu0
    %9515 = vdwg.mxu0
    %9516 = vmatpush.bf16.msra.mxu0 %v6421
    %9517 = vmatpush.bf16.msra.mxu0 %v6417
    %9518 = vmatpush.bf16.msra.mxu0 %v6413
    %9519 = vmatpush.bf16.msra.mxu0 %v6409
    %9520 = vmatpush.bf16.msra.mxu0 %v6405
    %9521 = vmatpush.bf16.msra.mxu0 %v6401
    %9522 = vmatpush.bf16.msra.mxu0 %v6397
    %9523 = vmatpush.bf16.msra.mxu0 %v6393
    %9524 = vmatmul.bf16.gmra.mxu0 %v200
    %v9525 = vpop.f32.mrf.mxu0
    %v9526 = vadd.f32 %v9513, %v9525
    %v9527 = vpop.f32.mrf.mxu0
    %9528 = vdwg.mxu0
    %9529 = vmatpush.bf16.msra.mxu0 %v6453
    %9530 = vmatpush.bf16.msra.mxu0 %v6449
    %9531 = vmatpush.bf16.msra.mxu0 %v6445
    %9532 = vmatpush.bf16.msra.mxu0 %v6441
    %9533 = vmatpush.bf16.msra.mxu0 %v6437
    %9534 = vmatpush.bf16.msra.mxu0 %v6433
    %9535 = vmatpush.bf16.msra.mxu0 %v6429
    %9536 = vmatpush.bf16.msra.mxu0 %v6425
    %9537 = vmatmul.bf16.gmra.mxu0 %v201
    %v9538 = vpop.f32.mrf.mxu0
    %v9539 = vadd.f32 %v9526, %v9538
    %v9540 = vpop.f32.mrf.mxu0
    %9541 = vdwg.mxu0
    %9542 = vmatpush.bf16.msra.mxu0 %v6485
    %9543 = vmatpush.bf16.msra.mxu0 %v6481
    %9544 = vmatpush.bf16.msra.mxu0 %v6477
    %9545 = vmatpush.bf16.msra.mxu0 %v6473
    %9546 = vmatpush.bf16.msra.mxu0 %v6469
    %9547 = vmatpush.bf16.msra.mxu0 %v6465
    %9548 = vmatpush.bf16.msra.mxu0 %v6461
    %9549 = vmatpush.bf16.msra.mxu0 %v6457
    %9550 = vmatmul.bf16.gmra.mxu0 %v202
    %v9551 = vpop.f32.mrf.mxu0
    %v9552 = vadd.f32 %v9539, %v9551
    %v9553 = vpop.f32.mrf.mxu0
    %9554 = vdwg.mxu0
    %9555 = vmatpush.bf16.msra.mxu0 %v6517
    %9556 = vmatpush.bf16.msra.mxu0 %v6513
    %9557 = vmatpush.bf16.msra.mxu0 %v6509
    %9558 = vmatpush.bf16.msra.mxu0 %v6505
    %9559 = vmatpush.bf16.msra.mxu0 %v6501
    %9560 = vmatpush.bf16.msra.mxu0 %v6497
    %9561 = vmatpush.bf16.msra.mxu0 %v6493
    %9562 = vmatpush.bf16.msra.mxu0 %v6489
    %9563 = vmatmul.bf16.gmra.mxu0 %v203
    %v9564 = vpop.f32.mrf.mxu0
    %v9565 = vadd.f32 %v9552, %v9564
    %v9566 = vpop.f32.mrf.mxu0
    %9567 = vdwg.mxu0
    %9568 = vmatpush.bf16.msra.mxu0 %v6549
    %9569 = vmatpush.bf16.msra.mxu0 %v6545
    %9570 = vmatpush.bf16.msra.mxu0 %v6541
    %9571 = vmatpush.bf16.msra.mxu0 %v6537
    %9572 = vmatpush.bf16.msra.mxu0 %v6533
    %9573 = vmatpush.bf16.msra.mxu0 %v6529
    %9574 = vmatpush.bf16.msra.mxu0 %v6525
    %9575 = vmatpush.bf16.msra.mxu0 %v6521
    %9576 = vmatmul.bf16.gmra.mxu0 %v204
    %v9577 = vpop.f32.mrf.mxu0
    %v9578 = vadd.f32 %v9565, %v9577
    %v9579 = vpop.f32.mrf.mxu0
    %9580 = vdwg.mxu0
    %9581 = vmatpush.bf16.msra.mxu0 %v6581
    %9582 = vmatpush.bf16.msra.mxu0 %v6577
    %9583 = vmatpush.bf16.msra.mxu0 %v6573
    %9584 = vmatpush.bf16.msra.mxu0 %v6569
    %9585 = vmatpush.bf16.msra.mxu0 %v6565
    %9586 = vmatpush.bf16.msra.mxu0 %v6561
    %9587 = vmatpush.bf16.msra.mxu0 %v6557
    %9588 = vmatpush.bf16.msra.mxu0 %v6553
    %9589 = vmatmul.bf16.gmra.mxu0 %v205
    %v9590 = vpop.f32.mrf.mxu0
    %v9591 = vadd.f32 %v9578, %v9590
    %v9592 = vpop.f32.mrf.mxu0
    %9593 = vdwg.mxu0
    %9594 = vmatpush.bf16.msra.mxu0 %v6613
    %9595 = vmatpush.bf16.msra.mxu0 %v6609
    %9596 = vmatpush.bf16.msra.mxu0 %v6605
    %9597 = vmatpush.bf16.msra.mxu0 %v6601
    %9598 = vmatpush.bf16.msra.mxu0 %v6597
    %9599 = vmatpush.bf16.msra.mxu0 %v6593
    %9600 = vmatpush.bf16.msra.mxu0 %v6589
    %9601 = vmatpush.bf16.msra.mxu0 %v6585
    %9602 = vmatmul.bf16.gmra.mxu0 %v206
    %v9603 = vpop.f32.mrf.mxu0
    %v9604 = vadd.f32 %v9591, %v9603
    %v9605 = vpop.f32.mrf.mxu0
    %9606 = vdwg.mxu0
    %9607 = vmatpush.bf16.msra.mxu0 %v6645
    %9608 = vmatpush.bf16.msra.mxu0 %v6641
    %9609 = vmatpush.bf16.msra.mxu0 %v6637
    %9610 = vmatpush.bf16.msra.mxu0 %v6633
    %9611 = vmatpush.bf16.msra.mxu0 %v6629
    %9612 = vmatpush.bf16.msra.mxu0 %v6625
    %9613 = vmatpush.bf16.msra.mxu0 %v6621
    %9614 = vmatpush.bf16.msra.mxu0 %v6617
    %9615 = vmatmul.bf16.gmra.mxu0 %v207
    %v9616 = vpop.f32.mrf.mxu0
    %v9617 = vadd.f32 %v9604, %v9616
    %v9618 = vpop.f32.mrf.mxu0
    %9619 = vdwg.mxu0
    %9620 = vmatpush.bf16.msra.mxu0 %v6677
    %9621 = vmatpush.bf16.msra.mxu0 %v6673
    %9622 = vmatpush.bf16.msra.mxu0 %v6669
    %9623 = vmatpush.bf16.msra.mxu0 %v6665
    %9624 = vmatpush.bf16.msra.mxu0 %v6661
    %9625 = vmatpush.bf16.msra.mxu0 %v6657
    %9626 = vmatpush.bf16.msra.mxu0 %v6653
    %9627 = vmatpush.bf16.msra.mxu0 %v6649
    %9628 = vmatmul.bf16.gmra.mxu0 %v208
    %v9629 = vpop.f32.mrf.mxu0
    %v9630 = vadd.f32 %v9617, %v9629
    %v9631 = vpop.f32.mrf.mxu0
    %9632 = vdwg.mxu0
    %9633 = vmatpush.bf16.msra.mxu0 %v6709
    %9634 = vmatpush.bf16.msra.mxu0 %v6705
    %9635 = vmatpush.bf16.msra.mxu0 %v6701
    %9636 = vmatpush.bf16.msra.mxu0 %v6697
    %9637 = vmatpush.bf16.msra.mxu0 %v6693
    %9638 = vmatpush.bf16.msra.mxu0 %v6689
    %9639 = vmatpush.bf16.msra.mxu0 %v6685
    %9640 = vmatpush.bf16.msra.mxu0 %v6681
    %9641 = vmatmul.bf16.gmra.mxu0 %v209
    %v9642 = vpop.f32.mrf.mxu0
    %v9643 = vadd.f32 %v9630, %v9642
    %v9644 = vpop.f32.mrf.mxu0
    %9645 = vdwg.mxu0
    %9646 = vmatpush.bf16.msra.mxu0 %v6741
    %9647 = vmatpush.bf16.msra.mxu0 %v6737
    %9648 = vmatpush.bf16.msra.mxu0 %v6733
    %9649 = vmatpush.bf16.msra.mxu0 %v6729
    %9650 = vmatpush.bf16.msra.mxu0 %v6725
    %9651 = vmatpush.bf16.msra.mxu0 %v6721
    %9652 = vmatpush.bf16.msra.mxu0 %v6717
    %9653 = vmatpush.bf16.msra.mxu0 %v6713
    %9654 = vmatmul.bf16.gmra.mxu0 %v210
    %v9655 = vpop.f32.mrf.mxu0
    %v9656 = vadd.f32 %v9643, %v9655
    %v9657 = vpop.f32.mrf.mxu0
    %9658 = vdwg.mxu0
    %9659 = vmatpush.bf16.msra.mxu0 %v6773
    %9660 = vmatpush.bf16.msra.mxu0 %v6769
    %9661 = vmatpush.bf16.msra.mxu0 %v6765
    %9662 = vmatpush.bf16.msra.mxu0 %v6761
    %9663 = vmatpush.bf16.msra.mxu0 %v6757
    %9664 = vmatpush.bf16.msra.mxu0 %v6753
    %9665 = vmatpush.bf16.msra.mxu0 %v6749
    %9666 = vmatpush.bf16.msra.mxu0 %v6745
    %9667 = vmatmul.bf16.gmra.mxu0 %v211
    %v9668 = vpop.f32.mrf.mxu0
    %v9669 = vadd.f32 %v9656, %v9668
    %v9670 = vpop.f32.mrf.mxu0
    %9671 = vdwg.mxu0
    %9672 = vmatpush.bf16.msra.mxu0 %v6805
    %9673 = vmatpush.bf16.msra.mxu0 %v6801
    %9674 = vmatpush.bf16.msra.mxu0 %v6797
    %9675 = vmatpush.bf16.msra.mxu0 %v6793
    %9676 = vmatpush.bf16.msra.mxu0 %v6789
    %9677 = vmatpush.bf16.msra.mxu0 %v6785
    %9678 = vmatpush.bf16.msra.mxu0 %v6781
    %9679 = vmatpush.bf16.msra.mxu0 %v6777
    %9680 = vmatmul.bf16.gmra.mxu0 %v212
    %v9681 = vpop.f32.mrf.mxu0
    %v9682 = vadd.f32 %v9669, %v9681
    %v9683 = vpop.f32.mrf.mxu0
    %9684 = vdwg.mxu0
    %9685 = vmatpush.bf16.msra.mxu0 %v6837
    %9686 = vmatpush.bf16.msra.mxu0 %v6833
    %9687 = vmatpush.bf16.msra.mxu0 %v6829
    %9688 = vmatpush.bf16.msra.mxu0 %v6825
    %9689 = vmatpush.bf16.msra.mxu0 %v6821
    %9690 = vmatpush.bf16.msra.mxu0 %v6817
    %9691 = vmatpush.bf16.msra.mxu0 %v6813
    %9692 = vmatpush.bf16.msra.mxu0 %v6809
    %9693 = vmatmul.bf16.gmra.mxu0 %v213
    %v9694 = vpop.f32.mrf.mxu0
    %v9695 = vadd.f32 %v9682, %v9694
    %v9696 = vpop.f32.mrf.mxu0
    %9697 = vdwg.mxu0
    %9698 = vmatpush.bf16.msra.mxu0 %v6869
    %9699 = vmatpush.bf16.msra.mxu0 %v6865
    %9700 = vmatpush.bf16.msra.mxu0 %v6861
    %9701 = vmatpush.bf16.msra.mxu0 %v6857
    %9702 = vmatpush.bf16.msra.mxu0 %v6853
    %9703 = vmatpush.bf16.msra.mxu0 %v6849
    %9704 = vmatpush.bf16.msra.mxu0 %v6845
    %9705 = vmatpush.bf16.msra.mxu0 %v6841
    %9706 = vmatmul.bf16.gmra.mxu0 %v214
    %v9707 = vpop.f32.mrf.mxu0
    %v9708 = vadd.f32 %v9695, %v9707
    %v9709 = vpop.f32.mrf.mxu0
    %9710 = vdwg.mxu0
    %9711 = vmatpush.bf16.msra.mxu0 %v5622
    %9712 = vmatpush.bf16.msra.mxu0 %v5618
    %9713 = vmatpush.bf16.msra.mxu0 %v5614
    %9714 = vmatpush.bf16.msra.mxu0 %v5610
    %9715 = vmatpush.bf16.msra.mxu0 %v5606
    %9716 = vmatpush.bf16.msra.mxu0 %v5602
    %9717 = vmatpush.bf16.msra.mxu0 %v5598
    %9718 = vmatpush.bf16.msra.mxu0 %v5594
    %9719 = vmatmul.bf16.gmra.mxu0 %v175
    %v9720 = vpop.f32.mrf.mxu0
    %v9721 = vadd.f32 0.0, %v9720
    %v9722 = vpop.f32.mrf.mxu0
    %9723 = vdwg.mxu0
    %9724 = vmatpush.bf16.msra.mxu0 %v5654
    %9725 = vmatpush.bf16.msra.mxu0 %v5650
    %9726 = vmatpush.bf16.msra.mxu0 %v5646
    %9727 = vmatpush.bf16.msra.mxu0 %v5642
    %9728 = vmatpush.bf16.msra.mxu0 %v5638
    %9729 = vmatpush.bf16.msra.mxu0 %v5634
    %9730 = vmatpush.bf16.msra.mxu0 %v5630
    %9731 = vmatpush.bf16.msra.mxu0 %v5626
    %9732 = vmatmul.bf16.gmra.mxu0 %v176
    %v9733 = vpop.f32.mrf.mxu0
    %v9734 = vadd.f32 %v9721, %v9733
    %v9735 = vpop.f32.mrf.mxu0
    %9736 = vdwg.mxu0
    %9737 = vmatpush.bf16.msra.mxu0 %v5686
    %9738 = vmatpush.bf16.msra.mxu0 %v5682
    %9739 = vmatpush.bf16.msra.mxu0 %v5678
    %9740 = vmatpush.bf16.msra.mxu0 %v5674
    %9741 = vmatpush.bf16.msra.mxu0 %v5670
    %9742 = vmatpush.bf16.msra.mxu0 %v5666
    %9743 = vmatpush.bf16.msra.mxu0 %v5662
    %9744 = vmatpush.bf16.msra.mxu0 %v5658
    %9745 = vmatmul.bf16.gmra.mxu0 %v177
    %v9746 = vpop.f32.mrf.mxu0
    %v9747 = vadd.f32 %v9734, %v9746
    %v9748 = vpop.f32.mrf.mxu0
    %9749 = vdwg.mxu0
    %9750 = vmatpush.bf16.msra.mxu0 %v5718
    %9751 = vmatpush.bf16.msra.mxu0 %v5714
    %9752 = vmatpush.bf16.msra.mxu0 %v5710
    %9753 = vmatpush.bf16.msra.mxu0 %v5706
    %9754 = vmatpush.bf16.msra.mxu0 %v5702
    %9755 = vmatpush.bf16.msra.mxu0 %v5698
    %9756 = vmatpush.bf16.msra.mxu0 %v5694
    %9757 = vmatpush.bf16.msra.mxu0 %v5690
    %9758 = vmatmul.bf16.gmra.mxu0 %v178
    %v9759 = vpop.f32.mrf.mxu0
    %v9760 = vadd.f32 %v9747, %v9759
    %v9761 = vpop.f32.mrf.mxu0
    %9762 = vdwg.mxu0
    %9763 = vmatpush.bf16.msra.mxu0 %v5750
    %9764 = vmatpush.bf16.msra.mxu0 %v5746
    %9765 = vmatpush.bf16.msra.mxu0 %v5742
    %9766 = vmatpush.bf16.msra.mxu0 %v5738
    %9767 = vmatpush.bf16.msra.mxu0 %v5734
    %9768 = vmatpush.bf16.msra.mxu0 %v5730
    %9769 = vmatpush.bf16.msra.mxu0 %v5726
    %9770 = vmatpush.bf16.msra.mxu0 %v5722
    %9771 = vmatmul.bf16.gmra.mxu0 %v179
    %v9772 = vpop.f32.mrf.mxu0
    %v9773 = vadd.f32 %v9760, %v9772
    %v9774 = vpop.f32.mrf.mxu0
    %9775 = vdwg.mxu0
    %9776 = vmatpush.bf16.msra.mxu0 %v5782
    %9777 = vmatpush.bf16.msra.mxu0 %v5778
    %9778 = vmatpush.bf16.msra.mxu0 %v5774
    %9779 = vmatpush.bf16.msra.mxu0 %v5770
    %9780 = vmatpush.bf16.msra.mxu0 %v5766
    %9781 = vmatpush.bf16.msra.mxu0 %v5762
    %9782 = vmatpush.bf16.msra.mxu0 %v5758
    %9783 = vmatpush.bf16.msra.mxu0 %v5754
    %9784 = vmatmul.bf16.gmra.mxu0 %v180
    %v9785 = vpop.f32.mrf.mxu0
    %v9786 = vadd.f32 %v9773, %v9785
    %v9787 = vpop.f32.mrf.mxu0
    %9788 = vdwg.mxu0
    %9789 = vmatpush.bf16.msra.mxu0 %v5814
    %9790 = vmatpush.bf16.msra.mxu0 %v5810
    %9791 = vmatpush.bf16.msra.mxu0 %v5806
    %9792 = vmatpush.bf16.msra.mxu0 %v5802
    %9793 = vmatpush.bf16.msra.mxu0 %v5798
    %9794 = vmatpush.bf16.msra.mxu0 %v5794
    %9795 = vmatpush.bf16.msra.mxu0 %v5790
    %9796 = vmatpush.bf16.msra.mxu0 %v5786
    %9797 = vmatmul.bf16.gmra.mxu0 %v181
    %v9798 = vpop.f32.mrf.mxu0
    %v9799 = vadd.f32 %v9786, %v9798
    %v9800 = vpop.f32.mrf.mxu0
    %9801 = vdwg.mxu0
    %9802 = vmatpush.bf16.msra.mxu0 %v5846
    %9803 = vmatpush.bf16.msra.mxu0 %v5842
    %9804 = vmatpush.bf16.msra.mxu0 %v5838
    %9805 = vmatpush.bf16.msra.mxu0 %v5834
    %9806 = vmatpush.bf16.msra.mxu0 %v5830
    %9807 = vmatpush.bf16.msra.mxu0 %v5826
    %9808 = vmatpush.bf16.msra.mxu0 %v5822
    %9809 = vmatpush.bf16.msra.mxu0 %v5818
    %9810 = vmatmul.bf16.gmra.mxu0 %v182
    %v9811 = vpop.f32.mrf.mxu0
    %v9812 = vadd.f32 %v9799, %v9811
    %v9813 = vpop.f32.mrf.mxu0
    %9814 = vdwg.mxu0
    %9815 = vmatpush.bf16.msra.mxu0 %v5878
    %9816 = vmatpush.bf16.msra.mxu0 %v5874
    %9817 = vmatpush.bf16.msra.mxu0 %v5870
    %9818 = vmatpush.bf16.msra.mxu0 %v5866
    %9819 = vmatpush.bf16.msra.mxu0 %v5862
    %9820 = vmatpush.bf16.msra.mxu0 %v5858
    %9821 = vmatpush.bf16.msra.mxu0 %v5854
    %9822 = vmatpush.bf16.msra.mxu0 %v5850
    %9823 = vmatmul.bf16.gmra.mxu0 %v183
    %v9824 = vpop.f32.mrf.mxu0
    %v9825 = vadd.f32 %v9812, %v9824
    %v9826 = vpop.f32.mrf.mxu0
    %9827 = vdwg.mxu0
    %9828 = vmatpush.bf16.msra.mxu0 %v5910
    %9829 = vmatpush.bf16.msra.mxu0 %v5906
    %9830 = vmatpush.bf16.msra.mxu0 %v5902
    %9831 = vmatpush.bf16.msra.mxu0 %v5898
    %9832 = vmatpush.bf16.msra.mxu0 %v5894
    %9833 = vmatpush.bf16.msra.mxu0 %v5890
    %9834 = vmatpush.bf16.msra.mxu0 %v5886
    %9835 = vmatpush.bf16.msra.mxu0 %v5882
    %9836 = vmatmul.bf16.gmra.mxu0 %v184
    %v9837 = vpop.f32.mrf.mxu0
    %v9838 = vadd.f32 %v9825, %v9837
    %v9839 = vpop.f32.mrf.mxu0
    %9840 = vdwg.mxu0
    %9841 = vmatpush.bf16.msra.mxu0 %v5942
    %9842 = vmatpush.bf16.msra.mxu0 %v5938
    %9843 = vmatpush.bf16.msra.mxu0 %v5934
    %9844 = vmatpush.bf16.msra.mxu0 %v5930
    %9845 = vmatpush.bf16.msra.mxu0 %v5926
    %9846 = vmatpush.bf16.msra.mxu0 %v5922
    %9847 = vmatpush.bf16.msra.mxu0 %v5918
    %9848 = vmatpush.bf16.msra.mxu0 %v5914
    %9849 = vmatmul.bf16.gmra.mxu0 %v185
    %v9850 = vpop.f32.mrf.mxu0
    %v9851 = vadd.f32 %v9838, %v9850
    %v9852 = vpop.f32.mrf.mxu0
    %9853 = vdwg.mxu0
    %9854 = vmatpush.bf16.msra.mxu0 %v5974
    %9855 = vmatpush.bf16.msra.mxu0 %v5970
    %9856 = vmatpush.bf16.msra.mxu0 %v5966
    %9857 = vmatpush.bf16.msra.mxu0 %v5962
    %9858 = vmatpush.bf16.msra.mxu0 %v5958
    %9859 = vmatpush.bf16.msra.mxu0 %v5954
    %9860 = vmatpush.bf16.msra.mxu0 %v5950
    %9861 = vmatpush.bf16.msra.mxu0 %v5946
    %9862 = vmatmul.bf16.gmra.mxu0 %v186
    %v9863 = vpop.f32.mrf.mxu0
    %v9864 = vadd.f32 %v9851, %v9863
    %v9865 = vpop.f32.mrf.mxu0
    %9866 = vdwg.mxu0
    %9867 = vmatpush.bf16.msra.mxu0 %v6006
    %9868 = vmatpush.bf16.msra.mxu0 %v6002
    %9869 = vmatpush.bf16.msra.mxu0 %v5998
    %9870 = vmatpush.bf16.msra.mxu0 %v5994
    %9871 = vmatpush.bf16.msra.mxu0 %v5990
    %9872 = vmatpush.bf16.msra.mxu0 %v5986
    %9873 = vmatpush.bf16.msra.mxu0 %v5982
    %9874 = vmatpush.bf16.msra.mxu0 %v5978
    %9875 = vmatmul.bf16.gmra.mxu0 %v187
    %v9876 = vpop.f32.mrf.mxu0
    %v9877 = vadd.f32 %v9864, %v9876
    %v9878 = vpop.f32.mrf.mxu0
    %9879 = vdwg.mxu0
    %9880 = vmatpush.bf16.msra.mxu0 %v6038
    %9881 = vmatpush.bf16.msra.mxu0 %v6034
    %9882 = vmatpush.bf16.msra.mxu0 %v6030
    %9883 = vmatpush.bf16.msra.mxu0 %v6026
    %9884 = vmatpush.bf16.msra.mxu0 %v6022
    %9885 = vmatpush.bf16.msra.mxu0 %v6018
    %9886 = vmatpush.bf16.msra.mxu0 %v6014
    %9887 = vmatpush.bf16.msra.mxu0 %v6010
    %9888 = vmatmul.bf16.gmra.mxu0 %v188
    %v9889 = vpop.f32.mrf.mxu0
    %v9890 = vadd.f32 %v9877, %v9889
    %v9891 = vpop.f32.mrf.mxu0
    %9892 = vdwg.mxu0
    %9893 = vmatpush.bf16.msra.mxu0 %v6070
    %9894 = vmatpush.bf16.msra.mxu0 %v6066
    %9895 = vmatpush.bf16.msra.mxu0 %v6062
    %9896 = vmatpush.bf16.msra.mxu0 %v6058
    %9897 = vmatpush.bf16.msra.mxu0 %v6054
    %9898 = vmatpush.bf16.msra.mxu0 %v6050
    %9899 = vmatpush.bf16.msra.mxu0 %v6046
    %9900 = vmatpush.bf16.msra.mxu0 %v6042
    %9901 = vmatmul.bf16.gmra.mxu0 %v189
    %v9902 = vpop.f32.mrf.mxu0
    %v9903 = vadd.f32 %v9890, %v9902
    %v9904 = vpop.f32.mrf.mxu0
    %9905 = vdwg.mxu0
    %9906 = vmatpush.bf16.msra.mxu0 %v6102
    %9907 = vmatpush.bf16.msra.mxu0 %v6098
    %9908 = vmatpush.bf16.msra.mxu0 %v6094
    %9909 = vmatpush.bf16.msra.mxu0 %v6090
    %9910 = vmatpush.bf16.msra.mxu0 %v6086
    %9911 = vmatpush.bf16.msra.mxu0 %v6082
    %9912 = vmatpush.bf16.msra.mxu0 %v6078
    %9913 = vmatpush.bf16.msra.mxu0 %v6074
    %9914 = vmatmul.bf16.gmra.mxu0 %v190
    %v9915 = vpop.f32.mrf.mxu0
    %v9916 = vadd.f32 %v9903, %v9915
    %v9917 = vpop.f32.mrf.mxu0
    %9918 = vdwg.mxu0
    %9919 = vmatpush.bf16.msra.mxu0 %v6134
    %9920 = vmatpush.bf16.msra.mxu0 %v6130
    %9921 = vmatpush.bf16.msra.mxu0 %v6126
    %9922 = vmatpush.bf16.msra.mxu0 %v6122
    %9923 = vmatpush.bf16.msra.mxu0 %v6118
    %9924 = vmatpush.bf16.msra.mxu0 %v6114
    %9925 = vmatpush.bf16.msra.mxu0 %v6110
    %9926 = vmatpush.bf16.msra.mxu0 %v6106
    %9927 = vmatmul.bf16.gmra.mxu0 %v191
    %v9928 = vpop.f32.mrf.mxu0
    %v9929 = vadd.f32 %v9916, %v9928
    %v9930 = vpop.f32.mrf.mxu0
    %9931 = vdwg.mxu0
    %9932 = vmatpush.bf16.msra.mxu0 %v6166
    %9933 = vmatpush.bf16.msra.mxu0 %v6162
    %9934 = vmatpush.bf16.msra.mxu0 %v6158
    %9935 = vmatpush.bf16.msra.mxu0 %v6154
    %9936 = vmatpush.bf16.msra.mxu0 %v6150
    %9937 = vmatpush.bf16.msra.mxu0 %v6146
    %9938 = vmatpush.bf16.msra.mxu0 %v6142
    %9939 = vmatpush.bf16.msra.mxu0 %v6138
    %9940 = vmatmul.bf16.gmra.mxu0 %v192
    %v9941 = vpop.f32.mrf.mxu0
    %v9942 = vadd.f32 %v9929, %v9941
    %v9943 = vpop.f32.mrf.mxu0
    %9944 = vdwg.mxu0
    %9945 = vmatpush.bf16.msra.mxu0 %v6198
    %9946 = vmatpush.bf16.msra.mxu0 %v6194
    %9947 = vmatpush.bf16.msra.mxu0 %v6190
    %9948 = vmatpush.bf16.msra.mxu0 %v6186
    %9949 = vmatpush.bf16.msra.mxu0 %v6182
    %9950 = vmatpush.bf16.msra.mxu0 %v6178
    %9951 = vmatpush.bf16.msra.mxu0 %v6174
    %9952 = vmatpush.bf16.msra.mxu0 %v6170
    %9953 = vmatmul.bf16.gmra.mxu0 %v193
    %v9954 = vpop.f32.mrf.mxu0
    %v9955 = vadd.f32 %v9942, %v9954
    %v9956 = vpop.f32.mrf.mxu0
    %9957 = vdwg.mxu0
    %9958 = vmatpush.bf16.msra.mxu0 %v6230
    %9959 = vmatpush.bf16.msra.mxu0 %v6226
    %9960 = vmatpush.bf16.msra.mxu0 %v6222
    %9961 = vmatpush.bf16.msra.mxu0 %v6218
    %9962 = vmatpush.bf16.msra.mxu0 %v6214
    %9963 = vmatpush.bf16.msra.mxu0 %v6210
    %9964 = vmatpush.bf16.msra.mxu0 %v6206
    %9965 = vmatpush.bf16.msra.mxu0 %v6202
    %9966 = vmatmul.bf16.gmra.mxu0 %v194
    %v9967 = vpop.f32.mrf.mxu0
    %v9968 = vadd.f32 %v9955, %v9967
    %v9969 = vpop.f32.mrf.mxu0
    %9970 = vdwg.mxu0
    %9971 = vmatpush.bf16.msra.mxu0 %v6262
    %9972 = vmatpush.bf16.msra.mxu0 %v6258
    %9973 = vmatpush.bf16.msra.mxu0 %v6254
    %9974 = vmatpush.bf16.msra.mxu0 %v6250
    %9975 = vmatpush.bf16.msra.mxu0 %v6246
    %9976 = vmatpush.bf16.msra.mxu0 %v6242
    %9977 = vmatpush.bf16.msra.mxu0 %v6238
    %9978 = vmatpush.bf16.msra.mxu0 %v6234
    %9979 = vmatmul.bf16.gmra.mxu0 %v195
    %v9980 = vpop.f32.mrf.mxu0
    %v9981 = vadd.f32 %v9968, %v9980
    %v9982 = vpop.f32.mrf.mxu0
    %9983 = vdwg.mxu0
    %9984 = vmatpush.bf16.msra.mxu0 %v6294
    %9985 = vmatpush.bf16.msra.mxu0 %v6290
    %9986 = vmatpush.bf16.msra.mxu0 %v6286
    %9987 = vmatpush.bf16.msra.mxu0 %v6282
    %9988 = vmatpush.bf16.msra.mxu0 %v6278
    %9989 = vmatpush.bf16.msra.mxu0 %v6274
    %9990 = vmatpush.bf16.msra.mxu0 %v6270
    %9991 = vmatpush.bf16.msra.mxu0 %v6266
    %9992 = vmatmul.bf16.gmra.mxu0 %v196
    %v9993 = vpop.f32.mrf.mxu0
    %v9994 = vadd.f32 %v9981, %v9993
    %v9995 = vpop.f32.mrf.mxu0
    %9996 = vdwg.mxu0
    %9997 = vmatpush.bf16.msra.mxu0 %v6326
    %9998 = vmatpush.bf16.msra.mxu0 %v6322
    %9999 = vmatpush.bf16.msra.mxu0 %v6318
    %10000 = vmatpush.bf16.msra.mxu0 %v6314
    %10001 = vmatpush.bf16.msra.mxu0 %v6310
    %10002 = vmatpush.bf16.msra.mxu0 %v6306
    %10003 = vmatpush.bf16.msra.mxu0 %v6302
    %10004 = vmatpush.bf16.msra.mxu0 %v6298
    %10005 = vmatmul.bf16.gmra.mxu0 %v197
    %v10006 = vpop.f32.mrf.mxu0
    %v10007 = vadd.f32 %v9994, %v10006
    %v10008 = vpop.f32.mrf.mxu0
    %10009 = vdwg.mxu0
    %10010 = vmatpush.bf16.msra.mxu0 %v6358
    %10011 = vmatpush.bf16.msra.mxu0 %v6354
    %10012 = vmatpush.bf16.msra.mxu0 %v6350
    %10013 = vmatpush.bf16.msra.mxu0 %v6346
    %10014 = vmatpush.bf16.msra.mxu0 %v6342
    %10015 = vmatpush.bf16.msra.mxu0 %v6338
    %10016 = vmatpush.bf16.msra.mxu0 %v6334
    %10017 = vmatpush.bf16.msra.mxu0 %v6330
    %10018 = vmatmul.bf16.gmra.mxu0 %v198
    %v10019 = vpop.f32.mrf.mxu0
    %v10020 = vadd.f32 %v10007, %v10019
    %v10021 = vpop.f32.mrf.mxu0
    %10022 = vdwg.mxu0
    %10023 = vmatpush.bf16.msra.mxu0 %v6390
    %10024 = vmatpush.bf16.msra.mxu0 %v6386
    %10025 = vmatpush.bf16.msra.mxu0 %v6382
    %10026 = vmatpush.bf16.msra.mxu0 %v6378
    %10027 = vmatpush.bf16.msra.mxu0 %v6374
    %10028 = vmatpush.bf16.msra.mxu0 %v6370
    %10029 = vmatpush.bf16.msra.mxu0 %v6366
    %10030 = vmatpush.bf16.msra.mxu0 %v6362
    %10031 = vmatmul.bf16.gmra.mxu0 %v199
    %v10032 = vpop.f32.mrf.mxu0
    %v10033 = vadd.f32 %v10020, %v10032
    %v10034 = vpop.f32.mrf.mxu0
    %10035 = vdwg.mxu0
    %10036 = vmatpush.bf16.msra.mxu0 %v6422
    %10037 = vmatpush.bf16.msra.mxu0 %v6418
    %10038 = vmatpush.bf16.msra.mxu0 %v6414
    %10039 = vmatpush.bf16.msra.mxu0 %v6410
    %10040 = vmatpush.bf16.msra.mxu0 %v6406
    %10041 = vmatpush.bf16.msra.mxu0 %v6402
    %10042 = vmatpush.bf16.msra.mxu0 %v6398
    %10043 = vmatpush.bf16.msra.mxu0 %v6394
    %10044 = vmatmul.bf16.gmra.mxu0 %v200
    %v10045 = vpop.f32.mrf.mxu0
    %v10046 = vadd.f32 %v10033, %v10045
    %v10047 = vpop.f32.mrf.mxu0
    %10048 = vdwg.mxu0
    %10049 = vmatpush.bf16.msra.mxu0 %v6454
    %10050 = vmatpush.bf16.msra.mxu0 %v6450
    %10051 = vmatpush.bf16.msra.mxu0 %v6446
    %10052 = vmatpush.bf16.msra.mxu0 %v6442
    %10053 = vmatpush.bf16.msra.mxu0 %v6438
    %10054 = vmatpush.bf16.msra.mxu0 %v6434
    %10055 = vmatpush.bf16.msra.mxu0 %v6430
    %10056 = vmatpush.bf16.msra.mxu0 %v6426
    %10057 = vmatmul.bf16.gmra.mxu0 %v201
    %v10058 = vpop.f32.mrf.mxu0
    %v10059 = vadd.f32 %v10046, %v10058
    %v10060 = vpop.f32.mrf.mxu0
    %10061 = vdwg.mxu0
    %10062 = vmatpush.bf16.msra.mxu0 %v6486
    %10063 = vmatpush.bf16.msra.mxu0 %v6482
    %10064 = vmatpush.bf16.msra.mxu0 %v6478
    %10065 = vmatpush.bf16.msra.mxu0 %v6474
    %10066 = vmatpush.bf16.msra.mxu0 %v6470
    %10067 = vmatpush.bf16.msra.mxu0 %v6466
    %10068 = vmatpush.bf16.msra.mxu0 %v6462
    %10069 = vmatpush.bf16.msra.mxu0 %v6458
    %10070 = vmatmul.bf16.gmra.mxu0 %v202
    %v10071 = vpop.f32.mrf.mxu0
    %v10072 = vadd.f32 %v10059, %v10071
    %v10073 = vpop.f32.mrf.mxu0
    %10074 = vdwg.mxu0
    %10075 = vmatpush.bf16.msra.mxu0 %v6518
    %10076 = vmatpush.bf16.msra.mxu0 %v6514
    %10077 = vmatpush.bf16.msra.mxu0 %v6510
    %10078 = vmatpush.bf16.msra.mxu0 %v6506
    %10079 = vmatpush.bf16.msra.mxu0 %v6502
    %10080 = vmatpush.bf16.msra.mxu0 %v6498
    %10081 = vmatpush.bf16.msra.mxu0 %v6494
    %10082 = vmatpush.bf16.msra.mxu0 %v6490
    %10083 = vmatmul.bf16.gmra.mxu0 %v203
    %v10084 = vpop.f32.mrf.mxu0
    %v10085 = vadd.f32 %v10072, %v10084
    %v10086 = vpop.f32.mrf.mxu0
    %10087 = vdwg.mxu0
    %10088 = vmatpush.bf16.msra.mxu0 %v6550
    %10089 = vmatpush.bf16.msra.mxu0 %v6546
    %10090 = vmatpush.bf16.msra.mxu0 %v6542
    %10091 = vmatpush.bf16.msra.mxu0 %v6538
    %10092 = vmatpush.bf16.msra.mxu0 %v6534
    %10093 = vmatpush.bf16.msra.mxu0 %v6530
    %10094 = vmatpush.bf16.msra.mxu0 %v6526
    %10095 = vmatpush.bf16.msra.mxu0 %v6522
    %10096 = vmatmul.bf16.gmra.mxu0 %v204
    %v10097 = vpop.f32.mrf.mxu0
    %v10098 = vadd.f32 %v10085, %v10097
    %v10099 = vpop.f32.mrf.mxu0
    %10100 = vdwg.mxu0
    %10101 = vmatpush.bf16.msra.mxu0 %v6582
    %10102 = vmatpush.bf16.msra.mxu0 %v6578
    %10103 = vmatpush.bf16.msra.mxu0 %v6574
    %10104 = vmatpush.bf16.msra.mxu0 %v6570
    %10105 = vmatpush.bf16.msra.mxu0 %v6566
    %10106 = vmatpush.bf16.msra.mxu0 %v6562
    %10107 = vmatpush.bf16.msra.mxu0 %v6558
    %10108 = vmatpush.bf16.msra.mxu0 %v6554
    %10109 = vmatmul.bf16.gmra.mxu0 %v205
    %v10110 = vpop.f32.mrf.mxu0
    %v10111 = vadd.f32 %v10098, %v10110
    %v10112 = vpop.f32.mrf.mxu0
    %10113 = vdwg.mxu0
    %10114 = vmatpush.bf16.msra.mxu0 %v6614
    %10115 = vmatpush.bf16.msra.mxu0 %v6610
    %10116 = vmatpush.bf16.msra.mxu0 %v6606
    %10117 = vmatpush.bf16.msra.mxu0 %v6602
    %10118 = vmatpush.bf16.msra.mxu0 %v6598
    %10119 = vmatpush.bf16.msra.mxu0 %v6594
    %10120 = vmatpush.bf16.msra.mxu0 %v6590
    %10121 = vmatpush.bf16.msra.mxu0 %v6586
    %10122 = vmatmul.bf16.gmra.mxu0 %v206
    %v10123 = vpop.f32.mrf.mxu0
    %v10124 = vadd.f32 %v10111, %v10123
    %v10125 = vpop.f32.mrf.mxu0
    %10126 = vdwg.mxu0
    %10127 = vmatpush.bf16.msra.mxu0 %v6646
    %10128 = vmatpush.bf16.msra.mxu0 %v6642
    %10129 = vmatpush.bf16.msra.mxu0 %v6638
    %10130 = vmatpush.bf16.msra.mxu0 %v6634
    %10131 = vmatpush.bf16.msra.mxu0 %v6630
    %10132 = vmatpush.bf16.msra.mxu0 %v6626
    %10133 = vmatpush.bf16.msra.mxu0 %v6622
    %10134 = vmatpush.bf16.msra.mxu0 %v6618
    %10135 = vmatmul.bf16.gmra.mxu0 %v207
    %v10136 = vpop.f32.mrf.mxu0
    %v10137 = vadd.f32 %v10124, %v10136
    %v10138 = vpop.f32.mrf.mxu0
    %10139 = vdwg.mxu0
    %10140 = vmatpush.bf16.msra.mxu0 %v6678
    %10141 = vmatpush.bf16.msra.mxu0 %v6674
    %10142 = vmatpush.bf16.msra.mxu0 %v6670
    %10143 = vmatpush.bf16.msra.mxu0 %v6666
    %10144 = vmatpush.bf16.msra.mxu0 %v6662
    %10145 = vmatpush.bf16.msra.mxu0 %v6658
    %10146 = vmatpush.bf16.msra.mxu0 %v6654
    %10147 = vmatpush.bf16.msra.mxu0 %v6650
    %10148 = vmatmul.bf16.gmra.mxu0 %v208
    %v10149 = vpop.f32.mrf.mxu0
    %v10150 = vadd.f32 %v10137, %v10149
    %v10151 = vpop.f32.mrf.mxu0
    %10152 = vdwg.mxu0
    %10153 = vmatpush.bf16.msra.mxu0 %v6710
    %10154 = vmatpush.bf16.msra.mxu0 %v6706
    %10155 = vmatpush.bf16.msra.mxu0 %v6702
    %10156 = vmatpush.bf16.msra.mxu0 %v6698
    %10157 = vmatpush.bf16.msra.mxu0 %v6694
    %10158 = vmatpush.bf16.msra.mxu0 %v6690
    %10159 = vmatpush.bf16.msra.mxu0 %v6686
    %10160 = vmatpush.bf16.msra.mxu0 %v6682
    %10161 = vmatmul.bf16.gmra.mxu0 %v209
    %v10162 = vpop.f32.mrf.mxu0
    %v10163 = vadd.f32 %v10150, %v10162
    %v10164 = vpop.f32.mrf.mxu0
    %10165 = vdwg.mxu0
    %10166 = vmatpush.bf16.msra.mxu0 %v6742
    %10167 = vmatpush.bf16.msra.mxu0 %v6738
    %10168 = vmatpush.bf16.msra.mxu0 %v6734
    %10169 = vmatpush.bf16.msra.mxu0 %v6730
    %10170 = vmatpush.bf16.msra.mxu0 %v6726
    %10171 = vmatpush.bf16.msra.mxu0 %v6722
    %10172 = vmatpush.bf16.msra.mxu0 %v6718
    %10173 = vmatpush.bf16.msra.mxu0 %v6714
    %10174 = vmatmul.bf16.gmra.mxu0 %v210
    %v10175 = vpop.f32.mrf.mxu0
    %v10176 = vadd.f32 %v10163, %v10175
    %v10177 = vpop.f32.mrf.mxu0
    %10178 = vdwg.mxu0
    %10179 = vmatpush.bf16.msra.mxu0 %v6774
    %10180 = vmatpush.bf16.msra.mxu0 %v6770
    %10181 = vmatpush.bf16.msra.mxu0 %v6766
    %10182 = vmatpush.bf16.msra.mxu0 %v6762
    %10183 = vmatpush.bf16.msra.mxu0 %v6758
    %10184 = vmatpush.bf16.msra.mxu0 %v6754
    %10185 = vmatpush.bf16.msra.mxu0 %v6750
    %10186 = vmatpush.bf16.msra.mxu0 %v6746
    %10187 = vmatmul.bf16.gmra.mxu0 %v211
    %v10188 = vpop.f32.mrf.mxu0
    %v10189 = vadd.f32 %v10176, %v10188
    %v10190 = vpop.f32.mrf.mxu0
    %10191 = vdwg.mxu0
    %10192 = vmatpush.bf16.msra.mxu0 %v6806
    %10193 = vmatpush.bf16.msra.mxu0 %v6802
    %10194 = vmatpush.bf16.msra.mxu0 %v6798
    %10195 = vmatpush.bf16.msra.mxu0 %v6794
    %10196 = vmatpush.bf16.msra.mxu0 %v6790
    %10197 = vmatpush.bf16.msra.mxu0 %v6786
    %10198 = vmatpush.bf16.msra.mxu0 %v6782
    %10199 = vmatpush.bf16.msra.mxu0 %v6778
    %10200 = vmatmul.bf16.gmra.mxu0 %v212
    %v10201 = vpop.f32.mrf.mxu0
    %v10202 = vadd.f32 %v10189, %v10201
    %v10203 = vpop.f32.mrf.mxu0
    %10204 = vdwg.mxu0
    %10205 = vmatpush.bf16.msra.mxu0 %v6838
    %10206 = vmatpush.bf16.msra.mxu0 %v6834
    %10207 = vmatpush.bf16.msra.mxu0 %v6830
    %10208 = vmatpush.bf16.msra.mxu0 %v6826
    %10209 = vmatpush.bf16.msra.mxu0 %v6822
    %10210 = vmatpush.bf16.msra.mxu0 %v6818
    %10211 = vmatpush.bf16.msra.mxu0 %v6814
    %10212 = vmatpush.bf16.msra.mxu0 %v6810
    %10213 = vmatmul.bf16.gmra.mxu0 %v213
    %v10214 = vpop.f32.mrf.mxu0
    %v10215 = vadd.f32 %v10202, %v10214
    %v10216 = vpop.f32.mrf.mxu0
    %10217 = vdwg.mxu0
    %10218 = vmatpush.bf16.msra.mxu0 %v6870
    %10219 = vmatpush.bf16.msra.mxu0 %v6866
    %10220 = vmatpush.bf16.msra.mxu0 %v6862
    %10221 = vmatpush.bf16.msra.mxu0 %v6858
    %10222 = vmatpush.bf16.msra.mxu0 %v6854
    %10223 = vmatpush.bf16.msra.mxu0 %v6850
    %10224 = vmatpush.bf16.msra.mxu0 %v6846
    %10225 = vmatpush.bf16.msra.mxu0 %v6842
    %10226 = vmatmul.bf16.gmra.mxu0 %v214
    %v10227 = vpop.f32.mrf.mxu0
    %v10228 = vadd.f32 %v10215, %v10227
    %v10229 = vpop.f32.mrf.mxu0
    %10230 = vdwg.mxu0
    %v10231 = vadd.f32 %v429, %v8668
    %v10232 = vadd.f32 %v442, %v9188
    %v10233 = vadd.f32 %v455, %v9708
    %v10234 = vadd.f32 %v468, %v10228
    %v10235 = vmax.f32 %v10231, 0.0
    %v10236 = vmax.f32 %v10232, 0.0
    %v10237 = vmax.f32 %v10233, 0.0
    %v10238 = vmax.f32 %v10234, 0.0
    %v10239 = vpack.c.bf16 %v10235, %v10235
    %v10240 = vpack.c.bf16 %v10236, %v10236
    %v10241 = vpack.c.bf16 %v10237, %v10237
    %v10242 = vpack.c.bf16 %v10238, %v10238
    %v10243 = vld [vmem:[#allocation7] sm:$0xff]
    %v10244 = vld [vmem:[#allocation7 + $0x8] sm:$0xff]
    %v10245 = vld [vmem:[#allocation7 + $0x10] sm:$0xff]
    %v10246 = vld [vmem:[#allocation7 + $0x18] sm:$0xff]
    %v10247 = vld [vmem:[#allocation7 + $0x20] sm:$0xff]
    %v10248 = vld [vmem:[#allocation7 + $0x28] sm:$0xff]
    %v10249 = vld [vmem:[#allocation7 + $0x30] sm:$0xff]
    %v10250 = vld [vmem:[#allocation7 + $0x38] sm:$0xff]
    %v10251 = vld [vmem:[#allocation7 + $0x40] sm:$0xff]
    %v10252 = vld [vmem:[#allocation7 + $0x48] sm:$0xff]
    %v10253 = vld [vmem:[#allocation7 + $0x50] sm:$0xff]
    %v10254 = vld [vmem:[#allocation7 + $0x58] sm:$0xff]
    %v10255 = vld [vmem:[#allocation7 + $0x60] sm:$0xff]
    %v10256 = vld [vmem:[#allocation7 + $0x68] sm:$0xff]
    %v10257 = vld [vmem:[#allocation7 + $0x70] sm:$0xff]
    %v10258 = vld [vmem:[#allocation7 + $0x78] sm:$0xff]
    %v10259 = vld [vmem:[#allocation7 + $0x80] sm:$0xff]
    %v10260 = vld [vmem:[#allocation7 + $0x88] sm:$0xff]
    %v10261 = vld [vmem:[#allocation7 + $0x90] sm:$0xff]
    %v10262 = vld [vmem:[#allocation7 + $0x98] sm:$0xff]
    %v10263 = vld [vmem:[#allocation7 + $0xa0] sm:$0xff]
    %v10264 = vld [vmem:[#allocation7 + $0xa8] sm:$0xff]
    %v10265 = vld [vmem:[#allocation7 + $0xb0] sm:$0xff]
    %v10266 = vld [vmem:[#allocation7 + $0xb8] sm:$0xff]
    %v10267 = vld [vmem:[#allocation7 + $0xc0] sm:$0xff]
    %v10268 = vld [vmem:[#allocation7 + $0xc8] sm:$0xff]
    %v10269 = vld [vmem:[#allocation7 + $0xd0] sm:$0xff]
    %v10270 = vld [vmem:[#allocation7 + $0xd8] sm:$0xff]
    %v10271 = vld [vmem:[#allocation7 + $0xe0] sm:$0xff]
    %v10272 = vld [vmem:[#allocation7 + $0xe8] sm:$0xff]
    %v10273 = vld [vmem:[#allocation7 + $0xf0] sm:$0xff]
    %v10274 = vld [vmem:[#allocation7 + $0xf8] sm:$0xff]
    %v10275 = vld [vmem:[#allocation7 + $0x100] sm:$0xff]
    %v10276 = vld [vmem:[#allocation7 + $0x108] sm:$0xff]
    %v10277 = vld [vmem:[#allocation7 + $0x110] sm:$0xff]
    %v10278 = vld [vmem:[#allocation7 + $0x118] sm:$0xff]
    %v10279 = vld [vmem:[#allocation7 + $0x120] sm:$0xff]
    %v10280 = vld [vmem:[#allocation7 + $0x128] sm:$0xff]
    %v10281 = vld [vmem:[#allocation7 + $0x130] sm:$0xff]
    %v10282 = vld [vmem:[#allocation7 + $0x138] sm:$0xff]
    %v10283 = vld [vmem:[#allocation7 + $0x140] sm:$0xff]
    %v10284 = vld [vmem:[#allocation7 + $0x148] sm:$0xff]
    %v10285 = vld [vmem:[#allocation7 + $0x150] sm:$0xff]
    %v10286 = vld [vmem:[#allocation7 + $0x158] sm:$0xff]
    %v10287 = vld [vmem:[#allocation7 + $0x160] sm:$0xff]
    %v10288 = vld [vmem:[#allocation7 + $0x168] sm:$0xff]
    %v10289 = vld [vmem:[#allocation7 + $0x170] sm:$0xff]
    %v10290 = vld [vmem:[#allocation7 + $0x178] sm:$0xff]
    %v10291 = vld [vmem:[#allocation7 + $0x180] sm:$0xff]
    %v10292 = vld [vmem:[#allocation7 + $0x188] sm:$0xff]
    %v10293 = vld [vmem:[#allocation7 + $0x190] sm:$0xff]
    %v10294 = vld [vmem:[#allocation7 + $0x198] sm:$0xff]
    %v10295 = vld [vmem:[#allocation7 + $0x1a0] sm:$0xff]
    %v10296 = vld [vmem:[#allocation7 + $0x1a8] sm:$0xff]
    %v10297 = vld [vmem:[#allocation7 + $0x1b0] sm:$0xff]
    %v10298 = vld [vmem:[#allocation7 + $0x1b8] sm:$0xff]
    %v10299 = vld [vmem:[#allocation7 + $0x1c0] sm:$0xff]
    %v10300 = vld [vmem:[#allocation7 + $0x1c8] sm:$0xff]
    %v10301 = vld [vmem:[#allocation7 + $0x1d0] sm:$0xff]
    %v10302 = vld [vmem:[#allocation7 + $0x1d8] sm:$0xff]
    %v10303 = vld [vmem:[#allocation7 + $0x1e0] sm:$0xff]
    %v10304 = vld [vmem:[#allocation7 + $0x1e8] sm:$0xff]
    %v10305 = vld [vmem:[#allocation7 + $0x1f0] sm:$0xff]
    %v10306 = vld [vmem:[#allocation7 + $0x1f8] sm:$0xff]
    %v10307 = vld [vmem:[#allocation9] sm:$0x3]
    %v10309 = vperm.slane %v10307, 0
    %v10310 = vperm.slane %v10307, 1
    %v10377 = vunpack.c.l.b16 %v10243
    %v10378 = vunpack.c.h.b16 %v10243
    %v10379 = vunpack.c.l.b16 %v10244
    %v10380 = vunpack.c.h.b16 %v10244
    %v10381 = vunpack.c.l.b16 %v10245
    %v10382 = vunpack.c.h.b16 %v10245
    %v10383 = vunpack.c.l.b16 %v10246
    %v10384 = vunpack.c.h.b16 %v10246
    %v10385 = vunpack.c.l.b16 %v10247
    %v10386 = vunpack.c.h.b16 %v10247
    %v10387 = vunpack.c.l.b16 %v10248
    %v10388 = vunpack.c.h.b16 %v10248
    %v10389 = vunpack.c.l.b16 %v10249
    %v10390 = vunpack.c.h.b16 %v10249
    %v10391 = vunpack.c.l.b16 %v10250
    %v10392 = vunpack.c.h.b16 %v10250
    %v10393 = vunpack.c.l.b16 %v10251
    %v10394 = vunpack.c.h.b16 %v10251
    %v10395 = vunpack.c.l.b16 %v10252
    %v10396 = vunpack.c.h.b16 %v10252
    %v10397 = vunpack.c.l.b16 %v10253
    %v10398 = vunpack.c.h.b16 %v10253
    %v10399 = vunpack.c.l.b16 %v10254
    %v10400 = vunpack.c.h.b16 %v10254
    %v10401 = vunpack.c.l.b16 %v10255
    %v10402 = vunpack.c.h.b16 %v10255
    %v10403 = vunpack.c.l.b16 %v10256
    %v10404 = vunpack.c.h.b16 %v10256
    %v10405 = vunpack.c.l.b16 %v10257
    %v10406 = vunpack.c.h.b16 %v10257
    %v10407 = vunpack.c.l.b16 %v10258
    %v10408 = vunpack.c.h.b16 %v10258
    %v10409 = vunpack.c.l.b16 %v10259
    %v10410 = vunpack.c.h.b16 %v10259
    %v10411 = vunpack.c.l.b16 %v10260
    %v10412 = vunpack.c.h.b16 %v10260
    %v10413 = vunpack.c.l.b16 %v10261
    %v10414 = vunpack.c.h.b16 %v10261
    %v10415 = vunpack.c.l.b16 %v10262
    %v10416 = vunpack.c.h.b16 %v10262
    %v10417 = vunpack.c.l.b16 %v10263
    %v10418 = vunpack.c.h.b16 %v10263
    %v10419 = vunpack.c.l.b16 %v10264
    %v10420 = vunpack.c.h.b16 %v10264
    %v10421 = vunpack.c.l.b16 %v10265
    %v10422 = vunpack.c.h.b16 %v10265
    %v10423 = vunpack.c.l.b16 %v10266
    %v10424 = vunpack.c.h.b16 %v10266
    %v10425 = vunpack.c.l.b16 %v10267
    %v10426 = vunpack.c.h.b16 %v10267
    %v10427 = vunpack.c.l.b16 %v10268
    %v10428 = vunpack.c.h.b16 %v10268
    %v10429 = vunpack.c.l.b16 %v10269
    %v10430 = vunpack.c.h.b16 %v10269
    %v10431 = vunpack.c.l.b16 %v10270
    %v10432 = vunpack.c.h.b16 %v10270
    %v10433 = vunpack.c.l.b16 %v10271
    %v10434 = vunpack.c.h.b16 %v10271
    %v10435 = vunpack.c.l.b16 %v10272
    %v10436 = vunpack.c.h.b16 %v10272
    %v10437 = vunpack.c.l.b16 %v10273
    %v10438 = vunpack.c.h.b16 %v10273
    %v10439 = vunpack.c.l.b16 %v10274
    %v10440 = vunpack.c.h.b16 %v10274
    %v10441 = vunpack.c.l.b16 %v10275
    %v10442 = vunpack.c.h.b16 %v10275
    %v10443 = vunpack.c.l.b16 %v10276
    %v10444 = vunpack.c.h.b16 %v10276
    %v10445 = vunpack.c.l.b16 %v10277
    %v10446 = vunpack.c.h.b16 %v10277
    %v10447 = vunpack.c.l.b16 %v10278
    %v10448 = vunpack.c.h.b16 %v10278
    %v10449 = vunpack.c.l.b16 %v10279
    %v10450 = vunpack.c.h.b16 %v10279
    %v10451 = vunpack.c.l.b16 %v10280
    %v10452 = vunpack.c.h.b16 %v10280
    %v10453 = vunpack.c.l.b16 %v10281
    %v10454 = vunpack.c.h.b16 %v10281
    %v10455 = vunpack.c.l.b16 %v10282
    %v10456 = vunpack.c.h.b16 %v10282
    %v10457 = vunpack.c.l.b16 %v10283
    %v10458 = vunpack.c.h.b16 %v10283
    %v10459 = vunpack.c.l.b16 %v10284
    %v10460 = vunpack.c.h.b16 %v10284
    %v10461 = vunpack.c.l.b16 %v10285
    %v10462 = vunpack.c.h.b16 %v10285
    %v10463 = vunpack.c.l.b16 %v10286
    %v10464 = vunpack.c.h.b16 %v10286
    %v10465 = vunpack.c.l.b16 %v10287
    %v10466 = vunpack.c.h.b16 %v10287
    %v10467 = vunpack.c.l.b16 %v10288
    %v10468 = vunpack.c.h.b16 %v10288
    %v10469 = vunpack.c.l.b16 %v10289
    %v10470 = vunpack.c.h.b16 %v10289
    %v10471 = vunpack.c.l.b16 %v10290
    %v10472 = vunpack.c.h.b16 %v10290
    %v10473 = vunpack.c.l.b16 %v10291
    %v10474 = vunpack.c.h.b16 %v10291
    %v10475 = vunpack.c.l.b16 %v10292
    %v10476 = vunpack.c.h.b16 %v10292
    %v10477 = vunpack.c.l.b16 %v10293
    %v10478 = vunpack.c.h.b16 %v10293
    %v10479 = vunpack.c.l.b16 %v10294
    %v10480 = vunpack.c.h.b16 %v10294
    %v10481 = vunpack.c.l.b16 %v10295
    %v10482 = vunpack.c.h.b16 %v10295
    %v10483 = vunpack.c.l.b16 %v10296
    %v10484 = vunpack.c.h.b16 %v10296
    %v10485 = vunpack.c.l.b16 %v10297
    %v10486 = vunpack.c.h.b16 %v10297
    %v10487 = vunpack.c.l.b16 %v10298
    %v10488 = vunpack.c.h.b16 %v10298
    %v10489 = vunpack.c.l.b16 %v10299
    %v10490 = vunpack.c.h.b16 %v10299
    %v10491 = vunpack.c.l.b16 %v10300
    %v10492 = vunpack.c.h.b16 %v10300
    %v10493 = vunpack.c.l.b16 %v10301
    %v10494 = vunpack.c.h.b16 %v10301
    %v10495 = vunpack.c.l.b16 %v10302
    %v10496 = vunpack.c.h.b16 %v10302
    %v10497 = vunpack.c.l.b16 %v10303
    %v10498 = vunpack.c.h.b16 %v10303
    %v10499 = vunpack.c.l.b16 %v10304
    %v10500 = vunpack.c.h.b16 %v10304
    %v10501 = vunpack.c.l.b16 %v10305
    %v10502 = vunpack.c.h.b16 %v10305
    %v10503 = vunpack.c.l.b16 %v10306
    %v10504 = vunpack.c.h.b16 %v10306
    %v10505 = vpack.c.b16 %v10379, %v10377
    %v10506 = vpack.c.b16 %v10380, %v10378
    %v10507 = vpack.c.b16 %v10383, %v10381
    %v10508 = vpack.c.b16 %v10384, %v10382
    %v10509 = vpack.c.b16 %v10387, %v10385
    %v10510 = vpack.c.b16 %v10388, %v10386
    %v10511 = vpack.c.b16 %v10391, %v10389
    %v10512 = vpack.c.b16 %v10392, %v10390
    %v10513 = vpack.c.b16 %v10395, %v10393
    %v10514 = vpack.c.b16 %v10396, %v10394
    %v10515 = vpack.c.b16 %v10399, %v10397
    %v10516 = vpack.c.b16 %v10400, %v10398
    %v10517 = vpack.c.b16 %v10403, %v10401
    %v10518 = vpack.c.b16 %v10404, %v10402
    %v10519 = vpack.c.b16 %v10407, %v10405
    %v10520 = vpack.c.b16 %v10408, %v10406
    %v10521 = vpack.c.b16 %v10411, %v10409
    %v10522 = vpack.c.b16 %v10412, %v10410
    %v10523 = vpack.c.b16 %v10415, %v10413
    %v10524 = vpack.c.b16 %v10416, %v10414
    %v10525 = vpack.c.b16 %v10419, %v10417
    %v10526 = vpack.c.b16 %v10420, %v10418
    %v10527 = vpack.c.b16 %v10423, %v10421
    %v10528 = vpack.c.b16 %v10424, %v10422
    %v10529 = vpack.c.b16 %v10427, %v10425
    %v10530 = vpack.c.b16 %v10428, %v10426
    %v10531 = vpack.c.b16 %v10431, %v10429
    %v10532 = vpack.c.b16 %v10432, %v10430
    %v10533 = vpack.c.b16 %v10435, %v10433
    %v10534 = vpack.c.b16 %v10436, %v10434
    %v10535 = vpack.c.b16 %v10439, %v10437
    %v10536 = vpack.c.b16 %v10440, %v10438
    %v10537 = vpack.c.b16 %v10443, %v10441
    %v10538 = vpack.c.b16 %v10444, %v10442
    %v10539 = vpack.c.b16 %v10447, %v10445
    %v10540 = vpack.c.b16 %v10448, %v10446
    %v10541 = vpack.c.b16 %v10451, %v10449
    %v10542 = vpack.c.b16 %v10452, %v10450
    %v10543 = vpack.c.b16 %v10455, %v10453
    %v10544 = vpack.c.b16 %v10456, %v10454
    %v10545 = vpack.c.b16 %v10459, %v10457
    %v10546 = vpack.c.b16 %v10460, %v10458
    %v10547 = vpack.c.b16 %v10463, %v10461
    %v10548 = vpack.c.b16 %v10464, %v10462
    %v10549 = vpack.c.b16 %v10467, %v10465
    %v10550 = vpack.c.b16 %v10468, %v10466
    %v10551 = vpack.c.b16 %v10471, %v10469
    %v10552 = vpack.c.b16 %v10472, %v10470
    %v10553 = vpack.c.b16 %v10475, %v10473
    %v10554 = vpack.c.b16 %v10476, %v10474
    %v10555 = vpack.c.b16 %v10479, %v10477
    %v10556 = vpack.c.b16 %v10480, %v10478
    %v10557 = vpack.c.b16 %v10483, %v10481
    %v10558 = vpack.c.b16 %v10484, %v10482
    %v10559 = vpack.c.b16 %v10487, %v10485
    %v10560 = vpack.c.b16 %v10488, %v10486
    %v10561 = vpack.c.b16 %v10491, %v10489
    %v10562 = vpack.c.b16 %v10492, %v10490
    %v10563 = vpack.c.b16 %v10495, %v10493
    %v10564 = vpack.c.b16 %v10496, %v10494
    %v10565 = vpack.c.b16 %v10499, %v10497
    %v10566 = vpack.c.b16 %v10500, %v10498
    %v10567 = vpack.c.b16 %v10503, %v10501
    %v10568 = vpack.c.b16 %v10504, %v10502
    %10633 = vmatpush.bf16.msra.mxu0 %v10519
    %10634 = vmatpush.bf16.msra.mxu0 %v10517
    %10635 = vmatpush.bf16.msra.mxu0 %v10515
    %10636 = vmatpush.bf16.msra.mxu0 %v10513
    %10637 = vmatpush.bf16.msra.mxu0 %v10511
    %10638 = vmatpush.bf16.msra.mxu0 %v10509
    %10639 = vmatpush.bf16.msra.mxu0 %v10507
    %10640 = vmatpush.bf16.msra.mxu0 %v10505
    %10641 = vmatmul.bf16.gmra.mxu0 %v10239
    %v10642 = vpop.f32.mrf.mxu0
    %v10643 = vadd.f32 %v10309, %v10642
    %v10644 = vpop.f32.mrf.mxu0
    %10645 = vdwg.mxu0
    %10646 = vmatpush.bf16.msra.mxu0 %v10535
    %10647 = vmatpush.bf16.msra.mxu0 %v10533
    %10648 = vmatpush.bf16.msra.mxu0 %v10531
    %10649 = vmatpush.bf16.msra.mxu0 %v10529
    %10650 = vmatpush.bf16.msra.mxu0 %v10527
    %10651 = vmatpush.bf16.msra.mxu0 %v10525
    %10652 = vmatpush.bf16.msra.mxu0 %v10523
    %10653 = vmatpush.bf16.msra.mxu0 %v10521
    %10654 = vmatmul.bf16.gmra.mxu0 %v10240
    %v10655 = vpop.f32.mrf.mxu0
    %v10656 = vadd.f32 %v10643, %v10655
    %v10657 = vpop.f32.mrf.mxu0
    %10658 = vdwg.mxu0
    %10659 = vmatpush.bf16.msra.mxu0 %v10551
    %10660 = vmatpush.bf16.msra.mxu0 %v10549
    %10661 = vmatpush.bf16.msra.mxu0 %v10547
    %10662 = vmatpush.bf16.msra.mxu0 %v10545
    %10663 = vmatpush.bf16.msra.mxu0 %v10543
    %10664 = vmatpush.bf16.msra.mxu0 %v10541
    %10665 = vmatpush.bf16.msra.mxu0 %v10539
    %10666 = vmatpush.bf16.msra.mxu0 %v10537
    %10667 = vmatmul.bf16.gmra.mxu0 %v10241
    %v10668 = vpop.f32.mrf.mxu0
    %v10669 = vadd.f32 %v10656, %v10668
    %v10670 = vpop.f32.mrf.mxu0
    %10671 = vdwg.mxu0
    %10672 = vmatpush.bf16.msra.mxu0 %v10567
    %10673 = vmatpush.bf16.msra.mxu0 %v10565
    %10674 = vmatpush.bf16.msra.mxu0 %v10563
    %10675 = vmatpush.bf16.msra.mxu0 %v10561
    %10676 = vmatpush.bf16.msra.mxu0 %v10559
    %10677 = vmatpush.bf16.msra.mxu0 %v10557
    %10678 = vmatpush.bf16.msra.mxu0 %v10555
    %10679 = vmatpush.bf16.msra.mxu0 %v10553
    %10680 = vmatmul.bf16.gmra.mxu0 %v10242
    %v10681 = vpop.f32.mrf.mxu0
    %v10682 = vadd.f32 %v10669, %v10681
    %v10683 = vpop.f32.mrf.mxu0
    %10684 = vdwg.mxu0
    %10685 = vmatpush.bf16.msra.mxu0 %v10520
    %10686 = vmatpush.bf16.msra.mxu0 %v10518
    %10687 = vmatpush.bf16.msra.mxu0 %v10516
    %10688 = vmatpush.bf16.msra.mxu0 %v10514
    %10689 = vmatpush.bf16.msra.mxu0 %v10512
    %10690 = vmatpush.bf16.msra.mxu0 %v10510
    %10691 = vmatpush.bf16.msra.mxu0 %v10508
    %10692 = vmatpush.bf16.msra.mxu0 %v10506
    %10693 = vmatmul.bf16.gmra.mxu0 %v10239
    %v10694 = vpop.f32.mrf.mxu0
    %v10695 = vadd.f32 %v10310, %v10694
    %v10696 = vpop.f32.mrf.mxu0
    %10697 = vdwg.mxu0
    %10698 = vmatpush.bf16.msra.mxu0 %v10536
    %10699 = vmatpush.bf16.msra.mxu0 %v10534
    %10700 = vmatpush.bf16.msra.mxu0 %v10532
    %10701 = vmatpush.bf16.msra.mxu0 %v10530
    %10702 = vmatpush.bf16.msra.mxu0 %v10528
    %10703 = vmatpush.bf16.msra.mxu0 %v10526
    %10704 = vmatpush.bf16.msra.mxu0 %v10524
    %10705 = vmatpush.bf16.msra.mxu0 %v10522
    %10706 = vmatmul.bf16.gmra.mxu0 %v10240
    %v10707 = vpop.f32.mrf.mxu0
    %v10708 = vadd.f32 %v10695, %v10707
    %v10709 = vpop.f32.mrf.mxu0
    %10710 = vdwg.mxu0
    %10711 = vmatpush.bf16.msra.mxu0 %v10552
    %10712 = vmatpush.bf16.msra.mxu0 %v10550
    %10713 = vmatpush.bf16.msra.mxu0 %v10548
    %10714 = vmatpush.bf16.msra.mxu0 %v10546
    %10715 = vmatpush.bf16.msra.mxu0 %v10544
    %10716 = vmatpush.bf16.msra.mxu0 %v10542
    %10717 = vmatpush.bf16.msra.mxu0 %v10540
    %10718 = vmatpush.bf16.msra.mxu0 %v10538
    %10719 = vmatmul.bf16.gmra.mxu0 %v10241
    %v10720 = vpop.f32.mrf.mxu0
    %v10721 = vadd.f32 %v10708, %v10720
    %v10722 = vpop.f32.mrf.mxu0
    %10723 = vdwg.mxu0
    %10724 = vmatpush.bf16.msra.mxu0 %v10568
    %10725 = vmatpush.bf16.msra.mxu0 %v10566
    %10726 = vmatpush.bf16.msra.mxu0 %v10564
    %10727 = vmatpush.bf16.msra.mxu0 %v10562
    %10728 = vmatpush.bf16.msra.mxu0 %v10560
    %10729 = vmatpush.bf16.msra.mxu0 %v10558
    %10730 = vmatpush.bf16.msra.mxu0 %v10556
    %10731 = vmatpush.bf16.msra.mxu0 %v10554
    %10732 = vmatmul.bf16.gmra.mxu0 %v10242
    %v10733 = vpop.f32.mrf.mxu0
    %v10734 = vadd.f32 %v10721, %v10733
    %v10735 = vpop.f32.mrf.mxu0
    %10736 = vdwg.mxu0
    %v10737 = vmax.f32 %v10682, 0.0
    %v10738 = vmax.f32 %v10734, 0.0
    %v10739 = vpack.c.bf16 %v10737, %v10737
    %v10740 = vpack.c.bf16 %v10738, %v10738
    %v10741 = vld [vmem:[#allocation10] sm:$0xf]
    %v10742 = vld [vmem:[#allocation10 + $0x4] sm:$0xf]
    %v10743 = vld [vmem:[#allocation10 + $0x8] sm:$0xf]
    %v10744 = vld [vmem:[#allocation10 + $0xc] sm:$0xf]
    %v10745 = vld [vmem:[#allocation10 + $0x10] sm:$0xf]
    %v10746 = vld [vmem:[#allocation10 + $0x14] sm:$0xf]
    %v10747 = vld [vmem:[#allocation10 + $0x18] sm:$0xf]
    %v10748 = vld [vmem:[#allocation10 + $0x1c] sm:$0xf]
    %v10749 = vld [vmem:[#allocation10 + $0x20] sm:$0xf]
    %v10750 = vld [vmem:[#allocation10 + $0x24] sm:$0xf]
    %v10751 = vld [vmem:[#allocation10 + $0x28] sm:$0xf]
    %v10752 = vld [vmem:[#allocation10 + $0x2c] sm:$0xf]
    %v10753 = vld [vmem:[#allocation10 + $0x30] sm:$0xf]
    %v10754 = vld [vmem:[#allocation10 + $0x34] sm:$0xf]
    %v10755 = vld [vmem:[#allocation10 + $0x38] sm:$0xf]
    %v10756 = vld [vmem:[#allocation10 + $0x3c] sm:$0xf]
    %v10757 = vld [vmem:[#allocation10 + $0x40] sm:$0xf]
    %v10758 = vld [vmem:[#allocation10 + $0x44] sm:$0xf]
    %v10759 = vld [vmem:[#allocation10 + $0x48] sm:$0xf]
    %v10760 = vld [vmem:[#allocation10 + $0x4c] sm:$0xf]
    %v10761 = vld [vmem:[#allocation10 + $0x50] sm:$0xf]
    %v10762 = vld [vmem:[#allocation10 + $0x54] sm:$0xf]
    %v10763 = vld [vmem:[#allocation10 + $0x58] sm:$0xf]
    %v10764 = vld [vmem:[#allocation10 + $0x5c] sm:$0xf]
    %v10765 = vld [vmem:[#allocation10 + $0x60] sm:$0xf]
    %v10766 = vld [vmem:[#allocation10 + $0x64] sm:$0xf]
    %v10767 = vld [vmem:[#allocation10 + $0x68] sm:$0xf]
    %v10768 = vld [vmem:[#allocation10 + $0x6c] sm:$0xf]
    %v10769 = vld [vmem:[#allocation10 + $0x70] sm:$0xf]
    %v10770 = vld [vmem:[#allocation10 + $0x74] sm:$0xf]
    %v10771 = vld [vmem:[#allocation10 + $0x78] sm:$0xf]
    %v10772 = vld [vmem:[#allocation10 + $0x7c] sm:$0xf]
    %v10773 = vld [vmem:[#allocation12] sm:$0x1]
    %v10775 = vperm.slane %v10773, 0
    %v10809 = vunpack.c.l.b16 %v10741
    %v10810 = vunpack.c.l.b16 %v10742
    %v10811 = vunpack.c.l.b16 %v10743
    %v10812 = vunpack.c.l.b16 %v10744
    %v10813 = vunpack.c.l.b16 %v10745
    %v10814 = vunpack.c.l.b16 %v10746
    %v10815 = vunpack.c.l.b16 %v10747
    %v10816 = vunpack.c.l.b16 %v10748
    %v10817 = vunpack.c.l.b16 %v10749
    %v10818 = vunpack.c.l.b16 %v10750
    %v10819 = vunpack.c.l.b16 %v10751
    %v10820 = vunpack.c.l.b16 %v10752
    %v10821 = vunpack.c.l.b16 %v10753
    %v10822 = vunpack.c.l.b16 %v10754
    %v10823 = vunpack.c.l.b16 %v10755
    %v10824 = vunpack.c.l.b16 %v10756
    %v10825 = vunpack.c.l.b16 %v10757
    %v10826 = vunpack.c.l.b16 %v10758
    %v10827 = vunpack.c.l.b16 %v10759
    %v10828 = vunpack.c.l.b16 %v10760
    %v10829 = vunpack.c.l.b16 %v10761
    %v10830 = vunpack.c.l.b16 %v10762
    %v10831 = vunpack.c.l.b16 %v10763
    %v10832 = vunpack.c.l.b16 %v10764
    %v10833 = vunpack.c.l.b16 %v10765
    %v10834 = vunpack.c.l.b16 %v10766
    %v10835 = vunpack.c.l.b16 %v10767
    %v10836 = vunpack.c.l.b16 %v10768
    %v10837 = vunpack.c.l.b16 %v10769
    %v10838 = vunpack.c.l.b16 %v10770
    %v10839 = vunpack.c.l.b16 %v10771
    %v10840 = vunpack.c.l.b16 %v10772
    %v10841 = vpack.c.b16 %v10810, %v10809
    %v10842 = vpack.c.b16 %v10812, %v10811
    %v10843 = vpack.c.b16 %v10814, %v10813
    %v10844 = vpack.c.b16 %v10816, %v10815
    %v10845 = vpack.c.b16 %v10818, %v10817
    %v10846 = vpack.c.b16 %v10820, %v10819
    %v10847 = vpack.c.b16 %v10822, %v10821
    %v10848 = vpack.c.b16 %v10824, %v10823
    %v10849 = vpack.c.b16 %v10826, %v10825
    %v10850 = vpack.c.b16 %v10828, %v10827
    %v10851 = vpack.c.b16 %v10830, %v10829
    %v10852 = vpack.c.b16 %v10832, %v10831
    %v10853 = vpack.c.b16 %v10834, %v10833
    %v10854 = vpack.c.b16 %v10836, %v10835
    %v10855 = vpack.c.b16 %v10838, %v10837
    %v10856 = vpack.c.b16 %v10840, %v10839
    %10873 = vmatpush.bf16.msra.mxu0 %v10848
    %10874 = vmatpush.bf16.msra.mxu0 %v10847
    %10875 = vmatpush.bf16.msra.mxu0 %v10846
    %10876 = vmatpush.bf16.msra.mxu0 %v10845
    %10877 = vmatpush.bf16.msra.mxu0 %v10844
    %10878 = vmatpush.bf16.msra.mxu0 %v10843
    %10879 = vmatpush.bf16.msra.mxu0 %v10842
    %10880 = vmatpush.bf16.msra.mxu0 %v10841
    %10881 = vmatmul.bf16.gmra.mxu0 %v10739
    %v10882 = vpop.f32.mrf.mxu0
    %v10883 = vadd.f32 %v10775, %v10882
    %v10884 = vpop.f32.mrf.mxu0
    %10885 = vdwg.mxu0
    %10886 = vmatpush.bf16.msra.mxu0 %v10856
    %10887 = vmatpush.bf16.msra.mxu0 %v10855
    %10888 = vmatpush.bf16.msra.mxu0 %v10854
    %10889 = vmatpush.bf16.msra.mxu0 %v10853
    %10890 = vmatpush.bf16.msra.mxu0 %v10852
    %10891 = vmatpush.bf16.msra.mxu0 %v10851
    %10892 = vmatpush.bf16.msra.mxu0 %v10850
    %10893 = vmatpush.bf16.msra.mxu0 %v10849
    %10894 = vmatmul.bf16.gmra.mxu0 %v10740
    %v10895 = vpop.f32.mrf.mxu0
    %v10896 = vadd.f32 %v10883, %v10895
    %v10897 = vpop.f32.mrf.mxu0
    %10898 = vdwg.mxu0
    %v10899 = vsub.f32 0.0, %v10896
    %v10900 = vmul.f32 %v10899, 1.442695
    %v10901 = vpow.pop %v10900
    %v10902 = vadd.f32 %v10901, 1.0
    %v10903 = vrcp.pop %v10902
    %v10904 = vmul.f32 %v10902, %v10903
    %v10905 = vsub.f32 1.0, %v10904
    %v10906 = vmul.f32 %v10903, %v10905
    %v10907 = vadd.f32 %v10903, %v10906
    %vm10908 = vweird.f32 %v10902
    %vm10909 = vweird.f32 %v10903
    %vm10910 = vmor %vm10908, %vm10909
    %v10911 = vsel %vm10910, %v10903, %v10907
    %v10912 = vand.u32 2147483647, %v10902
    %vm10913 = vcmp.eq.f32.partialorder %v10912, 8.507059e+37
    %v10914 = vand.u32 %v10902, 2147483648
    %v10915 = vor.u32 1.1754944e-38, %v10914
    %v10916 = vsel %vm10913, %v10915, %v10911
    %10917 = vst [vmem:[%s9] sm:$0xff] %v10916
    // Predicated region
    $region66: #{discriminator2_forward.1} parent=1 // pred_check
      _
    $region67: #{discriminator2_forward.1} parent=1 // pred_check_branch
      %10919 = sbr.rel (0) target = $region69
    $region68: #{discriminator2_forward.1} parent=1 // pred_region
      _
    $region69: #{discriminator2_forward.1} parent=1 // pred_fallthru
      _
    // Predicated region
    $region70: #{discriminator2_forward.1} parent=1 // pred_check
      _
    $region71: #{discriminator2_forward.1} parent=1 // pred_check_branch
      %10921 = sbr.rel (0) target = $region73
    $region72: #{discriminator2_forward.1} parent=1 // pred_region
      _
    $region73: #{discriminator2_forward.1} parent=1 // pred_fallthru
      _
    %10922 = vsyncpa [#allocation3], 1
    %10923 = vsyncpa [#allocation5], 1
    %10924 = vsyncpa [#allocation8], 1
    %10925 = vsyncpa [#allocation11], 1

</llo_original>
